<compile_context>
chip_gen: v7x
topology: tpu7x:2x2x1
jax: 0.10.0
libtpu: 0.0.40
codegen_flags: <defaults>
</compile_context>

<pallas_src>
import jax
import jax.numpy as jnp
from jax.experimental import pallas as pl
from jax.experimental.pallas import tpu as pltpu


def _round_up(x, m):
    return ((x + m - 1) // m) * m


def bert_classifier_kernel(nt_ref,                                   # SMEM scalar prefetch
                           vl_ref, tok_ids_ref, seg_ids_ref,
                           tok_tab_ref, seg_tab_ref,
                           pw_ref, pb_ref, cw_ref, cb_ref,
                           mask_ref, logits_ref,
                           hist_ref, seg1_ref):
    """Fused: mask gen -> masked histogram accumulation over seq tiles -> pooler -> classifier."""
    bi = pl.program_id(0)
    si = pl.program_id(1)
    n_seq = pl.num_programs(1)
    TB, TS = tok_ids_ref.shape
    Vp, H = tok_tab_ref.shape
    s_total = TS * n_seq

    # --- gen_attention_mask for this tile: 1.0 where absolute position < valid_length ---
    col = si * TS + jax.lax.broadcasted_iota(jnp.int32, (TB, TS), 1)
    vl = vl_ref[...]                                   # [TB, 1] int32
    mask = (col < vl).astype(jnp.float32)              # [TB, TS]
    mask_ref[...] = mask

    @pl.when(si == 0)
    def _init():
        hist_ref[...] = jnp.zeros_like(hist_ref)
        seg1_ref[...] = jnp.zeros_like(seg1_ref)

    # --- accumulate masked vocab histogram + masked segment-1 count.
    #     The embedding math itself is hoisted to _finalize (runs once, not per tile).
    #     All-padding seq tiles are skipped; their blocks are never re-DMA'd
    #     (the index_map clamps the block index so the previous buffer is reused). ---
    @pl.when(si < nt_ref[bi])
    def _accumulate():
        ids = tok_ids_ref[...]                                          # [TB, TS] int32
        vocab = jax.lax.broadcasted_iota(jnp.int32, (1, 1, Vp), 2)      # [1, 1, Vp]
        onehot = ids[:, :, None] == vocab                               # [TB, TS, Vp]
        hist_ref[...] += jnp.sum(jnp.where(onehot, mask[:, :, None], 0.0), axis=1)
        seg1 = (seg_ids_ref[...] > 0).astype(jnp.float32)               # [TB, TS]
        seg1_ref[...] += jnp.sum(seg1 * mask, axis=1, keepdims=True)    # [TB, 1]

    # --- finalize: token sum = hist @ table, add blended segment rows, masked mean,
    #     tanh(dense) pooler, classifier (dr_rate=None -> no dropout). ---
    @pl.when(si == n_seq - 1)
    def _finalize():
        valid = jnp.clip(vl, 0, s_total).astype(jnp.float32)            # [TB,1] == sum(mask)
        tok_sum = jnp.dot(hist_ref[...], tok_tab_ref[...].astype(jnp.float32),
                          preferred_element_type=jnp.float32)            # [TB, H]
        row0 = seg_tab_ref[0:1, :].astype(jnp.float32)                   # [1, H]
        row1 = seg_tab_ref[1:2, :].astype(jnp.float32)
        seg_sum = valid * row0 + seg1_ref[...] * (row1 - row0)           # [TB, H]
        denom = jnp.maximum(valid, 1.0)
        pooled = (tok_sum + seg_sum) / denom                             # exact divide
        pooler = jnp.tanh(
            jnp.dot(pooled, pw_ref[...].astype(jnp.float32),
                    preferred_element_type=jnp.float32) + pb_ref[...])
        logits_ref[...] = (
            jnp.dot(pooler, cw_ref[...].astype(jnp.float32),
                    preferred_element_type=jnp.float32) + cb_ref[...])


def bert_classifier_forward(token_ids, valid_length, segment_ids, params,
                            *, batch_tile=None, seq_tile=512):
    """JAX glue around pallas_call. Returns (attention_mask, logits)."""
    B, S = token_ids.shape
    V, H = params["tok_table"].shape
    C = params["cls_w"].shape[1]
    C_pad = _round_up(C, 128)        # lane-dense logits output
    V_pad = _round_up(V, 128)        # lane-dense histogram / one-hot

    # Tile selection. v7x has 2 TensorCores -> prefer >= 2 tiles on the "parallel"
    # batch axis; keep TB a multiple of 8 (sublane). Raise on non-divisibility
    # instead of silently degrading.
    if batch_tile is None:
        half = B // 2
        batch_tile = half if (B % 2 == 0 and half > 0 and half % 8 == 0) else B
    TB = batch_tile
    TS = min(seq_tile, S)
    if B % TB != 0:
        raise ValueError(f"batch_tile={TB} must divide batch={B}")
    if S % TS != 0:
        raise ValueError(f"seq_tile={TS} must divide seq={S}")
    num_bt, num_st = B // TB, S // TS

    tok_ids = token_ids.astype(jnp.int32)
    seg_ids = segment_ids.astype(jnp.int32)                     # {0,1} token types (BERT)
    vl2d = jnp.clip(valid_length.astype(jnp.int32), 0, S).reshape(B, 1)

    # Scalar prefetch: number of seq tiles holding any valid token, per batch tile (>= 1).
    max_vl = jnp.max(vl2d.reshape(num_bt, TB), axis=1)
    nt = jnp.clip((max_vl + TS - 1) // TS, 1, num_st).astype(jnp.int32)   # [num_bt]

    # Lane-padded bf16 tables / weights (VMEM-resident; upcast to f32 at the dot).
    tok_tab = params["tok_table"]
    if V_pad != V:
        tok_tab = jnp.zeros((V_pad, H), tok_tab.dtype).at[:V].set(tok_tab)
    cw_pad = jnp.zeros((H, C_pad), params["cls_w"].dtype).at[:, :C].set(params["cls_w"])
    cb_pad = jnp.zeros((1, C_pad), jnp.float32).at[:, :C].set(params["cls_b"])
    nseg = params["seg_table"].shape[0]

    in_specs = [
        pl.BlockSpec((TB, 1),      lambda bi, si, nt: (bi, 0)),                           # valid_length
        pl.BlockSpec((TB, TS),     lambda bi, si, nt: (bi, jnp.minimum(si, nt[bi] - 1))), # token ids
        pl.BlockSpec((TB, TS),     lambda bi, si, nt: (bi, jnp.minimum(si, nt[bi] - 1))), # segment ids
        pl.BlockSpec((V_pad, H),   lambda bi, si, nt: (0, 0)),                            # token table (resident)
        pl.BlockSpec((nseg, H),    lambda bi, si, nt: (0, 0)),                            # segment table
        pl.BlockSpec((H, H),       lambda bi, si, nt: (0, 0)),                            # pooler W (bf16)
        pl.BlockSpec((1, H),       lambda bi, si, nt: (0, 0)),                            # pooler b
        pl.BlockSpec((H, C_pad),   lambda bi, si, nt: (0, 0)),                            # classifier W (padded)
        pl.BlockSpec((1, C_pad),   lambda bi, si, nt: (0, 0)),                            # classifier b
    ]
    out_specs = (
        pl.BlockSpec((TB, TS),    lambda bi, si, nt: (bi, si)),                           # attention mask
        pl.BlockSpec((TB, C_pad), lambda bi, si, nt: (bi, 0)),                            # logits (resident over seq)
    )
    out_shape = (
        jax.ShapeDtypeStruct((B, S), jnp.float32),
        jax.ShapeDtypeStruct((B, C_pad), jnp.float32),
    )

    grid_spec = pltpu.PrefetchScalarGridSpec(
        num_scalar_prefetch=1,
        grid=(num_bt, num_st),
        in_specs=in_specs,
        out_specs=out_specs,
        scratch_shapes=[pltpu.VMEM((TB, V_pad), jnp.float32),    # masked vocab histogram
                        pltpu.VMEM((TB, 1), jnp.float32)],       # masked segment-1 count
    )

    # Generation-aware VMEM limit (v7x: 64 MiB/TC vs 128 MiB on v5e/v6e).
    try:
        vmem_cap = int(pltpu.get_tpu_info().vmem_capacity_bytes)
    except Exception:
        vmem_cap = 64 * 1024 * 1024
    e2 = jnp.dtype(tok_tab.dtype).itemsize
    dbuf = 2 * (TB * 4                                    # valid_length tile
                + 2 * TB * TS * 4                         # token-id + segment-id tiles
                + TB * TS * 4 + TB * C_pad * 4            # mask + logits output tiles
                + V_pad * H * e2 + nseg * H * e2          # tables
                + H * H * e2 + H * 4 + H * C_pad * e2 + C_pad * 4)
    scratch = TB * V_pad * 4 + TB * 128 * 4
    interm = 4 * TB * TS * V_pad * 4                      # one-hot / select / reduce transients
    budget = dbuf + scratch + interm
    vmem_limit = int(min(max(budget + budget // 2, 16 * 1024 * 1024),
                         (3 * vmem_cap) // 4))

    compiler_params = pltpu.CompilerParams(
        dimension_semantics=("parallel", "arbitrary"),    # batch parallel (v7x 2 TCs), seq = reduction
        vmem_limit_bytes=vmem_limit,
    )

    mask, logits_pad = pl.pallas_call(
        bert_classifier_kernel,
        out_shape=out_shape,
        grid_spec=grid_spec,
        compiler_params=compiler_params,
    )(nt, vl2d, tok_ids, seg_ids, tok_tab, params["seg_table"],
      params["pooler_w"], params["pooler_b"], cw_pad, cb_pad)

    return mask, logits_pad[:, :C]


def init_params(key, vocab_size, num_segments, hidden_size, num_classes):
    assert num_segments == 2, "in-kernel segment select assumes 2 token types (BERT)"
    k = jax.random.split(key, 6)
    scale = 0.1
    return {
        # bf16 tables / weights -> half the resident VMEM; all matmul accumulation is f32.
        "tok_table": (scale * jax.random.normal(k[0], (vocab_size, hidden_size))).astype(jnp.bfloat16),
        "seg_table": (scale * jax.random.normal(k[1], (num_segments, hidden_size))).astype(jnp.bfloat16),
        "pooler_w": (scale * jax.random.normal(k[2], (hidden_size, hidden_size))).astype(jnp.bfloat16),
        "pooler_b": scale * jax.random.normal(k[3], (1, hidden_size), jnp.float32),
        "cls_w":    (scale * jax.random.normal(k[4], (hidden_size, num_classes))).astype(jnp.bfloat16),
        "cls_b":    scale * jax.random.normal(k[5], (1, num_classes), jnp.float32),
    }


def reference_forward(token_ids, valid_length, segment_ids, params):
    """Pure-JAX reference of the same stand-in forward (same bf16 tables/weights, f32 math)."""
    B, S = token_ids.shape
    tok = params["tok_table"][token_ids].astype(jnp.float32)
    seg = params["seg_table"][segment_ids].astype(jnp.float32)
    col = jnp.arange(S, dtype=jnp.int32)[None, :]
    vl = jnp.clip(valid_length.astype(jnp.int32), 0, S)[:, None]
    mask = (col < vl).astype(jnp.float32)
    summed = jnp.sum((tok + seg) * mask[:, :, None], axis=1)
    counts = jnp.clip(vl, 1, S).astype(jnp.float32)
    pooled = summed / counts
    pooler = jnp.tanh(pooled @ params["pooler_w"].astype(jnp.float32) + params["pooler_b"])
    logits = pooler @ params["cls_w"].astype(jnp.float32) + params["cls_b"]
    return mask, logits


if __name__ == "__main__":
    B, S, H, C = 16, 512, 128, 2         # small but (8,128)-aligned so the tiling is real
    VOCAB, NSEG = 512, 2
    TB, TS = 8, 256                      # grid = (2 batch tiles, 2 seq tiles)

    key = jax.random.PRNGKey(0)
    kp, kt, ks = jax.random.split(key, 3)

    params = init_params(kp, VOCAB, NSEG, H, C)
    token_ids = jax.random.randint(kt, (B, S), 0, VOCAB, dtype=jnp.int32)
    segment_ids = jax.random.randint(ks, (B, S), 0, NSEG, dtype=jnp.int32)
    valid_length = jnp.array([5, 512, 130, 64, 0, 200, 17, 128,
                              256, 511, 1, 300, 33, 480, 77, 512], dtype=jnp.int32)

    mask, logits = bert_classifier_forward(token_ids, valid_length, segment_ids, params,
                                           batch_tile=TB, seq_tile=TS)
    jax.block_until_ready((mask, logits))

    ref_mask, ref_logits = reference_forward(token_ids, valid_length, segment_ids, params)

    assert mask.shape == (B, S) and logits.shape == (B, C)
    assert jnp.array_equal(mask, ref_mask)
    assert jnp.all(jnp.sum(mask, axis=1).astype(jnp.int32) == jnp.clip(valid_length, 0, S))
    assert jnp.allclose(logits, ref_logits, rtol=2e-2, atol=2e-3), (
        float(jnp.max(jnp.abs(logits - ref_logits))))
    print("KERNEL_OK")
</pallas_src>

<mosaic_0001>
module attributes {stable_mosaic.version = 11 : i64} {
  func.func @bert_classifier_kernel(%arg0: i32, %arg1: i32, %arg2: memref<2xi32, #tpu.memory_space<smem>>, %arg3: memref<8x1xi32, #tpu.memory_space<vmem>>, %arg4: memref<8x256xi32, #tpu.memory_space<vmem>>, %arg5: memref<8x256xi32, #tpu.memory_space<vmem>>, %arg6: memref<512x128xbf16, #tpu.memory_space<vmem>>, %arg7: memref<2x128xbf16, #tpu.memory_space<vmem>>, %arg8: memref<128x128xbf16, #tpu.memory_space<vmem>>, %arg9: memref<1x128xf32, #tpu.memory_space<vmem>>, %arg10: memref<128x128xbf16, #tpu.memory_space<vmem>>, %arg11: memref<1x128xf32, #tpu.memory_space<vmem>>, %arg12: memref<8x256xf32, #tpu.memory_space<vmem>>, %arg13: memref<8x128xf32, #tpu.memory_space<vmem>>, %arg14: memref<8x512xf32, #tpu.memory_space<vmem>>, %arg15: memref<8x1xf32, #tpu.memory_space<vmem>>) attributes {dimension_semantics = [#tpu.dimension_semantics<parallel>, #tpu.dimension_semantics<arbitrary>], iteration_bounds = array<i64: 2, 2>, scalar_prefetch = 1 : i64, scratch_operands = 2 : i64, tpu.core_type = #tpu.core_type<tc>, window_params = [{transform_indices = @transform_0, window_bounds = array<i64: 8, 1>}, {transform_indices = @transform_1, window_bounds = array<i64: 8, 256>}, {transform_indices = @transform_2, window_bounds = array<i64: 8, 256>}, {pipeline_mode = #tpu.pipeline_mode<synchronous>, transform_indices = @transform_3, window_bounds = array<i64: 512, 128>}, {pipeline_mode = #tpu.pipeline_mode<synchronous>, transform_indices = @transform_4, window_bounds = array<i64: 2, 128>}, {pipeline_mode = #tpu.pipeline_mode<synchronous>, transform_indices = @transform_5, window_bounds = array<i64: 128, 128>}, {pipeline_mode = #tpu.pipeline_mode<synchronous>, transform_indices = @transform_6, window_bounds = array<i64: 1, 128>}, {pipeline_mode = #tpu.pipeline_mode<synchronous>, transform_indices = @transform_7, window_bounds = array<i64: 128, 128>}, {pipeline_mode = #tpu.pipeline_mode<synchronous>, transform_indices = @transform_8, window_bounds = array<i64: 1, 128>}, {transform_indices = @transform_9, window_bounds = array<i64: 8, 256>}, {transform_indices = @transform_10, window_bounds = array<i64: 8, 128>}]} {
    %c256_i32 = arith.constant 256 : i32
    %0 = arith.muli %arg1, %c256_i32 : i32
    %1 = tpu.iota {dimensions = array<i32: 1>} : vector<8x256xi32>
    %2 = vector.broadcast %0 : i32 to vector<8x256xi32>
    %3 = arith.addi %2, %1 : vector<8x256xi32>
    %c0 = arith.constant 0 : index
    %c0_0 = arith.constant 0 : index
    %4 = vector.load %arg3[%c0, %c0_0] : memref<8x1xi32, #tpu.memory_space<vmem>>, vector<8x1xi32>
    %5 = vector.broadcast %4 : vector<8x1xi32> to vector<8x256xi32>
    %6 = arith.cmpi slt, %3, %5 : vector<8x256xi32>
    %7 = arith.extui %6 : vector<8x256xi1> to vector<8x256xi32>
    %8 = arith.sitofp %7 : vector<8x256xi32> to vector<8x256xf32>
    %c0_1 = arith.constant 0 : index
    %c0_2 = arith.constant 0 : index
    %9 = vector.load %arg12[%c0_1, %c0_2] : memref<8x256xf32, #tpu.memory_space<vmem>>, vector<8x256xf32>
    tpu.vector_store %arg12[%c0_1, %c0_2], %8 {strides = array<i32>} : memref<8x256xf32, #tpu.memory_space<vmem>>, vector<8x256xf32>,
    %c0_i32 = arith.constant 0 : i32
    %10 = arith.cmpi eq, %arg1, %c0_i32 : i32
    %11 = arith.extui %10 : i1 to i32
    %c0_i32_3 = arith.constant 0 : i32
    %12 = arith.cmpi ne, %11, %c0_i32_3 : i32
    scf.if %12 {
      %cst = arith.constant 0.000000e+00 : f32
      %21 = vector.broadcast %cst : f32 to vector<8x512xf32>
      %c0_6 = arith.constant 0 : index
      %c0_7 = arith.constant 0 : index
      %22 = vector.load %arg14[%c0_6, %c0_7] : memref<8x512xf32, #tpu.memory_space<vmem>>, vector<8x512xf32>
      tpu.vector_store %arg14[%c0_6, %c0_7], %21 {strides = array<i32>} : memref<8x512xf32, #tpu.memory_space<vmem>>, vector<8x512xf32>,
      %cst_8 = arith.constant 0.000000e+00 : f32
      %23 = vector.broadcast %cst_8 : f32 to vector<8x1xf32>
      %c0_9 = arith.constant 0 : index
      %c0_10 = arith.constant 0 : index
      %24 = vector.load %arg15[%c0_9, %c0_10] : memref<8x1xf32, #tpu.memory_space<vmem>>, vector<8x1xf32>
      tpu.vector_store %arg15[%c0_9, %c0_10], %23 {strides = array<i32>} : memref<8x1xf32, #tpu.memory_space<vmem>>, vector<8x1xf32>,
    } else {
    }
    %13 = arith.index_cast %arg0 : i32 to index
    %14 = memref.load %arg2[%13] : memref<2xi32, #tpu.memory_space<smem>>
    %15 = arith.cmpi slt, %arg1, %14 : i32
    %16 = arith.extui %15 : i1 to i32
    %c0_i32_4 = arith.constant 0 : i32
    %17 = arith.cmpi ne, %16, %c0_i32_4 : i32
    scf.if %17 {
      %c0_6 = arith.constant 0 : index
      %c0_7 = arith.constant 0 : index
      %21 = vector.load %arg4[%c0_6, %c0_7] : memref<8x256xi32, #tpu.memory_space<vmem>>, vector<8x256xi32>
      %22 = tpu.iota {dimensions = array<i32: 2>} : vector<1x1x512xi32>
      %23 = vector.shape_cast %21 : vector<8x256xi32> to vector<8x256x1xi32>
      %24 = vector.broadcast %23 : vector<8x256x1xi32> to vector<8x256x512xi32>
      %25 = vector.broadcast %22 : vector<1x1x512xi32> to vector<8x256x512xi32>
      %26 = arith.cmpi eq, %24, %25 : vector<8x256x512xi32>
      %c0_8 = arith.constant 0 : index
      %c0_9 = arith.constant 0 : index
      %27 = vector.load %arg14[%c0_8, %c0_9] : memref<8x512xf32, #tpu.memory_space<vmem>>, vector<8x512xf32>
      %28 = vector.shape_cast %8 : vector<8x256xf32> to vector<8x256x1xf32>
      %cst = arith.constant 0.000000e+00 : f32
      %29 = vector.shape_cast %28 : vector<8x256x1xf32> to vector<8x256x1xf32>
      %30 = vector.broadcast %29 : vector<8x256x1xf32> to vector<8x256x512xf32>
      %31 = vector.broadcast %cst : f32 to vector<8x256x512xf32>
      %32 = arith.select %26, %30, %31 : vector<8x256x512xi1>, vector<8x256x512xf32>
      %cst_10 = arith.constant dense<0.000000e+00> : vector<8x512xf32>
      %33 = vector.multi_reduction <add>, %32, %cst_10 [1] : vector<8x256x512xf32> to vector<8x512xf32>
      %34 = arith.addf %27, %33 : vector<8x512xf32>
      %c0_11 = arith.constant 0 : index
      %c0_12 = arith.constant 0 : index
      %35 = vector.load %arg14[%c0_11, %c0_12] : memref<8x512xf32, #tpu.memory_space<vmem>>, vector<8x512xf32>
      tpu.vector_store %arg14[%c0_11, %c0_12], %34 {strides = array<i32>} : memref<8x512xf32, #tpu.memory_space<vmem>>, vector<8x512xf32>,
      %c0_13 = arith.constant 0 : index
      %c0_14 = arith.constant 0 : index
      %36 = vector.load %arg5[%c0_13, %c0_14] : memref<8x256xi32, #tpu.memory_space<vmem>>, vector<8x256xi32>
      %c0_i32_15 = arith.constant 0 : i32
      %37 = vector.broadcast %c0_i32_15 : i32 to vector<8x256xi32>
      %38 = arith.cmpi sgt, %36, %37 : vector<8x256xi32>
      %39 = arith.extui %38 : vector<8x256xi1> to vector<8x256xi32>
      %40 = arith.sitofp %39 : vector<8x256xi32> to vector<8x256xf32>
      %c0_16 = arith.constant 0 : index
      %c0_17 = arith.constant 0 : index
      %41 = vector.load %arg15[%c0_16, %c0_17] : memref<8x1xf32, #tpu.memory_space<vmem>>, vector<8x1xf32>
      %42 = arith.mulf %40, %8 : vector<8x256xf32>
      %cst_18 = arith.constant dense<0.000000e+00> : vector<8xf32>
      %43 = vector.multi_reduction <add>, %42, %cst_18 [1] : vector<8x256xf32> to vector<8xf32>
      %44 = vector.shape_cast %43 : vector<8xf32> to vector<8x1xf32>
      %45 = arith.addf %41, %44 : vector<8x1xf32>
      %c0_19 = arith.constant 0 : index
      %c0_20 = arith.constant 0 : index
      %46 = vector.load %arg15[%c0_19, %c0_20] : memref<8x1xf32, #tpu.memory_space<vmem>>, vector<8x1xf32>
      tpu.vector_store %arg15[%c0_19, %c0_20], %45 {strides = array<i32>} : memref<8x1xf32, #tpu.memory_space<vmem>>, vector<8x1xf32>,
    } else {
    }
    %c1_i32 = arith.constant 1 : i32
    %18 = arith.cmpi eq, %arg1, %c1_i32 : i32
    %19 = arith.extui %18 : i1 to i32
    %c0_i32_5 = arith.constant 0 : i32
    %20 = arith.cmpi ne, %19, %c0_i32_5 : i32
    scf.if %20 {
      %c0_i32_6 = arith.constant 0 : i32
      %c512_i32 = arith.constant 512 : i32
      %21 = vector.broadcast %c0_i32_6 : i32 to vector<8x1xi32>
      %22 = arith.maxsi %21, %4 : vector<8x1xi32>
      %23 = vector.broadcast %c512_i32 : i32 to vector<8x1xi32>
      %24 = arith.minsi %23, %22 : vector<8x1xi32>
      %25 = arith.sitofp %24 : vector<8x1xi32> to vector<8x1xf32>
      %c0_7 = arith.constant 0 : index
      %c0_8 = arith.constant 0 : index
      %26 = vector.load %arg14[%c0_7, %c0_8] : memref<8x512xf32, #tpu.memory_space<vmem>>, vector<8x512xf32>
      %c0_9 = arith.constant 0 : index
      %c0_10 = arith.constant 0 : index
      %27 = vector.load %arg6[%c0_9, %c0_10] : memref<512x128xbf16, #tpu.memory_space<vmem>>, vector<512x128xbf16>
      %28 = arith.extf %27 : vector<512x128xbf16> to vector<512x128xf32>
      %cst = arith.constant dense<0.000000e+00> : vector<8x128xf32>
      %29 = tpu.matmul %26, %28, %cst {dimension_numbers = #tpu.dot_dimension_numbers<[1], [0], [0], [1], [0, 0, 1, 1], [], []>} : vector<8x512xf32>, vector<512x128xf32>, vector<8x128xf32> -> vector<8x128xf32>
      %c0_11 = arith.constant 0 : index
      %c0_12 = arith.constant 0 : index
      %30 = vector.load %arg7[%c0_11, %c0_12] : memref<2x128xbf16, #tpu.memory_space<vmem>>, vector<1x128xbf16>
      %31 = arith.extf %30 : vector<1x128xbf16> to vector<1x128xf32>
      %c1 = arith.constant 1 : index
      %c0_13 = arith.constant 0 : index
      %32 = vector.load %arg7[%c1, %c0_13] : memref<2x128xbf16, #tpu.memory_space<vmem>>, vector<1x128xbf16>
      %33 = arith.extf %32 : vector<1x128xbf16> to vector<1x128xf32>
      %34 = vector.broadcast %25 : vector<8x1xf32> to vector<8x128xf32>
      %35 = vector.broadcast %31 : vector<1x128xf32> to vector<8x128xf32>
      %36 = arith.mulf %34, %35 : vector<8x128xf32>
      %c0_14 = arith.constant 0 : index
      %c0_15 = arith.constant 0 : index
      %37 = vector.load %arg15[%c0_14, %c0_15] : memref<8x1xf32, #tpu.memory_space<vmem>>, vector<8x1xf32>
      %38 = arith.subf %33, %31 : vector<1x128xf32>
      %39 = vector.broadcast %37 : vector<8x1xf32> to vector<8x128xf32>
      %40 = vector.broadcast %38 : vector<1x128xf32> to vector<8x128xf32>
      %41 = arith.mulf %39, %40 : vector<8x128xf32>
      %42 = arith.addf %36, %41 : vector<8x128xf32>
      %cst_16 = arith.constant 1.000000e+00 : f32
      %43 = vector.broadcast %cst_16 : f32 to vector<8x1xf32>
      %44 = arith.maximumf %25, %43 : vector<8x1xf32>
      %45 = arith.addf %29, %42 : vector<8x128xf32>
      %46 = vector.broadcast %44 : vector<8x1xf32> to vector<8x128xf32>
      %47 = arith.divf %45, %46 : vector<8x128xf32>
      %c0_17 = arith.constant 0 : index
      %c0_18 = arith.constant 0 : index
      %48 = vector.load %arg8[%c0_17, %c0_18] : memref<128x128xbf16, #tpu.memory_space<vmem>>, vector<128x128xbf16>
      %49 = arith.extf %48 : vector<128x128xbf16> to vector<128x128xf32>
      %cst_19 = arith.constant dense<0.000000e+00> : vector<8x128xf32>
      %50 = tpu.matmul %47, %49, %cst_19 {dimension_numbers = #tpu.dot_dimension_numbers<[1], [0], [0], [1], [0, 0, 1, 1], [], []>} : vector<8x128xf32>, vector<128x128xf32>, vector<8x128xf32> -> vector<8x128xf32>
      %c0_20 = arith.constant 0 : index
      %c0_21 = arith.constant 0 : index
      %51 = vector.load %arg9[%c0_20, %c0_21] : memref<1x128xf32, #tpu.memory_space<vmem>>, vector<1x128xf32>
      %52 = vector.broadcast %51 : vector<1x128xf32> to vector<8x128xf32>
      %53 = arith.addf %50, %52 : vector<8x128xf32>
      %54 = math.tanh %53 : vector<8x128xf32>
      %c0_22 = arith.constant 0 : index
      %c0_23 = arith.constant 0 : index
      %55 = vector.load %arg10[%c0_22, %c0_23] : memref<128x128xbf16, #tpu.memory_space<vmem>>, vector<128x128xbf16>
      %56 = arith.extf %55 : vector<128x128xbf16> to vector<128x128xf32>
      %cst_24 = arith.constant dense<0.000000e+00> : vector<8x128xf32>
      %57 = tpu.matmul %54, %56, %cst_24 {dimension_numbers = #tpu.dot_dimension_numbers<[1], [0], [0], [1], [0, 0, 1, 1], [], []>} : vector<8x128xf32>, vector<128x128xf32>, vector<8x128xf32> -> vector<8x128xf32>
      %c0_25 = arith.constant 0 : index
      %c0_26 = arith.constant 0 : index
      %58 = vector.load %arg11[%c0_25, %c0_26] : memref<1x128xf32, #tpu.memory_space<vmem>>, vector<1x128xf32>
      %59 = vector.broadcast %58 : vector<1x128xf32> to vector<8x128xf32>
      %60 = arith.addf %57, %59 : vector<8x128xf32>
      %c0_27 = arith.constant 0 : index
      %c0_28 = arith.constant 0 : index
      %61 = vector.load %arg13[%c0_27, %c0_28] : memref<8x128xf32, #tpu.memory_space<vmem>>, vector<8x128xf32>
      tpu.vector_store %arg13[%c0_27, %c0_28], %60 {strides = array<i32>} : memref<8x128xf32, #tpu.memory_space<vmem>>, vector<8x128xf32>,
    } else {
    }
    return
  }
  func.func @transform_0(%arg0: i32, %arg1: i32, %arg2: memref<2xi32, #tpu.memory_space<smem>>) -> (i32, i32) {
    %c0_i32 = arith.constant 0 : i32
    %c0_i32_0 = arith.constant 0 : i32
    return %arg0, %c0_i32 : i32, i32
  }
  func.func @transform_1(%arg0: i32, %arg1: i32, %arg2: memref<2xi32, #tpu.memory_space<smem>>) -> (i32, i32) {
    %0 = arith.index_cast %arg0 : i32 to index
    %1 = memref.load %arg2[%0] : memref<2xi32, #tpu.memory_space<smem>>
    %c1_i32 = arith.constant 1 : i32
    %2 = arith.subi %1, %c1_i32 : i32
    %3 = arith.minsi %arg1, %2 : i32
    %c0_i32 = arith.constant 0 : i32
    return %arg0, %3 : i32, i32
  }
  func.func @transform_2(%arg0: i32, %arg1: i32, %arg2: memref<2xi32, #tpu.memory_space<smem>>) -> (i32, i32) {
    %0 = arith.index_cast %arg0 : i32 to index
    %1 = memref.load %arg2[%0] : memref<2xi32, #tpu.memory_space<smem>>
    %c1_i32 = arith.constant 1 : i32
    %2 = arith.subi %1, %c1_i32 : i32
    %3 = arith.minsi %arg1, %2 : i32
    %c0_i32 = arith.constant 0 : i32
    return %arg0, %3 : i32, i32
  }
  func.func @transform_3(%arg0: i32, %arg1: i32, %arg2: memref<2xi32, #tpu.memory_space<smem>>) -> (i32, i32) {
    %c0_i32 = arith.constant 0 : i32
    %c0_i32_0 = arith.constant 0 : i32
    %c0_i32_1 = arith.constant 0 : i32
    return %c0_i32, %c0_i32_0 : i32, i32
  }
  func.func @transform_4(%arg0: i32, %arg1: i32, %arg2: memref<2xi32, #tpu.memory_space<smem>>) -> (i32, i32) {
    %c0_i32 = arith.constant 0 : i32
    %c0_i32_0 = arith.constant 0 : i32
    %c0_i32_1 = arith.constant 0 : i32
    return %c0_i32, %c0_i32_0 : i32, i32
  }
  func.func @transform_5(%arg0: i32, %arg1: i32, %arg2: memref<2xi32, #tpu.memory_space<smem>>) -> (i32, i32) {
    %c0_i32 = arith.constant 0 : i32
    %c0_i32_0 = arith.constant 0 : i32
    %c0_i32_1 = arith.constant 0 : i32
    return %c0_i32, %c0_i32_0 : i32, i32
  }
  func.func @transform_6(%arg0: i32, %arg1: i32, %arg2: memref<2xi32, #tpu.memory_space<smem>>) -> (i32, i32) {
    %c0_i32 = arith.constant 0 : i32
    %c0_i32_0 = arith.constant 0 : i32
    %c0_i32_1 = arith.constant 0 : i32
    return %c0_i32, %c0_i32_0 : i32, i32
  }
  func.func @transform_7(%arg0: i32, %arg1: i32, %arg2: memref<2xi32, #tpu.memory_space<smem>>) -> (i32, i32) {
    %c0_i32 = arith.constant 0 : i32
    %c0_i32_0 = arith.constant 0 : i32
    %c0_i32_1 = arith.constant 0 : i32
    return %c0_i32, %c0_i32_0 : i32, i32
  }
  func.func @transform_8(%arg0: i32, %arg1: i32, %arg2: memref<2xi32, #tpu.memory_space<smem>>) -> (i32, i32) {
    %c0_i32 = arith.constant 0 : i32
    %c0_i32_0 = arith.constant 0 : i32
    %c0_i32_1 = arith.constant 0 : i32
    return %c0_i32, %c0_i32_0 : i32, i32
  }
  func.func @transform_9(%arg0: i32, %arg1: i32, %arg2: memref<2xi32, #tpu.memory_space<smem>>) -> (i32, i32) {
    %c0_i32 = arith.constant 0 : i32
    return %arg0, %arg1 : i32, i32
  }
  func.func @transform_10(%arg0: i32, %arg1: i32, %arg2: memref<2xi32, #tpu.memory_space<smem>>) -> (i32, i32) {
    %c0_i32 = arith.constant 0 : i32
    %c0_i32_0 = arith.constant 0 : i32
    return %arg0, %c0_i32 : i32, i32
  }
}

</mosaic_0001>

<llo_original>
// kernel: tpu_custom_call.1
$region0: #{tpu_custom_call.1}
  #allocation0 [shape = 'u32[]', space=smem, size = 0x4, offset = 0x4, fixed_abs, tag = 'smem constant byte address 0x4 - core index']
  #allocation1 [shape = 'u32[144,128]{1,0:T(1,128)}', space=vmem, size = 0x12000, scoped, tag = 'internal scratch']
  #allocation2 [shape = 'f32[8,512]{1,0:T(8,128)}', space=vmem, size = 0x4000, scoped, tag = 'scratch operand']
  #allocation3 [shape = 'f32[8,1]{1,0:T(8,128)}', space=vmem, size = 0x1000, scoped, tag = 'scratch operand']
  #allocation4 [shape = 's32[1]{0}', space=sflag, size = 0x4, scoped, tag = 'scoped memory for tpu_custom_call.1']
  #allocation5 [shape = 'u8[512]{0}', space=smem, size = 0x200, scoped, tag = 'prefetched SMEM operand 0']
  %s0 = inlined_call_operand.vmem [shape: s32[2], index: 0, kind: input, shape index: {}]
  %s1 = inlined_call_operand.vmem [shape: s32[16,1], index: 1, kind: input, shape index: {}]
  %s2 = inlined_call_operand.hbm [shape: s32[16,512], index: 2, kind: input, shape index: {}]
  %s3 = inlined_call_operand.hbm [shape: s32[16,512], index: 3, kind: input, shape index: {}]
  %s4 = inlined_call_operand.hbm [shape: bf16[512,128], index: 4, kind: input, shape index: {}]
  %s5 = inlined_call_operand.vmem [shape: bf16[2,128], index: 5, kind: input, shape index: {}]
  %s6 = inlined_call_operand.hbm [shape: bf16[128,128], index: 6, kind: input, shape index: {}]
  %s7 = inlined_call_operand.vmem [shape: f32[1,128], index: 7, kind: input, shape index: {}]
  %s8 = inlined_call_operand.hbm [shape: bf16[128,128], index: 8, kind: input, shape index: {}]
  %s9 = inlined_call_operand.vmem [shape: f32[1,128], index: 9, kind: input, shape index: {}]
  %s10 = inlined_call_operand.hbm [shape: f32[16,512], index: 10, kind: output, shape index: {0}]
  %s11 = inlined_call_operand.hbm [shape: f32[16,128], index: 11, kind: output, shape index: {1}]
  %12 = xla_tuple %s10, %s11
  %s13 = sld [smem:[#allocation0]]
  $region109: #{tpu_custom_call.1} parent=0
    _
  %s15 = ssub.s32 1, %s13
  %s16 = scalar_select 0, %s15, %s13
  %s17 = sshll.u32 %s0, 4
  %s18 = int_to_ptr.vmem [resolvable:$true] %s17
  %20 = dma.vmem_to_smem %s18, 16, [#allocation5], [#allocation4]
  %21 = dma.done [#allocation4], 16
  %22 = sfence
  $region1: #{tpu_custom_call.1} parent=0
    #allocation6 [shape = 'u8[16384]{0}', space=vmem, size = 0x4000, scoped, tag = 'input window, operand 2']
    #allocation7 [shape = 's32[2]{0}', space=sflag, size = 0x8, scoped, tag = 'scoped memory for tpu_custom_call.1']
    #allocation8 [shape = 's32[2]{0}', space=sflag, size = 0x8, scoped, tag = 'scoped memory for tpu_custom_call.1']
    #allocation9 [shape = 'u8[16384]{0}', space=vmem, size = 0x4000, scoped, tag = 'input window, operand 3']
    #allocation10 [shape = 's32[2]{0}', space=sflag, size = 0x8, scoped, tag = 'scoped memory for tpu_custom_call.1']
    #allocation11 [shape = 'u8[131072]{0}', space=vmem, size = 0x20000, scoped, tag = 'input window, operand 4, single buffered']
    #allocation12 [shape = 'u8[32768]{0}', space=vmem, size = 0x8000, scoped, tag = 'input window, operand 6, single buffered']
    #allocation13 [shape = 's32[1]{0}', space=sflag, size = 0x4, scoped, tag = 'scoped memory for tpu_custom_call.1']
    #allocation14 [shape = 'u8[32768]{0}', space=vmem, size = 0x8000, scoped, tag = 'input window, operand 8, single buffered']
    #allocation15 [shape = 'u8[16384]{0}', space=vmem, size = 0x4000, scoped, tag = 'output window, operand 0']
    #allocation16 [shape = 'u8[8192]{0}', space=vmem, size = 0x2000, scoped, tag = 'output window, operand 1']
    #allocation17 [shape = 's32[2]{0}', space=sflag, size = 0x8, scoped, tag = 'scoped memory for tpu_custom_call.1']
    %23 = vsyncpa [#allocation7], 0
    %s24 = scalar_lea.sflag [#allocation7], 1
    %25 = vsyncpa %s24, 0
    %26 = vsyncpa [#allocation10], 0
    %s27 = scalar_lea.sflag [#allocation10], 1
    %28 = vsyncpa %s27, 0
    %29 = vsyncpa [#allocation13], 0
    %30 = vsyncpa [#allocation8], 0
    %s31 = scalar_lea.sflag [#allocation8], 1
    %32 = vsyncpa %s31, 0
    %33 = vsyncpa [#allocation17], 0
    %s34 = scalar_lea.sflag [#allocation17], 1
    %35 = vsyncpa %s34, 0
    loop: start=0, step=1, limit=6
    $region2: #{tpu_custom_call.1} parent=1 // loop_pre_header
      _
    $region3: #{tpu_custom_call.1} parent=1 // loop_header
      %s37 = sphi 0, %s41
      %p38 = scmp.ge.s32.totalorder %s37, 6
      %s44 = sphi 0, %s56
      %s45 = sphi 0, %s52
      %s46 = sphi 0, %s44
      %s47 = sphi 0, %s45
      %s48 = sphi 0, %s46
      %s49 = sphi 0, %s47
      %s59 = sphi 0, %s61
      %s62 = sphi 0, %s59
      %s63 = sphi 0, %s62
      %s79 = sphi 0, %s63
      %s95 = sphi 0, %s97
      %s98 = sphi 0, %s95
      %s99 = sphi 0, %s98
      %s115 = sphi 0, %s99
      %s131 = sphi 0, %s133
      %s134 = sphi 0, %s131
      %s135 = sphi 0, %s134
      %s151 = sphi 0, %s135
      %s155 = sphi 0, %s155
      %s157 = sphi 0, %s155
      %s158 = sphi 0, %s157
      %s172 = sphi 0, %s158
      %s176 = sphi 0, %s176
      %s178 = sphi 0, %s176
      %s179 = sphi 0, %s178
      %s193 = sphi 0, %s179
      %s197 = sphi 0, %s197
      %s199 = sphi 0, %s197
      %s200 = sphi 0, %s199
      %s214 = sphi 0, %s200
      %s218 = sphi 0, %s218
      %s220 = sphi 0, %s218
      %s221 = sphi 0, %s220
      %s235 = sphi 0, %s221
      %s239 = sphi 0, %s239
      %s241 = sphi 0, %s239
      %s242 = sphi 0, %s241
      %s256 = sphi 0, %s242
      %s260 = sphi 0, %s260
      %s262 = sphi 0, %s260
      %s263 = sphi 0, %s262
      %s277 = sphi 0, %s263
      %s285 = sphi 0, %s287
      %s288 = sphi 0, %s285
      %s289 = sphi 0, %s288
      %s305 = sphi 0, %s289
      %s311 = sphi 0, %s313
      %s314 = sphi 0, %s311
      %s315 = sphi 0, %s314
      %s331 = sphi 0, %s315
    $region4: #{tpu_custom_call.1} parent=1 // loop_header_branch
      %40 = sbr.rel (%p38) target = $region8
    $region5: #{tpu_custom_call.1} parent=1 // loop_body
      %s42 = ssub.s32 %s37, 1
      %s43 = ssub.s32 %s37, 2
      %s50 = sadd.s32 1, %s45
      %p51 = scmp.ge.s32.totalorder %s50, 2
      %s52 = scalar_select %p51, 0, %s50
      %s53 = sadd.s32 1, %s44
      %s54 = scalar_select %p51, %s53, %s44
      %p55 = scmp.ge.s32.totalorder %s54, 2
      %s56 = scalar_select %p55, 0, %s54
      %s57 = ssub.s32 %s44, %s56
      %p58 = scmp.eq.s32.totalorder %s57, 0
      %s60 = sadd.s32 %s59, 1
      %s61 = scalar_select %p58, %s59, %s60
      %p64 = pneg %p58
      %p65 = scmp.eq.s32.totalorder %s37, 3
      %p66 = por %p64, %p65
      %p67 = scmp.ne.s32.totalorder %s59, %s62
      %p68 = scmp.eq.s32.totalorder %s37, 0
      %p69 = por %p67, %p68
      %p70 = scmp.ne.s32.totalorder %s59, %s62
      %p71 = scmp.eq.s32.totalorder %s42, 3
      %p72 = por %p70, %p71
      %p73 = scmp.ne.s32.totalorder %s62, %s63
      %p74 = scmp.eq.s32.totalorder %s42, 0
      %p75 = por %p73, %p74
      %p76 = scmp.ne.s32.totalorder %s62, %s63
      %p77 = scmp.eq.s32.totalorder %s43, 3
      %p78 = por %p76, %p77
      %p80 = scmp.ne.s32.totalorder %s63, %s79
      %p81 = scmp.eq.s32.totalorder %s43, 0
      %p82 = por %p80, %p81
      %s83 = sld [smem:[#allocation5 + %s44]]
      %s84 = ssub.s32 %s83, 1
      %p85 = scmp.lt.s32.totalorder %s45, %s84
      %s86 = scalar_select %p85, %s45, %s84
      %s87 = sld [smem:[#allocation5 + %s56]]
      %s88 = ssub.s32 %s87, 1
      %p89 = scmp.lt.s32.totalorder %s52, %s88
      %s90 = scalar_select %p89, %s52, %s88
      %s91 = ssub.s32 %s44, %s56
      %s92 = ssub.s32 %s86, %s90
      %s93 = sor.u32 %s91, %s92
      %p94 = scmp.eq.s32.totalorder %s93, 0
      %s96 = sadd.s32 %s95, 1
      %s97 = scalar_select %p94, %s95, %s96
      %p100 = pneg %p94
      %p101 = scmp.eq.s32.totalorder %s37, 3
      %p102 = por %p100, %p101
      %p103 = scmp.ne.s32.totalorder %s95, %s98
      %p104 = scmp.eq.s32.totalorder %s37, 0
      %p105 = por %p103, %p104
      %p106 = scmp.ne.s32.totalorder %s95, %s98
      %p107 = scmp.eq.s32.totalorder %s42, 3
      %p108 = por %p106, %p107
      %p109 = scmp.ne.s32.totalorder %s98, %s99
      %p110 = scmp.eq.s32.totalorder %s42, 0
      %p111 = por %p109, %p110
      %p112 = scmp.ne.s32.totalorder %s98, %s99
      %p113 = scmp.eq.s32.totalorder %s43, 3
      %p114 = por %p112, %p113
      %p116 = scmp.ne.s32.totalorder %s99, %s115
      %p117 = scmp.eq.s32.totalorder %s43, 0
      %p118 = por %p116, %p117
      %s119 = sld [smem:[#allocation5 + %s44]]
      %s120 = ssub.s32 %s119, 1
      %p121 = scmp.lt.s32.totalorder %s45, %s120
      %s122 = scalar_select %p121, %s45, %s120
      %s123 = sld [smem:[#allocation5 + %s56]]
      %s124 = ssub.s32 %s123, 1
      %p125 = scmp.lt.s32.totalorder %s52, %s124
      %s126 = scalar_select %p125, %s52, %s124
      %s127 = ssub.s32 %s44, %s56
      %s128 = ssub.s32 %s122, %s126
      %s129 = sor.u32 %s127, %s128
      %p130 = scmp.eq.s32.totalorder %s129, 0
      %s132 = sadd.s32 %s131, 1
      %s133 = scalar_select %p130, %s131, %s132
      %p136 = pneg %p130
      %p137 = scmp.eq.s32.totalorder %s37, 3
      %p138 = por %p136, %p137
      %p139 = scmp.ne.s32.totalorder %s131, %s134
      %p140 = scmp.eq.s32.totalorder %s37, 0
      %p141 = por %p139, %p140
      %p142 = scmp.ne.s32.totalorder %s131, %s134
      %p143 = scmp.eq.s32.totalorder %s42, 3
      %p144 = por %p142, %p143
      %p145 = scmp.ne.s32.totalorder %s134, %s135
      %p146 = scmp.eq.s32.totalorder %s42, 0
      %p147 = por %p145, %p146
      %p148 = scmp.ne.s32.totalorder %s134, %s135
      %p149 = scmp.eq.s32.totalorder %s43, 3
      %p150 = por %p148, %p149
      %p152 = scmp.ne.s32.totalorder %s135, %s151
      %p153 = scmp.eq.s32.totalorder %s43, 0
      %p154 = por %p152, %p153
      %s156 = sadd.s32 %s155, 1
      %p159 = scmp.eq.s32.totalorder %s37, 3
      %p160 = scmp.ne.s32.totalorder %s155, %s157
      %p161 = scmp.eq.s32.totalorder %s37, 0
      %p162 = por %p160, %p161
      %p163 = scmp.ne.s32.totalorder %s155, %s157
      %p164 = scmp.eq.s32.totalorder %s42, 3
      %p165 = por %p163, %p164
      %p166 = scmp.ne.s32.totalorder %s157, %s158
      %p167 = scmp.eq.s32.totalorder %s42, 0
      %p168 = por %p166, %p167
      %p169 = scmp.ne.s32.totalorder %s157, %s158
      %p170 = scmp.eq.s32.totalorder %s43, 3
      %p171 = por %p169, %p170
      %p173 = scmp.ne.s32.totalorder %s158, %s172
      %p174 = scmp.eq.s32.totalorder %s43, 0
      %p175 = por %p173, %p174
      %s177 = sadd.s32 %s176, 1
      %p180 = scmp.eq.s32.totalorder %s37, 3
      %p181 = scmp.ne.s32.totalorder %s176, %s178
      %p182 = scmp.eq.s32.totalorder %s37, 0
      %p183 = por %p181, %p182
      %p184 = scmp.ne.s32.totalorder %s176, %s178
      %p185 = scmp.eq.s32.totalorder %s42, 3
      %p186 = por %p184, %p185
      %p187 = scmp.ne.s32.totalorder %s178, %s179
      %p188 = scmp.eq.s32.totalorder %s42, 0
      %p189 = por %p187, %p188
      %p190 = scmp.ne.s32.totalorder %s178, %s179
      %p191 = scmp.eq.s32.totalorder %s43, 3
      %p192 = por %p190, %p191
      %p194 = scmp.ne.s32.totalorder %s179, %s193
      %p195 = scmp.eq.s32.totalorder %s43, 0
      %p196 = por %p194, %p195
      %s198 = sadd.s32 %s197, 1
      %p201 = scmp.eq.s32.totalorder %s37, 3
      %p202 = scmp.ne.s32.totalorder %s197, %s199
      %p203 = scmp.eq.s32.totalorder %s37, 0
      %p204 = por %p202, %p203
      %p205 = scmp.ne.s32.totalorder %s197, %s199
      %p206 = scmp.eq.s32.totalorder %s42, 3
      %p207 = por %p205, %p206
      %p208 = scmp.ne.s32.totalorder %s199, %s200
      %p209 = scmp.eq.s32.totalorder %s42, 0
      %p210 = por %p208, %p209
      %p211 = scmp.ne.s32.totalorder %s199, %s200
      %p212 = scmp.eq.s32.totalorder %s43, 3
      %p213 = por %p211, %p212
      %p215 = scmp.ne.s32.totalorder %s200, %s214
      %p216 = scmp.eq.s32.totalorder %s43, 0
      %p217 = por %p215, %p216
      %s219 = sadd.s32 %s218, 1
      %p222 = scmp.eq.s32.totalorder %s37, 3
      %p223 = scmp.ne.s32.totalorder %s218, %s220
      %p224 = scmp.eq.s32.totalorder %s37, 0
      %p225 = por %p223, %p224
      %p226 = scmp.ne.s32.totalorder %s218, %s220
      %p227 = scmp.eq.s32.totalorder %s42, 3
      %p228 = por %p226, %p227
      %p229 = scmp.ne.s32.totalorder %s220, %s221
      %p230 = scmp.eq.s32.totalorder %s42, 0
      %p231 = por %p229, %p230
      %p232 = scmp.ne.s32.totalorder %s220, %s221
      %p233 = scmp.eq.s32.totalorder %s43, 3
      %p234 = por %p232, %p233
      %p236 = scmp.ne.s32.totalorder %s221, %s235
      %p237 = scmp.eq.s32.totalorder %s43, 0
      %p238 = por %p236, %p237
      %s240 = sadd.s32 %s239, 1
      %p243 = scmp.eq.s32.totalorder %s37, 3
      %p244 = scmp.ne.s32.totalorder %s239, %s241
      %p245 = scmp.eq.s32.totalorder %s37, 0
      %p246 = por %p244, %p245
      %p247 = scmp.ne.s32.totalorder %s239, %s241
      %p248 = scmp.eq.s32.totalorder %s42, 3
      %p249 = por %p247, %p248
      %p250 = scmp.ne.s32.totalorder %s241, %s242
      %p251 = scmp.eq.s32.totalorder %s42, 0
      %p252 = por %p250, %p251
      %p253 = scmp.ne.s32.totalorder %s241, %s242
      %p254 = scmp.eq.s32.totalorder %s43, 3
      %p255 = por %p253, %p254
      %p257 = scmp.ne.s32.totalorder %s242, %s256
      %p258 = scmp.eq.s32.totalorder %s43, 0
      %p259 = por %p257, %p258
      %s261 = sadd.s32 %s260, 1
      %p264 = scmp.eq.s32.totalorder %s37, 3
      %p265 = scmp.ne.s32.totalorder %s260, %s262
      %p266 = scmp.eq.s32.totalorder %s37, 0
      %p267 = por %p265, %p266
      %p268 = scmp.ne.s32.totalorder %s260, %s262
      %p269 = scmp.eq.s32.totalorder %s42, 3
      %p270 = por %p268, %p269
      %p271 = scmp.ne.s32.totalorder %s262, %s263
      %p272 = scmp.eq.s32.totalorder %s42, 0
      %p273 = por %p271, %p272
      %p274 = scmp.ne.s32.totalorder %s262, %s263
      %p275 = scmp.eq.s32.totalorder %s43, 3
      %p276 = por %p274, %p275
      %p278 = scmp.ne.s32.totalorder %s263, %s277
      %p279 = scmp.eq.s32.totalorder %s43, 0
      %p280 = por %p278, %p279
      %s281 = ssub.s32 %s44, %s56
      %s282 = ssub.s32 %s45, %s52
      %s283 = sor.u32 %s281, %s282
      %p284 = scmp.eq.s32.totalorder %s283, 0
      %s286 = sadd.s32 %s285, 1
      %s287 = scalar_select %p284, %s285, %s286
      %p290 = pneg %p284
      %p291 = scmp.eq.s32.totalorder %s37, 3
      %p292 = por %p290, %p291
      %p293 = scmp.ne.s32.totalorder %s285, %s288
      %p294 = scmp.eq.s32.totalorder %s37, 0
      %p295 = por %p293, %p294
      %p296 = scmp.ne.s32.totalorder %s285, %s288
      %p297 = scmp.eq.s32.totalorder %s42, 3
      %p298 = por %p296, %p297
      %p299 = scmp.ne.s32.totalorder %s288, %s289
      %p300 = scmp.eq.s32.totalorder %s42, 0
      %p301 = por %p299, %p300
      %p302 = scmp.ne.s32.totalorder %s288, %s289
      %p303 = scmp.eq.s32.totalorder %s43, 3
      %p304 = por %p302, %p303
      %p306 = scmp.ne.s32.totalorder %s289, %s305
      %p307 = scmp.eq.s32.totalorder %s43, 0
      %p308 = por %p306, %p307
      %s309 = ssub.s32 %s44, %s56
      %p310 = scmp.eq.s32.totalorder %s309, 0
      %s312 = sadd.s32 %s311, 1
      %s313 = scalar_select %p310, %s311, %s312
      %p316 = pneg %p310
      %p317 = scmp.eq.s32.totalorder %s37, 3
      %p318 = por %p316, %p317
      %p319 = scmp.ne.s32.totalorder %s311, %s314
      %p320 = scmp.eq.s32.totalorder %s37, 0
      %p321 = por %p319, %p320
      %p322 = scmp.ne.s32.totalorder %s311, %s314
      %p323 = scmp.eq.s32.totalorder %s42, 3
      %p324 = por %p322, %p323
      %p325 = scmp.ne.s32.totalorder %s314, %s315
      %p326 = scmp.eq.s32.totalorder %s42, 0
      %p327 = por %p325, %p326
      %p328 = scmp.ne.s32.totalorder %s314, %s315
      %p329 = scmp.eq.s32.totalorder %s43, 3
      %p330 = por %p328, %p329
      %p332 = scmp.ne.s32.totalorder %s315, %s331
      %p333 = scmp.eq.s32.totalorder %s43, 0
      %p334 = por %p332, %p333
      %p335 = scmp.le.s32.totalorder 1, %s37
      %p336 = scmp.lt.s32.totalorder %s37, 5
      %p337 = pnand %p335, %p336
      %p338 = pneg %p337
      // Predicated region
      $region9: #{tpu_custom_call.1} parent=5 // pred_check
        _
      $region10: #{tpu_custom_call.1} parent=5 // pred_check_branch
        %340 = sbr.rel (%p337) target = $region12
      $region11: #{tpu_custom_call.1} parent=5 // pred_region
        %s341 = ssub.s32 %s37, 1
        // Predicated region
        $region13: #{tpu_custom_call.1} parent=11 // pred_check
          %p342 = pneg %p168
        $region14: #{tpu_custom_call.1} parent=11 // pred_check_branch
          %344 = sbr.rel (%p342) target = $region16
        $region15: #{tpu_custom_call.1} parent=11 // pred_region
          %s346 = ssub.s32 4096, 4096
          %347 = vsyncadd [#allocation10], %s346
          %s348 = sshll.u32 [#allocation11], 4
          %s349 = int_to_ptr.vmem [resolvable:$true] %s348
          %354 = dma.hbm_to_vmem [thread:$0]  %s4, 4096, %s349, [#allocation10], 64, 64, 4
        $region16: #{tpu_custom_call.1} parent=11 // pred_fallthru
          _
        // Predicated region
        $region17: #{tpu_custom_call.1} parent=11 // pred_check
          %p355 = pneg %p189
        $region18: #{tpu_custom_call.1} parent=11 // pred_check_branch
          %357 = sbr.rel (%p355) target = $region20
        $region19: #{tpu_custom_call.1} parent=11 // pred_region
          _
        $region20: #{tpu_custom_call.1} parent=11 // pred_fallthru
          _
        // Predicated region
        $region21: #{tpu_custom_call.1} parent=11 // pred_check
          %p358 = pneg %p210
        $region22: #{tpu_custom_call.1} parent=11 // pred_check_branch
          %360 = sbr.rel (%p358) target = $region24
        $region23: #{tpu_custom_call.1} parent=11 // pred_region
          %s362 = ssub.s32 1024, 1024
          %363 = vsyncadd [#allocation13], %s362
          %s364 = sshll.u32 [#allocation12], 4
          %s365 = int_to_ptr.vmem [resolvable:$true] %s364
          %370 = dma.hbm_to_vmem [thread:$0]  %s6, 1024, %s365, [#allocation13], 64, 64, 4
        $region24: #{tpu_custom_call.1} parent=11 // pred_fallthru
          _
        // Predicated region
        $region25: #{tpu_custom_call.1} parent=11 // pred_check
          %p371 = pneg %p231
        $region26: #{tpu_custom_call.1} parent=11 // pred_check_branch
          %373 = sbr.rel (%p371) target = $region28
        $region27: #{tpu_custom_call.1} parent=11 // pred_region
          _
        $region28: #{tpu_custom_call.1} parent=11 // pred_fallthru
          _
        // Predicated region
        $region29: #{tpu_custom_call.1} parent=11 // pred_check
          %p374 = pneg %p252
        $region30: #{tpu_custom_call.1} parent=11 // pred_check_branch
          %376 = sbr.rel (%p374) target = $region32
        $region31: #{tpu_custom_call.1} parent=11 // pred_region
          %s378 = ssub.s32 1024, 1024
          %379 = vsyncadd [#allocation13], %s378
          %s380 = sshll.u32 [#allocation14], 4
          %s381 = int_to_ptr.vmem [resolvable:$true] %s380
          %386 = dma.hbm_to_vmem [thread:$0]  %s8, 1024, %s381, [#allocation13], 64, 64, 4
        $region32: #{tpu_custom_call.1} parent=11 // pred_fallthru
          _
        // Predicated region
        $region33: #{tpu_custom_call.1} parent=11 // pred_check
          %p387 = pneg %p273
        $region34: #{tpu_custom_call.1} parent=11 // pred_check_branch
          %389 = sbr.rel (%p387) target = $region36
        $region35: #{tpu_custom_call.1} parent=11 // pred_region
          _
        $region36: #{tpu_custom_call.1} parent=11 // pred_fallthru
          _
      $region12: #{tpu_custom_call.1} parent=5 // pred_fallthru
        _
      %p390 = scmp.lt.s32.totalorder %s37, 4
      // Predicated region
      $region37: #{tpu_custom_call.1} parent=5 // pred_check
        %p391 = pneg %p390
      $region38: #{tpu_custom_call.1} parent=5 // pred_check_branch
        %393 = sbr.rel (%p391) target = $region40
      $region39: #{tpu_custom_call.1} parent=5 // pred_region
        // Predicated region
        $region41: #{tpu_custom_call.1} parent=39 // pred_check
          %p394 = pneg %p69
        $region42: #{tpu_custom_call.1} parent=39 // pred_check_branch
          %396 = sbr.rel (%p394) target = $region44
        $region43: #{tpu_custom_call.1} parent=39 // pred_region
          %p397 = scmp.lt.s32.totalorder %s44, 1
          %s398 = scalar_select %p397, %s44, 1
          %s399 = smul.addr %s398, 8
          %s400 = scalar_lea.vmem %s1, %s399
        $region44: #{tpu_custom_call.1} parent=39 // pred_fallthru
          _
        // Predicated region
        $region45: #{tpu_custom_call.1} parent=39 // pred_check
          %p401 = pneg %p105
        $region46: #{tpu_custom_call.1} parent=39 // pred_check_branch
          %403 = sbr.rel (%p401) target = $region48
        $region47: #{tpu_custom_call.1} parent=39 // pred_region
          %s404 = sand.u32 %s95, 1
          %s405 = scalar_lea.sflag [#allocation7], %s404
          %s406 = sand.u32 %s95, 1
          %s407 = smul.addr %s406, 16
          %s408 = scalar_lea.vmem [#allocation6], %s407
          %s409 = sld [smem:[#allocation5 + %s44]]
          %s410 = ssub.s32 %s409, 1
          %p411 = scmp.lt.s32.totalorder %s45, %s410
          %s412 = scalar_select %p411, %s45, %s410
          %s413 = smul.u32 2, %s412
          %s415 = ssub.s32 256, 256
          %416 = vsyncadd %s405, %s415
          %s417 = smul.addr %s44, 4
          %s418 = sadd.s32 %s413, %s417
          %s419 = smul.addr %s418, 128
          %s420 = scalar_lea.hbm %s2, %s419
          %s422 = sshll.u32 %s408, 4
          %s423 = int_to_ptr.vmem [resolvable:$true] %s422
          %425 = dma.hbm_to_vmem [thread:$0]  %s420, 256, %s423, %s405
        $region48: #{tpu_custom_call.1} parent=39 // pred_fallthru
          _
        // Predicated region
        $region49: #{tpu_custom_call.1} parent=39 // pred_check
          %p426 = pneg %p141
        $region50: #{tpu_custom_call.1} parent=39 // pred_check_branch
          %428 = sbr.rel (%p426) target = $region52
        $region51: #{tpu_custom_call.1} parent=39 // pred_region
          %s429 = sand.u32 %s37, 1
          %s430 = scalar_lea.sflag [#allocation10], %s429
          %s431 = sand.u32 %s131, 1
          %s432 = smul.addr %s431, 16
          %s433 = scalar_lea.vmem [#allocation9], %s432
          %s434 = sld [smem:[#allocation5 + %s44]]
          %s435 = ssub.s32 %s434, 1
          %p436 = scmp.lt.s32.totalorder %s45, %s435
          %s437 = scalar_select %p436, %s45, %s435
          %s438 = smul.u32 2, %s437
          %s440 = ssub.s32 256, 256
          %441 = vsyncadd %s430, %s440
          %s442 = smul.addr %s44, 4
          %s443 = sadd.s32 %s438, %s442
          %s444 = smul.addr %s443, 128
          %s445 = scalar_lea.hbm %s3, %s444
          %s447 = sshll.u32 %s433, 4
          %s448 = int_to_ptr.vmem [resolvable:$true] %s447
          %450 = dma.hbm_to_vmem [thread:$0]  %s445, 256, %s448, %s430
        $region52: #{tpu_custom_call.1} parent=39 // pred_fallthru
          _
      $region40: #{tpu_custom_call.1} parent=5 // pred_fallthru
        _
      %p451 = scmp.le.s32.totalorder 1, %s37
      %p452 = scmp.lt.s32.totalorder %s37, 5
      %p453 = pnand %p451, %p452
      %p454 = pneg %p453
      // Predicated region
      $region53: #{tpu_custom_call.1} parent=5 // pred_check
        _
      $region54: #{tpu_custom_call.1} parent=5 // pred_check_branch
        %456 = sbr.rel (%p453) target = $region56
      $region55: #{tpu_custom_call.1} parent=5 // pred_region
        %s457 = ssub.s32 %s37, 1
        %s458 = sand.u32 %s98, 1
        %s459 = scalar_lea.sflag [#allocation7], %s458
        %s460 = sand.u32 %s98, 1
        %s461 = smul.addr %s460, 16
        %s462 = scalar_lea.vmem [#allocation6], %s461
        // Predicated region
        $region57: #{tpu_custom_call.1} parent=55 // pred_check
          %p463 = pneg %p111
        $region58: #{tpu_custom_call.1} parent=55 // pred_check_branch
          %465 = sbr.rel (%p463) target = $region60
        $region59: #{tpu_custom_call.1} parent=55 // pred_region
          %466 = dma.done %s459, 256
        $region60: #{tpu_custom_call.1} parent=55 // pred_fallthru
          _
        %s467 = sand.u32 %s42, 1
        %s468 = scalar_lea.sflag [#allocation10], %s467
        %s469 = sand.u32 %s134, 1
        %s470 = smul.addr %s469, 16
        %s471 = scalar_lea.vmem [#allocation9], %s470
        // Predicated region
        $region61: #{tpu_custom_call.1} parent=55 // pred_check
          %p472 = pneg %p147
        $region62: #{tpu_custom_call.1} parent=55 // pred_check_branch
          %474 = sbr.rel (%p472) target = $region64
        $region63: #{tpu_custom_call.1} parent=55 // pred_region
          %475 = dma.done %s468, 256
        $region64: #{tpu_custom_call.1} parent=55 // pred_fallthru
          _
        // Predicated region
        $region65: #{tpu_custom_call.1} parent=55 // pred_check
          %p476 = pneg %p168
        $region66: #{tpu_custom_call.1} parent=55 // pred_check_branch
          %478 = sbr.rel (%p476) target = $region68
        $region67: #{tpu_custom_call.1} parent=55 // pred_region
          %479 = dma.done [#allocation10], 4096
        $region68: #{tpu_custom_call.1} parent=55 // pred_fallthru
          _
        // Predicated region
        $region69: #{tpu_custom_call.1} parent=55 // pred_check
          %p480 = pneg %p210
        $region70: #{tpu_custom_call.1} parent=55 // pred_check_branch
          %482 = sbr.rel (%p480) target = $region72
        $region71: #{tpu_custom_call.1} parent=55 // pred_region
          %483 = dma.done [#allocation13], 1024
        $region72: #{tpu_custom_call.1} parent=55 // pred_fallthru
          _
        // Predicated region
        $region73: #{tpu_custom_call.1} parent=55 // pred_check
          %p484 = pneg %p252
        $region74: #{tpu_custom_call.1} parent=55 // pred_check_branch
          %486 = sbr.rel (%p484) target = $region76
        $region75: #{tpu_custom_call.1} parent=55 // pred_region
          %487 = dma.done [#allocation13], 1024
        $region76: #{tpu_custom_call.1} parent=55 // pred_fallthru
          _
        %p488 = scmp.lt.s32.totalorder %s46, 1
        %s489 = scalar_select %p488, %s46, 1
        %s490 = smul.addr %s489, 8
        %s491 = scalar_lea.vmem %s1, %s490
        %p492 = pneg %p75
        %p493 = pneg %p72
        %s494 = sand.u32 %s98, 1
        %s495 = scalar_lea.sflag [#allocation7], %s494
        %s496 = sand.u32 %s98, 1
        %s497 = smul.addr %s496, 16
        %s498 = scalar_lea.vmem [#allocation6], %s497
        %p499 = pneg %p111
        %p500 = pneg %p108
        %s501 = sand.u32 %s42, 1
        %s502 = scalar_lea.sflag [#allocation10], %s501
        %s503 = sand.u32 %s134, 1
        %s504 = smul.addr %s503, 16
        %s505 = scalar_lea.vmem [#allocation9], %s504
        %p506 = pneg %p147
        %p507 = pneg %p144
        %p508 = pneg %p168
        %p509 = pneg %p165
        %p510 = pneg %p189
        %p511 = pneg %p186
        %p512 = pneg %p210
        %p513 = pneg %p207
        %p514 = pneg %p231
        %p515 = pneg %p228
        %p516 = pneg %p252
        %p517 = pneg %p249
        %p518 = pneg %p273
        %p519 = pneg %p270
        %p520 = pneg %p301
        %p521 = pneg %p298
        %s522 = sand.u32 %s288, 1
        %s523 = scalar_lea.sflag [#allocation8], %s522
        %s524 = sand.u32 %s288, 1
        %s525 = smul.addr %s524, 16
        %s526 = scalar_lea.vmem [#allocation15], %s525
        %p527 = pneg %p327
        %p528 = pneg %p324
        %s529 = sand.u32 %s314, 1
        %s530 = scalar_lea.sflag [#allocation17], %s529
        %s531 = sand.u32 %s314, 1
        %s532 = smul.addr %s531, 8
        %s533 = scalar_lea.vmem [#allocation16], %s532
        %p534 = scmp.lt.s32.totalorder %s46, 1
        %s535 = scalar_select %p534, %s46, 1
        %s536 = smul.addr %s535, 8
        %s537 = scalar_lea.vmem %s1, %s536
        %s538 = sld [smem:[#allocation5 + %s46]]
        %s539 = ssub.s32 %s538, 1
        %p540 = scmp.lt.s32.totalorder %s47, %s539
        %s541 = scalar_select %p540, %s47, %s539
        %s542 = smul.u32 2, %s541
        %s543 = sld [smem:[#allocation5 + %s46]]
        %s544 = ssub.s32 %s543, 1
        %p545 = scmp.lt.s32.totalorder %s47, %s544
        %s546 = scalar_select %p545, %s47, %s544
        %s547 = smul.u32 2, %s546
        %s548 = smul.u32 2, %s47
        %s549 = smul.u32 %s47, 256
        %v550 = vlaneseq
        %v551 = vand.u32 %v550, 127
        %v552 = vadd.s32 %v551, 128
        %v553 = vstv %s549
        %v554 = vadd.s32 %v553, %v551
        %v555 = vadd.s32 %v553, %v552
        %v556 = vld [vmem:[%s537] sm:$0xff]
        %557 = vset.pattern.permute.xlu0 0
        %558 = vperm.xlu0 %557, %v556
        %v559 = vpop.permute.xlu0 %558
        %vm560 = vcmp.lt.s32.totalorder %v554, %v559
        %vm561 = vcmp.lt.s32.totalorder %v555, %v559
        %v562 = vsel %vm560, 1, 0
        %v563 = vsel %vm561, 1, 0
        %v564 = vcvt.s32.f32 %v562
        %v565 = vcvt.s32.f32 %v563
        %566 = vst [vmem:[%s526] sm:$0xff] %v564
        %567 = vst [vmem:[%s526 + $0x8] sm:$0xff] %v565
        %p568 = scmp.eq.s32.totalorder %s47, 0
        // Predicated region
        $region77: #{tpu_custom_call.1} parent=55 // pred_check
          %p569 = pneg %p568
        $region78: #{tpu_custom_call.1} parent=55 // pred_check_branch
          %571 = sbr.rel (%p569) target = $region80
        $region79: #{tpu_custom_call.1} parent=55 // pred_region
          %572 = vst [vmem:[#allocation2] sm:$0xff] 0.0
          %573 = vst [vmem:[#allocation2 + $0x8] sm:$0xff] 0.0
          %574 = vst [vmem:[#allocation2 + $0x10] sm:$0xff] 0.0
          %575 = vst [vmem:[#allocation2 + $0x18] sm:$0xff] 0.0
          %vm576 = vcmask 7168
          %577 = vst.msk [vmem:[#allocation3] sm:$0xff] %vm576, 0.0
        $region80: #{tpu_custom_call.1} parent=55 // pred_fallthru
          _
        %s578 = sld [smem:[#allocation5 + %s46]]
        %p579 = scmp.lt.s32.totalorder %s47, %s578
        // Predicated region
        $region81: #{tpu_custom_call.1} parent=55 // pred_check
          %p580 = pneg %p579
        $region82: #{tpu_custom_call.1} parent=55 // pred_check_branch
          %582 = sbr.rel (%p580) target = $region84
        $region83: #{tpu_custom_call.1} parent=55 // pred_region
          %v583 = vld [vmem:[%s462] sm:$0xff]
          %v584 = vld [vmem:[%s462 + $0x8] sm:$0xff]
          %v585 = vadd.s32 %v551, 256
          %v586 = vadd.s32 %v551, 384
          %v587 = vlaneseq
          %v588 = vshrl.u32 %v587, 7
          %v589 = vsub.s32 0, %v588
          %v590 = vrot.slane %v583, %v589
          %592 = vbcast.lane.b32.xlu0 %v590, 256
          %v593 = vpop.permute.xlu0 %592
          %s595 = sor.u32 256, 8
          %596 = vbcast.lane.b32.xlu0 %v590, %s595
          %v597 = vpop.permute.xlu0 %596
          %s599 = sor.u32 256, 16
          %600 = vbcast.lane.b32.xlu0 %v590, %s599
          %v601 = vpop.permute.xlu0 %600
          %s603 = sor.u32 256, 24
          %604 = vbcast.lane.b32.xlu0 %v590, %s603
          %v605 = vpop.permute.xlu0 %604
          %s607 = sor.u32 256, 32
          %608 = vbcast.lane.b32.xlu0 %v590, %s607
          %v609 = vpop.permute.xlu0 %608
          %s611 = sor.u32 256, 40
          %612 = vbcast.lane.b32.xlu0 %v590, %s611
          %v613 = vpop.permute.xlu0 %612
          %s615 = sor.u32 256, 48
          %616 = vbcast.lane.b32.xlu0 %v590, %s615
          %v617 = vpop.permute.xlu0 %616
          %s619 = sor.u32 256, 56
          %620 = vbcast.lane.b32.xlu0 %v590, %s619
          %v621 = vpop.permute.xlu0 %620
          %s623 = sor.u32 256, 64
          %624 = vbcast.lane.b32.xlu0 %v590, %s623
          %v625 = vpop.permute.xlu0 %624
          %s627 = sor.u32 256, 72
          %628 = vbcast.lane.b32.xlu0 %v590, %s627
          %v629 = vpop.permute.xlu0 %628
          %s631 = sor.u32 256, 80
          %632 = vbcast.lane.b32.xlu0 %v590, %s631
          %v633 = vpop.permute.xlu0 %632
          %s635 = sor.u32 256, 88
          %636 = vbcast.lane.b32.xlu0 %v590, %s635
          %v637 = vpop.permute.xlu0 %636
          %s639 = sor.u32 256, 96
          %640 = vbcast.lane.b32.xlu0 %v590, %s639
          %v641 = vpop.permute.xlu0 %640
          %s643 = sor.u32 256, 104
          %644 = vbcast.lane.b32.xlu0 %v590, %s643
          %v645 = vpop.permute.xlu0 %644
          %s647 = sor.u32 256, 112
          %648 = vbcast.lane.b32.xlu0 %v590, %s647
          %v649 = vpop.permute.xlu0 %648
          %s651 = sor.u32 256, 120
          %652 = vbcast.lane.b32.xlu0 %v590, %s651
          %v653 = vpop.permute.xlu0 %652
          %v654 = vlaneseq
          %v655 = vshrl.u32 %v654, 7
          %v656 = vsub.s32 0, %v655
          %v657 = vrot.slane %v584, %v656
          %659 = vbcast.lane.b32.xlu0 %v657, 256
          %v660 = vpop.permute.xlu0 %659
          %s662 = sor.u32 256, 8
          %663 = vbcast.lane.b32.xlu0 %v657, %s662
          %v664 = vpop.permute.xlu0 %663
          %s666 = sor.u32 256, 16
          %667 = vbcast.lane.b32.xlu0 %v657, %s666
          %v668 = vpop.permute.xlu0 %667
          %s670 = sor.u32 256, 24
          %671 = vbcast.lane.b32.xlu0 %v657, %s670
          %v672 = vpop.permute.xlu0 %671
          %s674 = sor.u32 256, 32
          %675 = vbcast.lane.b32.xlu0 %v657, %s674
          %v676 = vpop.permute.xlu0 %675
          %s678 = sor.u32 256, 40
          %679 = vbcast.lane.b32.xlu0 %v657, %s678
          %v680 = vpop.permute.xlu0 %679
          %s682 = sor.u32 256, 48
          %683 = vbcast.lane.b32.xlu0 %v657, %s682
          %v684 = vpop.permute.xlu0 %683
          %s686 = sor.u32 256, 56
          %687 = vbcast.lane.b32.xlu0 %v657, %s686
          %v688 = vpop.permute.xlu0 %687
          %s690 = sor.u32 256, 64
          %691 = vbcast.lane.b32.xlu0 %v657, %s690
          %v692 = vpop.permute.xlu0 %691
          %s694 = sor.u32 256, 72
          %695 = vbcast.lane.b32.xlu0 %v657, %s694
          %v696 = vpop.permute.xlu0 %695
          %s698 = sor.u32 256, 80
          %699 = vbcast.lane.b32.xlu0 %v657, %s698
          %v700 = vpop.permute.xlu0 %699
          %s702 = sor.u32 256, 88
          %703 = vbcast.lane.b32.xlu0 %v657, %s702
          %v704 = vpop.permute.xlu0 %703
          %s706 = sor.u32 256, 96
          %707 = vbcast.lane.b32.xlu0 %v657, %s706
          %v708 = vpop.permute.xlu0 %707
          %s710 = sor.u32 256, 104
          %711 = vbcast.lane.b32.xlu0 %v657, %s710
          %v712 = vpop.permute.xlu0 %711
          %s714 = sor.u32 256, 112
          %715 = vbcast.lane.b32.xlu0 %v657, %s714
          %v716 = vpop.permute.xlu0 %715
          %s718 = sor.u32 256, 120
          %719 = vbcast.lane.b32.xlu0 %v657, %s718
          %v720 = vpop.permute.xlu0 %719
          %v721 = vlaneseq
          %v722 = vshrl.u32 %v721, 7
          %v723 = vsub.s32 1, %v722
          %v724 = vrot.slane %v583, %v723
          %726 = vbcast.lane.b32.xlu0 %v724, 256
          %v727 = vpop.permute.xlu0 %726
          %s729 = sor.u32 256, 8
          %730 = vbcast.lane.b32.xlu0 %v724, %s729
          %v731 = vpop.permute.xlu0 %730
          %s733 = sor.u32 256, 16
          %734 = vbcast.lane.b32.xlu0 %v724, %s733
          %v735 = vpop.permute.xlu0 %734
          %s737 = sor.u32 256, 24
          %738 = vbcast.lane.b32.xlu0 %v724, %s737
          %v739 = vpop.permute.xlu0 %738
          %s741 = sor.u32 256, 32
          %742 = vbcast.lane.b32.xlu0 %v724, %s741
          %v743 = vpop.permute.xlu0 %742
          %s745 = sor.u32 256, 40
          %746 = vbcast.lane.b32.xlu0 %v724, %s745
          %v747 = vpop.permute.xlu0 %746
          %s749 = sor.u32 256, 48
          %750 = vbcast.lane.b32.xlu0 %v724, %s749
          %v751 = vpop.permute.xlu0 %750
          %s753 = sor.u32 256, 56
          %754 = vbcast.lane.b32.xlu0 %v724, %s753
          %v755 = vpop.permute.xlu0 %754
          %s757 = sor.u32 256, 64
          %758 = vbcast.lane.b32.xlu0 %v724, %s757
          %v759 = vpop.permute.xlu0 %758
          %s761 = sor.u32 256, 72
          %762 = vbcast.lane.b32.xlu0 %v724, %s761
          %v763 = vpop.permute.xlu0 %762
          %s765 = sor.u32 256, 80
          %766 = vbcast.lane.b32.xlu0 %v724, %s765
          %v767 = vpop.permute.xlu0 %766
          %s769 = sor.u32 256, 88
          %770 = vbcast.lane.b32.xlu0 %v724, %s769
          %v771 = vpop.permute.xlu0 %770
          %s773 = sor.u32 256, 96
          %774 = vbcast.lane.b32.xlu0 %v724, %s773
          %v775 = vpop.permute.xlu0 %774
          %s777 = sor.u32 256, 104
          %778 = vbcast.lane.b32.xlu0 %v724, %s777
          %v779 = vpop.permute.xlu0 %778
          %s781 = sor.u32 256, 112
          %782 = vbcast.lane.b32.xlu0 %v724, %s781
          %v783 = vpop.permute.xlu0 %782
          %s785 = sor.u32 256, 120
          %786 = vbcast.lane.b32.xlu0 %v724, %s785
          %v787 = vpop.permute.xlu0 %786
          %v788 = vlaneseq
          %v789 = vshrl.u32 %v788, 7
          %v790 = vsub.s32 1, %v789
          %v791 = vrot.slane %v584, %v790
          %793 = vbcast.lane.b32.xlu0 %v791, 256
          %v794 = vpop.permute.xlu0 %793
          %s796 = sor.u32 256, 8
          %797 = vbcast.lane.b32.xlu0 %v791, %s796
          %v798 = vpop.permute.xlu0 %797
          %s800 = sor.u32 256, 16
          %801 = vbcast.lane.b32.xlu0 %v791, %s800
          %v802 = vpop.permute.xlu0 %801
          %s804 = sor.u32 256, 24
          %805 = vbcast.lane.b32.xlu0 %v791, %s804
          %v806 = vpop.permute.xlu0 %805
          %s808 = sor.u32 256, 32
          %809 = vbcast.lane.b32.xlu0 %v791, %s808
          %v810 = vpop.permute.xlu0 %809
          %s812 = sor.u32 256, 40
          %813 = vbcast.lane.b32.xlu0 %v791, %s812
          %v814 = vpop.permute.xlu0 %813
          %s816 = sor.u32 256, 48
          %817 = vbcast.lane.b32.xlu0 %v791, %s816
          %v818 = vpop.permute.xlu0 %817
          %s820 = sor.u32 256, 56
          %821 = vbcast.lane.b32.xlu0 %v791, %s820
          %v822 = vpop.permute.xlu0 %821
          %s824 = sor.u32 256, 64
          %825 = vbcast.lane.b32.xlu0 %v791, %s824
          %v826 = vpop.permute.xlu0 %825
          %s828 = sor.u32 256, 72
          %829 = vbcast.lane.b32.xlu0 %v791, %s828
          %v830 = vpop.permute.xlu0 %829
          %s832 = sor.u32 256, 80
          %833 = vbcast.lane.b32.xlu0 %v791, %s832
          %v834 = vpop.permute.xlu0 %833
          %s836 = sor.u32 256, 88
          %837 = vbcast.lane.b32.xlu0 %v791, %s836
          %v838 = vpop.permute.xlu0 %837
          %s840 = sor.u32 256, 96
          %841 = vbcast.lane.b32.xlu0 %v791, %s840
          %v842 = vpop.permute.xlu0 %841
          %s844 = sor.u32 256, 104
          %845 = vbcast.lane.b32.xlu0 %v791, %s844
          %v846 = vpop.permute.xlu0 %845
          %s848 = sor.u32 256, 112
          %849 = vbcast.lane.b32.xlu0 %v791, %s848
          %v850 = vpop.permute.xlu0 %849
          %s852 = sor.u32 256, 120
          %853 = vbcast.lane.b32.xlu0 %v791, %s852
          %v854 = vpop.permute.xlu0 %853
          %v855 = vlaneseq
          %v856 = vshrl.u32 %v855, 7
          %v857 = vsub.s32 2, %v856
          %v858 = vrot.slane %v583, %v857
          %860 = vbcast.lane.b32.xlu0 %v858, 256
          %v861 = vpop.permute.xlu0 %860
          %s863 = sor.u32 256, 8
          %864 = vbcast.lane.b32.xlu0 %v858, %s863
          %v865 = vpop.permute.xlu0 %864
          %s867 = sor.u32 256, 16
          %868 = vbcast.lane.b32.xlu0 %v858, %s867
          %v869 = vpop.permute.xlu0 %868
          %s871 = sor.u32 256, 24
          %872 = vbcast.lane.b32.xlu0 %v858, %s871
          %v873 = vpop.permute.xlu0 %872
          %s875 = sor.u32 256, 32
          %876 = vbcast.lane.b32.xlu0 %v858, %s875
          %v877 = vpop.permute.xlu0 %876
          %s879 = sor.u32 256, 40
          %880 = vbcast.lane.b32.xlu0 %v858, %s879
          %v881 = vpop.permute.xlu0 %880
          %s883 = sor.u32 256, 48
          %884 = vbcast.lane.b32.xlu0 %v858, %s883
          %v885 = vpop.permute.xlu0 %884
          %s887 = sor.u32 256, 56
          %888 = vbcast.lane.b32.xlu0 %v858, %s887
          %v889 = vpop.permute.xlu0 %888
          %s891 = sor.u32 256, 64
          %892 = vbcast.lane.b32.xlu0 %v858, %s891
          %v893 = vpop.permute.xlu0 %892
          %s895 = sor.u32 256, 72
          %896 = vbcast.lane.b32.xlu0 %v858, %s895
          %v897 = vpop.permute.xlu0 %896
          %s899 = sor.u32 256, 80
          %900 = vbcast.lane.b32.xlu0 %v858, %s899
          %v901 = vpop.permute.xlu0 %900
          %s903 = sor.u32 256, 88
          %904 = vbcast.lane.b32.xlu0 %v858, %s903
          %v905 = vpop.permute.xlu0 %904
          %s907 = sor.u32 256, 96
          %908 = vbcast.lane.b32.xlu0 %v858, %s907
          %v909 = vpop.permute.xlu0 %908
          %s911 = sor.u32 256, 104
          %912 = vbcast.lane.b32.xlu0 %v858, %s911
          %v913 = vpop.permute.xlu0 %912
          %s915 = sor.u32 256, 112
          %916 = vbcast.lane.b32.xlu0 %v858, %s915
          %v917 = vpop.permute.xlu0 %916
          %s919 = sor.u32 256, 120
          %920 = vbcast.lane.b32.xlu0 %v858, %s919
          %v921 = vpop.permute.xlu0 %920
          %v922 = vlaneseq
          %v923 = vshrl.u32 %v922, 7
          %v924 = vsub.s32 2, %v923
          %v925 = vrot.slane %v584, %v924
          %927 = vbcast.lane.b32.xlu0 %v925, 256
          %v928 = vpop.permute.xlu0 %927
          %s930 = sor.u32 256, 8
          %931 = vbcast.lane.b32.xlu0 %v925, %s930
          %v932 = vpop.permute.xlu0 %931
          %s934 = sor.u32 256, 16
          %935 = vbcast.lane.b32.xlu0 %v925, %s934
          %v936 = vpop.permute.xlu0 %935
          %s938 = sor.u32 256, 24
          %939 = vbcast.lane.b32.xlu0 %v925, %s938
          %v940 = vpop.permute.xlu0 %939
          %s942 = sor.u32 256, 32
          %943 = vbcast.lane.b32.xlu0 %v925, %s942
          %v944 = vpop.permute.xlu0 %943
          %s946 = sor.u32 256, 40
          %947 = vbcast.lane.b32.xlu0 %v925, %s946
          %v948 = vpop.permute.xlu0 %947
          %s950 = sor.u32 256, 48
          %951 = vbcast.lane.b32.xlu0 %v925, %s950
          %v952 = vpop.permute.xlu0 %951
          %s954 = sor.u32 256, 56
          %955 = vbcast.lane.b32.xlu0 %v925, %s954
          %v956 = vpop.permute.xlu0 %955
          %s958 = sor.u32 256, 64
          %959 = vbcast.lane.b32.xlu0 %v925, %s958
          %v960 = vpop.permute.xlu0 %959
          %s962 = sor.u32 256, 72
          %963 = vbcast.lane.b32.xlu0 %v925, %s962
          %v964 = vpop.permute.xlu0 %963
          %s966 = sor.u32 256, 80
          %967 = vbcast.lane.b32.xlu0 %v925, %s966
          %v968 = vpop.permute.xlu0 %967
          %s970 = sor.u32 256, 88
          %971 = vbcast.lane.b32.xlu0 %v925, %s970
          %v972 = vpop.permute.xlu0 %971
          %s974 = sor.u32 256, 96
          %975 = vbcast.lane.b32.xlu0 %v925, %s974
          %v976 = vpop.permute.xlu0 %975
          %s978 = sor.u32 256, 104
          %979 = vbcast.lane.b32.xlu0 %v925, %s978
          %v980 = vpop.permute.xlu0 %979
          %s982 = sor.u32 256, 112
          %983 = vbcast.lane.b32.xlu0 %v925, %s982
          %v984 = vpop.permute.xlu0 %983
          %s986 = sor.u32 256, 120
          %987 = vbcast.lane.b32.xlu0 %v925, %s986
          %v988 = vpop.permute.xlu0 %987
          %v989 = vlaneseq
          %v990 = vshrl.u32 %v989, 7
          %v991 = vsub.s32 3, %v990
          %v992 = vrot.slane %v583, %v991
          %994 = vbcast.lane.b32.xlu0 %v992, 256
          %v995 = vpop.permute.xlu0 %994
          %s997 = sor.u32 256, 8
          %998 = vbcast.lane.b32.xlu0 %v992, %s997
          %v999 = vpop.permute.xlu0 %998
          %s1001 = sor.u32 256, 16
          %1002 = vbcast.lane.b32.xlu0 %v992, %s1001
          %v1003 = vpop.permute.xlu0 %1002
          %s1005 = sor.u32 256, 24
          %1006 = vbcast.lane.b32.xlu0 %v992, %s1005
          %v1007 = vpop.permute.xlu0 %1006
          %s1009 = sor.u32 256, 32
          %1010 = vbcast.lane.b32.xlu0 %v992, %s1009
          %v1011 = vpop.permute.xlu0 %1010
          %s1013 = sor.u32 256, 40
          %1014 = vbcast.lane.b32.xlu0 %v992, %s1013
          %v1015 = vpop.permute.xlu0 %1014
          %s1017 = sor.u32 256, 48
          %1018 = vbcast.lane.b32.xlu0 %v992, %s1017
          %v1019 = vpop.permute.xlu0 %1018
          %s1021 = sor.u32 256, 56
          %1022 = vbcast.lane.b32.xlu0 %v992, %s1021
          %v1023 = vpop.permute.xlu0 %1022
          %s1025 = sor.u32 256, 64
          %1026 = vbcast.lane.b32.xlu0 %v992, %s1025
          %v1027 = vpop.permute.xlu0 %1026
          %s1029 = sor.u32 256, 72
          %1030 = vbcast.lane.b32.xlu0 %v992, %s1029
          %v1031 = vpop.permute.xlu0 %1030
          %s1033 = sor.u32 256, 80
          %1034 = vbcast.lane.b32.xlu0 %v992, %s1033
          %v1035 = vpop.permute.xlu0 %1034
          %s1037 = sor.u32 256, 88
          %1038 = vbcast.lane.b32.xlu0 %v992, %s1037
          %v1039 = vpop.permute.xlu0 %1038
          %s1041 = sor.u32 256, 96
          %1042 = vbcast.lane.b32.xlu0 %v992, %s1041
          %v1043 = vpop.permute.xlu0 %1042
          %s1045 = sor.u32 256, 104
          %1046 = vbcast.lane.b32.xlu0 %v992, %s1045
          %v1047 = vpop.permute.xlu0 %1046
          %s1049 = sor.u32 256, 112
          %1050 = vbcast.lane.b32.xlu0 %v992, %s1049
          %v1051 = vpop.permute.xlu0 %1050
          %s1053 = sor.u32 256, 120
          %1054 = vbcast.lane.b32.xlu0 %v992, %s1053
          %v1055 = vpop.permute.xlu0 %1054
          %v1056 = vlaneseq
          %v1057 = vshrl.u32 %v1056, 7
          %v1058 = vsub.s32 3, %v1057
          %v1059 = vrot.slane %v584, %v1058
          %1061 = vbcast.lane.b32.xlu0 %v1059, 256
          %v1062 = vpop.permute.xlu0 %1061
          %s1064 = sor.u32 256, 8
          %1065 = vbcast.lane.b32.xlu0 %v1059, %s1064
          %v1066 = vpop.permute.xlu0 %1065
          %s1068 = sor.u32 256, 16
          %1069 = vbcast.lane.b32.xlu0 %v1059, %s1068
          %v1070 = vpop.permute.xlu0 %1069
          %s1072 = sor.u32 256, 24
          %1073 = vbcast.lane.b32.xlu0 %v1059, %s1072
          %v1074 = vpop.permute.xlu0 %1073
          %s1076 = sor.u32 256, 32
          %1077 = vbcast.lane.b32.xlu0 %v1059, %s1076
          %v1078 = vpop.permute.xlu0 %1077
          %s1080 = sor.u32 256, 40
          %1081 = vbcast.lane.b32.xlu0 %v1059, %s1080
          %v1082 = vpop.permute.xlu0 %1081
          %s1084 = sor.u32 256, 48
          %1085 = vbcast.lane.b32.xlu0 %v1059, %s1084
          %v1086 = vpop.permute.xlu0 %1085
          %s1088 = sor.u32 256, 56
          %1089 = vbcast.lane.b32.xlu0 %v1059, %s1088
          %v1090 = vpop.permute.xlu0 %1089
          %s1092 = sor.u32 256, 64
          %1093 = vbcast.lane.b32.xlu0 %v1059, %s1092
          %v1094 = vpop.permute.xlu0 %1093
          %s1096 = sor.u32 256, 72
          %1097 = vbcast.lane.b32.xlu0 %v1059, %s1096
          %v1098 = vpop.permute.xlu0 %1097
          %s1100 = sor.u32 256, 80
          %1101 = vbcast.lane.b32.xlu0 %v1059, %s1100
          %v1102 = vpop.permute.xlu0 %1101
          %s1104 = sor.u32 256, 88
          %1105 = vbcast.lane.b32.xlu0 %v1059, %s1104
          %v1106 = vpop.permute.xlu0 %1105
          %s1108 = sor.u32 256, 96
          %1109 = vbcast.lane.b32.xlu0 %v1059, %s1108
          %v1110 = vpop.permute.xlu0 %1109
          %s1112 = sor.u32 256, 104
          %1113 = vbcast.lane.b32.xlu0 %v1059, %s1112
          %v1114 = vpop.permute.xlu0 %1113
          %s1116 = sor.u32 256, 112
          %1117 = vbcast.lane.b32.xlu0 %v1059, %s1116
          %v1118 = vpop.permute.xlu0 %1117
          %s1120 = sor.u32 256, 120
          %1121 = vbcast.lane.b32.xlu0 %v1059, %s1120
          %v1122 = vpop.permute.xlu0 %1121
          %v1123 = vlaneseq
          %v1124 = vshrl.u32 %v1123, 7
          %v1125 = vsub.s32 4, %v1124
          %v1126 = vrot.slane %v583, %v1125
          %1128 = vbcast.lane.b32.xlu0 %v1126, 256
          %v1129 = vpop.permute.xlu0 %1128
          %s1131 = sor.u32 256, 8
          %1132 = vbcast.lane.b32.xlu0 %v1126, %s1131
          %v1133 = vpop.permute.xlu0 %1132
          %s1135 = sor.u32 256, 16
          %1136 = vbcast.lane.b32.xlu0 %v1126, %s1135
          %v1137 = vpop.permute.xlu0 %1136
          %s1139 = sor.u32 256, 24
          %1140 = vbcast.lane.b32.xlu0 %v1126, %s1139
          %v1141 = vpop.permute.xlu0 %1140
          %s1143 = sor.u32 256, 32
          %1144 = vbcast.lane.b32.xlu0 %v1126, %s1143
          %v1145 = vpop.permute.xlu0 %1144
          %s1147 = sor.u32 256, 40
          %1148 = vbcast.lane.b32.xlu0 %v1126, %s1147
          %v1149 = vpop.permute.xlu0 %1148
          %s1151 = sor.u32 256, 48
          %1152 = vbcast.lane.b32.xlu0 %v1126, %s1151
          %v1153 = vpop.permute.xlu0 %1152
          %s1155 = sor.u32 256, 56
          %1156 = vbcast.lane.b32.xlu0 %v1126, %s1155
          %v1157 = vpop.permute.xlu0 %1156
          %s1159 = sor.u32 256, 64
          %1160 = vbcast.lane.b32.xlu0 %v1126, %s1159
          %v1161 = vpop.permute.xlu0 %1160
          %s1163 = sor.u32 256, 72
          %1164 = vbcast.lane.b32.xlu0 %v1126, %s1163
          %v1165 = vpop.permute.xlu0 %1164
          %s1167 = sor.u32 256, 80
          %1168 = vbcast.lane.b32.xlu0 %v1126, %s1167
          %v1169 = vpop.permute.xlu0 %1168
          %s1171 = sor.u32 256, 88
          %1172 = vbcast.lane.b32.xlu0 %v1126, %s1171
          %v1173 = vpop.permute.xlu0 %1172
          %s1175 = sor.u32 256, 96
          %1176 = vbcast.lane.b32.xlu0 %v1126, %s1175
          %v1177 = vpop.permute.xlu0 %1176
          %s1179 = sor.u32 256, 104
          %1180 = vbcast.lane.b32.xlu0 %v1126, %s1179
          %v1181 = vpop.permute.xlu0 %1180
          %s1183 = sor.u32 256, 112
          %1184 = vbcast.lane.b32.xlu0 %v1126, %s1183
          %v1185 = vpop.permute.xlu0 %1184
          %s1187 = sor.u32 256, 120
          %1188 = vbcast.lane.b32.xlu0 %v1126, %s1187
          %v1189 = vpop.permute.xlu0 %1188
          %v1190 = vlaneseq
          %v1191 = vshrl.u32 %v1190, 7
          %v1192 = vsub.s32 4, %v1191
          %v1193 = vrot.slane %v584, %v1192
          %1195 = vbcast.lane.b32.xlu0 %v1193, 256
          %v1196 = vpop.permute.xlu0 %1195
          %s1198 = sor.u32 256, 8
          %1199 = vbcast.lane.b32.xlu0 %v1193, %s1198
          %v1200 = vpop.permute.xlu0 %1199
          %s1202 = sor.u32 256, 16
          %1203 = vbcast.lane.b32.xlu0 %v1193, %s1202
          %v1204 = vpop.permute.xlu0 %1203
          %s1206 = sor.u32 256, 24
          %1207 = vbcast.lane.b32.xlu0 %v1193, %s1206
          %v1208 = vpop.permute.xlu0 %1207
          %s1210 = sor.u32 256, 32
          %1211 = vbcast.lane.b32.xlu0 %v1193, %s1210
          %v1212 = vpop.permute.xlu0 %1211
          %s1214 = sor.u32 256, 40
          %1215 = vbcast.lane.b32.xlu0 %v1193, %s1214
          %v1216 = vpop.permute.xlu0 %1215
          %s1218 = sor.u32 256, 48
          %1219 = vbcast.lane.b32.xlu0 %v1193, %s1218
          %v1220 = vpop.permute.xlu0 %1219
          %s1222 = sor.u32 256, 56
          %1223 = vbcast.lane.b32.xlu0 %v1193, %s1222
          %v1224 = vpop.permute.xlu0 %1223
          %s1226 = sor.u32 256, 64
          %1227 = vbcast.lane.b32.xlu0 %v1193, %s1226
          %v1228 = vpop.permute.xlu0 %1227
          %s1230 = sor.u32 256, 72
          %1231 = vbcast.lane.b32.xlu0 %v1193, %s1230
          %v1232 = vpop.permute.xlu0 %1231
          %s1234 = sor.u32 256, 80
          %1235 = vbcast.lane.b32.xlu0 %v1193, %s1234
          %v1236 = vpop.permute.xlu0 %1235
          %s1238 = sor.u32 256, 88
          %1239 = vbcast.lane.b32.xlu0 %v1193, %s1238
          %v1240 = vpop.permute.xlu0 %1239
          %s1242 = sor.u32 256, 96
          %1243 = vbcast.lane.b32.xlu0 %v1193, %s1242
          %v1244 = vpop.permute.xlu0 %1243
          %s1246 = sor.u32 256, 104
          %1247 = vbcast.lane.b32.xlu0 %v1193, %s1246
          %v1248 = vpop.permute.xlu0 %1247
          %s1250 = sor.u32 256, 112
          %1251 = vbcast.lane.b32.xlu0 %v1193, %s1250
          %v1252 = vpop.permute.xlu0 %1251
          %s1254 = sor.u32 256, 120
          %1255 = vbcast.lane.b32.xlu0 %v1193, %s1254
          %v1256 = vpop.permute.xlu0 %1255
          %v1257 = vlaneseq
          %v1258 = vshrl.u32 %v1257, 7
          %v1259 = vsub.s32 5, %v1258
          %v1260 = vrot.slane %v583, %v1259
          %1262 = vbcast.lane.b32.xlu0 %v1260, 256
          %v1263 = vpop.permute.xlu0 %1262
          %s1265 = sor.u32 256, 8
          %1266 = vbcast.lane.b32.xlu0 %v1260, %s1265
          %v1267 = vpop.permute.xlu0 %1266
          %s1269 = sor.u32 256, 16
          %1270 = vbcast.lane.b32.xlu0 %v1260, %s1269
          %v1271 = vpop.permute.xlu0 %1270
          %s1273 = sor.u32 256, 24
          %1274 = vbcast.lane.b32.xlu0 %v1260, %s1273
          %v1275 = vpop.permute.xlu0 %1274
          %s1277 = sor.u32 256, 32
          %1278 = vbcast.lane.b32.xlu0 %v1260, %s1277
          %v1279 = vpop.permute.xlu0 %1278
          %s1281 = sor.u32 256, 40
          %1282 = vbcast.lane.b32.xlu0 %v1260, %s1281
          %v1283 = vpop.permute.xlu0 %1282
          %s1285 = sor.u32 256, 48
          %1286 = vbcast.lane.b32.xlu0 %v1260, %s1285
          %v1287 = vpop.permute.xlu0 %1286
          %s1289 = sor.u32 256, 56
          %1290 = vbcast.lane.b32.xlu0 %v1260, %s1289
          %v1291 = vpop.permute.xlu0 %1290
          %s1293 = sor.u32 256, 64
          %1294 = vbcast.lane.b32.xlu0 %v1260, %s1293
          %v1295 = vpop.permute.xlu0 %1294
          %s1297 = sor.u32 256, 72
          %1298 = vbcast.lane.b32.xlu0 %v1260, %s1297
          %v1299 = vpop.permute.xlu0 %1298
          %s1301 = sor.u32 256, 80
          %1302 = vbcast.lane.b32.xlu0 %v1260, %s1301
          %v1303 = vpop.permute.xlu0 %1302
          %s1305 = sor.u32 256, 88
          %1306 = vbcast.lane.b32.xlu0 %v1260, %s1305
          %v1307 = vpop.permute.xlu0 %1306
          %s1309 = sor.u32 256, 96
          %1310 = vbcast.lane.b32.xlu0 %v1260, %s1309
          %v1311 = vpop.permute.xlu0 %1310
          %s1313 = sor.u32 256, 104
          %1314 = vbcast.lane.b32.xlu0 %v1260, %s1313
          %v1315 = vpop.permute.xlu0 %1314
          %s1317 = sor.u32 256, 112
          %1318 = vbcast.lane.b32.xlu0 %v1260, %s1317
          %v1319 = vpop.permute.xlu0 %1318
          %s1321 = sor.u32 256, 120
          %1322 = vbcast.lane.b32.xlu0 %v1260, %s1321
          %v1323 = vpop.permute.xlu0 %1322
          %v1324 = vlaneseq
          %v1325 = vshrl.u32 %v1324, 7
          %v1326 = vsub.s32 5, %v1325
          %v1327 = vrot.slane %v584, %v1326
          %1329 = vbcast.lane.b32.xlu0 %v1327, 256
          %v1330 = vpop.permute.xlu0 %1329
          %s1332 = sor.u32 256, 8
          %1333 = vbcast.lane.b32.xlu0 %v1327, %s1332
          %v1334 = vpop.permute.xlu0 %1333
          %s1336 = sor.u32 256, 16
          %1337 = vbcast.lane.b32.xlu0 %v1327, %s1336
          %v1338 = vpop.permute.xlu0 %1337
          %s1340 = sor.u32 256, 24
          %1341 = vbcast.lane.b32.xlu0 %v1327, %s1340
          %v1342 = vpop.permute.xlu0 %1341
          %s1344 = sor.u32 256, 32
          %1345 = vbcast.lane.b32.xlu0 %v1327, %s1344
          %v1346 = vpop.permute.xlu0 %1345
          %s1348 = sor.u32 256, 40
          %1349 = vbcast.lane.b32.xlu0 %v1327, %s1348
          %v1350 = vpop.permute.xlu0 %1349
          %s1352 = sor.u32 256, 48
          %1353 = vbcast.lane.b32.xlu0 %v1327, %s1352
          %v1354 = vpop.permute.xlu0 %1353
          %s1356 = sor.u32 256, 56
          %1357 = vbcast.lane.b32.xlu0 %v1327, %s1356
          %v1358 = vpop.permute.xlu0 %1357
          %s1360 = sor.u32 256, 64
          %1361 = vbcast.lane.b32.xlu0 %v1327, %s1360
          %v1362 = vpop.permute.xlu0 %1361
          %s1364 = sor.u32 256, 72
          %1365 = vbcast.lane.b32.xlu0 %v1327, %s1364
          %v1366 = vpop.permute.xlu0 %1365
          %s1368 = sor.u32 256, 80
          %1369 = vbcast.lane.b32.xlu0 %v1327, %s1368
          %v1370 = vpop.permute.xlu0 %1369
          %s1372 = sor.u32 256, 88
          %1373 = vbcast.lane.b32.xlu0 %v1327, %s1372
          %v1374 = vpop.permute.xlu0 %1373
          %s1376 = sor.u32 256, 96
          %1377 = vbcast.lane.b32.xlu0 %v1327, %s1376
          %v1378 = vpop.permute.xlu0 %1377
          %s1380 = sor.u32 256, 104
          %1381 = vbcast.lane.b32.xlu0 %v1327, %s1380
          %v1382 = vpop.permute.xlu0 %1381
          %s1384 = sor.u32 256, 112
          %1385 = vbcast.lane.b32.xlu0 %v1327, %s1384
          %v1386 = vpop.permute.xlu0 %1385
          %s1388 = sor.u32 256, 120
          %1389 = vbcast.lane.b32.xlu0 %v1327, %s1388
          %v1390 = vpop.permute.xlu0 %1389
          %v1391 = vlaneseq
          %v1392 = vshrl.u32 %v1391, 7
          %v1393 = vsub.s32 6, %v1392
          %v1394 = vrot.slane %v583, %v1393
          %1396 = vbcast.lane.b32.xlu0 %v1394, 256
          %v1397 = vpop.permute.xlu0 %1396
          %s1399 = sor.u32 256, 8
          %1400 = vbcast.lane.b32.xlu0 %v1394, %s1399
          %v1401 = vpop.permute.xlu0 %1400
          %s1403 = sor.u32 256, 16
          %1404 = vbcast.lane.b32.xlu0 %v1394, %s1403
          %v1405 = vpop.permute.xlu0 %1404
          %s1407 = sor.u32 256, 24
          %1408 = vbcast.lane.b32.xlu0 %v1394, %s1407
          %v1409 = vpop.permute.xlu0 %1408
          %s1411 = sor.u32 256, 32
          %1412 = vbcast.lane.b32.xlu0 %v1394, %s1411
          %v1413 = vpop.permute.xlu0 %1412
          %s1415 = sor.u32 256, 40
          %1416 = vbcast.lane.b32.xlu0 %v1394, %s1415
          %v1417 = vpop.permute.xlu0 %1416
          %s1419 = sor.u32 256, 48
          %1420 = vbcast.lane.b32.xlu0 %v1394, %s1419
          %v1421 = vpop.permute.xlu0 %1420
          %s1423 = sor.u32 256, 56
          %1424 = vbcast.lane.b32.xlu0 %v1394, %s1423
          %v1425 = vpop.permute.xlu0 %1424
          %s1427 = sor.u32 256, 64
          %1428 = vbcast.lane.b32.xlu0 %v1394, %s1427
          %v1429 = vpop.permute.xlu0 %1428
          %s1431 = sor.u32 256, 72
          %1432 = vbcast.lane.b32.xlu0 %v1394, %s1431
          %v1433 = vpop.permute.xlu0 %1432
          %s1435 = sor.u32 256, 80
          %1436 = vbcast.lane.b32.xlu0 %v1394, %s1435
          %v1437 = vpop.permute.xlu0 %1436
          %s1439 = sor.u32 256, 88
          %1440 = vbcast.lane.b32.xlu0 %v1394, %s1439
          %v1441 = vpop.permute.xlu0 %1440
          %s1443 = sor.u32 256, 96
          %1444 = vbcast.lane.b32.xlu0 %v1394, %s1443
          %v1445 = vpop.permute.xlu0 %1444
          %s1447 = sor.u32 256, 104
          %1448 = vbcast.lane.b32.xlu0 %v1394, %s1447
          %v1449 = vpop.permute.xlu0 %1448
          %s1451 = sor.u32 256, 112
          %1452 = vbcast.lane.b32.xlu0 %v1394, %s1451
          %v1453 = vpop.permute.xlu0 %1452
          %s1455 = sor.u32 256, 120
          %1456 = vbcast.lane.b32.xlu0 %v1394, %s1455
          %v1457 = vpop.permute.xlu0 %1456
          %v1458 = vlaneseq
          %v1459 = vshrl.u32 %v1458, 7
          %v1460 = vsub.s32 6, %v1459
          %v1461 = vrot.slane %v584, %v1460
          %1463 = vbcast.lane.b32.xlu0 %v1461, 256
          %v1464 = vpop.permute.xlu0 %1463
          %s1466 = sor.u32 256, 8
          %1467 = vbcast.lane.b32.xlu0 %v1461, %s1466
          %v1468 = vpop.permute.xlu0 %1467
          %s1470 = sor.u32 256, 16
          %1471 = vbcast.lane.b32.xlu0 %v1461, %s1470
          %v1472 = vpop.permute.xlu0 %1471
          %s1474 = sor.u32 256, 24
          %1475 = vbcast.lane.b32.xlu0 %v1461, %s1474
          %v1476 = vpop.permute.xlu0 %1475
          %s1478 = sor.u32 256, 32
          %1479 = vbcast.lane.b32.xlu0 %v1461, %s1478
          %v1480 = vpop.permute.xlu0 %1479
          %s1482 = sor.u32 256, 40
          %1483 = vbcast.lane.b32.xlu0 %v1461, %s1482
          %v1484 = vpop.permute.xlu0 %1483
          %s1486 = sor.u32 256, 48
          %1487 = vbcast.lane.b32.xlu0 %v1461, %s1486
          %v1488 = vpop.permute.xlu0 %1487
          %s1490 = sor.u32 256, 56
          %1491 = vbcast.lane.b32.xlu0 %v1461, %s1490
          %v1492 = vpop.permute.xlu0 %1491
          %s1494 = sor.u32 256, 64
          %1495 = vbcast.lane.b32.xlu0 %v1461, %s1494
          %v1496 = vpop.permute.xlu0 %1495
          %s1498 = sor.u32 256, 72
          %1499 = vbcast.lane.b32.xlu0 %v1461, %s1498
          %v1500 = vpop.permute.xlu0 %1499
          %s1502 = sor.u32 256, 80
          %1503 = vbcast.lane.b32.xlu0 %v1461, %s1502
          %v1504 = vpop.permute.xlu0 %1503
          %s1506 = sor.u32 256, 88
          %1507 = vbcast.lane.b32.xlu0 %v1461, %s1506
          %v1508 = vpop.permute.xlu0 %1507
          %s1510 = sor.u32 256, 96
          %1511 = vbcast.lane.b32.xlu0 %v1461, %s1510
          %v1512 = vpop.permute.xlu0 %1511
          %s1514 = sor.u32 256, 104
          %1515 = vbcast.lane.b32.xlu0 %v1461, %s1514
          %v1516 = vpop.permute.xlu0 %1515
          %s1518 = sor.u32 256, 112
          %1519 = vbcast.lane.b32.xlu0 %v1461, %s1518
          %v1520 = vpop.permute.xlu0 %1519
          %s1522 = sor.u32 256, 120
          %1523 = vbcast.lane.b32.xlu0 %v1461, %s1522
          %v1524 = vpop.permute.xlu0 %1523
          %v1525 = vlaneseq
          %v1526 = vshrl.u32 %v1525, 7
          %v1527 = vsub.s32 7, %v1526
          %v1528 = vrot.slane %v583, %v1527
          %1530 = vbcast.lane.b32.xlu0 %v1528, 256
          %v1531 = vpop.permute.xlu0 %1530
          %s1533 = sor.u32 256, 8
          %1534 = vbcast.lane.b32.xlu0 %v1528, %s1533
          %v1535 = vpop.permute.xlu0 %1534
          %s1537 = sor.u32 256, 16
          %1538 = vbcast.lane.b32.xlu0 %v1528, %s1537
          %v1539 = vpop.permute.xlu0 %1538
          %s1541 = sor.u32 256, 24
          %1542 = vbcast.lane.b32.xlu0 %v1528, %s1541
          %v1543 = vpop.permute.xlu0 %1542
          %s1545 = sor.u32 256, 32
          %1546 = vbcast.lane.b32.xlu0 %v1528, %s1545
          %v1547 = vpop.permute.xlu0 %1546
          %s1549 = sor.u32 256, 40
          %1550 = vbcast.lane.b32.xlu0 %v1528, %s1549
          %v1551 = vpop.permute.xlu0 %1550
          %s1553 = sor.u32 256, 48
          %1554 = vbcast.lane.b32.xlu0 %v1528, %s1553
          %v1555 = vpop.permute.xlu0 %1554
          %s1557 = sor.u32 256, 56
          %1558 = vbcast.lane.b32.xlu0 %v1528, %s1557
          %v1559 = vpop.permute.xlu0 %1558
          %s1561 = sor.u32 256, 64
          %1562 = vbcast.lane.b32.xlu0 %v1528, %s1561
          %v1563 = vpop.permute.xlu0 %1562
          %s1565 = sor.u32 256, 72
          %1566 = vbcast.lane.b32.xlu0 %v1528, %s1565
          %v1567 = vpop.permute.xlu0 %1566
          %s1569 = sor.u32 256, 80
          %1570 = vbcast.lane.b32.xlu0 %v1528, %s1569
          %v1571 = vpop.permute.xlu0 %1570
          %s1573 = sor.u32 256, 88
          %1574 = vbcast.lane.b32.xlu0 %v1528, %s1573
          %v1575 = vpop.permute.xlu0 %1574
          %s1577 = sor.u32 256, 96
          %1578 = vbcast.lane.b32.xlu0 %v1528, %s1577
          %v1579 = vpop.permute.xlu0 %1578
          %s1581 = sor.u32 256, 104
          %1582 = vbcast.lane.b32.xlu0 %v1528, %s1581
          %v1583 = vpop.permute.xlu0 %1582
          %s1585 = sor.u32 256, 112
          %1586 = vbcast.lane.b32.xlu0 %v1528, %s1585
          %v1587 = vpop.permute.xlu0 %1586
          %s1589 = sor.u32 256, 120
          %1590 = vbcast.lane.b32.xlu0 %v1528, %s1589
          %v1591 = vpop.permute.xlu0 %1590
          %v1592 = vlaneseq
          %v1593 = vshrl.u32 %v1592, 7
          %v1594 = vsub.s32 7, %v1593
          %v1595 = vrot.slane %v584, %v1594
          %1597 = vbcast.lane.b32.xlu0 %v1595, 256
          %v1598 = vpop.permute.xlu0 %1597
          %s1600 = sor.u32 256, 8
          %1601 = vbcast.lane.b32.xlu0 %v1595, %s1600
          %v1602 = vpop.permute.xlu0 %1601
          %s1604 = sor.u32 256, 16
          %1605 = vbcast.lane.b32.xlu0 %v1595, %s1604
          %v1606 = vpop.permute.xlu0 %1605
          %s1608 = sor.u32 256, 24
          %1609 = vbcast.lane.b32.xlu0 %v1595, %s1608
          %v1610 = vpop.permute.xlu0 %1609
          %s1612 = sor.u32 256, 32
          %1613 = vbcast.lane.b32.xlu0 %v1595, %s1612
          %v1614 = vpop.permute.xlu0 %1613
          %s1616 = sor.u32 256, 40
          %1617 = vbcast.lane.b32.xlu0 %v1595, %s1616
          %v1618 = vpop.permute.xlu0 %1617
          %s1620 = sor.u32 256, 48
          %1621 = vbcast.lane.b32.xlu0 %v1595, %s1620
          %v1622 = vpop.permute.xlu0 %1621
          %s1624 = sor.u32 256, 56
          %1625 = vbcast.lane.b32.xlu0 %v1595, %s1624
          %v1626 = vpop.permute.xlu0 %1625
          %s1628 = sor.u32 256, 64
          %1629 = vbcast.lane.b32.xlu0 %v1595, %s1628
          %v1630 = vpop.permute.xlu0 %1629
          %s1632 = sor.u32 256, 72
          %1633 = vbcast.lane.b32.xlu0 %v1595, %s1632
          %v1634 = vpop.permute.xlu0 %1633
          %s1636 = sor.u32 256, 80
          %1637 = vbcast.lane.b32.xlu0 %v1595, %s1636
          %v1638 = vpop.permute.xlu0 %1637
          %s1640 = sor.u32 256, 88
          %1641 = vbcast.lane.b32.xlu0 %v1595, %s1640
          %v1642 = vpop.permute.xlu0 %1641
          %s1644 = sor.u32 256, 96
          %1645 = vbcast.lane.b32.xlu0 %v1595, %s1644
          %v1646 = vpop.permute.xlu0 %1645
          %s1648 = sor.u32 256, 104
          %1649 = vbcast.lane.b32.xlu0 %v1595, %s1648
          %v1650 = vpop.permute.xlu0 %1649
          %s1652 = sor.u32 256, 112
          %1653 = vbcast.lane.b32.xlu0 %v1595, %s1652
          %v1654 = vpop.permute.xlu0 %1653
          %s1656 = sor.u32 256, 120
          %1657 = vbcast.lane.b32.xlu0 %v1595, %s1656
          %v1658 = vpop.permute.xlu0 %1657
          %vm1659 = vcmp.eq.s32.totalorder %v593, %v551
          %vm1660 = vcmp.eq.s32.totalorder %v593, %v552
          %vm1661 = vcmp.eq.s32.totalorder %v593, %v585
          %vm1662 = vcmp.eq.s32.totalorder %v593, %v586
          %vm1663 = vcmp.eq.s32.totalorder %v597, %v551
          %vm1664 = vcmp.eq.s32.totalorder %v597, %v552
          %vm1665 = vcmp.eq.s32.totalorder %v597, %v585
          %vm1666 = vcmp.eq.s32.totalorder %v597, %v586
          %vm1667 = vcmp.eq.s32.totalorder %v601, %v551
          %vm1668 = vcmp.eq.s32.totalorder %v601, %v552
          %vm1669 = vcmp.eq.s32.totalorder %v601, %v585
          %vm1670 = vcmp.eq.s32.totalorder %v601, %v586
          %vm1671 = vcmp.eq.s32.totalorder %v605, %v551
          %vm1672 = vcmp.eq.s32.totalorder %v605, %v552
          %vm1673 = vcmp.eq.s32.totalorder %v605, %v585
          %vm1674 = vcmp.eq.s32.totalorder %v605, %v586
          %vm1675 = vcmp.eq.s32.totalorder %v609, %v551
          %vm1676 = vcmp.eq.s32.totalorder %v609, %v552
          %vm1677 = vcmp.eq.s32.totalorder %v609, %v585
          %vm1678 = vcmp.eq.s32.totalorder %v609, %v586
          %vm1679 = vcmp.eq.s32.totalorder %v613, %v551
          %vm1680 = vcmp.eq.s32.totalorder %v613, %v552
          %vm1681 = vcmp.eq.s32.totalorder %v613, %v585
          %vm1682 = vcmp.eq.s32.totalorder %v613, %v586
          %vm1683 = vcmp.eq.s32.totalorder %v617, %v551
          %vm1684 = vcmp.eq.s32.totalorder %v617, %v552
          %vm1685 = vcmp.eq.s32.totalorder %v617, %v585
          %vm1686 = vcmp.eq.s32.totalorder %v617, %v586
          %vm1687 = vcmp.eq.s32.totalorder %v621, %v551
          %vm1688 = vcmp.eq.s32.totalorder %v621, %v552
          %vm1689 = vcmp.eq.s32.totalorder %v621, %v585
          %vm1690 = vcmp.eq.s32.totalorder %v621, %v586
          %vm1691 = vcmp.eq.s32.totalorder %v625, %v551
          %vm1692 = vcmp.eq.s32.totalorder %v625, %v552
          %vm1693 = vcmp.eq.s32.totalorder %v625, %v585
          %vm1694 = vcmp.eq.s32.totalorder %v625, %v586
          %vm1695 = vcmp.eq.s32.totalorder %v629, %v551
          %vm1696 = vcmp.eq.s32.totalorder %v629, %v552
          %vm1697 = vcmp.eq.s32.totalorder %v629, %v585
          %vm1698 = vcmp.eq.s32.totalorder %v629, %v586
          %vm1699 = vcmp.eq.s32.totalorder %v633, %v551
          %vm1700 = vcmp.eq.s32.totalorder %v633, %v552
          %vm1701 = vcmp.eq.s32.totalorder %v633, %v585
          %vm1702 = vcmp.eq.s32.totalorder %v633, %v586
          %vm1703 = vcmp.eq.s32.totalorder %v637, %v551
          %vm1704 = vcmp.eq.s32.totalorder %v637, %v552
          %vm1705 = vcmp.eq.s32.totalorder %v637, %v585
          %vm1706 = vcmp.eq.s32.totalorder %v637, %v586
          %vm1707 = vcmp.eq.s32.totalorder %v641, %v551
          %vm1708 = vcmp.eq.s32.totalorder %v641, %v552
          %vm1709 = vcmp.eq.s32.totalorder %v641, %v585
          %vm1710 = vcmp.eq.s32.totalorder %v641, %v586
          %vm1711 = vcmp.eq.s32.totalorder %v645, %v551
          %vm1712 = vcmp.eq.s32.totalorder %v645, %v552
          %vm1713 = vcmp.eq.s32.totalorder %v645, %v585
          %vm1714 = vcmp.eq.s32.totalorder %v645, %v586
          %vm1715 = vcmp.eq.s32.totalorder %v649, %v551
          %vm1716 = vcmp.eq.s32.totalorder %v649, %v552
          %vm1717 = vcmp.eq.s32.totalorder %v649, %v585
          %vm1718 = vcmp.eq.s32.totalorder %v649, %v586
          %vm1719 = vcmp.eq.s32.totalorder %v653, %v551
          %vm1720 = vcmp.eq.s32.totalorder %v653, %v552
          %vm1721 = vcmp.eq.s32.totalorder %v653, %v585
          %vm1722 = vcmp.eq.s32.totalorder %v653, %v586
          %vm1723 = vcmp.eq.s32.totalorder %v660, %v551
          %vm1724 = vcmp.eq.s32.totalorder %v660, %v552
          %vm1725 = vcmp.eq.s32.totalorder %v660, %v585
          %vm1726 = vcmp.eq.s32.totalorder %v660, %v586
          %vm1727 = vcmp.eq.s32.totalorder %v664, %v551
          %vm1728 = vcmp.eq.s32.totalorder %v664, %v552
          %vm1729 = vcmp.eq.s32.totalorder %v664, %v585
          %vm1730 = vcmp.eq.s32.totalorder %v664, %v586
          %vm1731 = vcmp.eq.s32.totalorder %v668, %v551
          %vm1732 = vcmp.eq.s32.totalorder %v668, %v552
          %vm1733 = vcmp.eq.s32.totalorder %v668, %v585
          %vm1734 = vcmp.eq.s32.totalorder %v668, %v586
          %vm1735 = vcmp.eq.s32.totalorder %v672, %v551
          %vm1736 = vcmp.eq.s32.totalorder %v672, %v552
          %vm1737 = vcmp.eq.s32.totalorder %v672, %v585
          %vm1738 = vcmp.eq.s32.totalorder %v672, %v586
          %vm1739 = vcmp.eq.s32.totalorder %v676, %v551
          %vm1740 = vcmp.eq.s32.totalorder %v676, %v552
          %vm1741 = vcmp.eq.s32.totalorder %v676, %v585
          %vm1742 = vcmp.eq.s32.totalorder %v676, %v586
          %vm1743 = vcmp.eq.s32.totalorder %v680, %v551
          %vm1744 = vcmp.eq.s32.totalorder %v680, %v552
          %vm1745 = vcmp.eq.s32.totalorder %v680, %v585
          %vm1746 = vcmp.eq.s32.totalorder %v680, %v586
          %vm1747 = vcmp.eq.s32.totalorder %v684, %v551
          %vm1748 = vcmp.eq.s32.totalorder %v684, %v552
          %vm1749 = vcmp.eq.s32.totalorder %v684, %v585
          %vm1750 = vcmp.eq.s32.totalorder %v684, %v586
          %vm1751 = vcmp.eq.s32.totalorder %v688, %v551
          %vm1752 = vcmp.eq.s32.totalorder %v688, %v552
          %vm1753 = vcmp.eq.s32.totalorder %v688, %v585
          %vm1754 = vcmp.eq.s32.totalorder %v688, %v586
          %vm1755 = vcmp.eq.s32.totalorder %v692, %v551
          %vm1756 = vcmp.eq.s32.totalorder %v692, %v552
          %vm1757 = vcmp.eq.s32.totalorder %v692, %v585
          %vm1758 = vcmp.eq.s32.totalorder %v692, %v586
          %vm1759 = vcmp.eq.s32.totalorder %v696, %v551
          %vm1760 = vcmp.eq.s32.totalorder %v696, %v552
          %vm1761 = vcmp.eq.s32.totalorder %v696, %v585
          %vm1762 = vcmp.eq.s32.totalorder %v696, %v586
          %vm1763 = vcmp.eq.s32.totalorder %v700, %v551
          %vm1764 = vcmp.eq.s32.totalorder %v700, %v552
          %vm1765 = vcmp.eq.s32.totalorder %v700, %v585
          %vm1766 = vcmp.eq.s32.totalorder %v700, %v586
          %vm1767 = vcmp.eq.s32.totalorder %v704, %v551
          %vm1768 = vcmp.eq.s32.totalorder %v704, %v552
          %vm1769 = vcmp.eq.s32.totalorder %v704, %v585
          %vm1770 = vcmp.eq.s32.totalorder %v704, %v586
          %vm1771 = vcmp.eq.s32.totalorder %v708, %v551
          %vm1772 = vcmp.eq.s32.totalorder %v708, %v552
          %vm1773 = vcmp.eq.s32.totalorder %v708, %v585
          %vm1774 = vcmp.eq.s32.totalorder %v708, %v586
          %vm1775 = vcmp.eq.s32.totalorder %v712, %v551
          %vm1776 = vcmp.eq.s32.totalorder %v712, %v552
          %vm1777 = vcmp.eq.s32.totalorder %v712, %v585
          %vm1778 = vcmp.eq.s32.totalorder %v712, %v586
          %vm1779 = vcmp.eq.s32.totalorder %v716, %v551
          %vm1780 = vcmp.eq.s32.totalorder %v716, %v552
          %vm1781 = vcmp.eq.s32.totalorder %v716, %v585
          %vm1782 = vcmp.eq.s32.totalorder %v716, %v586
          %vm1783 = vcmp.eq.s32.totalorder %v720, %v551
          %vm1784 = vcmp.eq.s32.totalorder %v720, %v552
          %vm1785 = vcmp.eq.s32.totalorder %v720, %v585
          %vm1786 = vcmp.eq.s32.totalorder %v720, %v586
          %vm1787 = vcmp.eq.s32.totalorder %v727, %v551
          %vm1788 = vcmp.eq.s32.totalorder %v727, %v552
          %vm1789 = vcmp.eq.s32.totalorder %v727, %v585
          %vm1790 = vcmp.eq.s32.totalorder %v727, %v586
          %vm1791 = vcmp.eq.s32.totalorder %v731, %v551
          %vm1792 = vcmp.eq.s32.totalorder %v731, %v552
          %vm1793 = vcmp.eq.s32.totalorder %v731, %v585
          %vm1794 = vcmp.eq.s32.totalorder %v731, %v586
          %vm1795 = vcmp.eq.s32.totalorder %v735, %v551
          %vm1796 = vcmp.eq.s32.totalorder %v735, %v552
          %vm1797 = vcmp.eq.s32.totalorder %v735, %v585
          %vm1798 = vcmp.eq.s32.totalorder %v735, %v586
          %vm1799 = vcmp.eq.s32.totalorder %v739, %v551
          %vm1800 = vcmp.eq.s32.totalorder %v739, %v552
          %vm1801 = vcmp.eq.s32.totalorder %v739, %v585
          %vm1802 = vcmp.eq.s32.totalorder %v739, %v586
          %vm1803 = vcmp.eq.s32.totalorder %v743, %v551
          %vm1804 = vcmp.eq.s32.totalorder %v743, %v552
          %vm1805 = vcmp.eq.s32.totalorder %v743, %v585
          %vm1806 = vcmp.eq.s32.totalorder %v743, %v586
          %vm1807 = vcmp.eq.s32.totalorder %v747, %v551
          %vm1808 = vcmp.eq.s32.totalorder %v747, %v552
          %vm1809 = vcmp.eq.s32.totalorder %v747, %v585
          %vm1810 = vcmp.eq.s32.totalorder %v747, %v586
          %vm1811 = vcmp.eq.s32.totalorder %v751, %v551
          %vm1812 = vcmp.eq.s32.totalorder %v751, %v552
          %vm1813 = vcmp.eq.s32.totalorder %v751, %v585
          %vm1814 = vcmp.eq.s32.totalorder %v751, %v586
          %vm1815 = vcmp.eq.s32.totalorder %v755, %v551
          %vm1816 = vcmp.eq.s32.totalorder %v755, %v552
          %vm1817 = vcmp.eq.s32.totalorder %v755, %v585
          %vm1818 = vcmp.eq.s32.totalorder %v755, %v586
          %vm1819 = vcmp.eq.s32.totalorder %v759, %v551
          %vm1820 = vcmp.eq.s32.totalorder %v759, %v552
          %vm1821 = vcmp.eq.s32.totalorder %v759, %v585
          %vm1822 = vcmp.eq.s32.totalorder %v759, %v586
          %vm1823 = vcmp.eq.s32.totalorder %v763, %v551
          %vm1824 = vcmp.eq.s32.totalorder %v763, %v552
          %vm1825 = vcmp.eq.s32.totalorder %v763, %v585
          %vm1826 = vcmp.eq.s32.totalorder %v763, %v586
          %vm1827 = vcmp.eq.s32.totalorder %v767, %v551
          %vm1828 = vcmp.eq.s32.totalorder %v767, %v552
          %vm1829 = vcmp.eq.s32.totalorder %v767, %v585
          %vm1830 = vcmp.eq.s32.totalorder %v767, %v586
          %vm1831 = vcmp.eq.s32.totalorder %v771, %v551
          %vm1832 = vcmp.eq.s32.totalorder %v771, %v552
          %vm1833 = vcmp.eq.s32.totalorder %v771, %v585
          %vm1834 = vcmp.eq.s32.totalorder %v771, %v586
          %vm1835 = vcmp.eq.s32.totalorder %v775, %v551
          %vm1836 = vcmp.eq.s32.totalorder %v775, %v552
          %vm1837 = vcmp.eq.s32.totalorder %v775, %v585
          %vm1838 = vcmp.eq.s32.totalorder %v775, %v586
          %vm1839 = vcmp.eq.s32.totalorder %v779, %v551
          %vm1840 = vcmp.eq.s32.totalorder %v779, %v552
          %vm1841 = vcmp.eq.s32.totalorder %v779, %v585
          %vm1842 = vcmp.eq.s32.totalorder %v779, %v586
          %vm1843 = vcmp.eq.s32.totalorder %v783, %v551
          %vm1844 = vcmp.eq.s32.totalorder %v783, %v552
          %vm1845 = vcmp.eq.s32.totalorder %v783, %v585
          %vm1846 = vcmp.eq.s32.totalorder %v783, %v586
          %vm1847 = vcmp.eq.s32.totalorder %v787, %v551
          %vm1848 = vcmp.eq.s32.totalorder %v787, %v552
          %vm1849 = vcmp.eq.s32.totalorder %v787, %v585
          %vm1850 = vcmp.eq.s32.totalorder %v787, %v586
          %vm1851 = vcmp.eq.s32.totalorder %v794, %v551
          %vm1852 = vcmp.eq.s32.totalorder %v794, %v552
          %vm1853 = vcmp.eq.s32.totalorder %v794, %v585
          %vm1854 = vcmp.eq.s32.totalorder %v794, %v586
          %vm1855 = vcmp.eq.s32.totalorder %v798, %v551
          %vm1856 = vcmp.eq.s32.totalorder %v798, %v552
          %vm1857 = vcmp.eq.s32.totalorder %v798, %v585
          %vm1858 = vcmp.eq.s32.totalorder %v798, %v586
          %vm1859 = vcmp.eq.s32.totalorder %v802, %v551
          %vm1860 = vcmp.eq.s32.totalorder %v802, %v552
          %vm1861 = vcmp.eq.s32.totalorder %v802, %v585
          %vm1862 = vcmp.eq.s32.totalorder %v802, %v586
          %vm1863 = vcmp.eq.s32.totalorder %v806, %v551
          %vm1864 = vcmp.eq.s32.totalorder %v806, %v552
          %vm1865 = vcmp.eq.s32.totalorder %v806, %v585
          %vm1866 = vcmp.eq.s32.totalorder %v806, %v586
          %vm1867 = vcmp.eq.s32.totalorder %v810, %v551
          %vm1868 = vcmp.eq.s32.totalorder %v810, %v552
          %vm1869 = vcmp.eq.s32.totalorder %v810, %v585
          %vm1870 = vcmp.eq.s32.totalorder %v810, %v586
          %vm1871 = vcmp.eq.s32.totalorder %v814, %v551
          %vm1872 = vcmp.eq.s32.totalorder %v814, %v552
          %vm1873 = vcmp.eq.s32.totalorder %v814, %v585
          %vm1874 = vcmp.eq.s32.totalorder %v814, %v586
          %vm1875 = vcmp.eq.s32.totalorder %v818, %v551
          %vm1876 = vcmp.eq.s32.totalorder %v818, %v552
          %vm1877 = vcmp.eq.s32.totalorder %v818, %v585
          %vm1878 = vcmp.eq.s32.totalorder %v818, %v586
          %vm1879 = vcmp.eq.s32.totalorder %v822, %v551
          %vm1880 = vcmp.eq.s32.totalorder %v822, %v552
          %vm1881 = vcmp.eq.s32.totalorder %v822, %v585
          %vm1882 = vcmp.eq.s32.totalorder %v822, %v586
          %vm1883 = vcmp.eq.s32.totalorder %v826, %v551
          %vm1884 = vcmp.eq.s32.totalorder %v826, %v552
          %vm1885 = vcmp.eq.s32.totalorder %v826, %v585
          %vm1886 = vcmp.eq.s32.totalorder %v826, %v586
          %vm1887 = vcmp.eq.s32.totalorder %v830, %v551
          %vm1888 = vcmp.eq.s32.totalorder %v830, %v552
          %vm1889 = vcmp.eq.s32.totalorder %v830, %v585
          %vm1890 = vcmp.eq.s32.totalorder %v830, %v586
          %vm1891 = vcmp.eq.s32.totalorder %v834, %v551
          %vm1892 = vcmp.eq.s32.totalorder %v834, %v552
          %vm1893 = vcmp.eq.s32.totalorder %v834, %v585
          %vm1894 = vcmp.eq.s32.totalorder %v834, %v586
          %vm1895 = vcmp.eq.s32.totalorder %v838, %v551
          %vm1896 = vcmp.eq.s32.totalorder %v838, %v552
          %vm1897 = vcmp.eq.s32.totalorder %v838, %v585
          %vm1898 = vcmp.eq.s32.totalorder %v838, %v586
          %vm1899 = vcmp.eq.s32.totalorder %v842, %v551
          %vm1900 = vcmp.eq.s32.totalorder %v842, %v552
          %vm1901 = vcmp.eq.s32.totalorder %v842, %v585
          %vm1902 = vcmp.eq.s32.totalorder %v842, %v586
          %vm1903 = vcmp.eq.s32.totalorder %v846, %v551
          %vm1904 = vcmp.eq.s32.totalorder %v846, %v552
          %vm1905 = vcmp.eq.s32.totalorder %v846, %v585
          %vm1906 = vcmp.eq.s32.totalorder %v846, %v586
          %vm1907 = vcmp.eq.s32.totalorder %v850, %v551
          %vm1908 = vcmp.eq.s32.totalorder %v850, %v552
          %vm1909 = vcmp.eq.s32.totalorder %v850, %v585
          %vm1910 = vcmp.eq.s32.totalorder %v850, %v586
          %vm1911 = vcmp.eq.s32.totalorder %v854, %v551
          %vm1912 = vcmp.eq.s32.totalorder %v854, %v552
          %vm1913 = vcmp.eq.s32.totalorder %v854, %v585
          %vm1914 = vcmp.eq.s32.totalorder %v854, %v586
          %vm1915 = vcmp.eq.s32.totalorder %v861, %v551
          %vm1916 = vcmp.eq.s32.totalorder %v861, %v552
          %vm1917 = vcmp.eq.s32.totalorder %v861, %v585
          %vm1918 = vcmp.eq.s32.totalorder %v861, %v586
          %vm1919 = vcmp.eq.s32.totalorder %v865, %v551
          %vm1920 = vcmp.eq.s32.totalorder %v865, %v552
          %vm1921 = vcmp.eq.s32.totalorder %v865, %v585
          %vm1922 = vcmp.eq.s32.totalorder %v865, %v586
          %vm1923 = vcmp.eq.s32.totalorder %v869, %v551
          %vm1924 = vcmp.eq.s32.totalorder %v869, %v552
          %vm1925 = vcmp.eq.s32.totalorder %v869, %v585
          %vm1926 = vcmp.eq.s32.totalorder %v869, %v586
          %vm1927 = vcmp.eq.s32.totalorder %v873, %v551
          %vm1928 = vcmp.eq.s32.totalorder %v873, %v552
          %vm1929 = vcmp.eq.s32.totalorder %v873, %v585
          %vm1930 = vcmp.eq.s32.totalorder %v873, %v586
          %vm1931 = vcmp.eq.s32.totalorder %v877, %v551
          %vm1932 = vcmp.eq.s32.totalorder %v877, %v552
          %vm1933 = vcmp.eq.s32.totalorder %v877, %v585
          %vm1934 = vcmp.eq.s32.totalorder %v877, %v586
          %vm1935 = vcmp.eq.s32.totalorder %v881, %v551
          %vm1936 = vcmp.eq.s32.totalorder %v881, %v552
          %vm1937 = vcmp.eq.s32.totalorder %v881, %v585
          %vm1938 = vcmp.eq.s32.totalorder %v881, %v586
          %vm1939 = vcmp.eq.s32.totalorder %v885, %v551
          %vm1940 = vcmp.eq.s32.totalorder %v885, %v552
          %vm1941 = vcmp.eq.s32.totalorder %v885, %v585
          %vm1942 = vcmp.eq.s32.totalorder %v885, %v586
          %vm1943 = vcmp.eq.s32.totalorder %v889, %v551
          %vm1944 = vcmp.eq.s32.totalorder %v889, %v552
          %vm1945 = vcmp.eq.s32.totalorder %v889, %v585
          %vm1946 = vcmp.eq.s32.totalorder %v889, %v586
          %vm1947 = vcmp.eq.s32.totalorder %v893, %v551
          %vm1948 = vcmp.eq.s32.totalorder %v893, %v552
          %vm1949 = vcmp.eq.s32.totalorder %v893, %v585
          %vm1950 = vcmp.eq.s32.totalorder %v893, %v586
          %vm1951 = vcmp.eq.s32.totalorder %v897, %v551
          %vm1952 = vcmp.eq.s32.totalorder %v897, %v552
          %vm1953 = vcmp.eq.s32.totalorder %v897, %v585
          %vm1954 = vcmp.eq.s32.totalorder %v897, %v586
          %vm1955 = vcmp.eq.s32.totalorder %v901, %v551
          %vm1956 = vcmp.eq.s32.totalorder %v901, %v552
          %vm1957 = vcmp.eq.s32.totalorder %v901, %v585
          %vm1958 = vcmp.eq.s32.totalorder %v901, %v586
          %vm1959 = vcmp.eq.s32.totalorder %v905, %v551
          %vm1960 = vcmp.eq.s32.totalorder %v905, %v552
          %vm1961 = vcmp.eq.s32.totalorder %v905, %v585
          %vm1962 = vcmp.eq.s32.totalorder %v905, %v586
          %vm1963 = vcmp.eq.s32.totalorder %v909, %v551
          %vm1964 = vcmp.eq.s32.totalorder %v909, %v552
          %vm1965 = vcmp.eq.s32.totalorder %v909, %v585
          %vm1966 = vcmp.eq.s32.totalorder %v909, %v586
          %vm1967 = vcmp.eq.s32.totalorder %v913, %v551
          %vm1968 = vcmp.eq.s32.totalorder %v913, %v552
          %vm1969 = vcmp.eq.s32.totalorder %v913, %v585
          %vm1970 = vcmp.eq.s32.totalorder %v913, %v586
          %vm1971 = vcmp.eq.s32.totalorder %v917, %v551
          %vm1972 = vcmp.eq.s32.totalorder %v917, %v552
          %vm1973 = vcmp.eq.s32.totalorder %v917, %v585
          %vm1974 = vcmp.eq.s32.totalorder %v917, %v586
          %vm1975 = vcmp.eq.s32.totalorder %v921, %v551
          %vm1976 = vcmp.eq.s32.totalorder %v921, %v552
          %vm1977 = vcmp.eq.s32.totalorder %v921, %v585
          %vm1978 = vcmp.eq.s32.totalorder %v921, %v586
          %vm1979 = vcmp.eq.s32.totalorder %v928, %v551
          %vm1980 = vcmp.eq.s32.totalorder %v928, %v552
          %vm1981 = vcmp.eq.s32.totalorder %v928, %v585
          %vm1982 = vcmp.eq.s32.totalorder %v928, %v586
          %vm1983 = vcmp.eq.s32.totalorder %v932, %v551
          %vm1984 = vcmp.eq.s32.totalorder %v932, %v552
          %vm1985 = vcmp.eq.s32.totalorder %v932, %v585
          %vm1986 = vcmp.eq.s32.totalorder %v932, %v586
          %vm1987 = vcmp.eq.s32.totalorder %v936, %v551
          %vm1988 = vcmp.eq.s32.totalorder %v936, %v552
          %vm1989 = vcmp.eq.s32.totalorder %v936, %v585
          %vm1990 = vcmp.eq.s32.totalorder %v936, %v586
          %vm1991 = vcmp.eq.s32.totalorder %v940, %v551
          %vm1992 = vcmp.eq.s32.totalorder %v940, %v552
          %vm1993 = vcmp.eq.s32.totalorder %v940, %v585
          %vm1994 = vcmp.eq.s32.totalorder %v940, %v586
          %vm1995 = vcmp.eq.s32.totalorder %v944, %v551
          %vm1996 = vcmp.eq.s32.totalorder %v944, %v552
          %vm1997 = vcmp.eq.s32.totalorder %v944, %v585
          %vm1998 = vcmp.eq.s32.totalorder %v944, %v586
          %vm1999 = vcmp.eq.s32.totalorder %v948, %v551
          %vm2000 = vcmp.eq.s32.totalorder %v948, %v552
          %vm2001 = vcmp.eq.s32.totalorder %v948, %v585
          %vm2002 = vcmp.eq.s32.totalorder %v948, %v586
          %vm2003 = vcmp.eq.s32.totalorder %v952, %v551
          %vm2004 = vcmp.eq.s32.totalorder %v952, %v552
          %vm2005 = vcmp.eq.s32.totalorder %v952, %v585
          %vm2006 = vcmp.eq.s32.totalorder %v952, %v586
          %vm2007 = vcmp.eq.s32.totalorder %v956, %v551
          %vm2008 = vcmp.eq.s32.totalorder %v956, %v552
          %vm2009 = vcmp.eq.s32.totalorder %v956, %v585
          %vm2010 = vcmp.eq.s32.totalorder %v956, %v586
          %vm2011 = vcmp.eq.s32.totalorder %v960, %v551
          %vm2012 = vcmp.eq.s32.totalorder %v960, %v552
          %vm2013 = vcmp.eq.s32.totalorder %v960, %v585
          %vm2014 = vcmp.eq.s32.totalorder %v960, %v586
          %vm2015 = vcmp.eq.s32.totalorder %v964, %v551
          %vm2016 = vcmp.eq.s32.totalorder %v964, %v552
          %vm2017 = vcmp.eq.s32.totalorder %v964, %v585
          %vm2018 = vcmp.eq.s32.totalorder %v964, %v586
          %vm2019 = vcmp.eq.s32.totalorder %v968, %v551
          %vm2020 = vcmp.eq.s32.totalorder %v968, %v552
          %vm2021 = vcmp.eq.s32.totalorder %v968, %v585
          %vm2022 = vcmp.eq.s32.totalorder %v968, %v586
          %vm2023 = vcmp.eq.s32.totalorder %v972, %v551
          %vm2024 = vcmp.eq.s32.totalorder %v972, %v552
          %vm2025 = vcmp.eq.s32.totalorder %v972, %v585
          %vm2026 = vcmp.eq.s32.totalorder %v972, %v586
          %vm2027 = vcmp.eq.s32.totalorder %v976, %v551
          %vm2028 = vcmp.eq.s32.totalorder %v976, %v552
          %vm2029 = vcmp.eq.s32.totalorder %v976, %v585
          %vm2030 = vcmp.eq.s32.totalorder %v976, %v586
          %vm2031 = vcmp.eq.s32.totalorder %v980, %v551
          %vm2032 = vcmp.eq.s32.totalorder %v980, %v552
          %vm2033 = vcmp.eq.s32.totalorder %v980, %v585
          %vm2034 = vcmp.eq.s32.totalorder %v980, %v586
          %vm2035 = vcmp.eq.s32.totalorder %v984, %v551
          %vm2036 = vcmp.eq.s32.totalorder %v984, %v552
          %vm2037 = vcmp.eq.s32.totalorder %v984, %v585
          %vm2038 = vcmp.eq.s32.totalorder %v984, %v586
          %vm2039 = vcmp.eq.s32.totalorder %v988, %v551
          %vm2040 = vcmp.eq.s32.totalorder %v988, %v552
          %vm2041 = vcmp.eq.s32.totalorder %v988, %v585
          %vm2042 = vcmp.eq.s32.totalorder %v988, %v586
          %vm2043 = vcmp.eq.s32.totalorder %v995, %v551
          %vm2044 = vcmp.eq.s32.totalorder %v995, %v552
          %vm2045 = vcmp.eq.s32.totalorder %v995, %v585
          %vm2046 = vcmp.eq.s32.totalorder %v995, %v586
          %vm2047 = vcmp.eq.s32.totalorder %v999, %v551
          %vm2048 = vcmp.eq.s32.totalorder %v999, %v552
          %vm2049 = vcmp.eq.s32.totalorder %v999, %v585
          %vm2050 = vcmp.eq.s32.totalorder %v999, %v586
          %vm2051 = vcmp.eq.s32.totalorder %v1003, %v551
          %vm2052 = vcmp.eq.s32.totalorder %v1003, %v552
          %vm2053 = vcmp.eq.s32.totalorder %v1003, %v585
          %vm2054 = vcmp.eq.s32.totalorder %v1003, %v586
          %vm2055 = vcmp.eq.s32.totalorder %v1007, %v551
          %vm2056 = vcmp.eq.s32.totalorder %v1007, %v552
          %vm2057 = vcmp.eq.s32.totalorder %v1007, %v585
          %vm2058 = vcmp.eq.s32.totalorder %v1007, %v586
          %vm2059 = vcmp.eq.s32.totalorder %v1011, %v551
          %vm2060 = vcmp.eq.s32.totalorder %v1011, %v552
          %vm2061 = vcmp.eq.s32.totalorder %v1011, %v585
          %vm2062 = vcmp.eq.s32.totalorder %v1011, %v586
          %vm2063 = vcmp.eq.s32.totalorder %v1015, %v551
          %vm2064 = vcmp.eq.s32.totalorder %v1015, %v552
          %vm2065 = vcmp.eq.s32.totalorder %v1015, %v585
          %vm2066 = vcmp.eq.s32.totalorder %v1015, %v586
          %vm2067 = vcmp.eq.s32.totalorder %v1019, %v551
          %vm2068 = vcmp.eq.s32.totalorder %v1019, %v552
          %vm2069 = vcmp.eq.s32.totalorder %v1019, %v585
          %vm2070 = vcmp.eq.s32.totalorder %v1019, %v586
          %vm2071 = vcmp.eq.s32.totalorder %v1023, %v551
          %vm2072 = vcmp.eq.s32.totalorder %v1023, %v552
          %vm2073 = vcmp.eq.s32.totalorder %v1023, %v585
          %vm2074 = vcmp.eq.s32.totalorder %v1023, %v586
          %vm2075 = vcmp.eq.s32.totalorder %v1027, %v551
          %vm2076 = vcmp.eq.s32.totalorder %v1027, %v552
          %vm2077 = vcmp.eq.s32.totalorder %v1027, %v585
          %vm2078 = vcmp.eq.s32.totalorder %v1027, %v586
          %vm2079 = vcmp.eq.s32.totalorder %v1031, %v551
          %vm2080 = vcmp.eq.s32.totalorder %v1031, %v552
          %vm2081 = vcmp.eq.s32.totalorder %v1031, %v585
          %vm2082 = vcmp.eq.s32.totalorder %v1031, %v586
          %vm2083 = vcmp.eq.s32.totalorder %v1035, %v551
          %vm2084 = vcmp.eq.s32.totalorder %v1035, %v552
          %vm2085 = vcmp.eq.s32.totalorder %v1035, %v585
          %vm2086 = vcmp.eq.s32.totalorder %v1035, %v586
          %vm2087 = vcmp.eq.s32.totalorder %v1039, %v551
          %vm2088 = vcmp.eq.s32.totalorder %v1039, %v552
          %vm2089 = vcmp.eq.s32.totalorder %v1039, %v585
          %vm2090 = vcmp.eq.s32.totalorder %v1039, %v586
          %vm2091 = vcmp.eq.s32.totalorder %v1043, %v551
          %vm2092 = vcmp.eq.s32.totalorder %v1043, %v552
          %vm2093 = vcmp.eq.s32.totalorder %v1043, %v585
          %vm2094 = vcmp.eq.s32.totalorder %v1043, %v586
          %vm2095 = vcmp.eq.s32.totalorder %v1047, %v551
          %vm2096 = vcmp.eq.s32.totalorder %v1047, %v552
          %vm2097 = vcmp.eq.s32.totalorder %v1047, %v585
          %vm2098 = vcmp.eq.s32.totalorder %v1047, %v586
          %vm2099 = vcmp.eq.s32.totalorder %v1051, %v551
          %vm2100 = vcmp.eq.s32.totalorder %v1051, %v552
          %vm2101 = vcmp.eq.s32.totalorder %v1051, %v585
          %vm2102 = vcmp.eq.s32.totalorder %v1051, %v586
          %vm2103 = vcmp.eq.s32.totalorder %v1055, %v551
          %vm2104 = vcmp.eq.s32.totalorder %v1055, %v552
          %vm2105 = vcmp.eq.s32.totalorder %v1055, %v585
          %vm2106 = vcmp.eq.s32.totalorder %v1055, %v586
          %vm2107 = vcmp.eq.s32.totalorder %v1062, %v551
          %vm2108 = vcmp.eq.s32.totalorder %v1062, %v552
          %vm2109 = vcmp.eq.s32.totalorder %v1062, %v585
          %vm2110 = vcmp.eq.s32.totalorder %v1062, %v586
          %vm2111 = vcmp.eq.s32.totalorder %v1066, %v551
          %vm2112 = vcmp.eq.s32.totalorder %v1066, %v552
          %vm2113 = vcmp.eq.s32.totalorder %v1066, %v585
          %vm2114 = vcmp.eq.s32.totalorder %v1066, %v586
          %vm2115 = vcmp.eq.s32.totalorder %v1070, %v551
          %vm2116 = vcmp.eq.s32.totalorder %v1070, %v552
          %vm2117 = vcmp.eq.s32.totalorder %v1070, %v585
          %vm2118 = vcmp.eq.s32.totalorder %v1070, %v586
          %vm2119 = vcmp.eq.s32.totalorder %v1074, %v551
          %vm2120 = vcmp.eq.s32.totalorder %v1074, %v552
          %vm2121 = vcmp.eq.s32.totalorder %v1074, %v585
          %vm2122 = vcmp.eq.s32.totalorder %v1074, %v586
          %vm2123 = vcmp.eq.s32.totalorder %v1078, %v551
          %vm2124 = vcmp.eq.s32.totalorder %v1078, %v552
          %vm2125 = vcmp.eq.s32.totalorder %v1078, %v585
          %vm2126 = vcmp.eq.s32.totalorder %v1078, %v586
          %vm2127 = vcmp.eq.s32.totalorder %v1082, %v551
          %vm2128 = vcmp.eq.s32.totalorder %v1082, %v552
          %vm2129 = vcmp.eq.s32.totalorder %v1082, %v585
          %vm2130 = vcmp.eq.s32.totalorder %v1082, %v586
          %vm2131 = vcmp.eq.s32.totalorder %v1086, %v551
          %vm2132 = vcmp.eq.s32.totalorder %v1086, %v552
          %vm2133 = vcmp.eq.s32.totalorder %v1086, %v585
          %vm2134 = vcmp.eq.s32.totalorder %v1086, %v586
          %vm2135 = vcmp.eq.s32.totalorder %v1090, %v551
          %vm2136 = vcmp.eq.s32.totalorder %v1090, %v552
          %vm2137 = vcmp.eq.s32.totalorder %v1090, %v585
          %vm2138 = vcmp.eq.s32.totalorder %v1090, %v586
          %vm2139 = vcmp.eq.s32.totalorder %v1094, %v551
          %vm2140 = vcmp.eq.s32.totalorder %v1094, %v552
          %vm2141 = vcmp.eq.s32.totalorder %v1094, %v585
          %vm2142 = vcmp.eq.s32.totalorder %v1094, %v586
          %vm2143 = vcmp.eq.s32.totalorder %v1098, %v551
          %vm2144 = vcmp.eq.s32.totalorder %v1098, %v552
          %vm2145 = vcmp.eq.s32.totalorder %v1098, %v585
          %vm2146 = vcmp.eq.s32.totalorder %v1098, %v586
          %vm2147 = vcmp.eq.s32.totalorder %v1102, %v551
          %vm2148 = vcmp.eq.s32.totalorder %v1102, %v552
          %vm2149 = vcmp.eq.s32.totalorder %v1102, %v585
          %vm2150 = vcmp.eq.s32.totalorder %v1102, %v586
          %vm2151 = vcmp.eq.s32.totalorder %v1106, %v551
          %vm2152 = vcmp.eq.s32.totalorder %v1106, %v552
          %vm2153 = vcmp.eq.s32.totalorder %v1106, %v585
          %vm2154 = vcmp.eq.s32.totalorder %v1106, %v586
          %vm2155 = vcmp.eq.s32.totalorder %v1110, %v551
          %vm2156 = vcmp.eq.s32.totalorder %v1110, %v552
          %vm2157 = vcmp.eq.s32.totalorder %v1110, %v585
          %vm2158 = vcmp.eq.s32.totalorder %v1110, %v586
          %vm2159 = vcmp.eq.s32.totalorder %v1114, %v551
          %vm2160 = vcmp.eq.s32.totalorder %v1114, %v552
          %vm2161 = vcmp.eq.s32.totalorder %v1114, %v585
          %vm2162 = vcmp.eq.s32.totalorder %v1114, %v586
          %vm2163 = vcmp.eq.s32.totalorder %v1118, %v551
          %vm2164 = vcmp.eq.s32.totalorder %v1118, %v552
          %vm2165 = vcmp.eq.s32.totalorder %v1118, %v585
          %vm2166 = vcmp.eq.s32.totalorder %v1118, %v586
          %vm2167 = vcmp.eq.s32.totalorder %v1122, %v551
          %vm2168 = vcmp.eq.s32.totalorder %v1122, %v552
          %vm2169 = vcmp.eq.s32.totalorder %v1122, %v585
          %vm2170 = vcmp.eq.s32.totalorder %v1122, %v586
          %vm2171 = vcmp.eq.s32.totalorder %v1129, %v551
          %vm2172 = vcmp.eq.s32.totalorder %v1129, %v552
          %vm2173 = vcmp.eq.s32.totalorder %v1129, %v585
          %vm2174 = vcmp.eq.s32.totalorder %v1129, %v586
          %vm2175 = vcmp.eq.s32.totalorder %v1133, %v551
          %vm2176 = vcmp.eq.s32.totalorder %v1133, %v552
          %vm2177 = vcmp.eq.s32.totalorder %v1133, %v585
          %vm2178 = vcmp.eq.s32.totalorder %v1133, %v586
          %vm2179 = vcmp.eq.s32.totalorder %v1137, %v551
          %vm2180 = vcmp.eq.s32.totalorder %v1137, %v552
          %vm2181 = vcmp.eq.s32.totalorder %v1137, %v585
          %vm2182 = vcmp.eq.s32.totalorder %v1137, %v586
          %vm2183 = vcmp.eq.s32.totalorder %v1141, %v551
          %vm2184 = vcmp.eq.s32.totalorder %v1141, %v552
          %vm2185 = vcmp.eq.s32.totalorder %v1141, %v585
          %vm2186 = vcmp.eq.s32.totalorder %v1141, %v586
          %vm2187 = vcmp.eq.s32.totalorder %v1145, %v551
          %vm2188 = vcmp.eq.s32.totalorder %v1145, %v552
          %vm2189 = vcmp.eq.s32.totalorder %v1145, %v585
          %vm2190 = vcmp.eq.s32.totalorder %v1145, %v586
          %vm2191 = vcmp.eq.s32.totalorder %v1149, %v551
          %vm2192 = vcmp.eq.s32.totalorder %v1149, %v552
          %vm2193 = vcmp.eq.s32.totalorder %v1149, %v585
          %vm2194 = vcmp.eq.s32.totalorder %v1149, %v586
          %vm2195 = vcmp.eq.s32.totalorder %v1153, %v551
          %vm2196 = vcmp.eq.s32.totalorder %v1153, %v552
          %vm2197 = vcmp.eq.s32.totalorder %v1153, %v585
          %vm2198 = vcmp.eq.s32.totalorder %v1153, %v586
          %vm2199 = vcmp.eq.s32.totalorder %v1157, %v551
          %vm2200 = vcmp.eq.s32.totalorder %v1157, %v552
          %vm2201 = vcmp.eq.s32.totalorder %v1157, %v585
          %vm2202 = vcmp.eq.s32.totalorder %v1157, %v586
          %vm2203 = vcmp.eq.s32.totalorder %v1161, %v551
          %vm2204 = vcmp.eq.s32.totalorder %v1161, %v552
          %vm2205 = vcmp.eq.s32.totalorder %v1161, %v585
          %vm2206 = vcmp.eq.s32.totalorder %v1161, %v586
          %vm2207 = vcmp.eq.s32.totalorder %v1165, %v551
          %vm2208 = vcmp.eq.s32.totalorder %v1165, %v552
          %vm2209 = vcmp.eq.s32.totalorder %v1165, %v585
          %vm2210 = vcmp.eq.s32.totalorder %v1165, %v586
          %vm2211 = vcmp.eq.s32.totalorder %v1169, %v551
          %vm2212 = vcmp.eq.s32.totalorder %v1169, %v552
          %vm2213 = vcmp.eq.s32.totalorder %v1169, %v585
          %vm2214 = vcmp.eq.s32.totalorder %v1169, %v586
          %vm2215 = vcmp.eq.s32.totalorder %v1173, %v551
          %vm2216 = vcmp.eq.s32.totalorder %v1173, %v552
          %vm2217 = vcmp.eq.s32.totalorder %v1173, %v585
          %vm2218 = vcmp.eq.s32.totalorder %v1173, %v586
          %vm2219 = vcmp.eq.s32.totalorder %v1177, %v551
          %vm2220 = vcmp.eq.s32.totalorder %v1177, %v552
          %vm2221 = vcmp.eq.s32.totalorder %v1177, %v585
          %vm2222 = vcmp.eq.s32.totalorder %v1177, %v586
          %vm2223 = vcmp.eq.s32.totalorder %v1181, %v551
          %vm2224 = vcmp.eq.s32.totalorder %v1181, %v552
          %vm2225 = vcmp.eq.s32.totalorder %v1181, %v585
          %vm2226 = vcmp.eq.s32.totalorder %v1181, %v586
          %vm2227 = vcmp.eq.s32.totalorder %v1185, %v551
          %vm2228 = vcmp.eq.s32.totalorder %v1185, %v552
          %vm2229 = vcmp.eq.s32.totalorder %v1185, %v585
          %vm2230 = vcmp.eq.s32.totalorder %v1185, %v586
          %vm2231 = vcmp.eq.s32.totalorder %v1189, %v551
          %vm2232 = vcmp.eq.s32.totalorder %v1189, %v552
          %vm2233 = vcmp.eq.s32.totalorder %v1189, %v585
          %vm2234 = vcmp.eq.s32.totalorder %v1189, %v586
          %vm2235 = vcmp.eq.s32.totalorder %v1196, %v551
          %vm2236 = vcmp.eq.s32.totalorder %v1196, %v552
          %vm2237 = vcmp.eq.s32.totalorder %v1196, %v585
          %vm2238 = vcmp.eq.s32.totalorder %v1196, %v586
          %vm2239 = vcmp.eq.s32.totalorder %v1200, %v551
          %vm2240 = vcmp.eq.s32.totalorder %v1200, %v552
          %vm2241 = vcmp.eq.s32.totalorder %v1200, %v585
          %vm2242 = vcmp.eq.s32.totalorder %v1200, %v586
          %vm2243 = vcmp.eq.s32.totalorder %v1204, %v551
          %vm2244 = vcmp.eq.s32.totalorder %v1204, %v552
          %vm2245 = vcmp.eq.s32.totalorder %v1204, %v585
          %vm2246 = vcmp.eq.s32.totalorder %v1204, %v586
          %vm2247 = vcmp.eq.s32.totalorder %v1208, %v551
          %vm2248 = vcmp.eq.s32.totalorder %v1208, %v552
          %vm2249 = vcmp.eq.s32.totalorder %v1208, %v585
          %vm2250 = vcmp.eq.s32.totalorder %v1208, %v586
          %vm2251 = vcmp.eq.s32.totalorder %v1212, %v551
          %vm2252 = vcmp.eq.s32.totalorder %v1212, %v552
          %vm2253 = vcmp.eq.s32.totalorder %v1212, %v585
          %vm2254 = vcmp.eq.s32.totalorder %v1212, %v586
          %vm2255 = vcmp.eq.s32.totalorder %v1216, %v551
          %vm2256 = vcmp.eq.s32.totalorder %v1216, %v552
          %vm2257 = vcmp.eq.s32.totalorder %v1216, %v585
          %vm2258 = vcmp.eq.s32.totalorder %v1216, %v586
          %vm2259 = vcmp.eq.s32.totalorder %v1220, %v551
          %vm2260 = vcmp.eq.s32.totalorder %v1220, %v552
          %vm2261 = vcmp.eq.s32.totalorder %v1220, %v585
          %vm2262 = vcmp.eq.s32.totalorder %v1220, %v586
          %vm2263 = vcmp.eq.s32.totalorder %v1224, %v551
          %vm2264 = vcmp.eq.s32.totalorder %v1224, %v552
          %vm2265 = vcmp.eq.s32.totalorder %v1224, %v585
          %vm2266 = vcmp.eq.s32.totalorder %v1224, %v586
          %vm2267 = vcmp.eq.s32.totalorder %v1228, %v551
          %vm2268 = vcmp.eq.s32.totalorder %v1228, %v552
          %vm2269 = vcmp.eq.s32.totalorder %v1228, %v585
          %vm2270 = vcmp.eq.s32.totalorder %v1228, %v586
          %vm2271 = vcmp.eq.s32.totalorder %v1232, %v551
          %vm2272 = vcmp.eq.s32.totalorder %v1232, %v552
          %vm2273 = vcmp.eq.s32.totalorder %v1232, %v585
          %vm2274 = vcmp.eq.s32.totalorder %v1232, %v586
          %vm2275 = vcmp.eq.s32.totalorder %v1236, %v551
          %vm2276 = vcmp.eq.s32.totalorder %v1236, %v552
          %vm2277 = vcmp.eq.s32.totalorder %v1236, %v585
          %vm2278 = vcmp.eq.s32.totalorder %v1236, %v586
          %vm2279 = vcmp.eq.s32.totalorder %v1240, %v551
          %vm2280 = vcmp.eq.s32.totalorder %v1240, %v552
          %vm2281 = vcmp.eq.s32.totalorder %v1240, %v585
          %vm2282 = vcmp.eq.s32.totalorder %v1240, %v586
          %vm2283 = vcmp.eq.s32.totalorder %v1244, %v551
          %vm2284 = vcmp.eq.s32.totalorder %v1244, %v552
          %vm2285 = vcmp.eq.s32.totalorder %v1244, %v585
          %vm2286 = vcmp.eq.s32.totalorder %v1244, %v586
          %vm2287 = vcmp.eq.s32.totalorder %v1248, %v551
          %vm2288 = vcmp.eq.s32.totalorder %v1248, %v552
          %vm2289 = vcmp.eq.s32.totalorder %v1248, %v585
          %vm2290 = vcmp.eq.s32.totalorder %v1248, %v586
          %vm2291 = vcmp.eq.s32.totalorder %v1252, %v551
          %vm2292 = vcmp.eq.s32.totalorder %v1252, %v552
          %vm2293 = vcmp.eq.s32.totalorder %v1252, %v585
          %vm2294 = vcmp.eq.s32.totalorder %v1252, %v586
          %vm2295 = vcmp.eq.s32.totalorder %v1256, %v551
          %vm2296 = vcmp.eq.s32.totalorder %v1256, %v552
          %vm2297 = vcmp.eq.s32.totalorder %v1256, %v585
          %vm2298 = vcmp.eq.s32.totalorder %v1256, %v586
          %vm2299 = vcmp.eq.s32.totalorder %v1263, %v551
          %vm2300 = vcmp.eq.s32.totalorder %v1263, %v552
          %vm2301 = vcmp.eq.s32.totalorder %v1263, %v585
          %vm2302 = vcmp.eq.s32.totalorder %v1263, %v586
          %vm2303 = vcmp.eq.s32.totalorder %v1267, %v551
          %vm2304 = vcmp.eq.s32.totalorder %v1267, %v552
          %vm2305 = vcmp.eq.s32.totalorder %v1267, %v585
          %vm2306 = vcmp.eq.s32.totalorder %v1267, %v586
          %vm2307 = vcmp.eq.s32.totalorder %v1271, %v551
          %vm2308 = vcmp.eq.s32.totalorder %v1271, %v552
          %vm2309 = vcmp.eq.s32.totalorder %v1271, %v585
          %vm2310 = vcmp.eq.s32.totalorder %v1271, %v586
          %vm2311 = vcmp.eq.s32.totalorder %v1275, %v551
          %vm2312 = vcmp.eq.s32.totalorder %v1275, %v552
          %vm2313 = vcmp.eq.s32.totalorder %v1275, %v585
          %vm2314 = vcmp.eq.s32.totalorder %v1275, %v586
          %vm2315 = vcmp.eq.s32.totalorder %v1279, %v551
          %vm2316 = vcmp.eq.s32.totalorder %v1279, %v552
          %vm2317 = vcmp.eq.s32.totalorder %v1279, %v585
          %vm2318 = vcmp.eq.s32.totalorder %v1279, %v586
          %vm2319 = vcmp.eq.s32.totalorder %v1283, %v551
          %vm2320 = vcmp.eq.s32.totalorder %v1283, %v552
          %vm2321 = vcmp.eq.s32.totalorder %v1283, %v585
          %vm2322 = vcmp.eq.s32.totalorder %v1283, %v586
          %vm2323 = vcmp.eq.s32.totalorder %v1287, %v551
          %vm2324 = vcmp.eq.s32.totalorder %v1287, %v552
          %vm2325 = vcmp.eq.s32.totalorder %v1287, %v585
          %vm2326 = vcmp.eq.s32.totalorder %v1287, %v586
          %vm2327 = vcmp.eq.s32.totalorder %v1291, %v551
          %vm2328 = vcmp.eq.s32.totalorder %v1291, %v552
          %vm2329 = vcmp.eq.s32.totalorder %v1291, %v585
          %vm2330 = vcmp.eq.s32.totalorder %v1291, %v586
          %vm2331 = vcmp.eq.s32.totalorder %v1295, %v551
          %vm2332 = vcmp.eq.s32.totalorder %v1295, %v552
          %vm2333 = vcmp.eq.s32.totalorder %v1295, %v585
          %vm2334 = vcmp.eq.s32.totalorder %v1295, %v586
          %vm2335 = vcmp.eq.s32.totalorder %v1299, %v551
          %vm2336 = vcmp.eq.s32.totalorder %v1299, %v552
          %vm2337 = vcmp.eq.s32.totalorder %v1299, %v585
          %vm2338 = vcmp.eq.s32.totalorder %v1299, %v586
          %vm2339 = vcmp.eq.s32.totalorder %v1303, %v551
          %vm2340 = vcmp.eq.s32.totalorder %v1303, %v552
          %vm2341 = vcmp.eq.s32.totalorder %v1303, %v585
          %vm2342 = vcmp.eq.s32.totalorder %v1303, %v586
          %vm2343 = vcmp.eq.s32.totalorder %v1307, %v551
          %vm2344 = vcmp.eq.s32.totalorder %v1307, %v552
          %vm2345 = vcmp.eq.s32.totalorder %v1307, %v585
          %vm2346 = vcmp.eq.s32.totalorder %v1307, %v586
          %vm2347 = vcmp.eq.s32.totalorder %v1311, %v551
          %vm2348 = vcmp.eq.s32.totalorder %v1311, %v552
          %vm2349 = vcmp.eq.s32.totalorder %v1311, %v585
          %vm2350 = vcmp.eq.s32.totalorder %v1311, %v586
          %vm2351 = vcmp.eq.s32.totalorder %v1315, %v551
          %vm2352 = vcmp.eq.s32.totalorder %v1315, %v552
          %vm2353 = vcmp.eq.s32.totalorder %v1315, %v585
          %vm2354 = vcmp.eq.s32.totalorder %v1315, %v586
          %vm2355 = vcmp.eq.s32.totalorder %v1319, %v551
          %vm2356 = vcmp.eq.s32.totalorder %v1319, %v552
          %vm2357 = vcmp.eq.s32.totalorder %v1319, %v585
          %vm2358 = vcmp.eq.s32.totalorder %v1319, %v586
          %vm2359 = vcmp.eq.s32.totalorder %v1323, %v551
          %vm2360 = vcmp.eq.s32.totalorder %v1323, %v552
          %vm2361 = vcmp.eq.s32.totalorder %v1323, %v585
          %vm2362 = vcmp.eq.s32.totalorder %v1323, %v586
          %vm2363 = vcmp.eq.s32.totalorder %v1330, %v551
          %vm2364 = vcmp.eq.s32.totalorder %v1330, %v552
          %vm2365 = vcmp.eq.s32.totalorder %v1330, %v585
          %vm2366 = vcmp.eq.s32.totalorder %v1330, %v586
          %vm2367 = vcmp.eq.s32.totalorder %v1334, %v551
          %vm2368 = vcmp.eq.s32.totalorder %v1334, %v552
          %vm2369 = vcmp.eq.s32.totalorder %v1334, %v585
          %vm2370 = vcmp.eq.s32.totalorder %v1334, %v586
          %vm2371 = vcmp.eq.s32.totalorder %v1338, %v551
          %vm2372 = vcmp.eq.s32.totalorder %v1338, %v552
          %vm2373 = vcmp.eq.s32.totalorder %v1338, %v585
          %vm2374 = vcmp.eq.s32.totalorder %v1338, %v586
          %vm2375 = vcmp.eq.s32.totalorder %v1342, %v551
          %vm2376 = vcmp.eq.s32.totalorder %v1342, %v552
          %vm2377 = vcmp.eq.s32.totalorder %v1342, %v585
          %vm2378 = vcmp.eq.s32.totalorder %v1342, %v586
          %vm2379 = vcmp.eq.s32.totalorder %v1346, %v551
          %vm2380 = vcmp.eq.s32.totalorder %v1346, %v552
          %vm2381 = vcmp.eq.s32.totalorder %v1346, %v585
          %vm2382 = vcmp.eq.s32.totalorder %v1346, %v586
          %vm2383 = vcmp.eq.s32.totalorder %v1350, %v551
          %vm2384 = vcmp.eq.s32.totalorder %v1350, %v552
          %vm2385 = vcmp.eq.s32.totalorder %v1350, %v585
          %vm2386 = vcmp.eq.s32.totalorder %v1350, %v586
          %vm2387 = vcmp.eq.s32.totalorder %v1354, %v551
          %vm2388 = vcmp.eq.s32.totalorder %v1354, %v552
          %vm2389 = vcmp.eq.s32.totalorder %v1354, %v585
          %vm2390 = vcmp.eq.s32.totalorder %v1354, %v586
          %vm2391 = vcmp.eq.s32.totalorder %v1358, %v551
          %vm2392 = vcmp.eq.s32.totalorder %v1358, %v552
          %vm2393 = vcmp.eq.s32.totalorder %v1358, %v585
          %vm2394 = vcmp.eq.s32.totalorder %v1358, %v586
          %vm2395 = vcmp.eq.s32.totalorder %v1362, %v551
          %vm2396 = vcmp.eq.s32.totalorder %v1362, %v552
          %vm2397 = vcmp.eq.s32.totalorder %v1362, %v585
          %vm2398 = vcmp.eq.s32.totalorder %v1362, %v586
          %vm2399 = vcmp.eq.s32.totalorder %v1366, %v551
          %vm2400 = vcmp.eq.s32.totalorder %v1366, %v552
          %vm2401 = vcmp.eq.s32.totalorder %v1366, %v585
          %vm2402 = vcmp.eq.s32.totalorder %v1366, %v586
          %vm2403 = vcmp.eq.s32.totalorder %v1370, %v551
          %vm2404 = vcmp.eq.s32.totalorder %v1370, %v552
          %vm2405 = vcmp.eq.s32.totalorder %v1370, %v585
          %vm2406 = vcmp.eq.s32.totalorder %v1370, %v586
          %vm2407 = vcmp.eq.s32.totalorder %v1374, %v551
          %vm2408 = vcmp.eq.s32.totalorder %v1374, %v552
          %vm2409 = vcmp.eq.s32.totalorder %v1374, %v585
          %vm2410 = vcmp.eq.s32.totalorder %v1374, %v586
          %vm2411 = vcmp.eq.s32.totalorder %v1378, %v551
          %vm2412 = vcmp.eq.s32.totalorder %v1378, %v552
          %vm2413 = vcmp.eq.s32.totalorder %v1378, %v585
          %vm2414 = vcmp.eq.s32.totalorder %v1378, %v586
          %vm2415 = vcmp.eq.s32.totalorder %v1382, %v551
          %vm2416 = vcmp.eq.s32.totalorder %v1382, %v552
          %vm2417 = vcmp.eq.s32.totalorder %v1382, %v585
          %vm2418 = vcmp.eq.s32.totalorder %v1382, %v586
          %vm2419 = vcmp.eq.s32.totalorder %v1386, %v551
          %vm2420 = vcmp.eq.s32.totalorder %v1386, %v552
          %vm2421 = vcmp.eq.s32.totalorder %v1386, %v585
          %vm2422 = vcmp.eq.s32.totalorder %v1386, %v586
          %vm2423 = vcmp.eq.s32.totalorder %v1390, %v551
          %vm2424 = vcmp.eq.s32.totalorder %v1390, %v552
          %vm2425 = vcmp.eq.s32.totalorder %v1390, %v585
          %vm2426 = vcmp.eq.s32.totalorder %v1390, %v586
          %vm2427 = vcmp.eq.s32.totalorder %v1397, %v551
          %vm2428 = vcmp.eq.s32.totalorder %v1397, %v552
          %vm2429 = vcmp.eq.s32.totalorder %v1397, %v585
          %vm2430 = vcmp.eq.s32.totalorder %v1397, %v586
          %vm2431 = vcmp.eq.s32.totalorder %v1401, %v551
          %vm2432 = vcmp.eq.s32.totalorder %v1401, %v552
          %vm2433 = vcmp.eq.s32.totalorder %v1401, %v585
          %vm2434 = vcmp.eq.s32.totalorder %v1401, %v586
          %vm2435 = vcmp.eq.s32.totalorder %v1405, %v551
          %vm2436 = vcmp.eq.s32.totalorder %v1405, %v552
          %vm2437 = vcmp.eq.s32.totalorder %v1405, %v585
          %vm2438 = vcmp.eq.s32.totalorder %v1405, %v586
          %vm2439 = vcmp.eq.s32.totalorder %v1409, %v551
          %vm2440 = vcmp.eq.s32.totalorder %v1409, %v552
          %vm2441 = vcmp.eq.s32.totalorder %v1409, %v585
          %vm2442 = vcmp.eq.s32.totalorder %v1409, %v586
          %vm2443 = vcmp.eq.s32.totalorder %v1413, %v551
          %vm2444 = vcmp.eq.s32.totalorder %v1413, %v552
          %vm2445 = vcmp.eq.s32.totalorder %v1413, %v585
          %vm2446 = vcmp.eq.s32.totalorder %v1413, %v586
          %vm2447 = vcmp.eq.s32.totalorder %v1417, %v551
          %vm2448 = vcmp.eq.s32.totalorder %v1417, %v552
          %vm2449 = vcmp.eq.s32.totalorder %v1417, %v585
          %vm2450 = vcmp.eq.s32.totalorder %v1417, %v586
          %vm2451 = vcmp.eq.s32.totalorder %v1421, %v551
          %vm2452 = vcmp.eq.s32.totalorder %v1421, %v552
          %vm2453 = vcmp.eq.s32.totalorder %v1421, %v585
          %vm2454 = vcmp.eq.s32.totalorder %v1421, %v586
          %vm2455 = vcmp.eq.s32.totalorder %v1425, %v551
          %vm2456 = vcmp.eq.s32.totalorder %v1425, %v552
          %vm2457 = vcmp.eq.s32.totalorder %v1425, %v585
          %vm2458 = vcmp.eq.s32.totalorder %v1425, %v586
          %vm2459 = vcmp.eq.s32.totalorder %v1429, %v551
          %vm2460 = vcmp.eq.s32.totalorder %v1429, %v552
          %vm2461 = vcmp.eq.s32.totalorder %v1429, %v585
          %vm2462 = vcmp.eq.s32.totalorder %v1429, %v586
          %vm2463 = vcmp.eq.s32.totalorder %v1433, %v551
          %vm2464 = vcmp.eq.s32.totalorder %v1433, %v552
          %vm2465 = vcmp.eq.s32.totalorder %v1433, %v585
          %vm2466 = vcmp.eq.s32.totalorder %v1433, %v586
          %vm2467 = vcmp.eq.s32.totalorder %v1437, %v551
          %vm2468 = vcmp.eq.s32.totalorder %v1437, %v552
          %vm2469 = vcmp.eq.s32.totalorder %v1437, %v585
          %vm2470 = vcmp.eq.s32.totalorder %v1437, %v586
          %vm2471 = vcmp.eq.s32.totalorder %v1441, %v551
          %vm2472 = vcmp.eq.s32.totalorder %v1441, %v552
          %vm2473 = vcmp.eq.s32.totalorder %v1441, %v585
          %vm2474 = vcmp.eq.s32.totalorder %v1441, %v586
          %vm2475 = vcmp.eq.s32.totalorder %v1445, %v551
          %vm2476 = vcmp.eq.s32.totalorder %v1445, %v552
          %vm2477 = vcmp.eq.s32.totalorder %v1445, %v585
          %vm2478 = vcmp.eq.s32.totalorder %v1445, %v586
          %vm2479 = vcmp.eq.s32.totalorder %v1449, %v551
          %vm2480 = vcmp.eq.s32.totalorder %v1449, %v552
          %vm2481 = vcmp.eq.s32.totalorder %v1449, %v585
          %vm2482 = vcmp.eq.s32.totalorder %v1449, %v586
          %vm2483 = vcmp.eq.s32.totalorder %v1453, %v551
          %vm2484 = vcmp.eq.s32.totalorder %v1453, %v552
          %vm2485 = vcmp.eq.s32.totalorder %v1453, %v585
          %vm2486 = vcmp.eq.s32.totalorder %v1453, %v586
          %vm2487 = vcmp.eq.s32.totalorder %v1457, %v551
          %vm2488 = vcmp.eq.s32.totalorder %v1457, %v552
          %vm2489 = vcmp.eq.s32.totalorder %v1457, %v585
          %vm2490 = vcmp.eq.s32.totalorder %v1457, %v586
          %vm2491 = vcmp.eq.s32.totalorder %v1464, %v551
          %vm2492 = vcmp.eq.s32.totalorder %v1464, %v552
          %vm2493 = vcmp.eq.s32.totalorder %v1464, %v585
          %vm2494 = vcmp.eq.s32.totalorder %v1464, %v586
          %vm2495 = vcmp.eq.s32.totalorder %v1468, %v551
          %vm2496 = vcmp.eq.s32.totalorder %v1468, %v552
          %vm2497 = vcmp.eq.s32.totalorder %v1468, %v585
          %vm2498 = vcmp.eq.s32.totalorder %v1468, %v586
          %vm2499 = vcmp.eq.s32.totalorder %v1472, %v551
          %vm2500 = vcmp.eq.s32.totalorder %v1472, %v552
          %vm2501 = vcmp.eq.s32.totalorder %v1472, %v585
          %vm2502 = vcmp.eq.s32.totalorder %v1472, %v586
          %vm2503 = vcmp.eq.s32.totalorder %v1476, %v551
          %vm2504 = vcmp.eq.s32.totalorder %v1476, %v552
          %vm2505 = vcmp.eq.s32.totalorder %v1476, %v585
          %vm2506 = vcmp.eq.s32.totalorder %v1476, %v586
          %vm2507 = vcmp.eq.s32.totalorder %v1480, %v551
          %vm2508 = vcmp.eq.s32.totalorder %v1480, %v552
          %vm2509 = vcmp.eq.s32.totalorder %v1480, %v585
          %vm2510 = vcmp.eq.s32.totalorder %v1480, %v586
          %vm2511 = vcmp.eq.s32.totalorder %v1484, %v551
          %vm2512 = vcmp.eq.s32.totalorder %v1484, %v552
          %vm2513 = vcmp.eq.s32.totalorder %v1484, %v585
          %vm2514 = vcmp.eq.s32.totalorder %v1484, %v586
          %vm2515 = vcmp.eq.s32.totalorder %v1488, %v551
          %vm2516 = vcmp.eq.s32.totalorder %v1488, %v552
          %vm2517 = vcmp.eq.s32.totalorder %v1488, %v585
          %vm2518 = vcmp.eq.s32.totalorder %v1488, %v586
          %vm2519 = vcmp.eq.s32.totalorder %v1492, %v551
          %vm2520 = vcmp.eq.s32.totalorder %v1492, %v552
          %vm2521 = vcmp.eq.s32.totalorder %v1492, %v585
          %vm2522 = vcmp.eq.s32.totalorder %v1492, %v586
          %vm2523 = vcmp.eq.s32.totalorder %v1496, %v551
          %vm2524 = vcmp.eq.s32.totalorder %v1496, %v552
          %vm2525 = vcmp.eq.s32.totalorder %v1496, %v585
          %vm2526 = vcmp.eq.s32.totalorder %v1496, %v586
          %vm2527 = vcmp.eq.s32.totalorder %v1500, %v551
          %vm2528 = vcmp.eq.s32.totalorder %v1500, %v552
          %vm2529 = vcmp.eq.s32.totalorder %v1500, %v585
          %vm2530 = vcmp.eq.s32.totalorder %v1500, %v586
          %vm2531 = vcmp.eq.s32.totalorder %v1504, %v551
          %vm2532 = vcmp.eq.s32.totalorder %v1504, %v552
          %vm2533 = vcmp.eq.s32.totalorder %v1504, %v585
          %vm2534 = vcmp.eq.s32.totalorder %v1504, %v586
          %vm2535 = vcmp.eq.s32.totalorder %v1508, %v551
          %vm2536 = vcmp.eq.s32.totalorder %v1508, %v552
          %vm2537 = vcmp.eq.s32.totalorder %v1508, %v585
          %vm2538 = vcmp.eq.s32.totalorder %v1508, %v586
          %vm2539 = vcmp.eq.s32.totalorder %v1512, %v551
          %vm2540 = vcmp.eq.s32.totalorder %v1512, %v552
          %vm2541 = vcmp.eq.s32.totalorder %v1512, %v585
          %vm2542 = vcmp.eq.s32.totalorder %v1512, %v586
          %vm2543 = vcmp.eq.s32.totalorder %v1516, %v551
          %vm2544 = vcmp.eq.s32.totalorder %v1516, %v552
          %vm2545 = vcmp.eq.s32.totalorder %v1516, %v585
          %vm2546 = vcmp.eq.s32.totalorder %v1516, %v586
          %vm2547 = vcmp.eq.s32.totalorder %v1520, %v551
          %vm2548 = vcmp.eq.s32.totalorder %v1520, %v552
          %vm2549 = vcmp.eq.s32.totalorder %v1520, %v585
          %vm2550 = vcmp.eq.s32.totalorder %v1520, %v586
          %vm2551 = vcmp.eq.s32.totalorder %v1524, %v551
          %vm2552 = vcmp.eq.s32.totalorder %v1524, %v552
          %vm2553 = vcmp.eq.s32.totalorder %v1524, %v585
          %vm2554 = vcmp.eq.s32.totalorder %v1524, %v586
          %vm2555 = vcmp.eq.s32.totalorder %v1531, %v551
          %vm2556 = vcmp.eq.s32.totalorder %v1531, %v552
          %vm2557 = vcmp.eq.s32.totalorder %v1531, %v585
          %vm2558 = vcmp.eq.s32.totalorder %v1531, %v586
          %vm2559 = vcmp.eq.s32.totalorder %v1535, %v551
          %vm2560 = vcmp.eq.s32.totalorder %v1535, %v552
          %vm2561 = vcmp.eq.s32.totalorder %v1535, %v585
          %vm2562 = vcmp.eq.s32.totalorder %v1535, %v586
          %vm2563 = vcmp.eq.s32.totalorder %v1539, %v551
          %vm2564 = vcmp.eq.s32.totalorder %v1539, %v552
          %vm2565 = vcmp.eq.s32.totalorder %v1539, %v585
          %vm2566 = vcmp.eq.s32.totalorder %v1539, %v586
          %vm2567 = vcmp.eq.s32.totalorder %v1543, %v551
          %vm2568 = vcmp.eq.s32.totalorder %v1543, %v552
          %vm2569 = vcmp.eq.s32.totalorder %v1543, %v585
          %vm2570 = vcmp.eq.s32.totalorder %v1543, %v586
          %vm2571 = vcmp.eq.s32.totalorder %v1547, %v551
          %vm2572 = vcmp.eq.s32.totalorder %v1547, %v552
          %vm2573 = vcmp.eq.s32.totalorder %v1547, %v585
          %vm2574 = vcmp.eq.s32.totalorder %v1547, %v586
          %vm2575 = vcmp.eq.s32.totalorder %v1551, %v551
          %vm2576 = vcmp.eq.s32.totalorder %v1551, %v552
          %vm2577 = vcmp.eq.s32.totalorder %v1551, %v585
          %vm2578 = vcmp.eq.s32.totalorder %v1551, %v586
          %vm2579 = vcmp.eq.s32.totalorder %v1555, %v551
          %vm2580 = vcmp.eq.s32.totalorder %v1555, %v552
          %vm2581 = vcmp.eq.s32.totalorder %v1555, %v585
          %vm2582 = vcmp.eq.s32.totalorder %v1555, %v586
          %vm2583 = vcmp.eq.s32.totalorder %v1559, %v551
          %vm2584 = vcmp.eq.s32.totalorder %v1559, %v552
          %vm2585 = vcmp.eq.s32.totalorder %v1559, %v585
          %vm2586 = vcmp.eq.s32.totalorder %v1559, %v586
          %vm2587 = vcmp.eq.s32.totalorder %v1563, %v551
          %vm2588 = vcmp.eq.s32.totalorder %v1563, %v552
          %vm2589 = vcmp.eq.s32.totalorder %v1563, %v585
          %vm2590 = vcmp.eq.s32.totalorder %v1563, %v586
          %vm2591 = vcmp.eq.s32.totalorder %v1567, %v551
          %vm2592 = vcmp.eq.s32.totalorder %v1567, %v552
          %vm2593 = vcmp.eq.s32.totalorder %v1567, %v585
          %vm2594 = vcmp.eq.s32.totalorder %v1567, %v586
          %vm2595 = vcmp.eq.s32.totalorder %v1571, %v551
          %vm2596 = vcmp.eq.s32.totalorder %v1571, %v552
          %vm2597 = vcmp.eq.s32.totalorder %v1571, %v585
          %vm2598 = vcmp.eq.s32.totalorder %v1571, %v586
          %vm2599 = vcmp.eq.s32.totalorder %v1575, %v551
          %vm2600 = vcmp.eq.s32.totalorder %v1575, %v552
          %vm2601 = vcmp.eq.s32.totalorder %v1575, %v585
          %vm2602 = vcmp.eq.s32.totalorder %v1575, %v586
          %vm2603 = vcmp.eq.s32.totalorder %v1579, %v551
          %vm2604 = vcmp.eq.s32.totalorder %v1579, %v552
          %vm2605 = vcmp.eq.s32.totalorder %v1579, %v585
          %vm2606 = vcmp.eq.s32.totalorder %v1579, %v586
          %vm2607 = vcmp.eq.s32.totalorder %v1583, %v551
          %vm2608 = vcmp.eq.s32.totalorder %v1583, %v552
          %vm2609 = vcmp.eq.s32.totalorder %v1583, %v585
          %vm2610 = vcmp.eq.s32.totalorder %v1583, %v586
          %vm2611 = vcmp.eq.s32.totalorder %v1587, %v551
          %vm2612 = vcmp.eq.s32.totalorder %v1587, %v552
          %vm2613 = vcmp.eq.s32.totalorder %v1587, %v585
          %vm2614 = vcmp.eq.s32.totalorder %v1587, %v586
          %vm2615 = vcmp.eq.s32.totalorder %v1591, %v551
          %vm2616 = vcmp.eq.s32.totalorder %v1591, %v552
          %vm2617 = vcmp.eq.s32.totalorder %v1591, %v585
          %vm2618 = vcmp.eq.s32.totalorder %v1591, %v586
          %vm2619 = vcmp.eq.s32.totalorder %v1598, %v551
          %vm2620 = vcmp.eq.s32.totalorder %v1598, %v552
          %vm2621 = vcmp.eq.s32.totalorder %v1598, %v585
          %vm2622 = vcmp.eq.s32.totalorder %v1598, %v586
          %vm2623 = vcmp.eq.s32.totalorder %v1602, %v551
          %vm2624 = vcmp.eq.s32.totalorder %v1602, %v552
          %vm2625 = vcmp.eq.s32.totalorder %v1602, %v585
          %vm2626 = vcmp.eq.s32.totalorder %v1602, %v586
          %vm2627 = vcmp.eq.s32.totalorder %v1606, %v551
          %vm2628 = vcmp.eq.s32.totalorder %v1606, %v552
          %vm2629 = vcmp.eq.s32.totalorder %v1606, %v585
          %vm2630 = vcmp.eq.s32.totalorder %v1606, %v586
          %vm2631 = vcmp.eq.s32.totalorder %v1610, %v551
          %vm2632 = vcmp.eq.s32.totalorder %v1610, %v552
          %vm2633 = vcmp.eq.s32.totalorder %v1610, %v585
          %vm2634 = vcmp.eq.s32.totalorder %v1610, %v586
          %vm2635 = vcmp.eq.s32.totalorder %v1614, %v551
          %vm2636 = vcmp.eq.s32.totalorder %v1614, %v552
          %vm2637 = vcmp.eq.s32.totalorder %v1614, %v585
          %vm2638 = vcmp.eq.s32.totalorder %v1614, %v586
          %vm2639 = vcmp.eq.s32.totalorder %v1618, %v551
          %vm2640 = vcmp.eq.s32.totalorder %v1618, %v552
          %vm2641 = vcmp.eq.s32.totalorder %v1618, %v585
          %vm2642 = vcmp.eq.s32.totalorder %v1618, %v586
          %vm2643 = vcmp.eq.s32.totalorder %v1622, %v551
          %vm2644 = vcmp.eq.s32.totalorder %v1622, %v552
          %vm2645 = vcmp.eq.s32.totalorder %v1622, %v585
          %vm2646 = vcmp.eq.s32.totalorder %v1622, %v586
          %vm2647 = vcmp.eq.s32.totalorder %v1626, %v551
          %vm2648 = vcmp.eq.s32.totalorder %v1626, %v552
          %vm2649 = vcmp.eq.s32.totalorder %v1626, %v585
          %vm2650 = vcmp.eq.s32.totalorder %v1626, %v586
          %vm2651 = vcmp.eq.s32.totalorder %v1630, %v551
          %vm2652 = vcmp.eq.s32.totalorder %v1630, %v552
          %vm2653 = vcmp.eq.s32.totalorder %v1630, %v585
          %vm2654 = vcmp.eq.s32.totalorder %v1630, %v586
          %vm2655 = vcmp.eq.s32.totalorder %v1634, %v551
          %vm2656 = vcmp.eq.s32.totalorder %v1634, %v552
          %vm2657 = vcmp.eq.s32.totalorder %v1634, %v585
          %vm2658 = vcmp.eq.s32.totalorder %v1634, %v586
          %vm2659 = vcmp.eq.s32.totalorder %v1638, %v551
          %vm2660 = vcmp.eq.s32.totalorder %v1638, %v552
          %vm2661 = vcmp.eq.s32.totalorder %v1638, %v585
          %vm2662 = vcmp.eq.s32.totalorder %v1638, %v586
          %vm2663 = vcmp.eq.s32.totalorder %v1642, %v551
          %vm2664 = vcmp.eq.s32.totalorder %v1642, %v552
          %vm2665 = vcmp.eq.s32.totalorder %v1642, %v585
          %vm2666 = vcmp.eq.s32.totalorder %v1642, %v586
          %vm2667 = vcmp.eq.s32.totalorder %v1646, %v551
          %vm2668 = vcmp.eq.s32.totalorder %v1646, %v552
          %vm2669 = vcmp.eq.s32.totalorder %v1646, %v585
          %vm2670 = vcmp.eq.s32.totalorder %v1646, %v586
          %vm2671 = vcmp.eq.s32.totalorder %v1650, %v551
          %vm2672 = vcmp.eq.s32.totalorder %v1650, %v552
          %vm2673 = vcmp.eq.s32.totalorder %v1650, %v585
          %vm2674 = vcmp.eq.s32.totalorder %v1650, %v586
          %vm2675 = vcmp.eq.s32.totalorder %v1654, %v551
          %vm2676 = vcmp.eq.s32.totalorder %v1654, %v552
          %vm2677 = vcmp.eq.s32.totalorder %v1654, %v585
          %vm2678 = vcmp.eq.s32.totalorder %v1654, %v586
          %vm2679 = vcmp.eq.s32.totalorder %v1658, %v551
          %vm2680 = vcmp.eq.s32.totalorder %v1658, %v552
          %vm2681 = vcmp.eq.s32.totalorder %v1658, %v585
          %vm2682 = vcmp.eq.s32.totalorder %v1658, %v586
          %v2683 = vld [vmem:[#allocation2] sm:$0xff]
          %v2684 = vld [vmem:[#allocation2 + $0x8] sm:$0xff]
          %v2685 = vld [vmem:[#allocation2 + $0x10] sm:$0xff]
          %v2686 = vld [vmem:[#allocation2 + $0x18] sm:$0xff]
          %v2687 = vlaneseq
          %v2688 = vshrl.u32 %v2687, 7
          %v2689 = vsub.s32 0, %v2688
          %v2690 = vrot.slane %v564, %v2689
          %2692 = vbcast.lane.b32.xlu0 %v2690, 256
          %v2693 = vpop.permute.xlu0 %2692
          %s2695 = sor.u32 256, 8
          %2696 = vbcast.lane.b32.xlu0 %v2690, %s2695
          %v2697 = vpop.permute.xlu0 %2696
          %s2699 = sor.u32 256, 16
          %2700 = vbcast.lane.b32.xlu0 %v2690, %s2699
          %v2701 = vpop.permute.xlu0 %2700
          %s2703 = sor.u32 256, 24
          %2704 = vbcast.lane.b32.xlu0 %v2690, %s2703
          %v2705 = vpop.permute.xlu0 %2704
          %s2707 = sor.u32 256, 32
          %2708 = vbcast.lane.b32.xlu0 %v2690, %s2707
          %v2709 = vpop.permute.xlu0 %2708
          %s2711 = sor.u32 256, 40
          %2712 = vbcast.lane.b32.xlu0 %v2690, %s2711
          %v2713 = vpop.permute.xlu0 %2712
          %s2715 = sor.u32 256, 48
          %2716 = vbcast.lane.b32.xlu0 %v2690, %s2715
          %v2717 = vpop.permute.xlu0 %2716
          %s2719 = sor.u32 256, 56
          %2720 = vbcast.lane.b32.xlu0 %v2690, %s2719
          %v2721 = vpop.permute.xlu0 %2720
          %s2723 = sor.u32 256, 64
          %2724 = vbcast.lane.b32.xlu0 %v2690, %s2723
          %v2725 = vpop.permute.xlu0 %2724
          %s2727 = sor.u32 256, 72
          %2728 = vbcast.lane.b32.xlu0 %v2690, %s2727
          %v2729 = vpop.permute.xlu0 %2728
          %s2731 = sor.u32 256, 80
          %2732 = vbcast.lane.b32.xlu0 %v2690, %s2731
          %v2733 = vpop.permute.xlu0 %2732
          %s2735 = sor.u32 256, 88
          %2736 = vbcast.lane.b32.xlu0 %v2690, %s2735
          %v2737 = vpop.permute.xlu0 %2736
          %s2739 = sor.u32 256, 96
          %2740 = vbcast.lane.b32.xlu0 %v2690, %s2739
          %v2741 = vpop.permute.xlu0 %2740
          %s2743 = sor.u32 256, 104
          %2744 = vbcast.lane.b32.xlu0 %v2690, %s2743
          %v2745 = vpop.permute.xlu0 %2744
          %s2747 = sor.u32 256, 112
          %2748 = vbcast.lane.b32.xlu0 %v2690, %s2747
          %v2749 = vpop.permute.xlu0 %2748
          %s2751 = sor.u32 256, 120
          %2752 = vbcast.lane.b32.xlu0 %v2690, %s2751
          %v2753 = vpop.permute.xlu0 %2752
          %v2754 = vlaneseq
          %v2755 = vshrl.u32 %v2754, 7
          %v2756 = vsub.s32 0, %v2755
          %v2757 = vrot.slane %v565, %v2756
          %2759 = vbcast.lane.b32.xlu0 %v2757, 256
          %v2760 = vpop.permute.xlu0 %2759
          %s2762 = sor.u32 256, 8
          %2763 = vbcast.lane.b32.xlu0 %v2757, %s2762
          %v2764 = vpop.permute.xlu0 %2763
          %s2766 = sor.u32 256, 16
          %2767 = vbcast.lane.b32.xlu0 %v2757, %s2766
          %v2768 = vpop.permute.xlu0 %2767
          %s2770 = sor.u32 256, 24
          %2771 = vbcast.lane.b32.xlu0 %v2757, %s2770
          %v2772 = vpop.permute.xlu0 %2771
          %s2774 = sor.u32 256, 32
          %2775 = vbcast.lane.b32.xlu0 %v2757, %s2774
          %v2776 = vpop.permute.xlu0 %2775
          %s2778 = sor.u32 256, 40
          %2779 = vbcast.lane.b32.xlu0 %v2757, %s2778
          %v2780 = vpop.permute.xlu0 %2779
          %s2782 = sor.u32 256, 48
          %2783 = vbcast.lane.b32.xlu0 %v2757, %s2782
          %v2784 = vpop.permute.xlu0 %2783
          %s2786 = sor.u32 256, 56
          %2787 = vbcast.lane.b32.xlu0 %v2757, %s2786
          %v2788 = vpop.permute.xlu0 %2787
          %s2790 = sor.u32 256, 64
          %2791 = vbcast.lane.b32.xlu0 %v2757, %s2790
          %v2792 = vpop.permute.xlu0 %2791
          %s2794 = sor.u32 256, 72
          %2795 = vbcast.lane.b32.xlu0 %v2757, %s2794
          %v2796 = vpop.permute.xlu0 %2795
          %s2798 = sor.u32 256, 80
          %2799 = vbcast.lane.b32.xlu0 %v2757, %s2798
          %v2800 = vpop.permute.xlu0 %2799
          %s2802 = sor.u32 256, 88
          %2803 = vbcast.lane.b32.xlu0 %v2757, %s2802
          %v2804 = vpop.permute.xlu0 %2803
          %s2806 = sor.u32 256, 96
          %2807 = vbcast.lane.b32.xlu0 %v2757, %s2806
          %v2808 = vpop.permute.xlu0 %2807
          %s2810 = sor.u32 256, 104
          %2811 = vbcast.lane.b32.xlu0 %v2757, %s2810
          %v2812 = vpop.permute.xlu0 %2811
          %s2814 = sor.u32 256, 112
          %2815 = vbcast.lane.b32.xlu0 %v2757, %s2814
          %v2816 = vpop.permute.xlu0 %2815
          %s2818 = sor.u32 256, 120
          %2819 = vbcast.lane.b32.xlu0 %v2757, %s2818
          %v2820 = vpop.permute.xlu0 %2819
          %v2821 = vlaneseq
          %v2822 = vshrl.u32 %v2821, 7
          %v2823 = vsub.s32 1, %v2822
          %v2824 = vrot.slane %v564, %v2823
          %2826 = vbcast.lane.b32.xlu0 %v2824, 256
          %v2827 = vpop.permute.xlu0 %2826
          %s2829 = sor.u32 256, 8
          %2830 = vbcast.lane.b32.xlu0 %v2824, %s2829
          %v2831 = vpop.permute.xlu0 %2830
          %s2833 = sor.u32 256, 16
          %2834 = vbcast.lane.b32.xlu0 %v2824, %s2833
          %v2835 = vpop.permute.xlu0 %2834
          %s2837 = sor.u32 256, 24
          %2838 = vbcast.lane.b32.xlu0 %v2824, %s2837
          %v2839 = vpop.permute.xlu0 %2838
          %s2841 = sor.u32 256, 32
          %2842 = vbcast.lane.b32.xlu0 %v2824, %s2841
          %v2843 = vpop.permute.xlu0 %2842
          %s2845 = sor.u32 256, 40
          %2846 = vbcast.lane.b32.xlu0 %v2824, %s2845
          %v2847 = vpop.permute.xlu0 %2846
          %s2849 = sor.u32 256, 48
          %2850 = vbcast.lane.b32.xlu0 %v2824, %s2849
          %v2851 = vpop.permute.xlu0 %2850
          %s2853 = sor.u32 256, 56
          %2854 = vbcast.lane.b32.xlu0 %v2824, %s2853
          %v2855 = vpop.permute.xlu0 %2854
          %s2857 = sor.u32 256, 64
          %2858 = vbcast.lane.b32.xlu0 %v2824, %s2857
          %v2859 = vpop.permute.xlu0 %2858
          %s2861 = sor.u32 256, 72
          %2862 = vbcast.lane.b32.xlu0 %v2824, %s2861
          %v2863 = vpop.permute.xlu0 %2862
          %s2865 = sor.u32 256, 80
          %2866 = vbcast.lane.b32.xlu0 %v2824, %s2865
          %v2867 = vpop.permute.xlu0 %2866
          %s2869 = sor.u32 256, 88
          %2870 = vbcast.lane.b32.xlu0 %v2824, %s2869
          %v2871 = vpop.permute.xlu0 %2870
          %s2873 = sor.u32 256, 96
          %2874 = vbcast.lane.b32.xlu0 %v2824, %s2873
          %v2875 = vpop.permute.xlu0 %2874
          %s2877 = sor.u32 256, 104
          %2878 = vbcast.lane.b32.xlu0 %v2824, %s2877
          %v2879 = vpop.permute.xlu0 %2878
          %s2881 = sor.u32 256, 112
          %2882 = vbcast.lane.b32.xlu0 %v2824, %s2881
          %v2883 = vpop.permute.xlu0 %2882
          %s2885 = sor.u32 256, 120
          %2886 = vbcast.lane.b32.xlu0 %v2824, %s2885
          %v2887 = vpop.permute.xlu0 %2886
          %v2888 = vlaneseq
          %v2889 = vshrl.u32 %v2888, 7
          %v2890 = vsub.s32 1, %v2889
          %v2891 = vrot.slane %v565, %v2890
          %2893 = vbcast.lane.b32.xlu0 %v2891, 256
          %v2894 = vpop.permute.xlu0 %2893
          %s2896 = sor.u32 256, 8
          %2897 = vbcast.lane.b32.xlu0 %v2891, %s2896
          %v2898 = vpop.permute.xlu0 %2897
          %s2900 = sor.u32 256, 16
          %2901 = vbcast.lane.b32.xlu0 %v2891, %s2900
          %v2902 = vpop.permute.xlu0 %2901
          %s2904 = sor.u32 256, 24
          %2905 = vbcast.lane.b32.xlu0 %v2891, %s2904
          %v2906 = vpop.permute.xlu0 %2905
          %s2908 = sor.u32 256, 32
          %2909 = vbcast.lane.b32.xlu0 %v2891, %s2908
          %v2910 = vpop.permute.xlu0 %2909
          %s2912 = sor.u32 256, 40
          %2913 = vbcast.lane.b32.xlu0 %v2891, %s2912
          %v2914 = vpop.permute.xlu0 %2913
          %s2916 = sor.u32 256, 48
          %2917 = vbcast.lane.b32.xlu0 %v2891, %s2916
          %v2918 = vpop.permute.xlu0 %2917
          %s2920 = sor.u32 256, 56
          %2921 = vbcast.lane.b32.xlu0 %v2891, %s2920
          %v2922 = vpop.permute.xlu0 %2921
          %s2924 = sor.u32 256, 64
          %2925 = vbcast.lane.b32.xlu0 %v2891, %s2924
          %v2926 = vpop.permute.xlu0 %2925
          %s2928 = sor.u32 256, 72
          %2929 = vbcast.lane.b32.xlu0 %v2891, %s2928
          %v2930 = vpop.permute.xlu0 %2929
          %s2932 = sor.u32 256, 80
          %2933 = vbcast.lane.b32.xlu0 %v2891, %s2932
          %v2934 = vpop.permute.xlu0 %2933
          %s2936 = sor.u32 256, 88
          %2937 = vbcast.lane.b32.xlu0 %v2891, %s2936
          %v2938 = vpop.permute.xlu0 %2937
          %s2940 = sor.u32 256, 96
          %2941 = vbcast.lane.b32.xlu0 %v2891, %s2940
          %v2942 = vpop.permute.xlu0 %2941
          %s2944 = sor.u32 256, 104
          %2945 = vbcast.lane.b32.xlu0 %v2891, %s2944
          %v2946 = vpop.permute.xlu0 %2945
          %s2948 = sor.u32 256, 112
          %2949 = vbcast.lane.b32.xlu0 %v2891, %s2948
          %v2950 = vpop.permute.xlu0 %2949
          %s2952 = sor.u32 256, 120
          %2953 = vbcast.lane.b32.xlu0 %v2891, %s2952
          %v2954 = vpop.permute.xlu0 %2953
          %v2955 = vlaneseq
          %v2956 = vshrl.u32 %v2955, 7
          %v2957 = vsub.s32 2, %v2956
          %v2958 = vrot.slane %v564, %v2957
          %2960 = vbcast.lane.b32.xlu0 %v2958, 256
          %v2961 = vpop.permute.xlu0 %2960
          %s2963 = sor.u32 256, 8
          %2964 = vbcast.lane.b32.xlu0 %v2958, %s2963
          %v2965 = vpop.permute.xlu0 %2964
          %s2967 = sor.u32 256, 16
          %2968 = vbcast.lane.b32.xlu0 %v2958, %s2967
          %v2969 = vpop.permute.xlu0 %2968
          %s2971 = sor.u32 256, 24
          %2972 = vbcast.lane.b32.xlu0 %v2958, %s2971
          %v2973 = vpop.permute.xlu0 %2972
          %s2975 = sor.u32 256, 32
          %2976 = vbcast.lane.b32.xlu0 %v2958, %s2975
          %v2977 = vpop.permute.xlu0 %2976
          %s2979 = sor.u32 256, 40
          %2980 = vbcast.lane.b32.xlu0 %v2958, %s2979
          %v2981 = vpop.permute.xlu0 %2980
          %s2983 = sor.u32 256, 48
          %2984 = vbcast.lane.b32.xlu0 %v2958, %s2983
          %v2985 = vpop.permute.xlu0 %2984
          %s2987 = sor.u32 256, 56
          %2988 = vbcast.lane.b32.xlu0 %v2958, %s2987
          %v2989 = vpop.permute.xlu0 %2988
          %s2991 = sor.u32 256, 64
          %2992 = vbcast.lane.b32.xlu0 %v2958, %s2991
          %v2993 = vpop.permute.xlu0 %2992
          %s2995 = sor.u32 256, 72
          %2996 = vbcast.lane.b32.xlu0 %v2958, %s2995
          %v2997 = vpop.permute.xlu0 %2996
          %s2999 = sor.u32 256, 80
          %3000 = vbcast.lane.b32.xlu0 %v2958, %s2999
          %v3001 = vpop.permute.xlu0 %3000
          %s3003 = sor.u32 256, 88
          %3004 = vbcast.lane.b32.xlu0 %v2958, %s3003
          %v3005 = vpop.permute.xlu0 %3004
          %s3007 = sor.u32 256, 96
          %3008 = vbcast.lane.b32.xlu0 %v2958, %s3007
          %v3009 = vpop.permute.xlu0 %3008
          %s3011 = sor.u32 256, 104
          %3012 = vbcast.lane.b32.xlu0 %v2958, %s3011
          %v3013 = vpop.permute.xlu0 %3012
          %s3015 = sor.u32 256, 112
          %3016 = vbcast.lane.b32.xlu0 %v2958, %s3015
          %v3017 = vpop.permute.xlu0 %3016
          %s3019 = sor.u32 256, 120
          %3020 = vbcast.lane.b32.xlu0 %v2958, %s3019
          %v3021 = vpop.permute.xlu0 %3020
          %v3022 = vlaneseq
          %v3023 = vshrl.u32 %v3022, 7
          %v3024 = vsub.s32 2, %v3023
          %v3025 = vrot.slane %v565, %v3024
          %3027 = vbcast.lane.b32.xlu0 %v3025, 256
          %v3028 = vpop.permute.xlu0 %3027
          %s3030 = sor.u32 256, 8
          %3031 = vbcast.lane.b32.xlu0 %v3025, %s3030
          %v3032 = vpop.permute.xlu0 %3031
          %s3034 = sor.u32 256, 16
          %3035 = vbcast.lane.b32.xlu0 %v3025, %s3034
          %v3036 = vpop.permute.xlu0 %3035
          %s3038 = sor.u32 256, 24
          %3039 = vbcast.lane.b32.xlu0 %v3025, %s3038
          %v3040 = vpop.permute.xlu0 %3039
          %s3042 = sor.u32 256, 32
          %3043 = vbcast.lane.b32.xlu0 %v3025, %s3042
          %v3044 = vpop.permute.xlu0 %3043
          %s3046 = sor.u32 256, 40
          %3047 = vbcast.lane.b32.xlu0 %v3025, %s3046
          %v3048 = vpop.permute.xlu0 %3047
          %s3050 = sor.u32 256, 48
          %3051 = vbcast.lane.b32.xlu0 %v3025, %s3050
          %v3052 = vpop.permute.xlu0 %3051
          %s3054 = sor.u32 256, 56
          %3055 = vbcast.lane.b32.xlu0 %v3025, %s3054
          %v3056 = vpop.permute.xlu0 %3055
          %s3058 = sor.u32 256, 64
          %3059 = vbcast.lane.b32.xlu0 %v3025, %s3058
          %v3060 = vpop.permute.xlu0 %3059
          %s3062 = sor.u32 256, 72
          %3063 = vbcast.lane.b32.xlu0 %v3025, %s3062
          %v3064 = vpop.permute.xlu0 %3063
          %s3066 = sor.u32 256, 80
          %3067 = vbcast.lane.b32.xlu0 %v3025, %s3066
          %v3068 = vpop.permute.xlu0 %3067
          %s3070 = sor.u32 256, 88
          %3071 = vbcast.lane.b32.xlu0 %v3025, %s3070
          %v3072 = vpop.permute.xlu0 %3071
          %s3074 = sor.u32 256, 96
          %3075 = vbcast.lane.b32.xlu0 %v3025, %s3074
          %v3076 = vpop.permute.xlu0 %3075
          %s3078 = sor.u32 256, 104
          %3079 = vbcast.lane.b32.xlu0 %v3025, %s3078
          %v3080 = vpop.permute.xlu0 %3079
          %s3082 = sor.u32 256, 112
          %3083 = vbcast.lane.b32.xlu0 %v3025, %s3082
          %v3084 = vpop.permute.xlu0 %3083
          %s3086 = sor.u32 256, 120
          %3087 = vbcast.lane.b32.xlu0 %v3025, %s3086
          %v3088 = vpop.permute.xlu0 %3087
          %v3089 = vlaneseq
          %v3090 = vshrl.u32 %v3089, 7
          %v3091 = vsub.s32 3, %v3090
          %v3092 = vrot.slane %v564, %v3091
          %3094 = vbcast.lane.b32.xlu0 %v3092, 256
          %v3095 = vpop.permute.xlu0 %3094
          %s3097 = sor.u32 256, 8
          %3098 = vbcast.lane.b32.xlu0 %v3092, %s3097
          %v3099 = vpop.permute.xlu0 %3098
          %s3101 = sor.u32 256, 16
          %3102 = vbcast.lane.b32.xlu0 %v3092, %s3101
          %v3103 = vpop.permute.xlu0 %3102
          %s3105 = sor.u32 256, 24
          %3106 = vbcast.lane.b32.xlu0 %v3092, %s3105
          %v3107 = vpop.permute.xlu0 %3106
          %s3109 = sor.u32 256, 32
          %3110 = vbcast.lane.b32.xlu0 %v3092, %s3109
          %v3111 = vpop.permute.xlu0 %3110
          %s3113 = sor.u32 256, 40
          %3114 = vbcast.lane.b32.xlu0 %v3092, %s3113
          %v3115 = vpop.permute.xlu0 %3114
          %s3117 = sor.u32 256, 48
          %3118 = vbcast.lane.b32.xlu0 %v3092, %s3117
          %v3119 = vpop.permute.xlu0 %3118
          %s3121 = sor.u32 256, 56
          %3122 = vbcast.lane.b32.xlu0 %v3092, %s3121
          %v3123 = vpop.permute.xlu0 %3122
          %s3125 = sor.u32 256, 64
          %3126 = vbcast.lane.b32.xlu0 %v3092, %s3125
          %v3127 = vpop.permute.xlu0 %3126
          %s3129 = sor.u32 256, 72
          %3130 = vbcast.lane.b32.xlu0 %v3092, %s3129
          %v3131 = vpop.permute.xlu0 %3130
          %s3133 = sor.u32 256, 80
          %3134 = vbcast.lane.b32.xlu0 %v3092, %s3133
          %v3135 = vpop.permute.xlu0 %3134
          %s3137 = sor.u32 256, 88
          %3138 = vbcast.lane.b32.xlu0 %v3092, %s3137
          %v3139 = vpop.permute.xlu0 %3138
          %s3141 = sor.u32 256, 96
          %3142 = vbcast.lane.b32.xlu0 %v3092, %s3141
          %v3143 = vpop.permute.xlu0 %3142
          %s3145 = sor.u32 256, 104
          %3146 = vbcast.lane.b32.xlu0 %v3092, %s3145
          %v3147 = vpop.permute.xlu0 %3146
          %s3149 = sor.u32 256, 112
          %3150 = vbcast.lane.b32.xlu0 %v3092, %s3149
          %v3151 = vpop.permute.xlu0 %3150
          %s3153 = sor.u32 256, 120
          %3154 = vbcast.lane.b32.xlu0 %v3092, %s3153
          %v3155 = vpop.permute.xlu0 %3154
          %v3156 = vlaneseq
          %v3157 = vshrl.u32 %v3156, 7
          %v3158 = vsub.s32 3, %v3157
          %v3159 = vrot.slane %v565, %v3158
          %3161 = vbcast.lane.b32.xlu0 %v3159, 256
          %v3162 = vpop.permute.xlu0 %3161
          %s3164 = sor.u32 256, 8
          %3165 = vbcast.lane.b32.xlu0 %v3159, %s3164
          %v3166 = vpop.permute.xlu0 %3165
          %s3168 = sor.u32 256, 16
          %3169 = vbcast.lane.b32.xlu0 %v3159, %s3168
          %v3170 = vpop.permute.xlu0 %3169
          %s3172 = sor.u32 256, 24
          %3173 = vbcast.lane.b32.xlu0 %v3159, %s3172
          %v3174 = vpop.permute.xlu0 %3173
          %s3176 = sor.u32 256, 32
          %3177 = vbcast.lane.b32.xlu0 %v3159, %s3176
          %v3178 = vpop.permute.xlu0 %3177
          %s3180 = sor.u32 256, 40
          %3181 = vbcast.lane.b32.xlu0 %v3159, %s3180
          %v3182 = vpop.permute.xlu0 %3181
          %s3184 = sor.u32 256, 48
          %3185 = vbcast.lane.b32.xlu0 %v3159, %s3184
          %v3186 = vpop.permute.xlu0 %3185
          %s3188 = sor.u32 256, 56
          %3189 = vbcast.lane.b32.xlu0 %v3159, %s3188
          %v3190 = vpop.permute.xlu0 %3189
          %s3192 = sor.u32 256, 64
          %3193 = vbcast.lane.b32.xlu0 %v3159, %s3192
          %v3194 = vpop.permute.xlu0 %3193
          %s3196 = sor.u32 256, 72
          %3197 = vbcast.lane.b32.xlu0 %v3159, %s3196
          %v3198 = vpop.permute.xlu0 %3197
          %s3200 = sor.u32 256, 80
          %3201 = vbcast.lane.b32.xlu0 %v3159, %s3200
          %v3202 = vpop.permute.xlu0 %3201
          %s3204 = sor.u32 256, 88
          %3205 = vbcast.lane.b32.xlu0 %v3159, %s3204
          %v3206 = vpop.permute.xlu0 %3205
          %s3208 = sor.u32 256, 96
          %3209 = vbcast.lane.b32.xlu0 %v3159, %s3208
          %v3210 = vpop.permute.xlu0 %3209
          %s3212 = sor.u32 256, 104
          %3213 = vbcast.lane.b32.xlu0 %v3159, %s3212
          %v3214 = vpop.permute.xlu0 %3213
          %s3216 = sor.u32 256, 112
          %3217 = vbcast.lane.b32.xlu0 %v3159, %s3216
          %v3218 = vpop.permute.xlu0 %3217
          %s3220 = sor.u32 256, 120
          %3221 = vbcast.lane.b32.xlu0 %v3159, %s3220
          %v3222 = vpop.permute.xlu0 %3221
          %v3223 = vlaneseq
          %v3224 = vshrl.u32 %v3223, 7
          %v3225 = vsub.s32 4, %v3224
          %v3226 = vrot.slane %v564, %v3225
          %3228 = vbcast.lane.b32.xlu0 %v3226, 256
          %v3229 = vpop.permute.xlu0 %3228
          %s3231 = sor.u32 256, 8
          %3232 = vbcast.lane.b32.xlu0 %v3226, %s3231
          %v3233 = vpop.permute.xlu0 %3232
          %s3235 = sor.u32 256, 16
          %3236 = vbcast.lane.b32.xlu0 %v3226, %s3235
          %v3237 = vpop.permute.xlu0 %3236
          %s3239 = sor.u32 256, 24
          %3240 = vbcast.lane.b32.xlu0 %v3226, %s3239
          %v3241 = vpop.permute.xlu0 %3240
          %s3243 = sor.u32 256, 32
          %3244 = vbcast.lane.b32.xlu0 %v3226, %s3243
          %v3245 = vpop.permute.xlu0 %3244
          %s3247 = sor.u32 256, 40
          %3248 = vbcast.lane.b32.xlu0 %v3226, %s3247
          %v3249 = vpop.permute.xlu0 %3248
          %s3251 = sor.u32 256, 48
          %3252 = vbcast.lane.b32.xlu0 %v3226, %s3251
          %v3253 = vpop.permute.xlu0 %3252
          %s3255 = sor.u32 256, 56
          %3256 = vbcast.lane.b32.xlu0 %v3226, %s3255
          %v3257 = vpop.permute.xlu0 %3256
          %s3259 = sor.u32 256, 64
          %3260 = vbcast.lane.b32.xlu0 %v3226, %s3259
          %v3261 = vpop.permute.xlu0 %3260
          %s3263 = sor.u32 256, 72
          %3264 = vbcast.lane.b32.xlu0 %v3226, %s3263
          %v3265 = vpop.permute.xlu0 %3264
          %s3267 = sor.u32 256, 80
          %3268 = vbcast.lane.b32.xlu0 %v3226, %s3267
          %v3269 = vpop.permute.xlu0 %3268
          %s3271 = sor.u32 256, 88
          %3272 = vbcast.lane.b32.xlu0 %v3226, %s3271
          %v3273 = vpop.permute.xlu0 %3272
          %s3275 = sor.u32 256, 96
          %3276 = vbcast.lane.b32.xlu0 %v3226, %s3275
          %v3277 = vpop.permute.xlu0 %3276
          %s3279 = sor.u32 256, 104
          %3280 = vbcast.lane.b32.xlu0 %v3226, %s3279
          %v3281 = vpop.permute.xlu0 %3280
          %s3283 = sor.u32 256, 112
          %3284 = vbcast.lane.b32.xlu0 %v3226, %s3283
          %v3285 = vpop.permute.xlu0 %3284
          %s3287 = sor.u32 256, 120
          %3288 = vbcast.lane.b32.xlu0 %v3226, %s3287
          %v3289 = vpop.permute.xlu0 %3288
          %v3290 = vlaneseq
          %v3291 = vshrl.u32 %v3290, 7
          %v3292 = vsub.s32 4, %v3291
          %v3293 = vrot.slane %v565, %v3292
          %3295 = vbcast.lane.b32.xlu0 %v3293, 256
          %v3296 = vpop.permute.xlu0 %3295
          %s3298 = sor.u32 256, 8
          %3299 = vbcast.lane.b32.xlu0 %v3293, %s3298
          %v3300 = vpop.permute.xlu0 %3299
          %s3302 = sor.u32 256, 16
          %3303 = vbcast.lane.b32.xlu0 %v3293, %s3302
          %v3304 = vpop.permute.xlu0 %3303
          %s3306 = sor.u32 256, 24
          %3307 = vbcast.lane.b32.xlu0 %v3293, %s3306
          %v3308 = vpop.permute.xlu0 %3307
          %s3310 = sor.u32 256, 32
          %3311 = vbcast.lane.b32.xlu0 %v3293, %s3310
          %v3312 = vpop.permute.xlu0 %3311
          %s3314 = sor.u32 256, 40
          %3315 = vbcast.lane.b32.xlu0 %v3293, %s3314
          %v3316 = vpop.permute.xlu0 %3315
          %s3318 = sor.u32 256, 48
          %3319 = vbcast.lane.b32.xlu0 %v3293, %s3318
          %v3320 = vpop.permute.xlu0 %3319
          %s3322 = sor.u32 256, 56
          %3323 = vbcast.lane.b32.xlu0 %v3293, %s3322
          %v3324 = vpop.permute.xlu0 %3323
          %s3326 = sor.u32 256, 64
          %3327 = vbcast.lane.b32.xlu0 %v3293, %s3326
          %v3328 = vpop.permute.xlu0 %3327
          %s3330 = sor.u32 256, 72
          %3331 = vbcast.lane.b32.xlu0 %v3293, %s3330
          %v3332 = vpop.permute.xlu0 %3331
          %s3334 = sor.u32 256, 80
          %3335 = vbcast.lane.b32.xlu0 %v3293, %s3334
          %v3336 = vpop.permute.xlu0 %3335
          %s3338 = sor.u32 256, 88
          %3339 = vbcast.lane.b32.xlu0 %v3293, %s3338
          %v3340 = vpop.permute.xlu0 %3339
          %s3342 = sor.u32 256, 96
          %3343 = vbcast.lane.b32.xlu0 %v3293, %s3342
          %v3344 = vpop.permute.xlu0 %3343
          %s3346 = sor.u32 256, 104
          %3347 = vbcast.lane.b32.xlu0 %v3293, %s3346
          %v3348 = vpop.permute.xlu0 %3347
          %s3350 = sor.u32 256, 112
          %3351 = vbcast.lane.b32.xlu0 %v3293, %s3350
          %v3352 = vpop.permute.xlu0 %3351
          %s3354 = sor.u32 256, 120
          %3355 = vbcast.lane.b32.xlu0 %v3293, %s3354
          %v3356 = vpop.permute.xlu0 %3355
          %v3357 = vlaneseq
          %v3358 = vshrl.u32 %v3357, 7
          %v3359 = vsub.s32 5, %v3358
          %v3360 = vrot.slane %v564, %v3359
          %3362 = vbcast.lane.b32.xlu0 %v3360, 256
          %v3363 = vpop.permute.xlu0 %3362
          %s3365 = sor.u32 256, 8
          %3366 = vbcast.lane.b32.xlu0 %v3360, %s3365
          %v3367 = vpop.permute.xlu0 %3366
          %s3369 = sor.u32 256, 16
          %3370 = vbcast.lane.b32.xlu0 %v3360, %s3369
          %v3371 = vpop.permute.xlu0 %3370
          %s3373 = sor.u32 256, 24
          %3374 = vbcast.lane.b32.xlu0 %v3360, %s3373
          %v3375 = vpop.permute.xlu0 %3374
          %s3377 = sor.u32 256, 32
          %3378 = vbcast.lane.b32.xlu0 %v3360, %s3377
          %v3379 = vpop.permute.xlu0 %3378
          %s3381 = sor.u32 256, 40
          %3382 = vbcast.lane.b32.xlu0 %v3360, %s3381
          %v3383 = vpop.permute.xlu0 %3382
          %s3385 = sor.u32 256, 48
          %3386 = vbcast.lane.b32.xlu0 %v3360, %s3385
          %v3387 = vpop.permute.xlu0 %3386
          %s3389 = sor.u32 256, 56
          %3390 = vbcast.lane.b32.xlu0 %v3360, %s3389
          %v3391 = vpop.permute.xlu0 %3390
          %s3393 = sor.u32 256, 64
          %3394 = vbcast.lane.b32.xlu0 %v3360, %s3393
          %v3395 = vpop.permute.xlu0 %3394
          %s3397 = sor.u32 256, 72
          %3398 = vbcast.lane.b32.xlu0 %v3360, %s3397
          %v3399 = vpop.permute.xlu0 %3398
          %s3401 = sor.u32 256, 80
          %3402 = vbcast.lane.b32.xlu0 %v3360, %s3401
          %v3403 = vpop.permute.xlu0 %3402
          %s3405 = sor.u32 256, 88
          %3406 = vbcast.lane.b32.xlu0 %v3360, %s3405
          %v3407 = vpop.permute.xlu0 %3406
          %s3409 = sor.u32 256, 96
          %3410 = vbcast.lane.b32.xlu0 %v3360, %s3409
          %v3411 = vpop.permute.xlu0 %3410
          %s3413 = sor.u32 256, 104
          %3414 = vbcast.lane.b32.xlu0 %v3360, %s3413
          %v3415 = vpop.permute.xlu0 %3414
          %s3417 = sor.u32 256, 112
          %3418 = vbcast.lane.b32.xlu0 %v3360, %s3417
          %v3419 = vpop.permute.xlu0 %3418
          %s3421 = sor.u32 256, 120
          %3422 = vbcast.lane.b32.xlu0 %v3360, %s3421
          %v3423 = vpop.permute.xlu0 %3422
          %v3424 = vlaneseq
          %v3425 = vshrl.u32 %v3424, 7
          %v3426 = vsub.s32 5, %v3425
          %v3427 = vrot.slane %v565, %v3426
          %3429 = vbcast.lane.b32.xlu0 %v3427, 256
          %v3430 = vpop.permute.xlu0 %3429
          %s3432 = sor.u32 256, 8
          %3433 = vbcast.lane.b32.xlu0 %v3427, %s3432
          %v3434 = vpop.permute.xlu0 %3433
          %s3436 = sor.u32 256, 16
          %3437 = vbcast.lane.b32.xlu0 %v3427, %s3436
          %v3438 = vpop.permute.xlu0 %3437
          %s3440 = sor.u32 256, 24
          %3441 = vbcast.lane.b32.xlu0 %v3427, %s3440
          %v3442 = vpop.permute.xlu0 %3441
          %s3444 = sor.u32 256, 32
          %3445 = vbcast.lane.b32.xlu0 %v3427, %s3444
          %v3446 = vpop.permute.xlu0 %3445
          %s3448 = sor.u32 256, 40
          %3449 = vbcast.lane.b32.xlu0 %v3427, %s3448
          %v3450 = vpop.permute.xlu0 %3449
          %s3452 = sor.u32 256, 48
          %3453 = vbcast.lane.b32.xlu0 %v3427, %s3452
          %v3454 = vpop.permute.xlu0 %3453
          %s3456 = sor.u32 256, 56
          %3457 = vbcast.lane.b32.xlu0 %v3427, %s3456
          %v3458 = vpop.permute.xlu0 %3457
          %s3460 = sor.u32 256, 64
          %3461 = vbcast.lane.b32.xlu0 %v3427, %s3460
          %v3462 = vpop.permute.xlu0 %3461
          %s3464 = sor.u32 256, 72
          %3465 = vbcast.lane.b32.xlu0 %v3427, %s3464
          %v3466 = vpop.permute.xlu0 %3465
          %s3468 = sor.u32 256, 80
          %3469 = vbcast.lane.b32.xlu0 %v3427, %s3468
          %v3470 = vpop.permute.xlu0 %3469
          %s3472 = sor.u32 256, 88
          %3473 = vbcast.lane.b32.xlu0 %v3427, %s3472
          %v3474 = vpop.permute.xlu0 %3473
          %s3476 = sor.u32 256, 96
          %3477 = vbcast.lane.b32.xlu0 %v3427, %s3476
          %v3478 = vpop.permute.xlu0 %3477
          %s3480 = sor.u32 256, 104
          %3481 = vbcast.lane.b32.xlu0 %v3427, %s3480
          %v3482 = vpop.permute.xlu0 %3481
          %s3484 = sor.u32 256, 112
          %3485 = vbcast.lane.b32.xlu0 %v3427, %s3484
          %v3486 = vpop.permute.xlu0 %3485
          %s3488 = sor.u32 256, 120
          %3489 = vbcast.lane.b32.xlu0 %v3427, %s3488
          %v3490 = vpop.permute.xlu0 %3489
          %v3491 = vlaneseq
          %v3492 = vshrl.u32 %v3491, 7
          %v3493 = vsub.s32 6, %v3492
          %v3494 = vrot.slane %v564, %v3493
          %3496 = vbcast.lane.b32.xlu0 %v3494, 256
          %v3497 = vpop.permute.xlu0 %3496
          %s3499 = sor.u32 256, 8
          %3500 = vbcast.lane.b32.xlu0 %v3494, %s3499
          %v3501 = vpop.permute.xlu0 %3500
          %s3503 = sor.u32 256, 16
          %3504 = vbcast.lane.b32.xlu0 %v3494, %s3503
          %v3505 = vpop.permute.xlu0 %3504
          %s3507 = sor.u32 256, 24
          %3508 = vbcast.lane.b32.xlu0 %v3494, %s3507
          %v3509 = vpop.permute.xlu0 %3508
          %s3511 = sor.u32 256, 32
          %3512 = vbcast.lane.b32.xlu0 %v3494, %s3511
          %v3513 = vpop.permute.xlu0 %3512
          %s3515 = sor.u32 256, 40
          %3516 = vbcast.lane.b32.xlu0 %v3494, %s3515
          %v3517 = vpop.permute.xlu0 %3516
          %s3519 = sor.u32 256, 48
          %3520 = vbcast.lane.b32.xlu0 %v3494, %s3519
          %v3521 = vpop.permute.xlu0 %3520
          %s3523 = sor.u32 256, 56
          %3524 = vbcast.lane.b32.xlu0 %v3494, %s3523
          %v3525 = vpop.permute.xlu0 %3524
          %s3527 = sor.u32 256, 64
          %3528 = vbcast.lane.b32.xlu0 %v3494, %s3527
          %v3529 = vpop.permute.xlu0 %3528
          %s3531 = sor.u32 256, 72
          %3532 = vbcast.lane.b32.xlu0 %v3494, %s3531
          %v3533 = vpop.permute.xlu0 %3532
          %s3535 = sor.u32 256, 80
          %3536 = vbcast.lane.b32.xlu0 %v3494, %s3535
          %v3537 = vpop.permute.xlu0 %3536
          %s3539 = sor.u32 256, 88
          %3540 = vbcast.lane.b32.xlu0 %v3494, %s3539
          %v3541 = vpop.permute.xlu0 %3540
          %s3543 = sor.u32 256, 96
          %3544 = vbcast.lane.b32.xlu0 %v3494, %s3543
          %v3545 = vpop.permute.xlu0 %3544
          %s3547 = sor.u32 256, 104
          %3548 = vbcast.lane.b32.xlu0 %v3494, %s3547
          %v3549 = vpop.permute.xlu0 %3548
          %s3551 = sor.u32 256, 112
          %3552 = vbcast.lane.b32.xlu0 %v3494, %s3551
          %v3553 = vpop.permute.xlu0 %3552
          %s3555 = sor.u32 256, 120
          %3556 = vbcast.lane.b32.xlu0 %v3494, %s3555
          %v3557 = vpop.permute.xlu0 %3556
          %v3558 = vlaneseq
          %v3559 = vshrl.u32 %v3558, 7
          %v3560 = vsub.s32 6, %v3559
          %v3561 = vrot.slane %v565, %v3560
          %3563 = vbcast.lane.b32.xlu0 %v3561, 256
          %v3564 = vpop.permute.xlu0 %3563
          %s3566 = sor.u32 256, 8
          %3567 = vbcast.lane.b32.xlu0 %v3561, %s3566
          %v3568 = vpop.permute.xlu0 %3567
          %s3570 = sor.u32 256, 16
          %3571 = vbcast.lane.b32.xlu0 %v3561, %s3570
          %v3572 = vpop.permute.xlu0 %3571
          %s3574 = sor.u32 256, 24
          %3575 = vbcast.lane.b32.xlu0 %v3561, %s3574
          %v3576 = vpop.permute.xlu0 %3575
          %s3578 = sor.u32 256, 32
          %3579 = vbcast.lane.b32.xlu0 %v3561, %s3578
          %v3580 = vpop.permute.xlu0 %3579
          %s3582 = sor.u32 256, 40
          %3583 = vbcast.lane.b32.xlu0 %v3561, %s3582
          %v3584 = vpop.permute.xlu0 %3583
          %s3586 = sor.u32 256, 48
          %3587 = vbcast.lane.b32.xlu0 %v3561, %s3586
          %v3588 = vpop.permute.xlu0 %3587
          %s3590 = sor.u32 256, 56
          %3591 = vbcast.lane.b32.xlu0 %v3561, %s3590
          %v3592 = vpop.permute.xlu0 %3591
          %s3594 = sor.u32 256, 64
          %3595 = vbcast.lane.b32.xlu0 %v3561, %s3594
          %v3596 = vpop.permute.xlu0 %3595
          %s3598 = sor.u32 256, 72
          %3599 = vbcast.lane.b32.xlu0 %v3561, %s3598
          %v3600 = vpop.permute.xlu0 %3599
          %s3602 = sor.u32 256, 80
          %3603 = vbcast.lane.b32.xlu0 %v3561, %s3602
          %v3604 = vpop.permute.xlu0 %3603
          %s3606 = sor.u32 256, 88
          %3607 = vbcast.lane.b32.xlu0 %v3561, %s3606
          %v3608 = vpop.permute.xlu0 %3607
          %s3610 = sor.u32 256, 96
          %3611 = vbcast.lane.b32.xlu0 %v3561, %s3610
          %v3612 = vpop.permute.xlu0 %3611
          %s3614 = sor.u32 256, 104
          %3615 = vbcast.lane.b32.xlu0 %v3561, %s3614
          %v3616 = vpop.permute.xlu0 %3615
          %s3618 = sor.u32 256, 112
          %3619 = vbcast.lane.b32.xlu0 %v3561, %s3618
          %v3620 = vpop.permute.xlu0 %3619
          %s3622 = sor.u32 256, 120
          %3623 = vbcast.lane.b32.xlu0 %v3561, %s3622
          %v3624 = vpop.permute.xlu0 %3623
          %v3625 = vlaneseq
          %v3626 = vshrl.u32 %v3625, 7
          %v3627 = vsub.s32 7, %v3626
          %v3628 = vrot.slane %v564, %v3627
          %3630 = vbcast.lane.b32.xlu0 %v3628, 256
          %v3631 = vpop.permute.xlu0 %3630
          %s3633 = sor.u32 256, 8
          %3634 = vbcast.lane.b32.xlu0 %v3628, %s3633
          %v3635 = vpop.permute.xlu0 %3634
          %s3637 = sor.u32 256, 16
          %3638 = vbcast.lane.b32.xlu0 %v3628, %s3637
          %v3639 = vpop.permute.xlu0 %3638
          %s3641 = sor.u32 256, 24
          %3642 = vbcast.lane.b32.xlu0 %v3628, %s3641
          %v3643 = vpop.permute.xlu0 %3642
          %s3645 = sor.u32 256, 32
          %3646 = vbcast.lane.b32.xlu0 %v3628, %s3645
          %v3647 = vpop.permute.xlu0 %3646
          %s3649 = sor.u32 256, 40
          %3650 = vbcast.lane.b32.xlu0 %v3628, %s3649
          %v3651 = vpop.permute.xlu0 %3650
          %s3653 = sor.u32 256, 48
          %3654 = vbcast.lane.b32.xlu0 %v3628, %s3653
          %v3655 = vpop.permute.xlu0 %3654
          %s3657 = sor.u32 256, 56
          %3658 = vbcast.lane.b32.xlu0 %v3628, %s3657
          %v3659 = vpop.permute.xlu0 %3658
          %s3661 = sor.u32 256, 64
          %3662 = vbcast.lane.b32.xlu0 %v3628, %s3661
          %v3663 = vpop.permute.xlu0 %3662
          %s3665 = sor.u32 256, 72
          %3666 = vbcast.lane.b32.xlu0 %v3628, %s3665
          %v3667 = vpop.permute.xlu0 %3666
          %s3669 = sor.u32 256, 80
          %3670 = vbcast.lane.b32.xlu0 %v3628, %s3669
          %v3671 = vpop.permute.xlu0 %3670
          %s3673 = sor.u32 256, 88
          %3674 = vbcast.lane.b32.xlu0 %v3628, %s3673
          %v3675 = vpop.permute.xlu0 %3674
          %s3677 = sor.u32 256, 96
          %3678 = vbcast.lane.b32.xlu0 %v3628, %s3677
          %v3679 = vpop.permute.xlu0 %3678
          %s3681 = sor.u32 256, 104
          %3682 = vbcast.lane.b32.xlu0 %v3628, %s3681
          %v3683 = vpop.permute.xlu0 %3682
          %s3685 = sor.u32 256, 112
          %3686 = vbcast.lane.b32.xlu0 %v3628, %s3685
          %v3687 = vpop.permute.xlu0 %3686
          %s3689 = sor.u32 256, 120
          %3690 = vbcast.lane.b32.xlu0 %v3628, %s3689
          %v3691 = vpop.permute.xlu0 %3690
          %v3692 = vlaneseq
          %v3693 = vshrl.u32 %v3692, 7
          %v3694 = vsub.s32 7, %v3693
          %v3695 = vrot.slane %v565, %v3694
          %3697 = vbcast.lane.b32.xlu0 %v3695, 256
          %v3698 = vpop.permute.xlu0 %3697
          %s3700 = sor.u32 256, 8
          %3701 = vbcast.lane.b32.xlu0 %v3695, %s3700
          %v3702 = vpop.permute.xlu0 %3701
          %s3704 = sor.u32 256, 16
          %3705 = vbcast.lane.b32.xlu0 %v3695, %s3704
          %v3706 = vpop.permute.xlu0 %3705
          %s3708 = sor.u32 256, 24
          %3709 = vbcast.lane.b32.xlu0 %v3695, %s3708
          %v3710 = vpop.permute.xlu0 %3709
          %s3712 = sor.u32 256, 32
          %3713 = vbcast.lane.b32.xlu0 %v3695, %s3712
          %v3714 = vpop.permute.xlu0 %3713
          %s3716 = sor.u32 256, 40
          %3717 = vbcast.lane.b32.xlu0 %v3695, %s3716
          %v3718 = vpop.permute.xlu0 %3717
          %s3720 = sor.u32 256, 48
          %3721 = vbcast.lane.b32.xlu0 %v3695, %s3720
          %v3722 = vpop.permute.xlu0 %3721
          %s3724 = sor.u32 256, 56
          %3725 = vbcast.lane.b32.xlu0 %v3695, %s3724
          %v3726 = vpop.permute.xlu0 %3725
          %s3728 = sor.u32 256, 64
          %3729 = vbcast.lane.b32.xlu0 %v3695, %s3728
          %v3730 = vpop.permute.xlu0 %3729
          %s3732 = sor.u32 256, 72
          %3733 = vbcast.lane.b32.xlu0 %v3695, %s3732
          %v3734 = vpop.permute.xlu0 %3733
          %s3736 = sor.u32 256, 80
          %3737 = vbcast.lane.b32.xlu0 %v3695, %s3736
          %v3738 = vpop.permute.xlu0 %3737
          %s3740 = sor.u32 256, 88
          %3741 = vbcast.lane.b32.xlu0 %v3695, %s3740
          %v3742 = vpop.permute.xlu0 %3741
          %s3744 = sor.u32 256, 96
          %3745 = vbcast.lane.b32.xlu0 %v3695, %s3744
          %v3746 = vpop.permute.xlu0 %3745
          %s3748 = sor.u32 256, 104
          %3749 = vbcast.lane.b32.xlu0 %v3695, %s3748
          %v3750 = vpop.permute.xlu0 %3749
          %s3752 = sor.u32 256, 112
          %3753 = vbcast.lane.b32.xlu0 %v3695, %s3752
          %v3754 = vpop.permute.xlu0 %3753
          %s3756 = sor.u32 256, 120
          %3757 = vbcast.lane.b32.xlu0 %v3695, %s3756
          %v3758 = vpop.permute.xlu0 %3757
          %v3759 = vsel %vm1659, %v2693, 0.0
          %v3760 = vsel %vm1660, %v2693, 0.0
          %v3761 = vsel %vm1661, %v2693, 0.0
          %v3762 = vsel %vm1662, %v2693, 0.0
          %v3763 = vsel %vm1663, %v2697, 0.0
          %v3764 = vsel %vm1664, %v2697, 0.0
          %v3765 = vsel %vm1665, %v2697, 0.0
          %v3766 = vsel %vm1666, %v2697, 0.0
          %v3767 = vsel %vm1667, %v2701, 0.0
          %v3768 = vsel %vm1668, %v2701, 0.0
          %v3769 = vsel %vm1669, %v2701, 0.0
          %v3770 = vsel %vm1670, %v2701, 0.0
          %v3771 = vsel %vm1671, %v2705, 0.0
          %v3772 = vsel %vm1672, %v2705, 0.0
          %v3773 = vsel %vm1673, %v2705, 0.0
          %v3774 = vsel %vm1674, %v2705, 0.0
          %v3775 = vsel %vm1675, %v2709, 0.0
          %v3776 = vsel %vm1676, %v2709, 0.0
          %v3777 = vsel %vm1677, %v2709, 0.0
          %v3778 = vsel %vm1678, %v2709, 0.0
          %v3779 = vsel %vm1679, %v2713, 0.0
          %v3780 = vsel %vm1680, %v2713, 0.0
          %v3781 = vsel %vm1681, %v2713, 0.0
          %v3782 = vsel %vm1682, %v2713, 0.0
          %v3783 = vsel %vm1683, %v2717, 0.0
          %v3784 = vsel %vm1684, %v2717, 0.0
          %v3785 = vsel %vm1685, %v2717, 0.0
          %v3786 = vsel %vm1686, %v2717, 0.0
          %v3787 = vsel %vm1687, %v2721, 0.0
          %v3788 = vsel %vm1688, %v2721, 0.0
          %v3789 = vsel %vm1689, %v2721, 0.0
          %v3790 = vsel %vm1690, %v2721, 0.0
          %v3791 = vsel %vm1691, %v2725, 0.0
          %v3792 = vsel %vm1692, %v2725, 0.0
          %v3793 = vsel %vm1693, %v2725, 0.0
          %v3794 = vsel %vm1694, %v2725, 0.0
          %v3795 = vsel %vm1695, %v2729, 0.0
          %v3796 = vsel %vm1696, %v2729, 0.0
          %v3797 = vsel %vm1697, %v2729, 0.0
          %v3798 = vsel %vm1698, %v2729, 0.0
          %v3799 = vsel %vm1699, %v2733, 0.0
          %v3800 = vsel %vm1700, %v2733, 0.0
          %v3801 = vsel %vm1701, %v2733, 0.0
          %v3802 = vsel %vm1702, %v2733, 0.0
          %v3803 = vsel %vm1703, %v2737, 0.0
          %v3804 = vsel %vm1704, %v2737, 0.0
          %v3805 = vsel %vm1705, %v2737, 0.0
          %v3806 = vsel %vm1706, %v2737, 0.0
          %v3807 = vsel %vm1707, %v2741, 0.0
          %v3808 = vsel %vm1708, %v2741, 0.0
          %v3809 = vsel %vm1709, %v2741, 0.0
          %v3810 = vsel %vm1710, %v2741, 0.0
          %v3811 = vsel %vm1711, %v2745, 0.0
          %v3812 = vsel %vm1712, %v2745, 0.0
          %v3813 = vsel %vm1713, %v2745, 0.0
          %v3814 = vsel %vm1714, %v2745, 0.0
          %v3815 = vsel %vm1715, %v2749, 0.0
          %v3816 = vsel %vm1716, %v2749, 0.0
          %v3817 = vsel %vm1717, %v2749, 0.0
          %v3818 = vsel %vm1718, %v2749, 0.0
          %v3819 = vsel %vm1719, %v2753, 0.0
          %v3820 = vsel %vm1720, %v2753, 0.0
          %v3821 = vsel %vm1721, %v2753, 0.0
          %v3822 = vsel %vm1722, %v2753, 0.0
          %v3823 = vsel %vm1723, %v2760, 0.0
          %v3824 = vsel %vm1724, %v2760, 0.0
          %v3825 = vsel %vm1725, %v2760, 0.0
          %v3826 = vsel %vm1726, %v2760, 0.0
          %v3827 = vsel %vm1727, %v2764, 0.0
          %v3828 = vsel %vm1728, %v2764, 0.0
          %v3829 = vsel %vm1729, %v2764, 0.0
          %v3830 = vsel %vm1730, %v2764, 0.0
          %v3831 = vsel %vm1731, %v2768, 0.0
          %v3832 = vsel %vm1732, %v2768, 0.0
          %v3833 = vsel %vm1733, %v2768, 0.0
          %v3834 = vsel %vm1734, %v2768, 0.0
          %v3835 = vsel %vm1735, %v2772, 0.0
          %v3836 = vsel %vm1736, %v2772, 0.0
          %v3837 = vsel %vm1737, %v2772, 0.0
          %v3838 = vsel %vm1738, %v2772, 0.0
          %v3839 = vsel %vm1739, %v2776, 0.0
          %v3840 = vsel %vm1740, %v2776, 0.0
          %v3841 = vsel %vm1741, %v2776, 0.0
          %v3842 = vsel %vm1742, %v2776, 0.0
          %v3843 = vsel %vm1743, %v2780, 0.0
          %v3844 = vsel %vm1744, %v2780, 0.0
          %v3845 = vsel %vm1745, %v2780, 0.0
          %v3846 = vsel %vm1746, %v2780, 0.0
          %v3847 = vsel %vm1747, %v2784, 0.0
          %v3848 = vsel %vm1748, %v2784, 0.0
          %v3849 = vsel %vm1749, %v2784, 0.0
          %v3850 = vsel %vm1750, %v2784, 0.0
          %v3851 = vsel %vm1751, %v2788, 0.0
          %v3852 = vsel %vm1752, %v2788, 0.0
          %v3853 = vsel %vm1753, %v2788, 0.0
          %v3854 = vsel %vm1754, %v2788, 0.0
          %v3855 = vsel %vm1755, %v2792, 0.0
          %v3856 = vsel %vm1756, %v2792, 0.0
          %v3857 = vsel %vm1757, %v2792, 0.0
          %v3858 = vsel %vm1758, %v2792, 0.0
          %v3859 = vsel %vm1759, %v2796, 0.0
          %v3860 = vsel %vm1760, %v2796, 0.0
          %v3861 = vsel %vm1761, %v2796, 0.0
          %v3862 = vsel %vm1762, %v2796, 0.0
          %v3863 = vsel %vm1763, %v2800, 0.0
          %v3864 = vsel %vm1764, %v2800, 0.0
          %v3865 = vsel %vm1765, %v2800, 0.0
          %v3866 = vsel %vm1766, %v2800, 0.0
          %v3867 = vsel %vm1767, %v2804, 0.0
          %v3868 = vsel %vm1768, %v2804, 0.0
          %v3869 = vsel %vm1769, %v2804, 0.0
          %v3870 = vsel %vm1770, %v2804, 0.0
          %v3871 = vsel %vm1771, %v2808, 0.0
          %v3872 = vsel %vm1772, %v2808, 0.0
          %v3873 = vsel %vm1773, %v2808, 0.0
          %v3874 = vsel %vm1774, %v2808, 0.0
          %v3875 = vsel %vm1775, %v2812, 0.0
          %v3876 = vsel %vm1776, %v2812, 0.0
          %v3877 = vsel %vm1777, %v2812, 0.0
          %v3878 = vsel %vm1778, %v2812, 0.0
          %v3879 = vsel %vm1779, %v2816, 0.0
          %v3880 = vsel %vm1780, %v2816, 0.0
          %v3881 = vsel %vm1781, %v2816, 0.0
          %v3882 = vsel %vm1782, %v2816, 0.0
          %v3883 = vsel %vm1783, %v2820, 0.0
          %v3884 = vsel %vm1784, %v2820, 0.0
          %v3885 = vsel %vm1785, %v2820, 0.0
          %v3886 = vsel %vm1786, %v2820, 0.0
          %v3887 = vsel %vm1787, %v2827, 0.0
          %v3888 = vsel %vm1788, %v2827, 0.0
          %v3889 = vsel %vm1789, %v2827, 0.0
          %v3890 = vsel %vm1790, %v2827, 0.0
          %v3891 = vsel %vm1791, %v2831, 0.0
          %v3892 = vsel %vm1792, %v2831, 0.0
          %v3893 = vsel %vm1793, %v2831, 0.0
          %v3894 = vsel %vm1794, %v2831, 0.0
          %v3895 = vsel %vm1795, %v2835, 0.0
          %v3896 = vsel %vm1796, %v2835, 0.0
          %v3897 = vsel %vm1797, %v2835, 0.0
          %v3898 = vsel %vm1798, %v2835, 0.0
          %v3899 = vsel %vm1799, %v2839, 0.0
          %v3900 = vsel %vm1800, %v2839, 0.0
          %v3901 = vsel %vm1801, %v2839, 0.0
          %v3902 = vsel %vm1802, %v2839, 0.0
          %v3903 = vsel %vm1803, %v2843, 0.0
          %v3904 = vsel %vm1804, %v2843, 0.0
          %v3905 = vsel %vm1805, %v2843, 0.0
          %v3906 = vsel %vm1806, %v2843, 0.0
          %v3907 = vsel %vm1807, %v2847, 0.0
          %v3908 = vsel %vm1808, %v2847, 0.0
          %v3909 = vsel %vm1809, %v2847, 0.0
          %v3910 = vsel %vm1810, %v2847, 0.0
          %v3911 = vsel %vm1811, %v2851, 0.0
          %v3912 = vsel %vm1812, %v2851, 0.0
          %v3913 = vsel %vm1813, %v2851, 0.0
          %v3914 = vsel %vm1814, %v2851, 0.0
          %v3915 = vsel %vm1815, %v2855, 0.0
          %v3916 = vsel %vm1816, %v2855, 0.0
          %v3917 = vsel %vm1817, %v2855, 0.0
          %v3918 = vsel %vm1818, %v2855, 0.0
          %v3919 = vsel %vm1819, %v2859, 0.0
          %v3920 = vsel %vm1820, %v2859, 0.0
          %v3921 = vsel %vm1821, %v2859, 0.0
          %v3922 = vsel %vm1822, %v2859, 0.0
          %v3923 = vsel %vm1823, %v2863, 0.0
          %v3924 = vsel %vm1824, %v2863, 0.0
          %v3925 = vsel %vm1825, %v2863, 0.0
          %v3926 = vsel %vm1826, %v2863, 0.0
          %v3927 = vsel %vm1827, %v2867, 0.0
          %v3928 = vsel %vm1828, %v2867, 0.0
          %v3929 = vsel %vm1829, %v2867, 0.0
          %v3930 = vsel %vm1830, %v2867, 0.0
          %v3931 = vsel %vm1831, %v2871, 0.0
          %v3932 = vsel %vm1832, %v2871, 0.0
          %v3933 = vsel %vm1833, %v2871, 0.0
          %v3934 = vsel %vm1834, %v2871, 0.0
          %v3935 = vsel %vm1835, %v2875, 0.0
          %v3936 = vsel %vm1836, %v2875, 0.0
          %v3937 = vsel %vm1837, %v2875, 0.0
          %v3938 = vsel %vm1838, %v2875, 0.0
          %v3939 = vsel %vm1839, %v2879, 0.0
          %v3940 = vsel %vm1840, %v2879, 0.0
          %v3941 = vsel %vm1841, %v2879, 0.0
          %v3942 = vsel %vm1842, %v2879, 0.0
          %v3943 = vsel %vm1843, %v2883, 0.0
          %v3944 = vsel %vm1844, %v2883, 0.0
          %v3945 = vsel %vm1845, %v2883, 0.0
          %v3946 = vsel %vm1846, %v2883, 0.0
          %v3947 = vsel %vm1847, %v2887, 0.0
          %v3948 = vsel %vm1848, %v2887, 0.0
          %v3949 = vsel %vm1849, %v2887, 0.0
          %v3950 = vsel %vm1850, %v2887, 0.0
          %v3951 = vsel %vm1851, %v2894, 0.0
          %v3952 = vsel %vm1852, %v2894, 0.0
          %v3953 = vsel %vm1853, %v2894, 0.0
          %v3954 = vsel %vm1854, %v2894, 0.0
          %v3955 = vsel %vm1855, %v2898, 0.0
          %v3956 = vsel %vm1856, %v2898, 0.0
          %v3957 = vsel %vm1857, %v2898, 0.0
          %v3958 = vsel %vm1858, %v2898, 0.0
          %v3959 = vsel %vm1859, %v2902, 0.0
          %v3960 = vsel %vm1860, %v2902, 0.0
          %v3961 = vsel %vm1861, %v2902, 0.0
          %v3962 = vsel %vm1862, %v2902, 0.0
          %v3963 = vsel %vm1863, %v2906, 0.0
          %v3964 = vsel %vm1864, %v2906, 0.0
          %v3965 = vsel %vm1865, %v2906, 0.0
          %v3966 = vsel %vm1866, %v2906, 0.0
          %v3967 = vsel %vm1867, %v2910, 0.0
          %v3968 = vsel %vm1868, %v2910, 0.0
          %v3969 = vsel %vm1869, %v2910, 0.0
          %v3970 = vsel %vm1870, %v2910, 0.0
          %v3971 = vsel %vm1871, %v2914, 0.0
          %v3972 = vsel %vm1872, %v2914, 0.0
          %v3973 = vsel %vm1873, %v2914, 0.0
          %v3974 = vsel %vm1874, %v2914, 0.0
          %v3975 = vsel %vm1875, %v2918, 0.0
          %v3976 = vsel %vm1876, %v2918, 0.0
          %v3977 = vsel %vm1877, %v2918, 0.0
          %v3978 = vsel %vm1878, %v2918, 0.0
          %v3979 = vsel %vm1879, %v2922, 0.0
          %v3980 = vsel %vm1880, %v2922, 0.0
          %v3981 = vsel %vm1881, %v2922, 0.0
          %v3982 = vsel %vm1882, %v2922, 0.0
          %v3983 = vsel %vm1883, %v2926, 0.0
          %v3984 = vsel %vm1884, %v2926, 0.0
          %v3985 = vsel %vm1885, %v2926, 0.0
          %v3986 = vsel %vm1886, %v2926, 0.0
          %v3987 = vsel %vm1887, %v2930, 0.0
          %v3988 = vsel %vm1888, %v2930, 0.0
          %v3989 = vsel %vm1889, %v2930, 0.0
          %v3990 = vsel %vm1890, %v2930, 0.0
          %v3991 = vsel %vm1891, %v2934, 0.0
          %v3992 = vsel %vm1892, %v2934, 0.0
          %v3993 = vsel %vm1893, %v2934, 0.0
          %v3994 = vsel %vm1894, %v2934, 0.0
          %v3995 = vsel %vm1895, %v2938, 0.0
          %v3996 = vsel %vm1896, %v2938, 0.0
          %v3997 = vsel %vm1897, %v2938, 0.0
          %v3998 = vsel %vm1898, %v2938, 0.0
          %v3999 = vsel %vm1899, %v2942, 0.0
          %v4000 = vsel %vm1900, %v2942, 0.0
          %v4001 = vsel %vm1901, %v2942, 0.0
          %v4002 = vsel %vm1902, %v2942, 0.0
          %v4003 = vsel %vm1903, %v2946, 0.0
          %v4004 = vsel %vm1904, %v2946, 0.0
          %v4005 = vsel %vm1905, %v2946, 0.0
          %v4006 = vsel %vm1906, %v2946, 0.0
          %v4007 = vsel %vm1907, %v2950, 0.0
          %v4008 = vsel %vm1908, %v2950, 0.0
          %v4009 = vsel %vm1909, %v2950, 0.0
          %v4010 = vsel %vm1910, %v2950, 0.0
          %v4011 = vsel %vm1911, %v2954, 0.0
          %v4012 = vsel %vm1912, %v2954, 0.0
          %v4013 = vsel %vm1913, %v2954, 0.0
          %v4014 = vsel %vm1914, %v2954, 0.0
          %v4015 = vsel %vm1915, %v2961, 0.0
          %v4016 = vsel %vm1916, %v2961, 0.0
          %v4017 = vsel %vm1917, %v2961, 0.0
          %v4018 = vsel %vm1918, %v2961, 0.0
          %v4019 = vsel %vm1919, %v2965, 0.0
          %v4020 = vsel %vm1920, %v2965, 0.0
          %v4021 = vsel %vm1921, %v2965, 0.0
          %v4022 = vsel %vm1922, %v2965, 0.0
          %v4023 = vsel %vm1923, %v2969, 0.0
          %v4024 = vsel %vm1924, %v2969, 0.0
          %v4025 = vsel %vm1925, %v2969, 0.0
          %v4026 = vsel %vm1926, %v2969, 0.0
          %v4027 = vsel %vm1927, %v2973, 0.0
          %v4028 = vsel %vm1928, %v2973, 0.0
          %v4029 = vsel %vm1929, %v2973, 0.0
          %v4030 = vsel %vm1930, %v2973, 0.0
          %v4031 = vsel %vm1931, %v2977, 0.0
          %v4032 = vsel %vm1932, %v2977, 0.0
          %v4033 = vsel %vm1933, %v2977, 0.0
          %v4034 = vsel %vm1934, %v2977, 0.0
          %v4035 = vsel %vm1935, %v2981, 0.0
          %v4036 = vsel %vm1936, %v2981, 0.0
          %v4037 = vsel %vm1937, %v2981, 0.0
          %v4038 = vsel %vm1938, %v2981, 0.0
          %v4039 = vsel %vm1939, %v2985, 0.0
          %v4040 = vsel %vm1940, %v2985, 0.0
          %v4041 = vsel %vm1941, %v2985, 0.0
          %v4042 = vsel %vm1942, %v2985, 0.0
          %v4043 = vsel %vm1943, %v2989, 0.0
          %v4044 = vsel %vm1944, %v2989, 0.0
          %v4045 = vsel %vm1945, %v2989, 0.0
          %v4046 = vsel %vm1946, %v2989, 0.0
          %v4047 = vsel %vm1947, %v2993, 0.0
          %v4048 = vsel %vm1948, %v2993, 0.0
          %v4049 = vsel %vm1949, %v2993, 0.0
          %v4050 = vsel %vm1950, %v2993, 0.0
          %v4051 = vsel %vm1951, %v2997, 0.0
          %v4052 = vsel %vm1952, %v2997, 0.0
          %v4053 = vsel %vm1953, %v2997, 0.0
          %v4054 = vsel %vm1954, %v2997, 0.0
          %v4055 = vsel %vm1955, %v3001, 0.0
          %v4056 = vsel %vm1956, %v3001, 0.0
          %v4057 = vsel %vm1957, %v3001, 0.0
          %v4058 = vsel %vm1958, %v3001, 0.0
          %v4059 = vsel %vm1959, %v3005, 0.0
          %v4060 = vsel %vm1960, %v3005, 0.0
          %v4061 = vsel %vm1961, %v3005, 0.0
          %v4062 = vsel %vm1962, %v3005, 0.0
          %v4063 = vsel %vm1963, %v3009, 0.0
          %v4064 = vsel %vm1964, %v3009, 0.0
          %v4065 = vsel %vm1965, %v3009, 0.0
          %v4066 = vsel %vm1966, %v3009, 0.0
          %v4067 = vsel %vm1967, %v3013, 0.0
          %v4068 = vsel %vm1968, %v3013, 0.0
          %v4069 = vsel %vm1969, %v3013, 0.0
          %v4070 = vsel %vm1970, %v3013, 0.0
          %v4071 = vsel %vm1971, %v3017, 0.0
          %v4072 = vsel %vm1972, %v3017, 0.0
          %v4073 = vsel %vm1973, %v3017, 0.0
          %v4074 = vsel %vm1974, %v3017, 0.0
          %v4075 = vsel %vm1975, %v3021, 0.0
          %v4076 = vsel %vm1976, %v3021, 0.0
          %v4077 = vsel %vm1977, %v3021, 0.0
          %v4078 = vsel %vm1978, %v3021, 0.0
          %v4079 = vsel %vm1979, %v3028, 0.0
          %v4080 = vsel %vm1980, %v3028, 0.0
          %v4081 = vsel %vm1981, %v3028, 0.0
          %v4082 = vsel %vm1982, %v3028, 0.0
          %v4083 = vsel %vm1983, %v3032, 0.0
          %v4084 = vsel %vm1984, %v3032, 0.0
          %v4085 = vsel %vm1985, %v3032, 0.0
          %v4086 = vsel %vm1986, %v3032, 0.0
          %v4087 = vsel %vm1987, %v3036, 0.0
          %v4088 = vsel %vm1988, %v3036, 0.0
          %v4089 = vsel %vm1989, %v3036, 0.0
          %v4090 = vsel %vm1990, %v3036, 0.0
          %v4091 = vsel %vm1991, %v3040, 0.0
          %v4092 = vsel %vm1992, %v3040, 0.0
          %v4093 = vsel %vm1993, %v3040, 0.0
          %v4094 = vsel %vm1994, %v3040, 0.0
          %v4095 = vsel %vm1995, %v3044, 0.0
          %v4096 = vsel %vm1996, %v3044, 0.0
          %v4097 = vsel %vm1997, %v3044, 0.0
          %v4098 = vsel %vm1998, %v3044, 0.0
          %v4099 = vsel %vm1999, %v3048, 0.0
          %v4100 = vsel %vm2000, %v3048, 0.0
          %v4101 = vsel %vm2001, %v3048, 0.0
          %v4102 = vsel %vm2002, %v3048, 0.0
          %v4103 = vsel %vm2003, %v3052, 0.0
          %v4104 = vsel %vm2004, %v3052, 0.0
          %v4105 = vsel %vm2005, %v3052, 0.0
          %v4106 = vsel %vm2006, %v3052, 0.0
          %v4107 = vsel %vm2007, %v3056, 0.0
          %v4108 = vsel %vm2008, %v3056, 0.0
          %v4109 = vsel %vm2009, %v3056, 0.0
          %v4110 = vsel %vm2010, %v3056, 0.0
          %v4111 = vsel %vm2011, %v3060, 0.0
          %v4112 = vsel %vm2012, %v3060, 0.0
          %v4113 = vsel %vm2013, %v3060, 0.0
          %v4114 = vsel %vm2014, %v3060, 0.0
          %v4115 = vsel %vm2015, %v3064, 0.0
          %v4116 = vsel %vm2016, %v3064, 0.0
          %v4117 = vsel %vm2017, %v3064, 0.0
          %v4118 = vsel %vm2018, %v3064, 0.0
          %v4119 = vsel %vm2019, %v3068, 0.0
          %v4120 = vsel %vm2020, %v3068, 0.0
          %v4121 = vsel %vm2021, %v3068, 0.0
          %v4122 = vsel %vm2022, %v3068, 0.0
          %v4123 = vsel %vm2023, %v3072, 0.0
          %v4124 = vsel %vm2024, %v3072, 0.0
          %v4125 = vsel %vm2025, %v3072, 0.0
          %v4126 = vsel %vm2026, %v3072, 0.0
          %v4127 = vsel %vm2027, %v3076, 0.0
          %v4128 = vsel %vm2028, %v3076, 0.0
          %v4129 = vsel %vm2029, %v3076, 0.0
          %v4130 = vsel %vm2030, %v3076, 0.0
          %v4131 = vsel %vm2031, %v3080, 0.0
          %v4132 = vsel %vm2032, %v3080, 0.0
          %v4133 = vsel %vm2033, %v3080, 0.0
          %v4134 = vsel %vm2034, %v3080, 0.0
          %v4135 = vsel %vm2035, %v3084, 0.0
          %v4136 = vsel %vm2036, %v3084, 0.0
          %v4137 = vsel %vm2037, %v3084, 0.0
          %v4138 = vsel %vm2038, %v3084, 0.0
          %v4139 = vsel %vm2039, %v3088, 0.0
          %v4140 = vsel %vm2040, %v3088, 0.0
          %v4141 = vsel %vm2041, %v3088, 0.0
          %v4142 = vsel %vm2042, %v3088, 0.0
          %v4143 = vsel %vm2043, %v3095, 0.0
          %v4144 = vsel %vm2044, %v3095, 0.0
          %v4145 = vsel %vm2045, %v3095, 0.0
          %v4146 = vsel %vm2046, %v3095, 0.0
          %v4147 = vsel %vm2047, %v3099, 0.0
          %v4148 = vsel %vm2048, %v3099, 0.0
          %v4149 = vsel %vm2049, %v3099, 0.0
          %v4150 = vsel %vm2050, %v3099, 0.0
          %v4151 = vsel %vm2051, %v3103, 0.0
          %v4152 = vsel %vm2052, %v3103, 0.0
          %v4153 = vsel %vm2053, %v3103, 0.0
          %v4154 = vsel %vm2054, %v3103, 0.0
          %v4155 = vsel %vm2055, %v3107, 0.0
          %v4156 = vsel %vm2056, %v3107, 0.0
          %v4157 = vsel %vm2057, %v3107, 0.0
          %v4158 = vsel %vm2058, %v3107, 0.0
          %v4159 = vsel %vm2059, %v3111, 0.0
          %v4160 = vsel %vm2060, %v3111, 0.0
          %v4161 = vsel %vm2061, %v3111, 0.0
          %v4162 = vsel %vm2062, %v3111, 0.0
          %v4163 = vsel %vm2063, %v3115, 0.0
          %v4164 = vsel %vm2064, %v3115, 0.0
          %v4165 = vsel %vm2065, %v3115, 0.0
          %v4166 = vsel %vm2066, %v3115, 0.0
          %v4167 = vsel %vm2067, %v3119, 0.0
          %v4168 = vsel %vm2068, %v3119, 0.0
          %v4169 = vsel %vm2069, %v3119, 0.0
          %v4170 = vsel %vm2070, %v3119, 0.0
          %v4171 = vsel %vm2071, %v3123, 0.0
          %v4172 = vsel %vm2072, %v3123, 0.0
          %v4173 = vsel %vm2073, %v3123, 0.0
          %v4174 = vsel %vm2074, %v3123, 0.0
          %v4175 = vsel %vm2075, %v3127, 0.0
          %v4176 = vsel %vm2076, %v3127, 0.0
          %v4177 = vsel %vm2077, %v3127, 0.0
          %v4178 = vsel %vm2078, %v3127, 0.0
          %v4179 = vsel %vm2079, %v3131, 0.0
          %v4180 = vsel %vm2080, %v3131, 0.0
          %v4181 = vsel %vm2081, %v3131, 0.0
          %v4182 = vsel %vm2082, %v3131, 0.0
          %v4183 = vsel %vm2083, %v3135, 0.0
          %v4184 = vsel %vm2084, %v3135, 0.0
          %v4185 = vsel %vm2085, %v3135, 0.0
          %v4186 = vsel %vm2086, %v3135, 0.0
          %v4187 = vsel %vm2087, %v3139, 0.0
          %v4188 = vsel %vm2088, %v3139, 0.0
          %v4189 = vsel %vm2089, %v3139, 0.0
          %v4190 = vsel %vm2090, %v3139, 0.0
          %v4191 = vsel %vm2091, %v3143, 0.0
          %v4192 = vsel %vm2092, %v3143, 0.0
          %v4193 = vsel %vm2093, %v3143, 0.0
          %v4194 = vsel %vm2094, %v3143, 0.0
          %v4195 = vsel %vm2095, %v3147, 0.0
          %v4196 = vsel %vm2096, %v3147, 0.0
          %v4197 = vsel %vm2097, %v3147, 0.0
          %v4198 = vsel %vm2098, %v3147, 0.0
          %v4199 = vsel %vm2099, %v3151, 0.0
          %v4200 = vsel %vm2100, %v3151, 0.0
          %v4201 = vsel %vm2101, %v3151, 0.0
          %v4202 = vsel %vm2102, %v3151, 0.0
          %v4203 = vsel %vm2103, %v3155, 0.0
          %v4204 = vsel %vm2104, %v3155, 0.0
          %v4205 = vsel %vm2105, %v3155, 0.0
          %v4206 = vsel %vm2106, %v3155, 0.0
          %v4207 = vsel %vm2107, %v3162, 0.0
          %v4208 = vsel %vm2108, %v3162, 0.0
          %v4209 = vsel %vm2109, %v3162, 0.0
          %v4210 = vsel %vm2110, %v3162, 0.0
          %v4211 = vsel %vm2111, %v3166, 0.0
          %v4212 = vsel %vm2112, %v3166, 0.0
          %v4213 = vsel %vm2113, %v3166, 0.0
          %v4214 = vsel %vm2114, %v3166, 0.0
          %v4215 = vsel %vm2115, %v3170, 0.0
          %v4216 = vsel %vm2116, %v3170, 0.0
          %v4217 = vsel %vm2117, %v3170, 0.0
          %v4218 = vsel %vm2118, %v3170, 0.0
          %v4219 = vsel %vm2119, %v3174, 0.0
          %v4220 = vsel %vm2120, %v3174, 0.0
          %v4221 = vsel %vm2121, %v3174, 0.0
          %v4222 = vsel %vm2122, %v3174, 0.0
          %v4223 = vsel %vm2123, %v3178, 0.0
          %v4224 = vsel %vm2124, %v3178, 0.0
          %v4225 = vsel %vm2125, %v3178, 0.0
          %v4226 = vsel %vm2126, %v3178, 0.0
          %v4227 = vsel %vm2127, %v3182, 0.0
          %v4228 = vsel %vm2128, %v3182, 0.0
          %v4229 = vsel %vm2129, %v3182, 0.0
          %v4230 = vsel %vm2130, %v3182, 0.0
          %v4231 = vsel %vm2131, %v3186, 0.0
          %v4232 = vsel %vm2132, %v3186, 0.0
          %v4233 = vsel %vm2133, %v3186, 0.0
          %v4234 = vsel %vm2134, %v3186, 0.0
          %v4235 = vsel %vm2135, %v3190, 0.0
          %v4236 = vsel %vm2136, %v3190, 0.0
          %v4237 = vsel %vm2137, %v3190, 0.0
          %v4238 = vsel %vm2138, %v3190, 0.0
          %v4239 = vsel %vm2139, %v3194, 0.0
          %v4240 = vsel %vm2140, %v3194, 0.0
          %v4241 = vsel %vm2141, %v3194, 0.0
          %v4242 = vsel %vm2142, %v3194, 0.0
          %v4243 = vsel %vm2143, %v3198, 0.0
          %v4244 = vsel %vm2144, %v3198, 0.0
          %v4245 = vsel %vm2145, %v3198, 0.0
          %v4246 = vsel %vm2146, %v3198, 0.0
          %v4247 = vsel %vm2147, %v3202, 0.0
          %v4248 = vsel %vm2148, %v3202, 0.0
          %v4249 = vsel %vm2149, %v3202, 0.0
          %v4250 = vsel %vm2150, %v3202, 0.0
          %v4251 = vsel %vm2151, %v3206, 0.0
          %v4252 = vsel %vm2152, %v3206, 0.0
          %v4253 = vsel %vm2153, %v3206, 0.0
          %v4254 = vsel %vm2154, %v3206, 0.0
          %v4255 = vsel %vm2155, %v3210, 0.0
          %v4256 = vsel %vm2156, %v3210, 0.0
          %v4257 = vsel %vm2157, %v3210, 0.0
          %v4258 = vsel %vm2158, %v3210, 0.0
          %v4259 = vsel %vm2159, %v3214, 0.0
          %v4260 = vsel %vm2160, %v3214, 0.0
          %v4261 = vsel %vm2161, %v3214, 0.0
          %v4262 = vsel %vm2162, %v3214, 0.0
          %v4263 = vsel %vm2163, %v3218, 0.0
          %v4264 = vsel %vm2164, %v3218, 0.0
          %v4265 = vsel %vm2165, %v3218, 0.0
          %v4266 = vsel %vm2166, %v3218, 0.0
          %v4267 = vsel %vm2167, %v3222, 0.0
          %v4268 = vsel %vm2168, %v3222, 0.0
          %v4269 = vsel %vm2169, %v3222, 0.0
          %v4270 = vsel %vm2170, %v3222, 0.0
          %v4271 = vsel %vm2171, %v3229, 0.0
          %v4272 = vsel %vm2172, %v3229, 0.0
          %v4273 = vsel %vm2173, %v3229, 0.0
          %v4274 = vsel %vm2174, %v3229, 0.0
          %v4275 = vsel %vm2175, %v3233, 0.0
          %v4276 = vsel %vm2176, %v3233, 0.0
          %v4277 = vsel %vm2177, %v3233, 0.0
          %v4278 = vsel %vm2178, %v3233, 0.0
          %v4279 = vsel %vm2179, %v3237, 0.0
          %v4280 = vsel %vm2180, %v3237, 0.0
          %v4281 = vsel %vm2181, %v3237, 0.0
          %v4282 = vsel %vm2182, %v3237, 0.0
          %v4283 = vsel %vm2183, %v3241, 0.0
          %v4284 = vsel %vm2184, %v3241, 0.0
          %v4285 = vsel %vm2185, %v3241, 0.0
          %v4286 = vsel %vm2186, %v3241, 0.0
          %v4287 = vsel %vm2187, %v3245, 0.0
          %v4288 = vsel %vm2188, %v3245, 0.0
          %v4289 = vsel %vm2189, %v3245, 0.0
          %v4290 = vsel %vm2190, %v3245, 0.0
          %v4291 = vsel %vm2191, %v3249, 0.0
          %v4292 = vsel %vm2192, %v3249, 0.0
          %v4293 = vsel %vm2193, %v3249, 0.0
          %v4294 = vsel %vm2194, %v3249, 0.0
          %v4295 = vsel %vm2195, %v3253, 0.0
          %v4296 = vsel %vm2196, %v3253, 0.0
          %v4297 = vsel %vm2197, %v3253, 0.0
          %v4298 = vsel %vm2198, %v3253, 0.0
          %v4299 = vsel %vm2199, %v3257, 0.0
          %v4300 = vsel %vm2200, %v3257, 0.0
          %v4301 = vsel %vm2201, %v3257, 0.0
          %v4302 = vsel %vm2202, %v3257, 0.0
          %v4303 = vsel %vm2203, %v3261, 0.0
          %v4304 = vsel %vm2204, %v3261, 0.0
          %v4305 = vsel %vm2205, %v3261, 0.0
          %v4306 = vsel %vm2206, %v3261, 0.0
          %v4307 = vsel %vm2207, %v3265, 0.0
          %v4308 = vsel %vm2208, %v3265, 0.0
          %v4309 = vsel %vm2209, %v3265, 0.0
          %v4310 = vsel %vm2210, %v3265, 0.0
          %v4311 = vsel %vm2211, %v3269, 0.0
          %v4312 = vsel %vm2212, %v3269, 0.0
          %v4313 = vsel %vm2213, %v3269, 0.0
          %v4314 = vsel %vm2214, %v3269, 0.0
          %v4315 = vsel %vm2215, %v3273, 0.0
          %v4316 = vsel %vm2216, %v3273, 0.0
          %v4317 = vsel %vm2217, %v3273, 0.0
          %v4318 = vsel %vm2218, %v3273, 0.0
          %v4319 = vsel %vm2219, %v3277, 0.0
          %v4320 = vsel %vm2220, %v3277, 0.0
          %v4321 = vsel %vm2221, %v3277, 0.0
          %v4322 = vsel %vm2222, %v3277, 0.0
          %v4323 = vsel %vm2223, %v3281, 0.0
          %v4324 = vsel %vm2224, %v3281, 0.0
          %v4325 = vsel %vm2225, %v3281, 0.0
          %v4326 = vsel %vm2226, %v3281, 0.0
          %v4327 = vsel %vm2227, %v3285, 0.0
          %v4328 = vsel %vm2228, %v3285, 0.0
          %v4329 = vsel %vm2229, %v3285, 0.0
          %v4330 = vsel %vm2230, %v3285, 0.0
          %v4331 = vsel %vm2231, %v3289, 0.0
          %v4332 = vsel %vm2232, %v3289, 0.0
          %v4333 = vsel %vm2233, %v3289, 0.0
          %v4334 = vsel %vm2234, %v3289, 0.0
          %v4335 = vsel %vm2235, %v3296, 0.0
          %v4336 = vsel %vm2236, %v3296, 0.0
          %v4337 = vsel %vm2237, %v3296, 0.0
          %v4338 = vsel %vm2238, %v3296, 0.0
          %v4339 = vsel %vm2239, %v3300, 0.0
          %v4340 = vsel %vm2240, %v3300, 0.0
          %v4341 = vsel %vm2241, %v3300, 0.0
          %v4342 = vsel %vm2242, %v3300, 0.0
          %v4343 = vsel %vm2243, %v3304, 0.0
          %v4344 = vsel %vm2244, %v3304, 0.0
          %v4345 = vsel %vm2245, %v3304, 0.0
          %v4346 = vsel %vm2246, %v3304, 0.0
          %v4347 = vsel %vm2247, %v3308, 0.0
          %v4348 = vsel %vm2248, %v3308, 0.0
          %v4349 = vsel %vm2249, %v3308, 0.0
          %v4350 = vsel %vm2250, %v3308, 0.0
          %v4351 = vsel %vm2251, %v3312, 0.0
          %v4352 = vsel %vm2252, %v3312, 0.0
          %v4353 = vsel %vm2253, %v3312, 0.0
          %v4354 = vsel %vm2254, %v3312, 0.0
          %v4355 = vsel %vm2255, %v3316, 0.0
          %v4356 = vsel %vm2256, %v3316, 0.0
          %v4357 = vsel %vm2257, %v3316, 0.0
          %v4358 = vsel %vm2258, %v3316, 0.0
          %v4359 = vsel %vm2259, %v3320, 0.0
          %v4360 = vsel %vm2260, %v3320, 0.0
          %v4361 = vsel %vm2261, %v3320, 0.0
          %v4362 = vsel %vm2262, %v3320, 0.0
          %v4363 = vsel %vm2263, %v3324, 0.0
          %v4364 = vsel %vm2264, %v3324, 0.0
          %v4365 = vsel %vm2265, %v3324, 0.0
          %v4366 = vsel %vm2266, %v3324, 0.0
          %v4367 = vsel %vm2267, %v3328, 0.0
          %v4368 = vsel %vm2268, %v3328, 0.0
          %v4369 = vsel %vm2269, %v3328, 0.0
          %v4370 = vsel %vm2270, %v3328, 0.0
          %v4371 = vsel %vm2271, %v3332, 0.0
          %v4372 = vsel %vm2272, %v3332, 0.0
          %v4373 = vsel %vm2273, %v3332, 0.0
          %v4374 = vsel %vm2274, %v3332, 0.0
          %v4375 = vsel %vm2275, %v3336, 0.0
          %v4376 = vsel %vm2276, %v3336, 0.0
          %v4377 = vsel %vm2277, %v3336, 0.0
          %v4378 = vsel %vm2278, %v3336, 0.0
          %v4379 = vsel %vm2279, %v3340, 0.0
          %v4380 = vsel %vm2280, %v3340, 0.0
          %v4381 = vsel %vm2281, %v3340, 0.0
          %v4382 = vsel %vm2282, %v3340, 0.0
          %v4383 = vsel %vm2283, %v3344, 0.0
          %v4384 = vsel %vm2284, %v3344, 0.0
          %v4385 = vsel %vm2285, %v3344, 0.0
          %v4386 = vsel %vm2286, %v3344, 0.0
          %v4387 = vsel %vm2287, %v3348, 0.0
          %v4388 = vsel %vm2288, %v3348, 0.0
          %v4389 = vsel %vm2289, %v3348, 0.0
          %v4390 = vsel %vm2290, %v3348, 0.0
          %v4391 = vsel %vm2291, %v3352, 0.0
          %v4392 = vsel %vm2292, %v3352, 0.0
          %v4393 = vsel %vm2293, %v3352, 0.0
          %v4394 = vsel %vm2294, %v3352, 0.0
          %v4395 = vsel %vm2295, %v3356, 0.0
          %v4396 = vsel %vm2296, %v3356, 0.0
          %v4397 = vsel %vm2297, %v3356, 0.0
          %v4398 = vsel %vm2298, %v3356, 0.0
          %v4399 = vsel %vm2299, %v3363, 0.0
          %v4400 = vsel %vm2300, %v3363, 0.0
          %v4401 = vsel %vm2301, %v3363, 0.0
          %v4402 = vsel %vm2302, %v3363, 0.0
          %v4403 = vsel %vm2303, %v3367, 0.0
          %v4404 = vsel %vm2304, %v3367, 0.0
          %v4405 = vsel %vm2305, %v3367, 0.0
          %v4406 = vsel %vm2306, %v3367, 0.0
          %v4407 = vsel %vm2307, %v3371, 0.0
          %v4408 = vsel %vm2308, %v3371, 0.0
          %v4409 = vsel %vm2309, %v3371, 0.0
          %v4410 = vsel %vm2310, %v3371, 0.0
          %v4411 = vsel %vm2311, %v3375, 0.0
          %v4412 = vsel %vm2312, %v3375, 0.0
          %v4413 = vsel %vm2313, %v3375, 0.0
          %v4414 = vsel %vm2314, %v3375, 0.0
          %v4415 = vsel %vm2315, %v3379, 0.0
          %v4416 = vsel %vm2316, %v3379, 0.0
          %v4417 = vsel %vm2317, %v3379, 0.0
          %v4418 = vsel %vm2318, %v3379, 0.0
          %v4419 = vsel %vm2319, %v3383, 0.0
          %v4420 = vsel %vm2320, %v3383, 0.0
          %v4421 = vsel %vm2321, %v3383, 0.0
          %v4422 = vsel %vm2322, %v3383, 0.0
          %v4423 = vsel %vm2323, %v3387, 0.0
          %v4424 = vsel %vm2324, %v3387, 0.0
          %v4425 = vsel %vm2325, %v3387, 0.0
          %v4426 = vsel %vm2326, %v3387, 0.0
          %v4427 = vsel %vm2327, %v3391, 0.0
          %v4428 = vsel %vm2328, %v3391, 0.0
          %v4429 = vsel %vm2329, %v3391, 0.0
          %v4430 = vsel %vm2330, %v3391, 0.0
          %v4431 = vsel %vm2331, %v3395, 0.0
          %v4432 = vsel %vm2332, %v3395, 0.0
          %v4433 = vsel %vm2333, %v3395, 0.0
          %v4434 = vsel %vm2334, %v3395, 0.0
          %v4435 = vsel %vm2335, %v3399, 0.0
          %v4436 = vsel %vm2336, %v3399, 0.0
          %v4437 = vsel %vm2337, %v3399, 0.0
          %v4438 = vsel %vm2338, %v3399, 0.0
          %v4439 = vsel %vm2339, %v3403, 0.0
          %v4440 = vsel %vm2340, %v3403, 0.0
          %v4441 = vsel %vm2341, %v3403, 0.0
          %v4442 = vsel %vm2342, %v3403, 0.0
          %v4443 = vsel %vm2343, %v3407, 0.0
          %v4444 = vsel %vm2344, %v3407, 0.0
          %v4445 = vsel %vm2345, %v3407, 0.0
          %v4446 = vsel %vm2346, %v3407, 0.0
          %v4447 = vsel %vm2347, %v3411, 0.0
          %v4448 = vsel %vm2348, %v3411, 0.0
          %v4449 = vsel %vm2349, %v3411, 0.0
          %v4450 = vsel %vm2350, %v3411, 0.0
          %v4451 = vsel %vm2351, %v3415, 0.0
          %v4452 = vsel %vm2352, %v3415, 0.0
          %v4453 = vsel %vm2353, %v3415, 0.0
          %v4454 = vsel %vm2354, %v3415, 0.0
          %v4455 = vsel %vm2355, %v3419, 0.0
          %v4456 = vsel %vm2356, %v3419, 0.0
          %v4457 = vsel %vm2357, %v3419, 0.0
          %v4458 = vsel %vm2358, %v3419, 0.0
          %v4459 = vsel %vm2359, %v3423, 0.0
          %v4460 = vsel %vm2360, %v3423, 0.0
          %v4461 = vsel %vm2361, %v3423, 0.0
          %v4462 = vsel %vm2362, %v3423, 0.0
          %v4463 = vsel %vm2363, %v3430, 0.0
          %v4464 = vsel %vm2364, %v3430, 0.0
          %v4465 = vsel %vm2365, %v3430, 0.0
          %v4466 = vsel %vm2366, %v3430, 0.0
          %v4467 = vsel %vm2367, %v3434, 0.0
          %v4468 = vsel %vm2368, %v3434, 0.0
          %v4469 = vsel %vm2369, %v3434, 0.0
          %v4470 = vsel %vm2370, %v3434, 0.0
          %v4471 = vsel %vm2371, %v3438, 0.0
          %v4472 = vsel %vm2372, %v3438, 0.0
          %v4473 = vsel %vm2373, %v3438, 0.0
          %v4474 = vsel %vm2374, %v3438, 0.0
          %v4475 = vsel %vm2375, %v3442, 0.0
          %v4476 = vsel %vm2376, %v3442, 0.0
          %v4477 = vsel %vm2377, %v3442, 0.0
          %v4478 = vsel %vm2378, %v3442, 0.0
          %v4479 = vsel %vm2379, %v3446, 0.0
          %v4480 = vsel %vm2380, %v3446, 0.0
          %v4481 = vsel %vm2381, %v3446, 0.0
          %v4482 = vsel %vm2382, %v3446, 0.0
          %v4483 = vsel %vm2383, %v3450, 0.0
          %v4484 = vsel %vm2384, %v3450, 0.0
          %v4485 = vsel %vm2385, %v3450, 0.0
          %v4486 = vsel %vm2386, %v3450, 0.0
          %v4487 = vsel %vm2387, %v3454, 0.0
          %v4488 = vsel %vm2388, %v3454, 0.0
          %v4489 = vsel %vm2389, %v3454, 0.0
          %v4490 = vsel %vm2390, %v3454, 0.0
          %v4491 = vsel %vm2391, %v3458, 0.0
          %v4492 = vsel %vm2392, %v3458, 0.0
          %v4493 = vsel %vm2393, %v3458, 0.0
          %v4494 = vsel %vm2394, %v3458, 0.0
          %v4495 = vsel %vm2395, %v3462, 0.0
          %v4496 = vsel %vm2396, %v3462, 0.0
          %v4497 = vsel %vm2397, %v3462, 0.0
          %v4498 = vsel %vm2398, %v3462, 0.0
          %v4499 = vsel %vm2399, %v3466, 0.0
          %v4500 = vsel %vm2400, %v3466, 0.0
          %v4501 = vsel %vm2401, %v3466, 0.0
          %v4502 = vsel %vm2402, %v3466, 0.0
          %v4503 = vsel %vm2403, %v3470, 0.0
          %v4504 = vsel %vm2404, %v3470, 0.0
          %v4505 = vsel %vm2405, %v3470, 0.0
          %v4506 = vsel %vm2406, %v3470, 0.0
          %v4507 = vsel %vm2407, %v3474, 0.0
          %v4508 = vsel %vm2408, %v3474, 0.0
          %v4509 = vsel %vm2409, %v3474, 0.0
          %v4510 = vsel %vm2410, %v3474, 0.0
          %v4511 = vsel %vm2411, %v3478, 0.0
          %v4512 = vsel %vm2412, %v3478, 0.0
          %v4513 = vsel %vm2413, %v3478, 0.0
          %v4514 = vsel %vm2414, %v3478, 0.0
          %v4515 = vsel %vm2415, %v3482, 0.0
          %v4516 = vsel %vm2416, %v3482, 0.0
          %v4517 = vsel %vm2417, %v3482, 0.0
          %v4518 = vsel %vm2418, %v3482, 0.0
          %v4519 = vsel %vm2419, %v3486, 0.0
          %v4520 = vsel %vm2420, %v3486, 0.0
          %v4521 = vsel %vm2421, %v3486, 0.0
          %v4522 = vsel %vm2422, %v3486, 0.0
          %v4523 = vsel %vm2423, %v3490, 0.0
          %v4524 = vsel %vm2424, %v3490, 0.0
          %v4525 = vsel %vm2425, %v3490, 0.0
          %v4526 = vsel %vm2426, %v3490, 0.0
          %v4527 = vsel %vm2427, %v3497, 0.0
          %v4528 = vsel %vm2428, %v3497, 0.0
          %v4529 = vsel %vm2429, %v3497, 0.0
          %v4530 = vsel %vm2430, %v3497, 0.0
          %v4531 = vsel %vm2431, %v3501, 0.0
          %v4532 = vsel %vm2432, %v3501, 0.0
          %v4533 = vsel %vm2433, %v3501, 0.0
          %v4534 = vsel %vm2434, %v3501, 0.0
          %v4535 = vsel %vm2435, %v3505, 0.0
          %v4536 = vsel %vm2436, %v3505, 0.0
          %v4537 = vsel %vm2437, %v3505, 0.0
          %v4538 = vsel %vm2438, %v3505, 0.0
          %v4539 = vsel %vm2439, %v3509, 0.0
          %v4540 = vsel %vm2440, %v3509, 0.0
          %v4541 = vsel %vm2441, %v3509, 0.0
          %v4542 = vsel %vm2442, %v3509, 0.0
          %v4543 = vsel %vm2443, %v3513, 0.0
          %v4544 = vsel %vm2444, %v3513, 0.0
          %v4545 = vsel %vm2445, %v3513, 0.0
          %v4546 = vsel %vm2446, %v3513, 0.0
          %v4547 = vsel %vm2447, %v3517, 0.0
          %v4548 = vsel %vm2448, %v3517, 0.0
          %v4549 = vsel %vm2449, %v3517, 0.0
          %v4550 = vsel %vm2450, %v3517, 0.0
          %v4551 = vsel %vm2451, %v3521, 0.0
          %v4552 = vsel %vm2452, %v3521, 0.0
          %v4553 = vsel %vm2453, %v3521, 0.0
          %v4554 = vsel %vm2454, %v3521, 0.0
          %v4555 = vsel %vm2455, %v3525, 0.0
          %v4556 = vsel %vm2456, %v3525, 0.0
          %v4557 = vsel %vm2457, %v3525, 0.0
          %v4558 = vsel %vm2458, %v3525, 0.0
          %v4559 = vsel %vm2459, %v3529, 0.0
          %v4560 = vsel %vm2460, %v3529, 0.0
          %v4561 = vsel %vm2461, %v3529, 0.0
          %v4562 = vsel %vm2462, %v3529, 0.0
          %v4563 = vsel %vm2463, %v3533, 0.0
          %v4564 = vsel %vm2464, %v3533, 0.0
          %v4565 = vsel %vm2465, %v3533, 0.0
          %v4566 = vsel %vm2466, %v3533, 0.0
          %v4567 = vsel %vm2467, %v3537, 0.0
          %v4568 = vsel %vm2468, %v3537, 0.0
          %v4569 = vsel %vm2469, %v3537, 0.0
          %v4570 = vsel %vm2470, %v3537, 0.0
          %v4571 = vsel %vm2471, %v3541, 0.0
          %v4572 = vsel %vm2472, %v3541, 0.0
          %v4573 = vsel %vm2473, %v3541, 0.0
          %v4574 = vsel %vm2474, %v3541, 0.0
          %v4575 = vsel %vm2475, %v3545, 0.0
          %v4576 = vsel %vm2476, %v3545, 0.0
          %v4577 = vsel %vm2477, %v3545, 0.0
          %v4578 = vsel %vm2478, %v3545, 0.0
          %v4579 = vsel %vm2479, %v3549, 0.0
          %v4580 = vsel %vm2480, %v3549, 0.0
          %v4581 = vsel %vm2481, %v3549, 0.0
          %v4582 = vsel %vm2482, %v3549, 0.0
          %v4583 = vsel %vm2483, %v3553, 0.0
          %v4584 = vsel %vm2484, %v3553, 0.0
          %v4585 = vsel %vm2485, %v3553, 0.0
          %v4586 = vsel %vm2486, %v3553, 0.0
          %v4587 = vsel %vm2487, %v3557, 0.0
          %v4588 = vsel %vm2488, %v3557, 0.0
          %v4589 = vsel %vm2489, %v3557, 0.0
          %v4590 = vsel %vm2490, %v3557, 0.0
          %v4591 = vsel %vm2491, %v3564, 0.0
          %v4592 = vsel %vm2492, %v3564, 0.0
          %v4593 = vsel %vm2493, %v3564, 0.0
          %v4594 = vsel %vm2494, %v3564, 0.0
          %v4595 = vsel %vm2495, %v3568, 0.0
          %v4596 = vsel %vm2496, %v3568, 0.0
          %v4597 = vsel %vm2497, %v3568, 0.0
          %v4598 = vsel %vm2498, %v3568, 0.0
          %v4599 = vsel %vm2499, %v3572, 0.0
          %v4600 = vsel %vm2500, %v3572, 0.0
          %v4601 = vsel %vm2501, %v3572, 0.0
          %v4602 = vsel %vm2502, %v3572, 0.0
          %v4603 = vsel %vm2503, %v3576, 0.0
          %v4604 = vsel %vm2504, %v3576, 0.0
          %v4605 = vsel %vm2505, %v3576, 0.0
          %v4606 = vsel %vm2506, %v3576, 0.0
          %v4607 = vsel %vm2507, %v3580, 0.0
          %v4608 = vsel %vm2508, %v3580, 0.0
          %v4609 = vsel %vm2509, %v3580, 0.0
          %v4610 = vsel %vm2510, %v3580, 0.0
          %v4611 = vsel %vm2511, %v3584, 0.0
          %v4612 = vsel %vm2512, %v3584, 0.0
          %v4613 = vsel %vm2513, %v3584, 0.0
          %v4614 = vsel %vm2514, %v3584, 0.0
          %v4615 = vsel %vm2515, %v3588, 0.0
          %v4616 = vsel %vm2516, %v3588, 0.0
          %v4617 = vsel %vm2517, %v3588, 0.0
          %v4618 = vsel %vm2518, %v3588, 0.0
          %v4619 = vsel %vm2519, %v3592, 0.0
          %v4620 = vsel %vm2520, %v3592, 0.0
          %v4621 = vsel %vm2521, %v3592, 0.0
          %v4622 = vsel %vm2522, %v3592, 0.0
          %v4623 = vsel %vm2523, %v3596, 0.0
          %v4624 = vsel %vm2524, %v3596, 0.0
          %v4625 = vsel %vm2525, %v3596, 0.0
          %v4626 = vsel %vm2526, %v3596, 0.0
          %v4627 = vsel %vm2527, %v3600, 0.0
          %v4628 = vsel %vm2528, %v3600, 0.0
          %v4629 = vsel %vm2529, %v3600, 0.0
          %v4630 = vsel %vm2530, %v3600, 0.0
          %v4631 = vsel %vm2531, %v3604, 0.0
          %v4632 = vsel %vm2532, %v3604, 0.0
          %v4633 = vsel %vm2533, %v3604, 0.0
          %v4634 = vsel %vm2534, %v3604, 0.0
          %v4635 = vsel %vm2535, %v3608, 0.0
          %v4636 = vsel %vm2536, %v3608, 0.0
          %v4637 = vsel %vm2537, %v3608, 0.0
          %v4638 = vsel %vm2538, %v3608, 0.0
          %v4639 = vsel %vm2539, %v3612, 0.0
          %v4640 = vsel %vm2540, %v3612, 0.0
          %v4641 = vsel %vm2541, %v3612, 0.0
          %v4642 = vsel %vm2542, %v3612, 0.0
          %v4643 = vsel %vm2543, %v3616, 0.0
          %v4644 = vsel %vm2544, %v3616, 0.0
          %v4645 = vsel %vm2545, %v3616, 0.0
          %v4646 = vsel %vm2546, %v3616, 0.0
          %v4647 = vsel %vm2547, %v3620, 0.0
          %v4648 = vsel %vm2548, %v3620, 0.0
          %v4649 = vsel %vm2549, %v3620, 0.0
          %v4650 = vsel %vm2550, %v3620, 0.0
          %v4651 = vsel %vm2551, %v3624, 0.0
          %v4652 = vsel %vm2552, %v3624, 0.0
          %v4653 = vsel %vm2553, %v3624, 0.0
          %v4654 = vsel %vm2554, %v3624, 0.0
          %v4655 = vsel %vm2555, %v3631, 0.0
          %v4656 = vsel %vm2556, %v3631, 0.0
          %v4657 = vsel %vm2557, %v3631, 0.0
          %v4658 = vsel %vm2558, %v3631, 0.0
          %v4659 = vsel %vm2559, %v3635, 0.0
          %v4660 = vsel %vm2560, %v3635, 0.0
          %v4661 = vsel %vm2561, %v3635, 0.0
          %v4662 = vsel %vm2562, %v3635, 0.0
          %v4663 = vsel %vm2563, %v3639, 0.0
          %v4664 = vsel %vm2564, %v3639, 0.0
          %v4665 = vsel %vm2565, %v3639, 0.0
          %v4666 = vsel %vm2566, %v3639, 0.0
          %v4667 = vsel %vm2567, %v3643, 0.0
          %v4668 = vsel %vm2568, %v3643, 0.0
          %v4669 = vsel %vm2569, %v3643, 0.0
          %v4670 = vsel %vm2570, %v3643, 0.0
          %v4671 = vsel %vm2571, %v3647, 0.0
          %v4672 = vsel %vm2572, %v3647, 0.0
          %v4673 = vsel %vm2573, %v3647, 0.0
          %v4674 = vsel %vm2574, %v3647, 0.0
          %v4675 = vsel %vm2575, %v3651, 0.0
          %v4676 = vsel %vm2576, %v3651, 0.0
          %v4677 = vsel %vm2577, %v3651, 0.0
          %v4678 = vsel %vm2578, %v3651, 0.0
          %v4679 = vsel %vm2579, %v3655, 0.0
          %v4680 = vsel %vm2580, %v3655, 0.0
          %v4681 = vsel %vm2581, %v3655, 0.0
          %v4682 = vsel %vm2582, %v3655, 0.0
          %v4683 = vsel %vm2583, %v3659, 0.0
          %v4684 = vsel %vm2584, %v3659, 0.0
          %v4685 = vsel %vm2585, %v3659, 0.0
          %v4686 = vsel %vm2586, %v3659, 0.0
          %v4687 = vsel %vm2587, %v3663, 0.0
          %v4688 = vsel %vm2588, %v3663, 0.0
          %v4689 = vsel %vm2589, %v3663, 0.0
          %v4690 = vsel %vm2590, %v3663, 0.0
          %v4691 = vsel %vm2591, %v3667, 0.0
          %v4692 = vsel %vm2592, %v3667, 0.0
          %v4693 = vsel %vm2593, %v3667, 0.0
          %v4694 = vsel %vm2594, %v3667, 0.0
          %v4695 = vsel %vm2595, %v3671, 0.0
          %v4696 = vsel %vm2596, %v3671, 0.0
          %v4697 = vsel %vm2597, %v3671, 0.0
          %v4698 = vsel %vm2598, %v3671, 0.0
          %v4699 = vsel %vm2599, %v3675, 0.0
          %v4700 = vsel %vm2600, %v3675, 0.0
          %v4701 = vsel %vm2601, %v3675, 0.0
          %v4702 = vsel %vm2602, %v3675, 0.0
          %v4703 = vsel %vm2603, %v3679, 0.0
          %v4704 = vsel %vm2604, %v3679, 0.0
          %v4705 = vsel %vm2605, %v3679, 0.0
          %v4706 = vsel %vm2606, %v3679, 0.0
          %v4707 = vsel %vm2607, %v3683, 0.0
          %v4708 = vsel %vm2608, %v3683, 0.0
          %v4709 = vsel %vm2609, %v3683, 0.0
          %v4710 = vsel %vm2610, %v3683, 0.0
          %v4711 = vsel %vm2611, %v3687, 0.0
          %v4712 = vsel %vm2612, %v3687, 0.0
          %v4713 = vsel %vm2613, %v3687, 0.0
          %v4714 = vsel %vm2614, %v3687, 0.0
          %v4715 = vsel %vm2615, %v3691, 0.0
          %v4716 = vsel %vm2616, %v3691, 0.0
          %v4717 = vsel %vm2617, %v3691, 0.0
          %v4718 = vsel %vm2618, %v3691, 0.0
          %v4719 = vsel %vm2619, %v3698, 0.0
          %v4720 = vsel %vm2620, %v3698, 0.0
          %v4721 = vsel %vm2621, %v3698, 0.0
          %v4722 = vsel %vm2622, %v3698, 0.0
          %v4723 = vsel %vm2623, %v3702, 0.0
          %v4724 = vsel %vm2624, %v3702, 0.0
          %v4725 = vsel %vm2625, %v3702, 0.0
          %v4726 = vsel %vm2626, %v3702, 0.0
          %v4727 = vsel %vm2627, %v3706, 0.0
          %v4728 = vsel %vm2628, %v3706, 0.0
          %v4729 = vsel %vm2629, %v3706, 0.0
          %v4730 = vsel %vm2630, %v3706, 0.0
          %v4731 = vsel %vm2631, %v3710, 0.0
          %v4732 = vsel %vm2632, %v3710, 0.0
          %v4733 = vsel %vm2633, %v3710, 0.0
          %v4734 = vsel %vm2634, %v3710, 0.0
          %v4735 = vsel %vm2635, %v3714, 0.0
          %v4736 = vsel %vm2636, %v3714, 0.0
          %v4737 = vsel %vm2637, %v3714, 0.0
          %v4738 = vsel %vm2638, %v3714, 0.0
          %v4739 = vsel %vm2639, %v3718, 0.0
          %v4740 = vsel %vm2640, %v3718, 0.0
          %v4741 = vsel %vm2641, %v3718, 0.0
          %v4742 = vsel %vm2642, %v3718, 0.0
          %v4743 = vsel %vm2643, %v3722, 0.0
          %v4744 = vsel %vm2644, %v3722, 0.0
          %v4745 = vsel %vm2645, %v3722, 0.0
          %v4746 = vsel %vm2646, %v3722, 0.0
          %v4747 = vsel %vm2647, %v3726, 0.0
          %v4748 = vsel %vm2648, %v3726, 0.0
          %v4749 = vsel %vm2649, %v3726, 0.0
          %v4750 = vsel %vm2650, %v3726, 0.0
          %v4751 = vsel %vm2651, %v3730, 0.0
          %v4752 = vsel %vm2652, %v3730, 0.0
          %v4753 = vsel %vm2653, %v3730, 0.0
          %v4754 = vsel %vm2654, %v3730, 0.0
          %v4755 = vsel %vm2655, %v3734, 0.0
          %v4756 = vsel %vm2656, %v3734, 0.0
          %v4757 = vsel %vm2657, %v3734, 0.0
          %v4758 = vsel %vm2658, %v3734, 0.0
          %v4759 = vsel %vm2659, %v3738, 0.0
          %v4760 = vsel %vm2660, %v3738, 0.0
          %v4761 = vsel %vm2661, %v3738, 0.0
          %v4762 = vsel %vm2662, %v3738, 0.0
          %v4763 = vsel %vm2663, %v3742, 0.0
          %v4764 = vsel %vm2664, %v3742, 0.0
          %v4765 = vsel %vm2665, %v3742, 0.0
          %v4766 = vsel %vm2666, %v3742, 0.0
          %v4767 = vsel %vm2667, %v3746, 0.0
          %v4768 = vsel %vm2668, %v3746, 0.0
          %v4769 = vsel %vm2669, %v3746, 0.0
          %v4770 = vsel %vm2670, %v3746, 0.0
          %v4771 = vsel %vm2671, %v3750, 0.0
          %v4772 = vsel %vm2672, %v3750, 0.0
          %v4773 = vsel %vm2673, %v3750, 0.0
          %v4774 = vsel %vm2674, %v3750, 0.0
          %v4775 = vsel %vm2675, %v3754, 0.0
          %v4776 = vsel %vm2676, %v3754, 0.0
          %v4777 = vsel %vm2677, %v3754, 0.0
          %v4778 = vsel %vm2678, %v3754, 0.0
          %v4779 = vsel %vm2679, %v3758, 0.0
          %v4780 = vsel %vm2680, %v3758, 0.0
          %v4781 = vsel %vm2681, %v3758, 0.0
          %v4782 = vsel %vm2682, %v3758, 0.0
          %v4783 = vadd.f32 %v3759, %v3763
          %v4784 = vadd.f32 %v4783, %v3767
          %v4785 = vadd.f32 %v4784, %v3771
          %v4786 = vadd.f32 %v4785, %v3775
          %v4787 = vadd.f32 %v4786, %v3779
          %v4788 = vadd.f32 %v4787, %v3783
          %v4789 = vadd.f32 %v4788, %v3787
          %v4790 = vadd.f32 %v4789, %v3791
          %v4791 = vadd.f32 %v4790, %v3795
          %v4792 = vadd.f32 %v4791, %v3799
          %v4793 = vadd.f32 %v4792, %v3803
          %v4794 = vadd.f32 %v4793, %v3807
          %v4795 = vadd.f32 %v4794, %v3811
          %v4796 = vadd.f32 %v4795, %v3815
          %v4797 = vadd.f32 %v4796, %v3819
          %v4798 = vadd.f32 %v4797, %v3823
          %v4799 = vadd.f32 %v4798, %v3827
          %v4800 = vadd.f32 %v4799, %v3831
          %v4801 = vadd.f32 %v4800, %v3835
          %v4802 = vadd.f32 %v4801, %v3839
          %v4803 = vadd.f32 %v4802, %v3843
          %v4804 = vadd.f32 %v4803, %v3847
          %v4805 = vadd.f32 %v4804, %v3851
          %v4806 = vadd.f32 %v4805, %v3855
          %v4807 = vadd.f32 %v4806, %v3859
          %v4808 = vadd.f32 %v4807, %v3863
          %v4809 = vadd.f32 %v4808, %v3867
          %v4810 = vadd.f32 %v4809, %v3871
          %v4811 = vadd.f32 %v4810, %v3875
          %v4812 = vadd.f32 %v4811, %v3879
          %v4813 = vadd.f32 %v4812, %v3883
          %v4814 = vrot.slane %v4813, 4
          %v4815 = vadd.f32 %v4813, %v4814
          %v4816 = vrot.slane %v4815, 2
          %v4817 = vadd.f32 %v4815, %v4816
          %v4818 = vrot.slane %v4817, 1
          %v4819 = vadd.f32 %v4817, %v4818
          %v4820 = vadd.f32 %v3760, %v3764
          %v4821 = vadd.f32 %v4820, %v3768
          %v4822 = vadd.f32 %v4821, %v3772
          %v4823 = vadd.f32 %v4822, %v3776
          %v4824 = vadd.f32 %v4823, %v3780
          %v4825 = vadd.f32 %v4824, %v3784
          %v4826 = vadd.f32 %v4825, %v3788
          %v4827 = vadd.f32 %v4826, %v3792
          %v4828 = vadd.f32 %v4827, %v3796
          %v4829 = vadd.f32 %v4828, %v3800
          %v4830 = vadd.f32 %v4829, %v3804
          %v4831 = vadd.f32 %v4830, %v3808
          %v4832 = vadd.f32 %v4831, %v3812
          %v4833 = vadd.f32 %v4832, %v3816
          %v4834 = vadd.f32 %v4833, %v3820
          %v4835 = vadd.f32 %v4834, %v3824
          %v4836 = vadd.f32 %v4835, %v3828
          %v4837 = vadd.f32 %v4836, %v3832
          %v4838 = vadd.f32 %v4837, %v3836
          %v4839 = vadd.f32 %v4838, %v3840
          %v4840 = vadd.f32 %v4839, %v3844
          %v4841 = vadd.f32 %v4840, %v3848
          %v4842 = vadd.f32 %v4841, %v3852
          %v4843 = vadd.f32 %v4842, %v3856
          %v4844 = vadd.f32 %v4843, %v3860
          %v4845 = vadd.f32 %v4844, %v3864
          %v4846 = vadd.f32 %v4845, %v3868
          %v4847 = vadd.f32 %v4846, %v3872
          %v4848 = vadd.f32 %v4847, %v3876
          %v4849 = vadd.f32 %v4848, %v3880
          %v4850 = vadd.f32 %v4849, %v3884
          %v4851 = vrot.slane %v4850, 4
          %v4852 = vadd.f32 %v4850, %v4851
          %v4853 = vrot.slane %v4852, 2
          %v4854 = vadd.f32 %v4852, %v4853
          %v4855 = vrot.slane %v4854, 1
          %v4856 = vadd.f32 %v4854, %v4855
          %v4857 = vadd.f32 %v3761, %v3765
          %v4858 = vadd.f32 %v4857, %v3769
          %v4859 = vadd.f32 %v4858, %v3773
          %v4860 = vadd.f32 %v4859, %v3777
          %v4861 = vadd.f32 %v4860, %v3781
          %v4862 = vadd.f32 %v4861, %v3785
          %v4863 = vadd.f32 %v4862, %v3789
          %v4864 = vadd.f32 %v4863, %v3793
          %v4865 = vadd.f32 %v4864, %v3797
          %v4866 = vadd.f32 %v4865, %v3801
          %v4867 = vadd.f32 %v4866, %v3805
          %v4868 = vadd.f32 %v4867, %v3809
          %v4869 = vadd.f32 %v4868, %v3813
          %v4870 = vadd.f32 %v4869, %v3817
          %v4871 = vadd.f32 %v4870, %v3821
          %v4872 = vadd.f32 %v4871, %v3825
          %v4873 = vadd.f32 %v4872, %v3829
          %v4874 = vadd.f32 %v4873, %v3833
          %v4875 = vadd.f32 %v4874, %v3837
          %v4876 = vadd.f32 %v4875, %v3841
          %v4877 = vadd.f32 %v4876, %v3845
          %v4878 = vadd.f32 %v4877, %v3849
          %v4879 = vadd.f32 %v4878, %v3853
          %v4880 = vadd.f32 %v4879, %v3857
          %v4881 = vadd.f32 %v4880, %v3861
          %v4882 = vadd.f32 %v4881, %v3865
          %v4883 = vadd.f32 %v4882, %v3869
          %v4884 = vadd.f32 %v4883, %v3873
          %v4885 = vadd.f32 %v4884, %v3877
          %v4886 = vadd.f32 %v4885, %v3881
          %v4887 = vadd.f32 %v4886, %v3885
          %v4888 = vrot.slane %v4887, 4
          %v4889 = vadd.f32 %v4887, %v4888
          %v4890 = vrot.slane %v4889, 2
          %v4891 = vadd.f32 %v4889, %v4890
          %v4892 = vrot.slane %v4891, 1
          %v4893 = vadd.f32 %v4891, %v4892
          %v4894 = vadd.f32 %v3762, %v3766
          %v4895 = vadd.f32 %v4894, %v3770
          %v4896 = vadd.f32 %v4895, %v3774
          %v4897 = vadd.f32 %v4896, %v3778
          %v4898 = vadd.f32 %v4897, %v3782
          %v4899 = vadd.f32 %v4898, %v3786
          %v4900 = vadd.f32 %v4899, %v3790
          %v4901 = vadd.f32 %v4900, %v3794
          %v4902 = vadd.f32 %v4901, %v3798
          %v4903 = vadd.f32 %v4902, %v3802
          %v4904 = vadd.f32 %v4903, %v3806
          %v4905 = vadd.f32 %v4904, %v3810
          %v4906 = vadd.f32 %v4905, %v3814
          %v4907 = vadd.f32 %v4906, %v3818
          %v4908 = vadd.f32 %v4907, %v3822
          %v4909 = vadd.f32 %v4908, %v3826
          %v4910 = vadd.f32 %v4909, %v3830
          %v4911 = vadd.f32 %v4910, %v3834
          %v4912 = vadd.f32 %v4911, %v3838
          %v4913 = vadd.f32 %v4912, %v3842
          %v4914 = vadd.f32 %v4913, %v3846
          %v4915 = vadd.f32 %v4914, %v3850
          %v4916 = vadd.f32 %v4915, %v3854
          %v4917 = vadd.f32 %v4916, %v3858
          %v4918 = vadd.f32 %v4917, %v3862
          %v4919 = vadd.f32 %v4918, %v3866
          %v4920 = vadd.f32 %v4919, %v3870
          %v4921 = vadd.f32 %v4920, %v3874
          %v4922 = vadd.f32 %v4921, %v3878
          %v4923 = vadd.f32 %v4922, %v3882
          %v4924 = vadd.f32 %v4923, %v3886
          %v4925 = vrot.slane %v4924, 4
          %v4926 = vadd.f32 %v4924, %v4925
          %v4927 = vrot.slane %v4926, 2
          %v4928 = vadd.f32 %v4926, %v4927
          %v4929 = vrot.slane %v4928, 1
          %v4930 = vadd.f32 %v4928, %v4929
          %v4931 = vadd.f32 %v3887, %v3891
          %v4932 = vadd.f32 %v4931, %v3895
          %v4933 = vadd.f32 %v4932, %v3899
          %v4934 = vadd.f32 %v4933, %v3903
          %v4935 = vadd.f32 %v4934, %v3907
          %v4936 = vadd.f32 %v4935, %v3911
          %v4937 = vadd.f32 %v4936, %v3915
          %v4938 = vadd.f32 %v4937, %v3919
          %v4939 = vadd.f32 %v4938, %v3923
          %v4940 = vadd.f32 %v4939, %v3927
          %v4941 = vadd.f32 %v4940, %v3931
          %v4942 = vadd.f32 %v4941, %v3935
          %v4943 = vadd.f32 %v4942, %v3939
          %v4944 = vadd.f32 %v4943, %v3943
          %v4945 = vadd.f32 %v4944, %v3947
          %v4946 = vadd.f32 %v4945, %v3951
          %v4947 = vadd.f32 %v4946, %v3955
          %v4948 = vadd.f32 %v4947, %v3959
          %v4949 = vadd.f32 %v4948, %v3963
          %v4950 = vadd.f32 %v4949, %v3967
          %v4951 = vadd.f32 %v4950, %v3971
          %v4952 = vadd.f32 %v4951, %v3975
          %v4953 = vadd.f32 %v4952, %v3979
          %v4954 = vadd.f32 %v4953, %v3983
          %v4955 = vadd.f32 %v4954, %v3987
          %v4956 = vadd.f32 %v4955, %v3991
          %v4957 = vadd.f32 %v4956, %v3995
          %v4958 = vadd.f32 %v4957, %v3999
          %v4959 = vadd.f32 %v4958, %v4003
          %v4960 = vadd.f32 %v4959, %v4007
          %v4961 = vadd.f32 %v4960, %v4011
          %v4962 = vrot.slane %v4961, 4
          %v4963 = vadd.f32 %v4961, %v4962
          %v4964 = vrot.slane %v4963, 2
          %v4965 = vadd.f32 %v4963, %v4964
          %v4966 = vrot.slane %v4965, 1
          %v4967 = vadd.f32 %v4965, %v4966
          %v4968 = vadd.f32 %v3888, %v3892
          %v4969 = vadd.f32 %v4968, %v3896
          %v4970 = vadd.f32 %v4969, %v3900
          %v4971 = vadd.f32 %v4970, %v3904
          %v4972 = vadd.f32 %v4971, %v3908
          %v4973 = vadd.f32 %v4972, %v3912
          %v4974 = vadd.f32 %v4973, %v3916
          %v4975 = vadd.f32 %v4974, %v3920
          %v4976 = vadd.f32 %v4975, %v3924
          %v4977 = vadd.f32 %v4976, %v3928
          %v4978 = vadd.f32 %v4977, %v3932
          %v4979 = vadd.f32 %v4978, %v3936
          %v4980 = vadd.f32 %v4979, %v3940
          %v4981 = vadd.f32 %v4980, %v3944
          %v4982 = vadd.f32 %v4981, %v3948
          %v4983 = vadd.f32 %v4982, %v3952
          %v4984 = vadd.f32 %v4983, %v3956
          %v4985 = vadd.f32 %v4984, %v3960
          %v4986 = vadd.f32 %v4985, %v3964
          %v4987 = vadd.f32 %v4986, %v3968
          %v4988 = vadd.f32 %v4987, %v3972
          %v4989 = vadd.f32 %v4988, %v3976
          %v4990 = vadd.f32 %v4989, %v3980
          %v4991 = vadd.f32 %v4990, %v3984
          %v4992 = vadd.f32 %v4991, %v3988
          %v4993 = vadd.f32 %v4992, %v3992
          %v4994 = vadd.f32 %v4993, %v3996
          %v4995 = vadd.f32 %v4994, %v4000
          %v4996 = vadd.f32 %v4995, %v4004
          %v4997 = vadd.f32 %v4996, %v4008
          %v4998 = vadd.f32 %v4997, %v4012
          %v4999 = vrot.slane %v4998, 4
          %v5000 = vadd.f32 %v4998, %v4999
          %v5001 = vrot.slane %v5000, 2
          %v5002 = vadd.f32 %v5000, %v5001
          %v5003 = vrot.slane %v5002, 1
          %v5004 = vadd.f32 %v5002, %v5003
          %v5005 = vadd.f32 %v3889, %v3893
          %v5006 = vadd.f32 %v5005, %v3897
          %v5007 = vadd.f32 %v5006, %v3901
          %v5008 = vadd.f32 %v5007, %v3905
          %v5009 = vadd.f32 %v5008, %v3909
          %v5010 = vadd.f32 %v5009, %v3913
          %v5011 = vadd.f32 %v5010, %v3917
          %v5012 = vadd.f32 %v5011, %v3921
          %v5013 = vadd.f32 %v5012, %v3925
          %v5014 = vadd.f32 %v5013, %v3929
          %v5015 = vadd.f32 %v5014, %v3933
          %v5016 = vadd.f32 %v5015, %v3937
          %v5017 = vadd.f32 %v5016, %v3941
          %v5018 = vadd.f32 %v5017, %v3945
          %v5019 = vadd.f32 %v5018, %v3949
          %v5020 = vadd.f32 %v5019, %v3953
          %v5021 = vadd.f32 %v5020, %v3957
          %v5022 = vadd.f32 %v5021, %v3961
          %v5023 = vadd.f32 %v5022, %v3965
          %v5024 = vadd.f32 %v5023, %v3969
          %v5025 = vadd.f32 %v5024, %v3973
          %v5026 = vadd.f32 %v5025, %v3977
          %v5027 = vadd.f32 %v5026, %v3981
          %v5028 = vadd.f32 %v5027, %v3985
          %v5029 = vadd.f32 %v5028, %v3989
          %v5030 = vadd.f32 %v5029, %v3993
          %v5031 = vadd.f32 %v5030, %v3997
          %v5032 = vadd.f32 %v5031, %v4001
          %v5033 = vadd.f32 %v5032, %v4005
          %v5034 = vadd.f32 %v5033, %v4009
          %v5035 = vadd.f32 %v5034, %v4013
          %v5036 = vrot.slane %v5035, 4
          %v5037 = vadd.f32 %v5035, %v5036
          %v5038 = vrot.slane %v5037, 2
          %v5039 = vadd.f32 %v5037, %v5038
          %v5040 = vrot.slane %v5039, 1
          %v5041 = vadd.f32 %v5039, %v5040
          %v5042 = vadd.f32 %v3890, %v3894
          %v5043 = vadd.f32 %v5042, %v3898
          %v5044 = vadd.f32 %v5043, %v3902
          %v5045 = vadd.f32 %v5044, %v3906
          %v5046 = vadd.f32 %v5045, %v3910
          %v5047 = vadd.f32 %v5046, %v3914
          %v5048 = vadd.f32 %v5047, %v3918
          %v5049 = vadd.f32 %v5048, %v3922
          %v5050 = vadd.f32 %v5049, %v3926
          %v5051 = vadd.f32 %v5050, %v3930
          %v5052 = vadd.f32 %v5051, %v3934
          %v5053 = vadd.f32 %v5052, %v3938
          %v5054 = vadd.f32 %v5053, %v3942
          %v5055 = vadd.f32 %v5054, %v3946
          %v5056 = vadd.f32 %v5055, %v3950
          %v5057 = vadd.f32 %v5056, %v3954
          %v5058 = vadd.f32 %v5057, %v3958
          %v5059 = vadd.f32 %v5058, %v3962
          %v5060 = vadd.f32 %v5059, %v3966
          %v5061 = vadd.f32 %v5060, %v3970
          %v5062 = vadd.f32 %v5061, %v3974
          %v5063 = vadd.f32 %v5062, %v3978
          %v5064 = vadd.f32 %v5063, %v3982
          %v5065 = vadd.f32 %v5064, %v3986
          %v5066 = vadd.f32 %v5065, %v3990
          %v5067 = vadd.f32 %v5066, %v3994
          %v5068 = vadd.f32 %v5067, %v3998
          %v5069 = vadd.f32 %v5068, %v4002
          %v5070 = vadd.f32 %v5069, %v4006
          %v5071 = vadd.f32 %v5070, %v4010
          %v5072 = vadd.f32 %v5071, %v4014
          %v5073 = vrot.slane %v5072, 4
          %v5074 = vadd.f32 %v5072, %v5073
          %v5075 = vrot.slane %v5074, 2
          %v5076 = vadd.f32 %v5074, %v5075
          %v5077 = vrot.slane %v5076, 1
          %v5078 = vadd.f32 %v5076, %v5077
          %v5079 = vadd.f32 %v4015, %v4019
          %v5080 = vadd.f32 %v5079, %v4023
          %v5081 = vadd.f32 %v5080, %v4027
          %v5082 = vadd.f32 %v5081, %v4031
          %v5083 = vadd.f32 %v5082, %v4035
          %v5084 = vadd.f32 %v5083, %v4039
          %v5085 = vadd.f32 %v5084, %v4043
          %v5086 = vadd.f32 %v5085, %v4047
          %v5087 = vadd.f32 %v5086, %v4051
          %v5088 = vadd.f32 %v5087, %v4055
          %v5089 = vadd.f32 %v5088, %v4059
          %v5090 = vadd.f32 %v5089, %v4063
          %v5091 = vadd.f32 %v5090, %v4067
          %v5092 = vadd.f32 %v5091, %v4071
          %v5093 = vadd.f32 %v5092, %v4075
          %v5094 = vadd.f32 %v5093, %v4079
          %v5095 = vadd.f32 %v5094, %v4083
          %v5096 = vadd.f32 %v5095, %v4087
          %v5097 = vadd.f32 %v5096, %v4091
          %v5098 = vadd.f32 %v5097, %v4095
          %v5099 = vadd.f32 %v5098, %v4099
          %v5100 = vadd.f32 %v5099, %v4103
          %v5101 = vadd.f32 %v5100, %v4107
          %v5102 = vadd.f32 %v5101, %v4111
          %v5103 = vadd.f32 %v5102, %v4115
          %v5104 = vadd.f32 %v5103, %v4119
          %v5105 = vadd.f32 %v5104, %v4123
          %v5106 = vadd.f32 %v5105, %v4127
          %v5107 = vadd.f32 %v5106, %v4131
          %v5108 = vadd.f32 %v5107, %v4135
          %v5109 = vadd.f32 %v5108, %v4139
          %v5110 = vrot.slane %v5109, 4
          %v5111 = vadd.f32 %v5109, %v5110
          %v5112 = vrot.slane %v5111, 2
          %v5113 = vadd.f32 %v5111, %v5112
          %v5114 = vrot.slane %v5113, 1
          %v5115 = vadd.f32 %v5113, %v5114
          %v5116 = vadd.f32 %v4016, %v4020
          %v5117 = vadd.f32 %v5116, %v4024
          %v5118 = vadd.f32 %v5117, %v4028
          %v5119 = vadd.f32 %v5118, %v4032
          %v5120 = vadd.f32 %v5119, %v4036
          %v5121 = vadd.f32 %v5120, %v4040
          %v5122 = vadd.f32 %v5121, %v4044
          %v5123 = vadd.f32 %v5122, %v4048
          %v5124 = vadd.f32 %v5123, %v4052
          %v5125 = vadd.f32 %v5124, %v4056
          %v5126 = vadd.f32 %v5125, %v4060
          %v5127 = vadd.f32 %v5126, %v4064
          %v5128 = vadd.f32 %v5127, %v4068
          %v5129 = vadd.f32 %v5128, %v4072
          %v5130 = vadd.f32 %v5129, %v4076
          %v5131 = vadd.f32 %v5130, %v4080
          %v5132 = vadd.f32 %v5131, %v4084
          %v5133 = vadd.f32 %v5132, %v4088
          %v5134 = vadd.f32 %v5133, %v4092
          %v5135 = vadd.f32 %v5134, %v4096
          %v5136 = vadd.f32 %v5135, %v4100
          %v5137 = vadd.f32 %v5136, %v4104
          %v5138 = vadd.f32 %v5137, %v4108
          %v5139 = vadd.f32 %v5138, %v4112
          %v5140 = vadd.f32 %v5139, %v4116
          %v5141 = vadd.f32 %v5140, %v4120
          %v5142 = vadd.f32 %v5141, %v4124
          %v5143 = vadd.f32 %v5142, %v4128
          %v5144 = vadd.f32 %v5143, %v4132
          %v5145 = vadd.f32 %v5144, %v4136
          %v5146 = vadd.f32 %v5145, %v4140
          %v5147 = vrot.slane %v5146, 4
          %v5148 = vadd.f32 %v5146, %v5147
          %v5149 = vrot.slane %v5148, 2
          %v5150 = vadd.f32 %v5148, %v5149
          %v5151 = vrot.slane %v5150, 1
          %v5152 = vadd.f32 %v5150, %v5151
          %v5153 = vadd.f32 %v4017, %v4021
          %v5154 = vadd.f32 %v5153, %v4025
          %v5155 = vadd.f32 %v5154, %v4029
          %v5156 = vadd.f32 %v5155, %v4033
          %v5157 = vadd.f32 %v5156, %v4037
          %v5158 = vadd.f32 %v5157, %v4041
          %v5159 = vadd.f32 %v5158, %v4045
          %v5160 = vadd.f32 %v5159, %v4049
          %v5161 = vadd.f32 %v5160, %v4053
          %v5162 = vadd.f32 %v5161, %v4057
          %v5163 = vadd.f32 %v5162, %v4061
          %v5164 = vadd.f32 %v5163, %v4065
          %v5165 = vadd.f32 %v5164, %v4069
          %v5166 = vadd.f32 %v5165, %v4073
          %v5167 = vadd.f32 %v5166, %v4077
          %v5168 = vadd.f32 %v5167, %v4081
          %v5169 = vadd.f32 %v5168, %v4085
          %v5170 = vadd.f32 %v5169, %v4089
          %v5171 = vadd.f32 %v5170, %v4093
          %v5172 = vadd.f32 %v5171, %v4097
          %v5173 = vadd.f32 %v5172, %v4101
          %v5174 = vadd.f32 %v5173, %v4105
          %v5175 = vadd.f32 %v5174, %v4109
          %v5176 = vadd.f32 %v5175, %v4113
          %v5177 = vadd.f32 %v5176, %v4117
          %v5178 = vadd.f32 %v5177, %v4121
          %v5179 = vadd.f32 %v5178, %v4125
          %v5180 = vadd.f32 %v5179, %v4129
          %v5181 = vadd.f32 %v5180, %v4133
          %v5182 = vadd.f32 %v5181, %v4137
          %v5183 = vadd.f32 %v5182, %v4141
          %v5184 = vrot.slane %v5183, 4
          %v5185 = vadd.f32 %v5183, %v5184
          %v5186 = vrot.slane %v5185, 2
          %v5187 = vadd.f32 %v5185, %v5186
          %v5188 = vrot.slane %v5187, 1
          %v5189 = vadd.f32 %v5187, %v5188
          %v5190 = vadd.f32 %v4018, %v4022
          %v5191 = vadd.f32 %v5190, %v4026
          %v5192 = vadd.f32 %v5191, %v4030
          %v5193 = vadd.f32 %v5192, %v4034
          %v5194 = vadd.f32 %v5193, %v4038
          %v5195 = vadd.f32 %v5194, %v4042
          %v5196 = vadd.f32 %v5195, %v4046
          %v5197 = vadd.f32 %v5196, %v4050
          %v5198 = vadd.f32 %v5197, %v4054
          %v5199 = vadd.f32 %v5198, %v4058
          %v5200 = vadd.f32 %v5199, %v4062
          %v5201 = vadd.f32 %v5200, %v4066
          %v5202 = vadd.f32 %v5201, %v4070
          %v5203 = vadd.f32 %v5202, %v4074
          %v5204 = vadd.f32 %v5203, %v4078
          %v5205 = vadd.f32 %v5204, %v4082
          %v5206 = vadd.f32 %v5205, %v4086
          %v5207 = vadd.f32 %v5206, %v4090
          %v5208 = vadd.f32 %v5207, %v4094
          %v5209 = vadd.f32 %v5208, %v4098
          %v5210 = vadd.f32 %v5209, %v4102
          %v5211 = vadd.f32 %v5210, %v4106
          %v5212 = vadd.f32 %v5211, %v4110
          %v5213 = vadd.f32 %v5212, %v4114
          %v5214 = vadd.f32 %v5213, %v4118
          %v5215 = vadd.f32 %v5214, %v4122
          %v5216 = vadd.f32 %v5215, %v4126
          %v5217 = vadd.f32 %v5216, %v4130
          %v5218 = vadd.f32 %v5217, %v4134
          %v5219 = vadd.f32 %v5218, %v4138
          %v5220 = vadd.f32 %v5219, %v4142
          %v5221 = vrot.slane %v5220, 4
          %v5222 = vadd.f32 %v5220, %v5221
          %v5223 = vrot.slane %v5222, 2
          %v5224 = vadd.f32 %v5222, %v5223
          %v5225 = vrot.slane %v5224, 1
          %v5226 = vadd.f32 %v5224, %v5225
          %v5227 = vadd.f32 %v4143, %v4147
          %v5228 = vadd.f32 %v5227, %v4151
          %v5229 = vadd.f32 %v5228, %v4155
          %v5230 = vadd.f32 %v5229, %v4159
          %v5231 = vadd.f32 %v5230, %v4163
          %v5232 = vadd.f32 %v5231, %v4167
          %v5233 = vadd.f32 %v5232, %v4171
          %v5234 = vadd.f32 %v5233, %v4175
          %v5235 = vadd.f32 %v5234, %v4179
          %v5236 = vadd.f32 %v5235, %v4183
          %v5237 = vadd.f32 %v5236, %v4187
          %v5238 = vadd.f32 %v5237, %v4191
          %v5239 = vadd.f32 %v5238, %v4195
          %v5240 = vadd.f32 %v5239, %v4199
          %v5241 = vadd.f32 %v5240, %v4203
          %v5242 = vadd.f32 %v5241, %v4207
          %v5243 = vadd.f32 %v5242, %v4211
          %v5244 = vadd.f32 %v5243, %v4215
          %v5245 = vadd.f32 %v5244, %v4219
          %v5246 = vadd.f32 %v5245, %v4223
          %v5247 = vadd.f32 %v5246, %v4227
          %v5248 = vadd.f32 %v5247, %v4231
          %v5249 = vadd.f32 %v5248, %v4235
          %v5250 = vadd.f32 %v5249, %v4239
          %v5251 = vadd.f32 %v5250, %v4243
          %v5252 = vadd.f32 %v5251, %v4247
          %v5253 = vadd.f32 %v5252, %v4251
          %v5254 = vadd.f32 %v5253, %v4255
          %v5255 = vadd.f32 %v5254, %v4259
          %v5256 = vadd.f32 %v5255, %v4263
          %v5257 = vadd.f32 %v5256, %v4267
          %v5258 = vrot.slane %v5257, 4
          %v5259 = vadd.f32 %v5257, %v5258
          %v5260 = vrot.slane %v5259, 2
          %v5261 = vadd.f32 %v5259, %v5260
          %v5262 = vrot.slane %v5261, 1
          %v5263 = vadd.f32 %v5261, %v5262
          %v5264 = vadd.f32 %v4144, %v4148
          %v5265 = vadd.f32 %v5264, %v4152
          %v5266 = vadd.f32 %v5265, %v4156
          %v5267 = vadd.f32 %v5266, %v4160
          %v5268 = vadd.f32 %v5267, %v4164
          %v5269 = vadd.f32 %v5268, %v4168
          %v5270 = vadd.f32 %v5269, %v4172
          %v5271 = vadd.f32 %v5270, %v4176
          %v5272 = vadd.f32 %v5271, %v4180
          %v5273 = vadd.f32 %v5272, %v4184
          %v5274 = vadd.f32 %v5273, %v4188
          %v5275 = vadd.f32 %v5274, %v4192
          %v5276 = vadd.f32 %v5275, %v4196
          %v5277 = vadd.f32 %v5276, %v4200
          %v5278 = vadd.f32 %v5277, %v4204
          %v5279 = vadd.f32 %v5278, %v4208
          %v5280 = vadd.f32 %v5279, %v4212
          %v5281 = vadd.f32 %v5280, %v4216
          %v5282 = vadd.f32 %v5281, %v4220
          %v5283 = vadd.f32 %v5282, %v4224
          %v5284 = vadd.f32 %v5283, %v4228
          %v5285 = vadd.f32 %v5284, %v4232
          %v5286 = vadd.f32 %v5285, %v4236
          %v5287 = vadd.f32 %v5286, %v4240
          %v5288 = vadd.f32 %v5287, %v4244
          %v5289 = vadd.f32 %v5288, %v4248
          %v5290 = vadd.f32 %v5289, %v4252
          %v5291 = vadd.f32 %v5290, %v4256
          %v5292 = vadd.f32 %v5291, %v4260
          %v5293 = vadd.f32 %v5292, %v4264
          %v5294 = vadd.f32 %v5293, %v4268
          %v5295 = vrot.slane %v5294, 4
          %v5296 = vadd.f32 %v5294, %v5295
          %v5297 = vrot.slane %v5296, 2
          %v5298 = vadd.f32 %v5296, %v5297
          %v5299 = vrot.slane %v5298, 1
          %v5300 = vadd.f32 %v5298, %v5299
          %v5301 = vadd.f32 %v4145, %v4149
          %v5302 = vadd.f32 %v5301, %v4153
          %v5303 = vadd.f32 %v5302, %v4157
          %v5304 = vadd.f32 %v5303, %v4161
          %v5305 = vadd.f32 %v5304, %v4165
          %v5306 = vadd.f32 %v5305, %v4169
          %v5307 = vadd.f32 %v5306, %v4173
          %v5308 = vadd.f32 %v5307, %v4177
          %v5309 = vadd.f32 %v5308, %v4181
          %v5310 = vadd.f32 %v5309, %v4185
          %v5311 = vadd.f32 %v5310, %v4189
          %v5312 = vadd.f32 %v5311, %v4193
          %v5313 = vadd.f32 %v5312, %v4197
          %v5314 = vadd.f32 %v5313, %v4201
          %v5315 = vadd.f32 %v5314, %v4205
          %v5316 = vadd.f32 %v5315, %v4209
          %v5317 = vadd.f32 %v5316, %v4213
          %v5318 = vadd.f32 %v5317, %v4217
          %v5319 = vadd.f32 %v5318, %v4221
          %v5320 = vadd.f32 %v5319, %v4225
          %v5321 = vadd.f32 %v5320, %v4229
          %v5322 = vadd.f32 %v5321, %v4233
          %v5323 = vadd.f32 %v5322, %v4237
          %v5324 = vadd.f32 %v5323, %v4241
          %v5325 = vadd.f32 %v5324, %v4245
          %v5326 = vadd.f32 %v5325, %v4249
          %v5327 = vadd.f32 %v5326, %v4253
          %v5328 = vadd.f32 %v5327, %v4257
          %v5329 = vadd.f32 %v5328, %v4261
          %v5330 = vadd.f32 %v5329, %v4265
          %v5331 = vadd.f32 %v5330, %v4269
          %v5332 = vrot.slane %v5331, 4
          %v5333 = vadd.f32 %v5331, %v5332
          %v5334 = vrot.slane %v5333, 2
          %v5335 = vadd.f32 %v5333, %v5334
          %v5336 = vrot.slane %v5335, 1
          %v5337 = vadd.f32 %v5335, %v5336
          %v5338 = vadd.f32 %v4146, %v4150
          %v5339 = vadd.f32 %v5338, %v4154
          %v5340 = vadd.f32 %v5339, %v4158
          %v5341 = vadd.f32 %v5340, %v4162
          %v5342 = vadd.f32 %v5341, %v4166
          %v5343 = vadd.f32 %v5342, %v4170
          %v5344 = vadd.f32 %v5343, %v4174
          %v5345 = vadd.f32 %v5344, %v4178
          %v5346 = vadd.f32 %v5345, %v4182
          %v5347 = vadd.f32 %v5346, %v4186
          %v5348 = vadd.f32 %v5347, %v4190
          %v5349 = vadd.f32 %v5348, %v4194
          %v5350 = vadd.f32 %v5349, %v4198
          %v5351 = vadd.f32 %v5350, %v4202
          %v5352 = vadd.f32 %v5351, %v4206
          %v5353 = vadd.f32 %v5352, %v4210
          %v5354 = vadd.f32 %v5353, %v4214
          %v5355 = vadd.f32 %v5354, %v4218
          %v5356 = vadd.f32 %v5355, %v4222
          %v5357 = vadd.f32 %v5356, %v4226
          %v5358 = vadd.f32 %v5357, %v4230
          %v5359 = vadd.f32 %v5358, %v4234
          %v5360 = vadd.f32 %v5359, %v4238
          %v5361 = vadd.f32 %v5360, %v4242
          %v5362 = vadd.f32 %v5361, %v4246
          %v5363 = vadd.f32 %v5362, %v4250
          %v5364 = vadd.f32 %v5363, %v4254
          %v5365 = vadd.f32 %v5364, %v4258
          %v5366 = vadd.f32 %v5365, %v4262
          %v5367 = vadd.f32 %v5366, %v4266
          %v5368 = vadd.f32 %v5367, %v4270
          %v5369 = vrot.slane %v5368, 4
          %v5370 = vadd.f32 %v5368, %v5369
          %v5371 = vrot.slane %v5370, 2
          %v5372 = vadd.f32 %v5370, %v5371
          %v5373 = vrot.slane %v5372, 1
          %v5374 = vadd.f32 %v5372, %v5373
          %v5375 = vadd.f32 %v4271, %v4275
          %v5376 = vadd.f32 %v5375, %v4279
          %v5377 = vadd.f32 %v5376, %v4283
          %v5378 = vadd.f32 %v5377, %v4287
          %v5379 = vadd.f32 %v5378, %v4291
          %v5380 = vadd.f32 %v5379, %v4295
          %v5381 = vadd.f32 %v5380, %v4299
          %v5382 = vadd.f32 %v5381, %v4303
          %v5383 = vadd.f32 %v5382, %v4307
          %v5384 = vadd.f32 %v5383, %v4311
          %v5385 = vadd.f32 %v5384, %v4315
          %v5386 = vadd.f32 %v5385, %v4319
          %v5387 = vadd.f32 %v5386, %v4323
          %v5388 = vadd.f32 %v5387, %v4327
          %v5389 = vadd.f32 %v5388, %v4331
          %v5390 = vadd.f32 %v5389, %v4335
          %v5391 = vadd.f32 %v5390, %v4339
          %v5392 = vadd.f32 %v5391, %v4343
          %v5393 = vadd.f32 %v5392, %v4347
          %v5394 = vadd.f32 %v5393, %v4351
          %v5395 = vadd.f32 %v5394, %v4355
          %v5396 = vadd.f32 %v5395, %v4359
          %v5397 = vadd.f32 %v5396, %v4363
          %v5398 = vadd.f32 %v5397, %v4367
          %v5399 = vadd.f32 %v5398, %v4371
          %v5400 = vadd.f32 %v5399, %v4375
          %v5401 = vadd.f32 %v5400, %v4379
          %v5402 = vadd.f32 %v5401, %v4383
          %v5403 = vadd.f32 %v5402, %v4387
          %v5404 = vadd.f32 %v5403, %v4391
          %v5405 = vadd.f32 %v5404, %v4395
          %v5406 = vrot.slane %v5405, 4
          %v5407 = vadd.f32 %v5405, %v5406
          %v5408 = vrot.slane %v5407, 2
          %v5409 = vadd.f32 %v5407, %v5408
          %v5410 = vrot.slane %v5409, 1
          %v5411 = vadd.f32 %v5409, %v5410
          %v5412 = vadd.f32 %v4272, %v4276
          %v5413 = vadd.f32 %v5412, %v4280
          %v5414 = vadd.f32 %v5413, %v4284
          %v5415 = vadd.f32 %v5414, %v4288
          %v5416 = vadd.f32 %v5415, %v4292
          %v5417 = vadd.f32 %v5416, %v4296
          %v5418 = vadd.f32 %v5417, %v4300
          %v5419 = vadd.f32 %v5418, %v4304
          %v5420 = vadd.f32 %v5419, %v4308
          %v5421 = vadd.f32 %v5420, %v4312
          %v5422 = vadd.f32 %v5421, %v4316
          %v5423 = vadd.f32 %v5422, %v4320
          %v5424 = vadd.f32 %v5423, %v4324
          %v5425 = vadd.f32 %v5424, %v4328
          %v5426 = vadd.f32 %v5425, %v4332
          %v5427 = vadd.f32 %v5426, %v4336
          %v5428 = vadd.f32 %v5427, %v4340
          %v5429 = vadd.f32 %v5428, %v4344
          %v5430 = vadd.f32 %v5429, %v4348
          %v5431 = vadd.f32 %v5430, %v4352
          %v5432 = vadd.f32 %v5431, %v4356
          %v5433 = vadd.f32 %v5432, %v4360
          %v5434 = vadd.f32 %v5433, %v4364
          %v5435 = vadd.f32 %v5434, %v4368
          %v5436 = vadd.f32 %v5435, %v4372
          %v5437 = vadd.f32 %v5436, %v4376
          %v5438 = vadd.f32 %v5437, %v4380
          %v5439 = vadd.f32 %v5438, %v4384
          %v5440 = vadd.f32 %v5439, %v4388
          %v5441 = vadd.f32 %v5440, %v4392
          %v5442 = vadd.f32 %v5441, %v4396
          %v5443 = vrot.slane %v5442, 4
          %v5444 = vadd.f32 %v5442, %v5443
          %v5445 = vrot.slane %v5444, 2
          %v5446 = vadd.f32 %v5444, %v5445
          %v5447 = vrot.slane %v5446, 1
          %v5448 = vadd.f32 %v5446, %v5447
          %v5449 = vadd.f32 %v4273, %v4277
          %v5450 = vadd.f32 %v5449, %v4281
          %v5451 = vadd.f32 %v5450, %v4285
          %v5452 = vadd.f32 %v5451, %v4289
          %v5453 = vadd.f32 %v5452, %v4293
          %v5454 = vadd.f32 %v5453, %v4297
          %v5455 = vadd.f32 %v5454, %v4301
          %v5456 = vadd.f32 %v5455, %v4305
          %v5457 = vadd.f32 %v5456, %v4309
          %v5458 = vadd.f32 %v5457, %v4313
          %v5459 = vadd.f32 %v5458, %v4317
          %v5460 = vadd.f32 %v5459, %v4321
          %v5461 = vadd.f32 %v5460, %v4325
          %v5462 = vadd.f32 %v5461, %v4329
          %v5463 = vadd.f32 %v5462, %v4333
          %v5464 = vadd.f32 %v5463, %v4337
          %v5465 = vadd.f32 %v5464, %v4341
          %v5466 = vadd.f32 %v5465, %v4345
          %v5467 = vadd.f32 %v5466, %v4349
          %v5468 = vadd.f32 %v5467, %v4353
          %v5469 = vadd.f32 %v5468, %v4357
          %v5470 = vadd.f32 %v5469, %v4361
          %v5471 = vadd.f32 %v5470, %v4365
          %v5472 = vadd.f32 %v5471, %v4369
          %v5473 = vadd.f32 %v5472, %v4373
          %v5474 = vadd.f32 %v5473, %v4377
          %v5475 = vadd.f32 %v5474, %v4381
          %v5476 = vadd.f32 %v5475, %v4385
          %v5477 = vadd.f32 %v5476, %v4389
          %v5478 = vadd.f32 %v5477, %v4393
          %v5479 = vadd.f32 %v5478, %v4397
          %v5480 = vrot.slane %v5479, 4
          %v5481 = vadd.f32 %v5479, %v5480
          %v5482 = vrot.slane %v5481, 2
          %v5483 = vadd.f32 %v5481, %v5482
          %v5484 = vrot.slane %v5483, 1
          %v5485 = vadd.f32 %v5483, %v5484
          %v5486 = vadd.f32 %v4274, %v4278
          %v5487 = vadd.f32 %v5486, %v4282
          %v5488 = vadd.f32 %v5487, %v4286
          %v5489 = vadd.f32 %v5488, %v4290
          %v5490 = vadd.f32 %v5489, %v4294
          %v5491 = vadd.f32 %v5490, %v4298
          %v5492 = vadd.f32 %v5491, %v4302
          %v5493 = vadd.f32 %v5492, %v4306
          %v5494 = vadd.f32 %v5493, %v4310
          %v5495 = vadd.f32 %v5494, %v4314
          %v5496 = vadd.f32 %v5495, %v4318
          %v5497 = vadd.f32 %v5496, %v4322
          %v5498 = vadd.f32 %v5497, %v4326
          %v5499 = vadd.f32 %v5498, %v4330
          %v5500 = vadd.f32 %v5499, %v4334
          %v5501 = vadd.f32 %v5500, %v4338
          %v5502 = vadd.f32 %v5501, %v4342
          %v5503 = vadd.f32 %v5502, %v4346
          %v5504 = vadd.f32 %v5503, %v4350
          %v5505 = vadd.f32 %v5504, %v4354
          %v5506 = vadd.f32 %v5505, %v4358
          %v5507 = vadd.f32 %v5506, %v4362
          %v5508 = vadd.f32 %v5507, %v4366
          %v5509 = vadd.f32 %v5508, %v4370
          %v5510 = vadd.f32 %v5509, %v4374
          %v5511 = vadd.f32 %v5510, %v4378
          %v5512 = vadd.f32 %v5511, %v4382
          %v5513 = vadd.f32 %v5512, %v4386
          %v5514 = vadd.f32 %v5513, %v4390
          %v5515 = vadd.f32 %v5514, %v4394
          %v5516 = vadd.f32 %v5515, %v4398
          %v5517 = vrot.slane %v5516, 4
          %v5518 = vadd.f32 %v5516, %v5517
          %v5519 = vrot.slane %v5518, 2
          %v5520 = vadd.f32 %v5518, %v5519
          %v5521 = vrot.slane %v5520, 1
          %v5522 = vadd.f32 %v5520, %v5521
          %v5523 = vadd.f32 %v4399, %v4403
          %v5524 = vadd.f32 %v5523, %v4407
          %v5525 = vadd.f32 %v5524, %v4411
          %v5526 = vadd.f32 %v5525, %v4415
          %v5527 = vadd.f32 %v5526, %v4419
          %v5528 = vadd.f32 %v5527, %v4423
          %v5529 = vadd.f32 %v5528, %v4427
          %v5530 = vadd.f32 %v5529, %v4431
          %v5531 = vadd.f32 %v5530, %v4435
          %v5532 = vadd.f32 %v5531, %v4439
          %v5533 = vadd.f32 %v5532, %v4443
          %v5534 = vadd.f32 %v5533, %v4447
          %v5535 = vadd.f32 %v5534, %v4451
          %v5536 = vadd.f32 %v5535, %v4455
          %v5537 = vadd.f32 %v5536, %v4459
          %v5538 = vadd.f32 %v5537, %v4463
          %v5539 = vadd.f32 %v5538, %v4467
          %v5540 = vadd.f32 %v5539, %v4471
          %v5541 = vadd.f32 %v5540, %v4475
          %v5542 = vadd.f32 %v5541, %v4479
          %v5543 = vadd.f32 %v5542, %v4483
          %v5544 = vadd.f32 %v5543, %v4487
          %v5545 = vadd.f32 %v5544, %v4491
          %v5546 = vadd.f32 %v5545, %v4495
          %v5547 = vadd.f32 %v5546, %v4499
          %v5548 = vadd.f32 %v5547, %v4503
          %v5549 = vadd.f32 %v5548, %v4507
          %v5550 = vadd.f32 %v5549, %v4511
          %v5551 = vadd.f32 %v5550, %v4515
          %v5552 = vadd.f32 %v5551, %v4519
          %v5553 = vadd.f32 %v5552, %v4523
          %v5554 = vrot.slane %v5553, 4
          %v5555 = vadd.f32 %v5553, %v5554
          %v5556 = vrot.slane %v5555, 2
          %v5557 = vadd.f32 %v5555, %v5556
          %v5558 = vrot.slane %v5557, 1
          %v5559 = vadd.f32 %v5557, %v5558
          %v5560 = vadd.f32 %v4400, %v4404
          %v5561 = vadd.f32 %v5560, %v4408
          %v5562 = vadd.f32 %v5561, %v4412
          %v5563 = vadd.f32 %v5562, %v4416
          %v5564 = vadd.f32 %v5563, %v4420
          %v5565 = vadd.f32 %v5564, %v4424
          %v5566 = vadd.f32 %v5565, %v4428
          %v5567 = vadd.f32 %v5566, %v4432
          %v5568 = vadd.f32 %v5567, %v4436
          %v5569 = vadd.f32 %v5568, %v4440
          %v5570 = vadd.f32 %v5569, %v4444
          %v5571 = vadd.f32 %v5570, %v4448
          %v5572 = vadd.f32 %v5571, %v4452
          %v5573 = vadd.f32 %v5572, %v4456
          %v5574 = vadd.f32 %v5573, %v4460
          %v5575 = vadd.f32 %v5574, %v4464
          %v5576 = vadd.f32 %v5575, %v4468
          %v5577 = vadd.f32 %v5576, %v4472
          %v5578 = vadd.f32 %v5577, %v4476
          %v5579 = vadd.f32 %v5578, %v4480
          %v5580 = vadd.f32 %v5579, %v4484
          %v5581 = vadd.f32 %v5580, %v4488
          %v5582 = vadd.f32 %v5581, %v4492
          %v5583 = vadd.f32 %v5582, %v4496
          %v5584 = vadd.f32 %v5583, %v4500
          %v5585 = vadd.f32 %v5584, %v4504
          %v5586 = vadd.f32 %v5585, %v4508
          %v5587 = vadd.f32 %v5586, %v4512
          %v5588 = vadd.f32 %v5587, %v4516
          %v5589 = vadd.f32 %v5588, %v4520
          %v5590 = vadd.f32 %v5589, %v4524
          %v5591 = vrot.slane %v5590, 4
          %v5592 = vadd.f32 %v5590, %v5591
          %v5593 = vrot.slane %v5592, 2
          %v5594 = vadd.f32 %v5592, %v5593
          %v5595 = vrot.slane %v5594, 1
          %v5596 = vadd.f32 %v5594, %v5595
          %v5597 = vadd.f32 %v4401, %v4405
          %v5598 = vadd.f32 %v5597, %v4409
          %v5599 = vadd.f32 %v5598, %v4413
          %v5600 = vadd.f32 %v5599, %v4417
          %v5601 = vadd.f32 %v5600, %v4421
          %v5602 = vadd.f32 %v5601, %v4425
          %v5603 = vadd.f32 %v5602, %v4429
          %v5604 = vadd.f32 %v5603, %v4433
          %v5605 = vadd.f32 %v5604, %v4437
          %v5606 = vadd.f32 %v5605, %v4441
          %v5607 = vadd.f32 %v5606, %v4445
          %v5608 = vadd.f32 %v5607, %v4449
          %v5609 = vadd.f32 %v5608, %v4453
          %v5610 = vadd.f32 %v5609, %v4457
          %v5611 = vadd.f32 %v5610, %v4461
          %v5612 = vadd.f32 %v5611, %v4465
          %v5613 = vadd.f32 %v5612, %v4469
          %v5614 = vadd.f32 %v5613, %v4473
          %v5615 = vadd.f32 %v5614, %v4477
          %v5616 = vadd.f32 %v5615, %v4481
          %v5617 = vadd.f32 %v5616, %v4485
          %v5618 = vadd.f32 %v5617, %v4489
          %v5619 = vadd.f32 %v5618, %v4493
          %v5620 = vadd.f32 %v5619, %v4497
          %v5621 = vadd.f32 %v5620, %v4501
          %v5622 = vadd.f32 %v5621, %v4505
          %v5623 = vadd.f32 %v5622, %v4509
          %v5624 = vadd.f32 %v5623, %v4513
          %v5625 = vadd.f32 %v5624, %v4517
          %v5626 = vadd.f32 %v5625, %v4521
          %v5627 = vadd.f32 %v5626, %v4525
          %v5628 = vrot.slane %v5627, 4
          %v5629 = vadd.f32 %v5627, %v5628
          %v5630 = vrot.slane %v5629, 2
          %v5631 = vadd.f32 %v5629, %v5630
          %v5632 = vrot.slane %v5631, 1
          %v5633 = vadd.f32 %v5631, %v5632
          %v5634 = vadd.f32 %v4402, %v4406
          %v5635 = vadd.f32 %v5634, %v4410
          %v5636 = vadd.f32 %v5635, %v4414
          %v5637 = vadd.f32 %v5636, %v4418
          %v5638 = vadd.f32 %v5637, %v4422
          %v5639 = vadd.f32 %v5638, %v4426
          %v5640 = vadd.f32 %v5639, %v4430
          %v5641 = vadd.f32 %v5640, %v4434
          %v5642 = vadd.f32 %v5641, %v4438
          %v5643 = vadd.f32 %v5642, %v4442
          %v5644 = vadd.f32 %v5643, %v4446
          %v5645 = vadd.f32 %v5644, %v4450
          %v5646 = vadd.f32 %v5645, %v4454
          %v5647 = vadd.f32 %v5646, %v4458
          %v5648 = vadd.f32 %v5647, %v4462
          %v5649 = vadd.f32 %v5648, %v4466
          %v5650 = vadd.f32 %v5649, %v4470
          %v5651 = vadd.f32 %v5650, %v4474
          %v5652 = vadd.f32 %v5651, %v4478
          %v5653 = vadd.f32 %v5652, %v4482
          %v5654 = vadd.f32 %v5653, %v4486
          %v5655 = vadd.f32 %v5654, %v4490
          %v5656 = vadd.f32 %v5655, %v4494
          %v5657 = vadd.f32 %v5656, %v4498
          %v5658 = vadd.f32 %v5657, %v4502
          %v5659 = vadd.f32 %v5658, %v4506
          %v5660 = vadd.f32 %v5659, %v4510
          %v5661 = vadd.f32 %v5660, %v4514
          %v5662 = vadd.f32 %v5661, %v4518
          %v5663 = vadd.f32 %v5662, %v4522
          %v5664 = vadd.f32 %v5663, %v4526
          %v5665 = vrot.slane %v5664, 4
          %v5666 = vadd.f32 %v5664, %v5665
          %v5667 = vrot.slane %v5666, 2
          %v5668 = vadd.f32 %v5666, %v5667
          %v5669 = vrot.slane %v5668, 1
          %v5670 = vadd.f32 %v5668, %v5669
          %v5671 = vadd.f32 %v4527, %v4531
          %v5672 = vadd.f32 %v5671, %v4535
          %v5673 = vadd.f32 %v5672, %v4539
          %v5674 = vadd.f32 %v5673, %v4543
          %v5675 = vadd.f32 %v5674, %v4547
          %v5676 = vadd.f32 %v5675, %v4551
          %v5677 = vadd.f32 %v5676, %v4555
          %v5678 = vadd.f32 %v5677, %v4559
          %v5679 = vadd.f32 %v5678, %v4563
          %v5680 = vadd.f32 %v5679, %v4567
          %v5681 = vadd.f32 %v5680, %v4571
          %v5682 = vadd.f32 %v5681, %v4575
          %v5683 = vadd.f32 %v5682, %v4579
          %v5684 = vadd.f32 %v5683, %v4583
          %v5685 = vadd.f32 %v5684, %v4587
          %v5686 = vadd.f32 %v5685, %v4591
          %v5687 = vadd.f32 %v5686, %v4595
          %v5688 = vadd.f32 %v5687, %v4599
          %v5689 = vadd.f32 %v5688, %v4603
          %v5690 = vadd.f32 %v5689, %v4607
          %v5691 = vadd.f32 %v5690, %v4611
          %v5692 = vadd.f32 %v5691, %v4615
          %v5693 = vadd.f32 %v5692, %v4619
          %v5694 = vadd.f32 %v5693, %v4623
          %v5695 = vadd.f32 %v5694, %v4627
          %v5696 = vadd.f32 %v5695, %v4631
          %v5697 = vadd.f32 %v5696, %v4635
          %v5698 = vadd.f32 %v5697, %v4639
          %v5699 = vadd.f32 %v5698, %v4643
          %v5700 = vadd.f32 %v5699, %v4647
          %v5701 = vadd.f32 %v5700, %v4651
          %v5702 = vrot.slane %v5701, 4
          %v5703 = vadd.f32 %v5701, %v5702
          %v5704 = vrot.slane %v5703, 2
          %v5705 = vadd.f32 %v5703, %v5704
          %v5706 = vrot.slane %v5705, 1
          %v5707 = vadd.f32 %v5705, %v5706
          %v5708 = vadd.f32 %v4528, %v4532
          %v5709 = vadd.f32 %v5708, %v4536
          %v5710 = vadd.f32 %v5709, %v4540
          %v5711 = vadd.f32 %v5710, %v4544
          %v5712 = vadd.f32 %v5711, %v4548
          %v5713 = vadd.f32 %v5712, %v4552
          %v5714 = vadd.f32 %v5713, %v4556
          %v5715 = vadd.f32 %v5714, %v4560
          %v5716 = vadd.f32 %v5715, %v4564
          %v5717 = vadd.f32 %v5716, %v4568
          %v5718 = vadd.f32 %v5717, %v4572
          %v5719 = vadd.f32 %v5718, %v4576
          %v5720 = vadd.f32 %v5719, %v4580
          %v5721 = vadd.f32 %v5720, %v4584
          %v5722 = vadd.f32 %v5721, %v4588
          %v5723 = vadd.f32 %v5722, %v4592
          %v5724 = vadd.f32 %v5723, %v4596
          %v5725 = vadd.f32 %v5724, %v4600
          %v5726 = vadd.f32 %v5725, %v4604
          %v5727 = vadd.f32 %v5726, %v4608
          %v5728 = vadd.f32 %v5727, %v4612
          %v5729 = vadd.f32 %v5728, %v4616
          %v5730 = vadd.f32 %v5729, %v4620
          %v5731 = vadd.f32 %v5730, %v4624
          %v5732 = vadd.f32 %v5731, %v4628
          %v5733 = vadd.f32 %v5732, %v4632
          %v5734 = vadd.f32 %v5733, %v4636
          %v5735 = vadd.f32 %v5734, %v4640
          %v5736 = vadd.f32 %v5735, %v4644
          %v5737 = vadd.f32 %v5736, %v4648
          %v5738 = vadd.f32 %v5737, %v4652
          %v5739 = vrot.slane %v5738, 4
          %v5740 = vadd.f32 %v5738, %v5739
          %v5741 = vrot.slane %v5740, 2
          %v5742 = vadd.f32 %v5740, %v5741
          %v5743 = vrot.slane %v5742, 1
          %v5744 = vadd.f32 %v5742, %v5743
          %v5745 = vadd.f32 %v4529, %v4533
          %v5746 = vadd.f32 %v5745, %v4537
          %v5747 = vadd.f32 %v5746, %v4541
          %v5748 = vadd.f32 %v5747, %v4545
          %v5749 = vadd.f32 %v5748, %v4549
          %v5750 = vadd.f32 %v5749, %v4553
          %v5751 = vadd.f32 %v5750, %v4557
          %v5752 = vadd.f32 %v5751, %v4561
          %v5753 = vadd.f32 %v5752, %v4565
          %v5754 = vadd.f32 %v5753, %v4569
          %v5755 = vadd.f32 %v5754, %v4573
          %v5756 = vadd.f32 %v5755, %v4577
          %v5757 = vadd.f32 %v5756, %v4581
          %v5758 = vadd.f32 %v5757, %v4585
          %v5759 = vadd.f32 %v5758, %v4589
          %v5760 = vadd.f32 %v5759, %v4593
          %v5761 = vadd.f32 %v5760, %v4597
          %v5762 = vadd.f32 %v5761, %v4601
          %v5763 = vadd.f32 %v5762, %v4605
          %v5764 = vadd.f32 %v5763, %v4609
          %v5765 = vadd.f32 %v5764, %v4613
          %v5766 = vadd.f32 %v5765, %v4617
          %v5767 = vadd.f32 %v5766, %v4621
          %v5768 = vadd.f32 %v5767, %v4625
          %v5769 = vadd.f32 %v5768, %v4629
          %v5770 = vadd.f32 %v5769, %v4633
          %v5771 = vadd.f32 %v5770, %v4637
          %v5772 = vadd.f32 %v5771, %v4641
          %v5773 = vadd.f32 %v5772, %v4645
          %v5774 = vadd.f32 %v5773, %v4649
          %v5775 = vadd.f32 %v5774, %v4653
          %v5776 = vrot.slane %v5775, 4
          %v5777 = vadd.f32 %v5775, %v5776
          %v5778 = vrot.slane %v5777, 2
          %v5779 = vadd.f32 %v5777, %v5778
          %v5780 = vrot.slane %v5779, 1
          %v5781 = vadd.f32 %v5779, %v5780
          %v5782 = vadd.f32 %v4530, %v4534
          %v5783 = vadd.f32 %v5782, %v4538
          %v5784 = vadd.f32 %v5783, %v4542
          %v5785 = vadd.f32 %v5784, %v4546
          %v5786 = vadd.f32 %v5785, %v4550
          %v5787 = vadd.f32 %v5786, %v4554
          %v5788 = vadd.f32 %v5787, %v4558
          %v5789 = vadd.f32 %v5788, %v4562
          %v5790 = vadd.f32 %v5789, %v4566
          %v5791 = vadd.f32 %v5790, %v4570
          %v5792 = vadd.f32 %v5791, %v4574
          %v5793 = vadd.f32 %v5792, %v4578
          %v5794 = vadd.f32 %v5793, %v4582
          %v5795 = vadd.f32 %v5794, %v4586
          %v5796 = vadd.f32 %v5795, %v4590
          %v5797 = vadd.f32 %v5796, %v4594
          %v5798 = vadd.f32 %v5797, %v4598
          %v5799 = vadd.f32 %v5798, %v4602
          %v5800 = vadd.f32 %v5799, %v4606
          %v5801 = vadd.f32 %v5800, %v4610
          %v5802 = vadd.f32 %v5801, %v4614
          %v5803 = vadd.f32 %v5802, %v4618
          %v5804 = vadd.f32 %v5803, %v4622
          %v5805 = vadd.f32 %v5804, %v4626
          %v5806 = vadd.f32 %v5805, %v4630
          %v5807 = vadd.f32 %v5806, %v4634
          %v5808 = vadd.f32 %v5807, %v4638
          %v5809 = vadd.f32 %v5808, %v4642
          %v5810 = vadd.f32 %v5809, %v4646
          %v5811 = vadd.f32 %v5810, %v4650
          %v5812 = vadd.f32 %v5811, %v4654
          %v5813 = vrot.slane %v5812, 4
          %v5814 = vadd.f32 %v5812, %v5813
          %v5815 = vrot.slane %v5814, 2
          %v5816 = vadd.f32 %v5814, %v5815
          %v5817 = vrot.slane %v5816, 1
          %v5818 = vadd.f32 %v5816, %v5817
          %v5819 = vadd.f32 %v4655, %v4659
          %v5820 = vadd.f32 %v5819, %v4663
          %v5821 = vadd.f32 %v5820, %v4667
          %v5822 = vadd.f32 %v5821, %v4671
          %v5823 = vadd.f32 %v5822, %v4675
          %v5824 = vadd.f32 %v5823, %v4679
          %v5825 = vadd.f32 %v5824, %v4683
          %v5826 = vadd.f32 %v5825, %v4687
          %v5827 = vadd.f32 %v5826, %v4691
          %v5828 = vadd.f32 %v5827, %v4695
          %v5829 = vadd.f32 %v5828, %v4699
          %v5830 = vadd.f32 %v5829, %v4703
          %v5831 = vadd.f32 %v5830, %v4707
          %v5832 = vadd.f32 %v5831, %v4711
          %v5833 = vadd.f32 %v5832, %v4715
          %v5834 = vadd.f32 %v5833, %v4719
          %v5835 = vadd.f32 %v5834, %v4723
          %v5836 = vadd.f32 %v5835, %v4727
          %v5837 = vadd.f32 %v5836, %v4731
          %v5838 = vadd.f32 %v5837, %v4735
          %v5839 = vadd.f32 %v5838, %v4739
          %v5840 = vadd.f32 %v5839, %v4743
          %v5841 = vadd.f32 %v5840, %v4747
          %v5842 = vadd.f32 %v5841, %v4751
          %v5843 = vadd.f32 %v5842, %v4755
          %v5844 = vadd.f32 %v5843, %v4759
          %v5845 = vadd.f32 %v5844, %v4763
          %v5846 = vadd.f32 %v5845, %v4767
          %v5847 = vadd.f32 %v5846, %v4771
          %v5848 = vadd.f32 %v5847, %v4775
          %v5849 = vadd.f32 %v5848, %v4779
          %v5850 = vrot.slane %v5849, 4
          %v5851 = vadd.f32 %v5849, %v5850
          %v5852 = vrot.slane %v5851, 2
          %v5853 = vadd.f32 %v5851, %v5852
          %v5854 = vrot.slane %v5853, 1
          %v5855 = vadd.f32 %v5853, %v5854
          %v5856 = vadd.f32 %v4656, %v4660
          %v5857 = vadd.f32 %v5856, %v4664
          %v5858 = vadd.f32 %v5857, %v4668
          %v5859 = vadd.f32 %v5858, %v4672
          %v5860 = vadd.f32 %v5859, %v4676
          %v5861 = vadd.f32 %v5860, %v4680
          %v5862 = vadd.f32 %v5861, %v4684
          %v5863 = vadd.f32 %v5862, %v4688
          %v5864 = vadd.f32 %v5863, %v4692
          %v5865 = vadd.f32 %v5864, %v4696
          %v5866 = vadd.f32 %v5865, %v4700
          %v5867 = vadd.f32 %v5866, %v4704
          %v5868 = vadd.f32 %v5867, %v4708
          %v5869 = vadd.f32 %v5868, %v4712
          %v5870 = vadd.f32 %v5869, %v4716
          %v5871 = vadd.f32 %v5870, %v4720
          %v5872 = vadd.f32 %v5871, %v4724
          %v5873 = vadd.f32 %v5872, %v4728
          %v5874 = vadd.f32 %v5873, %v4732
          %v5875 = vadd.f32 %v5874, %v4736
          %v5876 = vadd.f32 %v5875, %v4740
          %v5877 = vadd.f32 %v5876, %v4744
          %v5878 = vadd.f32 %v5877, %v4748
          %v5879 = vadd.f32 %v5878, %v4752
          %v5880 = vadd.f32 %v5879, %v4756
          %v5881 = vadd.f32 %v5880, %v4760
          %v5882 = vadd.f32 %v5881, %v4764
          %v5883 = vadd.f32 %v5882, %v4768
          %v5884 = vadd.f32 %v5883, %v4772
          %v5885 = vadd.f32 %v5884, %v4776
          %v5886 = vadd.f32 %v5885, %v4780
          %v5887 = vrot.slane %v5886, 4
          %v5888 = vadd.f32 %v5886, %v5887
          %v5889 = vrot.slane %v5888, 2
          %v5890 = vadd.f32 %v5888, %v5889
          %v5891 = vrot.slane %v5890, 1
          %v5892 = vadd.f32 %v5890, %v5891
          %v5893 = vadd.f32 %v4657, %v4661
          %v5894 = vadd.f32 %v5893, %v4665
          %v5895 = vadd.f32 %v5894, %v4669
          %v5896 = vadd.f32 %v5895, %v4673
          %v5897 = vadd.f32 %v5896, %v4677
          %v5898 = vadd.f32 %v5897, %v4681
          %v5899 = vadd.f32 %v5898, %v4685
          %v5900 = vadd.f32 %v5899, %v4689
          %v5901 = vadd.f32 %v5900, %v4693
          %v5902 = vadd.f32 %v5901, %v4697
          %v5903 = vadd.f32 %v5902, %v4701
          %v5904 = vadd.f32 %v5903, %v4705
          %v5905 = vadd.f32 %v5904, %v4709
          %v5906 = vadd.f32 %v5905, %v4713
          %v5907 = vadd.f32 %v5906, %v4717
          %v5908 = vadd.f32 %v5907, %v4721
          %v5909 = vadd.f32 %v5908, %v4725
          %v5910 = vadd.f32 %v5909, %v4729
          %v5911 = vadd.f32 %v5910, %v4733
          %v5912 = vadd.f32 %v5911, %v4737
          %v5913 = vadd.f32 %v5912, %v4741
          %v5914 = vadd.f32 %v5913, %v4745
          %v5915 = vadd.f32 %v5914, %v4749
          %v5916 = vadd.f32 %v5915, %v4753
          %v5917 = vadd.f32 %v5916, %v4757
          %v5918 = vadd.f32 %v5917, %v4761
          %v5919 = vadd.f32 %v5918, %v4765
          %v5920 = vadd.f32 %v5919, %v4769
          %v5921 = vadd.f32 %v5920, %v4773
          %v5922 = vadd.f32 %v5921, %v4777
          %v5923 = vadd.f32 %v5922, %v4781
          %v5924 = vrot.slane %v5923, 4
          %v5925 = vadd.f32 %v5923, %v5924
          %v5926 = vrot.slane %v5925, 2
          %v5927 = vadd.f32 %v5925, %v5926
          %v5928 = vrot.slane %v5927, 1
          %v5929 = vadd.f32 %v5927, %v5928
          %v5930 = vadd.f32 %v4658, %v4662
          %v5931 = vadd.f32 %v5930, %v4666
          %v5932 = vadd.f32 %v5931, %v4670
          %v5933 = vadd.f32 %v5932, %v4674
          %v5934 = vadd.f32 %v5933, %v4678
          %v5935 = vadd.f32 %v5934, %v4682
          %v5936 = vadd.f32 %v5935, %v4686
          %v5937 = vadd.f32 %v5936, %v4690
          %v5938 = vadd.f32 %v5937, %v4694
          %v5939 = vadd.f32 %v5938, %v4698
          %v5940 = vadd.f32 %v5939, %v4702
          %v5941 = vadd.f32 %v5940, %v4706
          %v5942 = vadd.f32 %v5941, %v4710
          %v5943 = vadd.f32 %v5942, %v4714
          %v5944 = vadd.f32 %v5943, %v4718
          %v5945 = vadd.f32 %v5944, %v4722
          %v5946 = vadd.f32 %v5945, %v4726
          %v5947 = vadd.f32 %v5946, %v4730
          %v5948 = vadd.f32 %v5947, %v4734
          %v5949 = vadd.f32 %v5948, %v4738
          %v5950 = vadd.f32 %v5949, %v4742
          %v5951 = vadd.f32 %v5950, %v4746
          %v5952 = vadd.f32 %v5951, %v4750
          %v5953 = vadd.f32 %v5952, %v4754
          %v5954 = vadd.f32 %v5953, %v4758
          %v5955 = vadd.f32 %v5954, %v4762
          %v5956 = vadd.f32 %v5955, %v4766
          %v5957 = vadd.f32 %v5956, %v4770
          %v5958 = vadd.f32 %v5957, %v4774
          %v5959 = vadd.f32 %v5958, %v4778
          %v5960 = vadd.f32 %v5959, %v4782
          %v5961 = vrot.slane %v5960, 4
          %v5962 = vadd.f32 %v5960, %v5961
          %v5963 = vrot.slane %v5962, 2
          %v5964 = vadd.f32 %v5962, %v5963
          %v5965 = vrot.slane %v5964, 1
          %v5966 = vadd.f32 %v5964, %v5965
          %vm5999 = vcmask 1041409
          %v6000 = vsel %vm5999, %v4967, %v4819
          %vm6001 = vcmask 1042434
          %v6002 = vsel %vm6001, %v5115, %v6000
          %vm6003 = vcmask 1043459
          %v6004 = vsel %vm6003, %v5263, %v6002
          %vm6005 = vcmask 1044484
          %v6006 = vsel %vm6005, %v5411, %v6004
          %vm6007 = vcmask 1045509
          %v6008 = vsel %vm6007, %v5559, %v6006
          %vm6009 = vcmask 1046534
          %v6010 = vsel %vm6009, %v5707, %v6008
          %vm6011 = vcmask 1047559
          %v6012 = vsel %vm6011, %v5855, %v6010
          %v6013 = vsel %vm5999, %v5004, %v4856
          %v6014 = vsel %vm6001, %v5152, %v6013
          %v6015 = vsel %vm6003, %v5300, %v6014
          %v6016 = vsel %vm6005, %v5448, %v6015
          %v6017 = vsel %vm6007, %v5596, %v6016
          %v6018 = vsel %vm6009, %v5744, %v6017
          %v6019 = vsel %vm6011, %v5892, %v6018
          %v6020 = vsel %vm5999, %v5041, %v4893
          %v6021 = vsel %vm6001, %v5189, %v6020
          %v6022 = vsel %vm6003, %v5337, %v6021
          %v6023 = vsel %vm6005, %v5485, %v6022
          %v6024 = vsel %vm6007, %v5633, %v6023
          %v6025 = vsel %vm6009, %v5781, %v6024
          %v6026 = vsel %vm6011, %v5929, %v6025
          %v6027 = vsel %vm5999, %v5078, %v4930
          %v6028 = vsel %vm6001, %v5226, %v6027
          %v6029 = vsel %vm6003, %v5374, %v6028
          %v6030 = vsel %vm6005, %v5522, %v6029
          %v6031 = vsel %vm6007, %v5670, %v6030
          %v6032 = vsel %vm6009, %v5818, %v6031
          %v6033 = vsel %vm6011, %v5966, %v6032
          %v6038 = vadd.f32 %v2683, %v6012
          %v6039 = vadd.f32 %v2684, %v6019
          %v6040 = vadd.f32 %v2685, %v6026
          %v6041 = vadd.f32 %v2686, %v6033
          %6042 = vst [vmem:[#allocation2] sm:$0xff] %v6038
          %6043 = vst [vmem:[#allocation2 + $0x8] sm:$0xff] %v6039
          %6044 = vst [vmem:[#allocation2 + $0x10] sm:$0xff] %v6040
          %6045 = vst [vmem:[#allocation2 + $0x18] sm:$0xff] %v6041
          %v6046 = vld [vmem:[%s471] sm:$0xff]
          %v6047 = vld [vmem:[%s471 + $0x8] sm:$0xff]
          %vm6048 = vcmp.gt.s32.totalorder %v6046, 0
          %vm6049 = vcmp.gt.s32.totalorder %v6047, 0
          %v6050 = vsel %vm6048, 1, 0
          %v6051 = vsel %vm6049, 1, 0
          %v6052 = vcvt.s32.f32 %v6050
          %v6053 = vcvt.s32.f32 %v6051
          %v6054 = vld [vmem:[#allocation3] sm:$0xff]
          %v6055 = vmul.f32 %v6052, %v564
          %v6056 = vmul.f32 %v6053, %v565
          %v6057 = vadd.f32 %v6055, %v6056
          %6058 = vadd.xlane.f32.xlu0 %v6057
          %v6059 = vpop.xlane.xlu0 %6058
          %v6060 = vadd.f32 %v6054, %v6059
          %vm6061 = vcmask 7168
          %6062 = vst.msk [vmem:[#allocation3] sm:$0xff] %vm6061, %v6060
        $region84: #{tpu_custom_call.1} parent=55 // pred_fallthru
          _
        %p6063 = scmp.eq.s32.totalorder %s47, 1
        // Predicated region
        $region85: #{tpu_custom_call.1} parent=55 // pred_check
          %p6064 = pneg %p6063
        $region86: #{tpu_custom_call.1} parent=55 // pred_check_branch
          %6066 = sbr.rel (%p6064) target = $region88
        $region87: #{tpu_custom_call.1} parent=55 // pred_region
          %vm6067 = vcmp.gt.s32.totalorder %v556, 0
          %v6068 = vsel %vm6067, %v556, 0
          %vm6069 = vcmp.lt.s32.totalorder %v6068, 512
          %v6070 = vsel %vm6069, %v6068, 512
          %v6071 = vcvt.s32.f32 %v6070
          %v6072 = vld [vmem:[#allocation2] sm:$0xff]
          %v6073 = vld [vmem:[#allocation2 + $0x8] sm:$0xff]
          %v6074 = vld [vmem:[#allocation2 + $0x10] sm:$0xff]
          %v6075 = vld [vmem:[#allocation2 + $0x18] sm:$0xff]
          %v6076 = vld [vmem:[#allocation11] sm:$0xf]
          %v6077 = vld [vmem:[#allocation11 + $0x4] sm:$0xf]
          %v6078 = vld [vmem:[#allocation11 + $0x8] sm:$0xf]
          %v6079 = vld [vmem:[#allocation11 + $0xc] sm:$0xf]
          %v6080 = vld [vmem:[#allocation11 + $0x10] sm:$0xf]
          %v6081 = vld [vmem:[#allocation11 + $0x14] sm:$0xf]
          %v6082 = vld [vmem:[#allocation11 + $0x18] sm:$0xf]
          %v6083 = vld [vmem:[#allocation11 + $0x1c] sm:$0xf]
          %v6084 = vld [vmem:[#allocation11 + $0x20] sm:$0xf]
          %v6085 = vld [vmem:[#allocation11 + $0x24] sm:$0xf]
          %v6086 = vld [vmem:[#allocation11 + $0x28] sm:$0xf]
          %v6087 = vld [vmem:[#allocation11 + $0x2c] sm:$0xf]
          %v6088 = vld [vmem:[#allocation11 + $0x30] sm:$0xf]
          %v6089 = vld [vmem:[#allocation11 + $0x34] sm:$0xf]
          %v6090 = vld [vmem:[#allocation11 + $0x38] sm:$0xf]
          %v6091 = vld [vmem:[#allocation11 + $0x3c] sm:$0xf]
          %v6092 = vld [vmem:[#allocation11 + $0x40] sm:$0xf]
          %v6093 = vld [vmem:[#allocation11 + $0x44] sm:$0xf]
          %v6094 = vld [vmem:[#allocation11 + $0x48] sm:$0xf]
          %v6095 = vld [vmem:[#allocation11 + $0x4c] sm:$0xf]
          %v6096 = vld [vmem:[#allocation11 + $0x50] sm:$0xf]
          %v6097 = vld [vmem:[#allocation11 + $0x54] sm:$0xf]
          %v6098 = vld [vmem:[#allocation11 + $0x58] sm:$0xf]
          %v6099 = vld [vmem:[#allocation11 + $0x5c] sm:$0xf]
          %v6100 = vld [vmem:[#allocation11 + $0x60] sm:$0xf]
          %v6101 = vld [vmem:[#allocation11 + $0x64] sm:$0xf]
          %v6102 = vld [vmem:[#allocation11 + $0x68] sm:$0xf]
          %v6103 = vld [vmem:[#allocation11 + $0x6c] sm:$0xf]
          %v6104 = vld [vmem:[#allocation11 + $0x70] sm:$0xf]
          %v6105 = vld [vmem:[#allocation11 + $0x74] sm:$0xf]
          %v6106 = vld [vmem:[#allocation11 + $0x78] sm:$0xf]
          %v6107 = vld [vmem:[#allocation11 + $0x7c] sm:$0xf]
          %v6108 = vld [vmem:[#allocation11 + $0x80] sm:$0xf]
          %v6109 = vld [vmem:[#allocation11 + $0x84] sm:$0xf]
          %v6110 = vld [vmem:[#allocation11 + $0x88] sm:$0xf]
          %v6111 = vld [vmem:[#allocation11 + $0x8c] sm:$0xf]
          %v6112 = vld [vmem:[#allocation11 + $0x90] sm:$0xf]
          %v6113 = vld [vmem:[#allocation11 + $0x94] sm:$0xf]
          %v6114 = vld [vmem:[#allocation11 + $0x98] sm:$0xf]
          %v6115 = vld [vmem:[#allocation11 + $0x9c] sm:$0xf]
          %v6116 = vld [vmem:[#allocation11 + $0xa0] sm:$0xf]
          %v6117 = vld [vmem:[#allocation11 + $0xa4] sm:$0xf]
          %v6118 = vld [vmem:[#allocation11 + $0xa8] sm:$0xf]
          %v6119 = vld [vmem:[#allocation11 + $0xac] sm:$0xf]
          %v6120 = vld [vmem:[#allocation11 + $0xb0] sm:$0xf]
          %v6121 = vld [vmem:[#allocation11 + $0xb4] sm:$0xf]
          %v6122 = vld [vmem:[#allocation11 + $0xb8] sm:$0xf]
          %v6123 = vld [vmem:[#allocation11 + $0xbc] sm:$0xf]
          %v6124 = vld [vmem:[#allocation11 + $0xc0] sm:$0xf]
          %v6125 = vld [vmem:[#allocation11 + $0xc4] sm:$0xf]
          %v6126 = vld [vmem:[#allocation11 + $0xc8] sm:$0xf]
          %v6127 = vld [vmem:[#allocation11 + $0xcc] sm:$0xf]
          %v6128 = vld [vmem:[#allocation11 + $0xd0] sm:$0xf]
          %v6129 = vld [vmem:[#allocation11 + $0xd4] sm:$0xf]
          %v6130 = vld [vmem:[#allocation11 + $0xd8] sm:$0xf]
          %v6131 = vld [vmem:[#allocation11 + $0xdc] sm:$0xf]
          %v6132 = vld [vmem:[#allocation11 + $0xe0] sm:$0xf]
          %v6133 = vld [vmem:[#allocation11 + $0xe4] sm:$0xf]
          %v6134 = vld [vmem:[#allocation11 + $0xe8] sm:$0xf]
          %v6135 = vld [vmem:[#allocation11 + $0xec] sm:$0xf]
          %v6136 = vld [vmem:[#allocation11 + $0xf0] sm:$0xf]
          %v6137 = vld [vmem:[#allocation11 + $0xf4] sm:$0xf]
          %v6138 = vld [vmem:[#allocation11 + $0xf8] sm:$0xf]
          %v6139 = vld [vmem:[#allocation11 + $0xfc] sm:$0xf]
          %v6140 = vunpack.c.l.bf16 %v6076
          %v6141 = vunpack.c.l.bf16 %v6077
          %v6142 = vunpack.c.l.bf16 %v6078
          %v6143 = vunpack.c.l.bf16 %v6079
          %v6144 = vunpack.c.l.bf16 %v6080
          %v6145 = vunpack.c.l.bf16 %v6081
          %v6146 = vunpack.c.l.bf16 %v6082
          %v6147 = vunpack.c.l.bf16 %v6083
          %v6148 = vunpack.c.l.bf16 %v6084
          %v6149 = vunpack.c.l.bf16 %v6085
          %v6150 = vunpack.c.l.bf16 %v6086
          %v6151 = vunpack.c.l.bf16 %v6087
          %v6152 = vunpack.c.l.bf16 %v6088
          %v6153 = vunpack.c.l.bf16 %v6089
          %v6154 = vunpack.c.l.bf16 %v6090
          %v6155 = vunpack.c.l.bf16 %v6091
          %v6156 = vunpack.c.l.bf16 %v6092
          %v6157 = vunpack.c.l.bf16 %v6093
          %v6158 = vunpack.c.l.bf16 %v6094
          %v6159 = vunpack.c.l.bf16 %v6095
          %v6160 = vunpack.c.l.bf16 %v6096
          %v6161 = vunpack.c.l.bf16 %v6097
          %v6162 = vunpack.c.l.bf16 %v6098
          %v6163 = vunpack.c.l.bf16 %v6099
          %v6164 = vunpack.c.l.bf16 %v6100
          %v6165 = vunpack.c.l.bf16 %v6101
          %v6166 = vunpack.c.l.bf16 %v6102
          %v6167 = vunpack.c.l.bf16 %v6103
          %v6168 = vunpack.c.l.bf16 %v6104
          %v6169 = vunpack.c.l.bf16 %v6105
          %v6170 = vunpack.c.l.bf16 %v6106
          %v6171 = vunpack.c.l.bf16 %v6107
          %v6172 = vunpack.c.l.bf16 %v6108
          %v6173 = vunpack.c.l.bf16 %v6109
          %v6174 = vunpack.c.l.bf16 %v6110
          %v6175 = vunpack.c.l.bf16 %v6111
          %v6176 = vunpack.c.l.bf16 %v6112
          %v6177 = vunpack.c.l.bf16 %v6113
          %v6178 = vunpack.c.l.bf16 %v6114
          %v6179 = vunpack.c.l.bf16 %v6115
          %v6180 = vunpack.c.l.bf16 %v6116
          %v6181 = vunpack.c.l.bf16 %v6117
          %v6182 = vunpack.c.l.bf16 %v6118
          %v6183 = vunpack.c.l.bf16 %v6119
          %v6184 = vunpack.c.l.bf16 %v6120
          %v6185 = vunpack.c.l.bf16 %v6121
          %v6186 = vunpack.c.l.bf16 %v6122
          %v6187 = vunpack.c.l.bf16 %v6123
          %v6188 = vunpack.c.l.bf16 %v6124
          %v6189 = vunpack.c.l.bf16 %v6125
          %v6190 = vunpack.c.l.bf16 %v6126
          %v6191 = vunpack.c.l.bf16 %v6127
          %v6192 = vunpack.c.l.bf16 %v6128
          %v6193 = vunpack.c.l.bf16 %v6129
          %v6194 = vunpack.c.l.bf16 %v6130
          %v6195 = vunpack.c.l.bf16 %v6131
          %v6196 = vunpack.c.l.bf16 %v6132
          %v6197 = vunpack.c.l.bf16 %v6133
          %v6198 = vunpack.c.l.bf16 %v6134
          %v6199 = vunpack.c.l.bf16 %v6135
          %v6200 = vunpack.c.l.bf16 %v6136
          %v6201 = vunpack.c.l.bf16 %v6137
          %v6202 = vunpack.c.l.bf16 %v6138
          %v6203 = vunpack.c.l.bf16 %v6139
          %v6204 = vld [vmem:[%s5] sm:$0x1]
          %v6205 = vunpack.c.l.bf16 %v6204
          %6207 = vset.pattern.permute.xlu0 0
          %6208 = vperm.xlu0 %6207, %v6071
          %v6209 = vpop.permute.xlu0 %6208
          %v6211 = vlaneseq
          %v6212 = vshrl.u32 %v6211, 7
          %v6213 = vsub.s32 0, %v6212
          %v6214 = vrot.slane %v6205, %v6213
          %v6215 = vmul.f32 %v6209, %v6214
          %v6216 = vld [vmem:[#allocation3] sm:$0xff]
          %v6218 = vrot.slane %v6205, 7
          %v6220 = vsub.f32 %v6205, %v6218
          %6222 = vset.pattern.permute.xlu0 0
          %6223 = vperm.xlu0 %6222, %v6216
          %v6224 = vpop.permute.xlu0 %6223
          %v6226 = vlaneseq
          %v6227 = vshrl.u32 %v6226, 7
          %v6228 = vsub.s32 1, %v6227
          %v6229 = vrot.slane %v6220, %v6228
          %v6230 = vmul.f32 %v6224, %v6229
          %v6231 = vadd.f32 %v6215, %v6230
          %v6232 = vmax.f32 %v6071, 1.0
          %6233 = vmatprep.subr.mxu0 0.0
          %6234 = vmatpush1.msra.mxu0 %v6140
          %6235 = vmatprep.subr.mxu0 0.0
          %6236 = vmatpush1.msra.mxu0 %v6141
          %6237 = vmatprep.subr.mxu0 0.0
          %6238 = vmatpush1.msra.mxu0 %v6142
          %6239 = vmatprep.subr.mxu0 0.0
          %6240 = vmatpush1.msra.mxu0 %v6143
          %6241 = vmatprep.subr.mxu0 0.0
          %6242 = vmatpush1.msra.mxu0 %v6144
          %6243 = vmatprep.subr.mxu0 0.0
          %6244 = vmatpush1.msra.mxu0 %v6145
          %6245 = vmatprep.subr.mxu0 0.0
          %6246 = vmatpush1.msra.mxu0 %v6146
          %6247 = vmatprep.subr.mxu0 0.0
          %6248 = vmatpush1.msra.mxu0 %v6147
          %6249 = vmatprep.subr.mxu0 0.0
          %6250 = vmatpush1.msra.mxu0 %v6148
          %6251 = vmatprep.subr.mxu0 0.0
          %6252 = vmatpush1.msra.mxu0 %v6149
          %6253 = vmatprep.subr.mxu0 0.0
          %6254 = vmatpush1.msra.mxu0 %v6150
          %6255 = vmatprep.subr.mxu0 0.0
          %6256 = vmatpush1.msra.mxu0 %v6151
          %6257 = vmatprep.subr.mxu0 0.0
          %6258 = vmatpush1.msra.mxu0 %v6152
          %6259 = vmatprep.subr.mxu0 0.0
          %6260 = vmatpush1.msra.mxu0 %v6153
          %6261 = vmatprep.subr.mxu0 0.0
          %6262 = vmatpush1.msra.mxu0 %v6154
          %6263 = vmatprep.subr.mxu0 0.0
          %6264 = vmatpush1.msra.mxu0 %v6155
          %6265 = vmatprep.subr.mxu0 0.0
          %6266 = vmatpush1.msra.mxu0 %v6156
          %6267 = vmatprep.subr.mxu0 0.0
          %6268 = vmatpush1.msra.mxu0 %v6157
          %6269 = vmatprep.subr.mxu0 0.0
          %6270 = vmatpush1.msra.mxu0 %v6158
          %6271 = vmatprep.subr.mxu0 0.0
          %6272 = vmatpush1.msra.mxu0 %v6159
          %6273 = vmatprep.subr.mxu0 0.0
          %6274 = vmatpush1.msra.mxu0 %v6160
          %6275 = vmatprep.subr.mxu0 0.0
          %6276 = vmatpush1.msra.mxu0 %v6161
          %6277 = vmatprep.subr.mxu0 0.0
          %6278 = vmatpush1.msra.mxu0 %v6162
          %6279 = vmatprep.subr.mxu0 0.0
          %6280 = vmatpush1.msra.mxu0 %v6163
          %6281 = vmatprep.subr.mxu0 0.0
          %6282 = vmatpush1.msra.mxu0 %v6164
          %6283 = vmatprep.subr.mxu0 0.0
          %6284 = vmatpush1.msra.mxu0 %v6165
          %6285 = vmatprep.subr.mxu0 0.0
          %6286 = vmatpush1.msra.mxu0 %v6166
          %6287 = vmatprep.subr.mxu0 0.0
          %6288 = vmatpush1.msra.mxu0 %v6167
          %6289 = vmatprep.subr.mxu0 0.0
          %6290 = vmatpush1.msra.mxu0 %v6168
          %6291 = vmatprep.subr.mxu0 0.0
          %6292 = vmatpush1.msra.mxu0 %v6169
          %6293 = vmatprep.subr.mxu0 0.0
          %6294 = vmatpush1.msra.mxu0 %v6170
          %6295 = vmatprep.subr.mxu0 0.0
          %6296 = vmatpush1.msra.mxu0 %v6171
          %6297 = vmatprep.mubr.f32.mxu0 %v6073
          %6298 = vmatmul.mubr.f32.gmra.mrb[0].mxu0 %v6072
          %v6299 = vpop.f32.mrb[0].mxu0
          %v6300 = vadd.f32 %v6231, %v6299
          %v6301 = vpop.f32.mrb[0].mxu0
          %6302 = vdwg.mxu0
          %6303 = vmatprep.subr.mxu0 0.0
          %6304 = vmatpush1.msra.mxu0 %v6172
          %6305 = vmatprep.subr.mxu0 0.0
          %6306 = vmatpush1.msra.mxu0 %v6173
          %6307 = vmatprep.subr.mxu0 0.0
          %6308 = vmatpush1.msra.mxu0 %v6174
          %6309 = vmatprep.subr.mxu0 0.0
          %6310 = vmatpush1.msra.mxu0 %v6175
          %6311 = vmatprep.subr.mxu0 0.0
          %6312 = vmatpush1.msra.mxu0 %v6176
          %6313 = vmatprep.subr.mxu0 0.0
          %6314 = vmatpush1.msra.mxu0 %v6177
          %6315 = vmatprep.subr.mxu0 0.0
          %6316 = vmatpush1.msra.mxu0 %v6178
          %6317 = vmatprep.subr.mxu0 0.0
          %6318 = vmatpush1.msra.mxu0 %v6179
          %6319 = vmatprep.subr.mxu0 0.0
          %6320 = vmatpush1.msra.mxu0 %v6180
          %6321 = vmatprep.subr.mxu0 0.0
          %6322 = vmatpush1.msra.mxu0 %v6181
          %6323 = vmatprep.subr.mxu0 0.0
          %6324 = vmatpush1.msra.mxu0 %v6182
          %6325 = vmatprep.subr.mxu0 0.0
          %6326 = vmatpush1.msra.mxu0 %v6183
          %6327 = vmatprep.subr.mxu0 0.0
          %6328 = vmatpush1.msra.mxu0 %v6184
          %6329 = vmatprep.subr.mxu0 0.0
          %6330 = vmatpush1.msra.mxu0 %v6185
          %6331 = vmatprep.subr.mxu0 0.0
          %6332 = vmatpush1.msra.mxu0 %v6186
          %6333 = vmatprep.subr.mxu0 0.0
          %6334 = vmatpush1.msra.mxu0 %v6187
          %6335 = vmatprep.subr.mxu0 0.0
          %6336 = vmatpush1.msra.mxu0 %v6188
          %6337 = vmatprep.subr.mxu0 0.0
          %6338 = vmatpush1.msra.mxu0 %v6189
          %6339 = vmatprep.subr.mxu0 0.0
          %6340 = vmatpush1.msra.mxu0 %v6190
          %6341 = vmatprep.subr.mxu0 0.0
          %6342 = vmatpush1.msra.mxu0 %v6191
          %6343 = vmatprep.subr.mxu0 0.0
          %6344 = vmatpush1.msra.mxu0 %v6192
          %6345 = vmatprep.subr.mxu0 0.0
          %6346 = vmatpush1.msra.mxu0 %v6193
          %6347 = vmatprep.subr.mxu0 0.0
          %6348 = vmatpush1.msra.mxu0 %v6194
          %6349 = vmatprep.subr.mxu0 0.0
          %6350 = vmatpush1.msra.mxu0 %v6195
          %6351 = vmatprep.subr.mxu0 0.0
          %6352 = vmatpush1.msra.mxu0 %v6196
          %6353 = vmatprep.subr.mxu0 0.0
          %6354 = vmatpush1.msra.mxu0 %v6197
          %6355 = vmatprep.subr.mxu0 0.0
          %6356 = vmatpush1.msra.mxu0 %v6198
          %6357 = vmatprep.subr.mxu0 0.0
          %6358 = vmatpush1.msra.mxu0 %v6199
          %6359 = vmatprep.subr.mxu0 0.0
          %6360 = vmatpush1.msra.mxu0 %v6200
          %6361 = vmatprep.subr.mxu0 0.0
          %6362 = vmatpush1.msra.mxu0 %v6201
          %6363 = vmatprep.subr.mxu0 0.0
          %6364 = vmatpush1.msra.mxu0 %v6202
          %6365 = vmatprep.subr.mxu0 0.0
          %6366 = vmatpush1.msra.mxu0 %v6203
          %6367 = vmatprep.mubr.f32.mxu0 %v6075
          %6368 = vmatmul.mubr.f32.gmra.mrb[0].mxu0 %v6074
          %v6369 = vpop.f32.mrb[0].mxu0
          %v6370 = vadd.f32 %v6300, %v6369
          %v6371 = vpop.f32.mrb[0].mxu0
          %6372 = vdwg.mxu0
          %6374 = vset.pattern.permute.xlu0 0
          %6375 = vperm.xlu0 %6374, %v6232
          %v6376 = vpop.permute.xlu0 %6375
          %v6378 = vrcp.pop %v6376
          %v6379 = vmul.f32 %v6370, %v6378
          %v6380 = vld [vmem:[#allocation12] sm:$0xf]
          %v6381 = vld [vmem:[#allocation12 + $0x4] sm:$0xf]
          %v6382 = vld [vmem:[#allocation12 + $0x8] sm:$0xf]
          %v6383 = vld [vmem:[#allocation12 + $0xc] sm:$0xf]
          %v6384 = vld [vmem:[#allocation12 + $0x10] sm:$0xf]
          %v6385 = vld [vmem:[#allocation12 + $0x14] sm:$0xf]
          %v6386 = vld [vmem:[#allocation12 + $0x18] sm:$0xf]
          %v6387 = vld [vmem:[#allocation12 + $0x1c] sm:$0xf]
          %v6388 = vld [vmem:[#allocation12 + $0x20] sm:$0xf]
          %v6389 = vld [vmem:[#allocation12 + $0x24] sm:$0xf]
          %v6390 = vld [vmem:[#allocation12 + $0x28] sm:$0xf]
          %v6391 = vld [vmem:[#allocation12 + $0x2c] sm:$0xf]
          %v6392 = vld [vmem:[#allocation12 + $0x30] sm:$0xf]
          %v6393 = vld [vmem:[#allocation12 + $0x34] sm:$0xf]
          %v6394 = vld [vmem:[#allocation12 + $0x38] sm:$0xf]
          %v6395 = vld [vmem:[#allocation12 + $0x3c] sm:$0xf]
          %v6396 = vunpack.c.l.bf16 %v6380
          %v6397 = vunpack.c.l.bf16 %v6381
          %v6398 = vunpack.c.l.bf16 %v6382
          %v6399 = vunpack.c.l.bf16 %v6383
          %v6400 = vunpack.c.l.bf16 %v6384
          %v6401 = vunpack.c.l.bf16 %v6385
          %v6402 = vunpack.c.l.bf16 %v6386
          %v6403 = vunpack.c.l.bf16 %v6387
          %v6404 = vunpack.c.l.bf16 %v6388
          %v6405 = vunpack.c.l.bf16 %v6389
          %v6406 = vunpack.c.l.bf16 %v6390
          %v6407 = vunpack.c.l.bf16 %v6391
          %v6408 = vunpack.c.l.bf16 %v6392
          %v6409 = vunpack.c.l.bf16 %v6393
          %v6410 = vunpack.c.l.bf16 %v6394
          %v6411 = vunpack.c.l.bf16 %v6395
          %v6412 = vld [vmem:[%s7] sm:$0x1]
          %v6414 = vlaneseq
          %v6415 = vshrl.u32 %v6414, 7
          %v6416 = vsub.s32 0, %v6415
          %v6417 = vrot.slane %v6412, %v6416
          %6419 = vmatprep.subr.mxu0 0.0
          %6420 = vmatpush1.msra.mxu0 %v6396
          %6421 = vmatprep.subr.mxu0 0.0
          %6422 = vmatpush1.msra.mxu0 %v6397
          %6423 = vmatprep.subr.mxu0 0.0
          %6424 = vmatpush1.msra.mxu0 %v6398
          %6425 = vmatprep.subr.mxu0 0.0
          %6426 = vmatpush1.msra.mxu0 %v6399
          %6427 = vmatprep.subr.mxu0 0.0
          %6428 = vmatpush1.msra.mxu0 %v6400
          %6429 = vmatprep.subr.mxu0 0.0
          %6430 = vmatpush1.msra.mxu0 %v6401
          %6431 = vmatprep.subr.mxu0 0.0
          %6432 = vmatpush1.msra.mxu0 %v6402
          %6433 = vmatprep.subr.mxu0 0.0
          %6434 = vmatpush1.msra.mxu0 %v6403
          %6435 = vmatprep.subr.mxu0 0.0
          %6436 = vmatpush1.msra.mxu0 %v6404
          %6437 = vmatprep.subr.mxu0 0.0
          %6438 = vmatpush1.msra.mxu0 %v6405
          %6439 = vmatprep.subr.mxu0 0.0
          %6440 = vmatpush1.msra.mxu0 %v6406
          %6441 = vmatprep.subr.mxu0 0.0
          %6442 = vmatpush1.msra.mxu0 %v6407
          %6443 = vmatprep.subr.mxu0 0.0
          %6444 = vmatpush1.msra.mxu0 %v6408
          %6445 = vmatprep.subr.mxu0 0.0
          %6446 = vmatpush1.msra.mxu0 %v6409
          %6447 = vmatprep.subr.mxu0 0.0
          %6448 = vmatpush1.msra.mxu0 %v6410
          %6449 = vmatprep.subr.mxu0 0.0
          %6450 = vmatpush1.msra.mxu0 %v6411
          %6451 = vmatprep.subr.mxu0 0.0
          %6452 = vmatpush1.msra.mxu0 0.0
          %6453 = vmatprep.subr.mxu0 0.0
          %6454 = vmatpush1.msra.mxu0 0.0
          %6455 = vmatprep.subr.mxu0 0.0
          %6456 = vmatpush1.msra.mxu0 0.0
          %6457 = vmatprep.subr.mxu0 0.0
          %6458 = vmatpush1.msra.mxu0 0.0
          %6459 = vmatprep.subr.mxu0 0.0
          %6460 = vmatpush1.msra.mxu0 0.0
          %6461 = vmatprep.subr.mxu0 0.0
          %6462 = vmatpush1.msra.mxu0 0.0
          %6463 = vmatprep.subr.mxu0 0.0
          %6464 = vmatpush1.msra.mxu0 0.0
          %6465 = vmatprep.subr.mxu0 0.0
          %6466 = vmatpush1.msra.mxu0 0.0
          %6467 = vmatprep.subr.mxu0 0.0
          %6468 = vmatpush1.msra.mxu0 0.0
          %6469 = vmatprep.subr.mxu0 0.0
          %6470 = vmatpush1.msra.mxu0 0.0
          %6471 = vmatprep.subr.mxu0 0.0
          %6472 = vmatpush1.msra.mxu0 0.0
          %6473 = vmatprep.subr.mxu0 0.0
          %6474 = vmatpush1.msra.mxu0 0.0
          %6475 = vmatprep.subr.mxu0 0.0
          %6476 = vmatpush1.msra.mxu0 0.0
          %6477 = vmatprep.subr.mxu0 0.0
          %6478 = vmatpush1.msra.mxu0 0.0
          %6479 = vmatprep.subr.mxu0 0.0
          %6480 = vmatpush1.msra.mxu0 0.0
          %6481 = vmatprep.subr.mxu0 0.0
          %6482 = vmatpush1.msra.mxu0 0.0
          %6483 = vmatprep.mubr.f32.mxu0 0.0
          %6484 = vmatmul.mubr.f32.gmra.mrb[0].mxu0 %v6379
          %v6485 = vpop.f32.mrb[0].mxu0
          %v6486 = vadd.f32 %v6417, %v6485
          %v6487 = vpop.f32.mrb[0].mxu0
          %6488 = vdwg.mxu0
          %v6489 = vtanh.pop %v6486
          %v6490 = vld [vmem:[#allocation14] sm:$0xf]
          %v6491 = vld [vmem:[#allocation14 + $0x4] sm:$0xf]
          %v6492 = vld [vmem:[#allocation14 + $0x8] sm:$0xf]
          %v6493 = vld [vmem:[#allocation14 + $0xc] sm:$0xf]
          %v6494 = vld [vmem:[#allocation14 + $0x10] sm:$0xf]
          %v6495 = vld [vmem:[#allocation14 + $0x14] sm:$0xf]
          %v6496 = vld [vmem:[#allocation14 + $0x18] sm:$0xf]
          %v6497 = vld [vmem:[#allocation14 + $0x1c] sm:$0xf]
          %v6498 = vld [vmem:[#allocation14 + $0x20] sm:$0xf]
          %v6499 = vld [vmem:[#allocation14 + $0x24] sm:$0xf]
          %v6500 = vld [vmem:[#allocation14 + $0x28] sm:$0xf]
          %v6501 = vld [vmem:[#allocation14 + $0x2c] sm:$0xf]
          %v6502 = vld [vmem:[#allocation14 + $0x30] sm:$0xf]
          %v6503 = vld [vmem:[#allocation14 + $0x34] sm:$0xf]
          %v6504 = vld [vmem:[#allocation14 + $0x38] sm:$0xf]
          %v6505 = vld [vmem:[#allocation14 + $0x3c] sm:$0xf]
          %v6506 = vunpack.c.l.bf16 %v6490
          %v6507 = vunpack.c.l.bf16 %v6491
          %v6508 = vunpack.c.l.bf16 %v6492
          %v6509 = vunpack.c.l.bf16 %v6493
          %v6510 = vunpack.c.l.bf16 %v6494
          %v6511 = vunpack.c.l.bf16 %v6495
          %v6512 = vunpack.c.l.bf16 %v6496
          %v6513 = vunpack.c.l.bf16 %v6497
          %v6514 = vunpack.c.l.bf16 %v6498
          %v6515 = vunpack.c.l.bf16 %v6499
          %v6516 = vunpack.c.l.bf16 %v6500
          %v6517 = vunpack.c.l.bf16 %v6501
          %v6518 = vunpack.c.l.bf16 %v6502
          %v6519 = vunpack.c.l.bf16 %v6503
          %v6520 = vunpack.c.l.bf16 %v6504
          %v6521 = vunpack.c.l.bf16 %v6505
          %v6522 = vld [vmem:[%s9] sm:$0x1]
          %v6524 = vlaneseq
          %v6525 = vshrl.u32 %v6524, 7
          %v6526 = vsub.s32 0, %v6525
          %v6527 = vrot.slane %v6522, %v6526
          %6529 = vmatprep.subr.mxu0 0.0
          %6530 = vmatpush1.msra.mxu0 %v6506
          %6531 = vmatprep.subr.mxu0 0.0
          %6532 = vmatpush1.msra.mxu0 %v6507
          %6533 = vmatprep.subr.mxu0 0.0
          %6534 = vmatpush1.msra.mxu0 %v6508
          %6535 = vmatprep.subr.mxu0 0.0
          %6536 = vmatpush1.msra.mxu0 %v6509
          %6537 = vmatprep.subr.mxu0 0.0
          %6538 = vmatpush1.msra.mxu0 %v6510
          %6539 = vmatprep.subr.mxu0 0.0
          %6540 = vmatpush1.msra.mxu0 %v6511
          %6541 = vmatprep.subr.mxu0 0.0
          %6542 = vmatpush1.msra.mxu0 %v6512
          %6543 = vmatprep.subr.mxu0 0.0
          %6544 = vmatpush1.msra.mxu0 %v6513
          %6545 = vmatprep.subr.mxu0 0.0
          %6546 = vmatpush1.msra.mxu0 %v6514
          %6547 = vmatprep.subr.mxu0 0.0
          %6548 = vmatpush1.msra.mxu0 %v6515
          %6549 = vmatprep.subr.mxu0 0.0
          %6550 = vmatpush1.msra.mxu0 %v6516
          %6551 = vmatprep.subr.mxu0 0.0
          %6552 = vmatpush1.msra.mxu0 %v6517
          %6553 = vmatprep.subr.mxu0 0.0
          %6554 = vmatpush1.msra.mxu0 %v6518
          %6555 = vmatprep.subr.mxu0 0.0
          %6556 = vmatpush1.msra.mxu0 %v6519
          %6557 = vmatprep.subr.mxu0 0.0
          %6558 = vmatpush1.msra.mxu0 %v6520
          %6559 = vmatprep.subr.mxu0 0.0
          %6560 = vmatpush1.msra.mxu0 %v6521
          %6561 = vmatprep.subr.mxu0 0.0
          %6562 = vmatpush1.msra.mxu0 0.0
          %6563 = vmatprep.subr.mxu0 0.0
          %6564 = vmatpush1.msra.mxu0 0.0
          %6565 = vmatprep.subr.mxu0 0.0
          %6566 = vmatpush1.msra.mxu0 0.0
          %6567 = vmatprep.subr.mxu0 0.0
          %6568 = vmatpush1.msra.mxu0 0.0
          %6569 = vmatprep.subr.mxu0 0.0
          %6570 = vmatpush1.msra.mxu0 0.0
          %6571 = vmatprep.subr.mxu0 0.0
          %6572 = vmatpush1.msra.mxu0 0.0
          %6573 = vmatprep.subr.mxu0 0.0
          %6574 = vmatpush1.msra.mxu0 0.0
          %6575 = vmatprep.subr.mxu0 0.0
          %6576 = vmatpush1.msra.mxu0 0.0
          %6577 = vmatprep.subr.mxu0 0.0
          %6578 = vmatpush1.msra.mxu0 0.0
          %6579 = vmatprep.subr.mxu0 0.0
          %6580 = vmatpush1.msra.mxu0 0.0
          %6581 = vmatprep.subr.mxu0 0.0
          %6582 = vmatpush1.msra.mxu0 0.0
          %6583 = vmatprep.subr.mxu0 0.0
          %6584 = vmatpush1.msra.mxu0 0.0
          %6585 = vmatprep.subr.mxu0 0.0
          %6586 = vmatpush1.msra.mxu0 0.0
          %6587 = vmatprep.subr.mxu0 0.0
          %6588 = vmatpush1.msra.mxu0 0.0
          %6589 = vmatprep.subr.mxu0 0.0
          %6590 = vmatpush1.msra.mxu0 0.0
          %6591 = vmatprep.subr.mxu0 0.0
          %6592 = vmatpush1.msra.mxu0 0.0
          %6593 = vmatprep.mubr.f32.mxu0 0.0
          %6594 = vmatmul.mubr.f32.gmra.mrb[0].mxu0 %v6489
          %v6595 = vpop.f32.mrb[0].mxu0
          %v6596 = vadd.f32 %v6527, %v6595
          %v6597 = vpop.f32.mrb[0].mxu0
          %6598 = vdwg.mxu0
          %6599 = vst [vmem:[%s533] sm:$0xff] %v6596
        $region88: #{tpu_custom_call.1} parent=55 // pred_fallthru
          _
        %s6600 = sand.u32 %s288, 1
        %s6601 = scalar_lea.sflag [#allocation8], %s6600
        %s6602 = sand.u32 %s288, 1
        %s6603 = smul.addr %s6602, 16
        %s6604 = scalar_lea.vmem [#allocation15], %s6603
        %s6605 = sand.u32 %s314, 1
        %s6606 = scalar_lea.sflag [#allocation17], %s6605
        %s6607 = sand.u32 %s314, 1
        %s6608 = smul.addr %s6607, 8
        %s6609 = scalar_lea.vmem [#allocation16], %s6608
        // Predicated region
        $region89: #{tpu_custom_call.1} parent=55 // pred_check
          %p6610 = pneg %p298
        $region90: #{tpu_custom_call.1} parent=55 // pred_check_branch
          %6612 = sbr.rel (%p6610) target = $region92
        $region91: #{tpu_custom_call.1} parent=55 // pred_region
          %s6613 = smul.u32 2, %s47
          %s6615 = ssub.s32 256, 256
          %6616 = vsyncadd %s6601, %s6615
          %s6617 = smul.addr %s46, 4
          %s6618 = sadd.s32 %s6613, %s6617
          %s6619 = smul.addr %s6618, 128
          %s6620 = scalar_lea.hbm %s10, %s6619
          %s6622 = sshll.u32 %s6604, 4
          %s6623 = int_to_ptr.vmem [resolvable:$true] %s6622
          %6625 = dma.vmem_to_hbm [thread:$0]  %s6623, 256, %s6620, %s6601
        $region92: #{tpu_custom_call.1} parent=55 // pred_fallthru
          _
        // Predicated region
        $region93: #{tpu_custom_call.1} parent=55 // pred_check
          %p6626 = pneg %p324
        $region94: #{tpu_custom_call.1} parent=55 // pred_check_branch
          %6628 = sbr.rel (%p6626) target = $region96
        $region95: #{tpu_custom_call.1} parent=55 // pred_region
          %s6630 = ssub.s32 128, 128
          %6631 = vsyncadd %s6606, %s6630
          %s6632 = smul.addr %s46, 128
          %s6633 = scalar_lea.hbm %s11, %s6632
          %s6635 = sshll.u32 %s6609, 4
          %s6636 = int_to_ptr.vmem [resolvable:$true] %s6635
          %6638 = dma.vmem_to_hbm [thread:$0]  %s6636, 128, %s6633, %s6606
        $region96: #{tpu_custom_call.1} parent=55 // pred_fallthru
          _
      $region56: #{tpu_custom_call.1} parent=5 // pred_fallthru
        _
      %p6639 = scmp.le.s32.totalorder 2, %s37
      // Predicated region
      $region97: #{tpu_custom_call.1} parent=5 // pred_check
        %p6640 = pneg %p6639
      $region98: #{tpu_custom_call.1} parent=5 // pred_check_branch
        %6642 = sbr.rel (%p6640) target = $region100
      $region99: #{tpu_custom_call.1} parent=5 // pred_region
        %s6643 = ssub.s32 %s37, 2
        // Predicated region
        $region101: #{tpu_custom_call.1} parent=99 // pred_check
          %p6644 = pneg %p304
        $region102: #{tpu_custom_call.1} parent=99 // pred_check_branch
          %6646 = sbr.rel (%p6644) target = $region104
        $region103: #{tpu_custom_call.1} parent=99 // pred_region
          %s6647 = sand.u32 %s289, 1
          %s6648 = scalar_lea.sflag [#allocation8], %s6647
          %s6649 = sand.u32 %s289, 1
          %s6650 = smul.addr %s6649, 16
          %s6651 = scalar_lea.vmem [#allocation15], %s6650
          %6652 = dma.done %s6648, 256
        $region104: #{tpu_custom_call.1} parent=99 // pred_fallthru
          _
        // Predicated region
        $region105: #{tpu_custom_call.1} parent=99 // pred_check
          %p6653 = pneg %p330
        $region106: #{tpu_custom_call.1} parent=99 // pred_check_branch
          %6655 = sbr.rel (%p6653) target = $region108
        $region107: #{tpu_custom_call.1} parent=99 // pred_region
          %s6656 = sand.u32 %s315, 1
          %s6657 = scalar_lea.sflag [#allocation17], %s6656
          %s6658 = sand.u32 %s315, 1
          %s6659 = smul.addr %s6658, 8
          %s6660 = scalar_lea.vmem [#allocation16], %s6659
          %6661 = dma.done %s6657, 128
        $region108: #{tpu_custom_call.1} parent=99 // pred_fallthru
          _
      $region100: #{tpu_custom_call.1} parent=5 // pred_fallthru
        _
    $region6: #{tpu_custom_call.1} parent=1 // loop_footer
      %s41 = sadd.s32 1, %s37
    $region7: #{tpu_custom_call.1} parent=1 // loop_footer_branch
      %36 = sbr.rel target = $region3
    $region8: #{tpu_custom_call.1} parent=1 // loop_exit
      _
    %6662 = vsyncpa [#allocation7], 1
    %s6663 = scalar_lea.sflag [#allocation7], 1
    %6664 = vsyncpa %s6663, 1
    %6665 = vsyncpa [#allocation10], 1
    %s6666 = scalar_lea.sflag [#allocation10], 1
    %6667 = vsyncpa %s6666, 1
    %6668 = vsyncpa [#allocation13], 1
    %6669 = vsyncpa [#allocation8], 1
    %s6670 = scalar_lea.sflag [#allocation8], 1
    %6671 = vsyncpa %s6670, 1
    %6672 = vsyncpa [#allocation17], 1
    %s6673 = scalar_lea.sflag [#allocation17], 1
    %6674 = vsyncpa %s6673, 1

</llo_original>
